<compile_context>
chip_gen: v5e
topology: v5e:2x2
jax: 0.10.0
libtpu: 0.0.40
codegen_flags: <defaults>
</compile_context>

<pallas_src>
import jax
import jax.numpy as jnp
import numpy as np
from jax.experimental import pallas as pl
from jax.experimental.pallas import tpu as pltpu

# Full f32 precision for in-kernel MXU matmuls and the XLA reference
# (also keeps the 0/1 shift-matrix matmuls exact).
jax.config.update("jax_default_matmul_precision", "highest")


def _silu(v):
    return v * (1.0 / (1.0 + jnp.exp(-v)))


def _softplus(v):
    return jnp.maximum(v, 0.0) + jnp.log(1.0 + jnp.exp(-jnp.abs(v)))


def aum_kernel(x_ref, wp_ref, bp_ref, wconv_ref, wdtf_ref, bdt_ref,
               wb_ref, wc_ref, alogT_ref, dpar_ref, o_ref, y_s):
    f32 = jnp.float32
    x = x_ref[...].astype(f32)            # (S, D)
    wp = wp_ref[...]                      # (D, D), applied as x @ wp
    bp = bp_ref[...]                      # (1, D)
    S, D = x.shape
    N, Din = alogT_ref.shape              # (d_state, dim_inner)
    L = D                                 # conv output length (k=3, pad=1)

    # ---- path1 = proj(x) ---------------------------------------------------
    path1 = jnp.dot(x, wp, preferred_element_type=f32) + bp          # (S, D)

    # ---- Conv1d(in_ch=S, out_ch=D, k=3, pad=1, no bias) over feature axis --
    # Column shifts via exact 0/1 shift matrices (kept over pltpu.roll: exact
    # under HIGHEST precision and guaranteed lowering); the three taps are
    # fused into ONE (D,3S)@(3S,D) matmul on the stacked shifted inputs.
    row = jax.lax.broadcasted_iota(jnp.int32, (D, D), 0)
    col = jax.lax.broadcasted_iota(jnp.int32, (D, D), 1)
    m_right = (row == col - 1).astype(f32)   # path1 @ m_right: shift right, zero col 0
    m_left = (row == col + 1).astype(f32)    # path1 @ m_left : shift left, zero last col
    p_r = jnp.dot(path1, m_right, preferred_element_type=f32)        # (S, D) tap k=0
    p_l = jnp.dot(path1, m_left, preferred_element_type=f32)         # (S, D) tap k=2
    stacked = jnp.concatenate([p_r, path1, p_l], axis=0)             # (3S, D)
    conv = jnp.dot(wconv_ref[...], stacked, preferred_element_type=f32)  # (D, D)

    u = _silu(conv)                        # SSM input, (L, Din) = (D, D)

    # ---- SSM projections (dt path pre-folded: wdelta @ wdt in the wrapper) --
    dt = jnp.dot(u, wdtf_ref[...], preferred_element_type=f32) + bdt_ref[...]
    delta = _softplus(dt)                                             # (L, Din)
    Bm = jnp.dot(u, wb_ref[...], preferred_element_type=f32)          # (L, N)
    Cm = jnp.dot(u, wc_ref[...], preferred_element_type=f32)          # (L, N)
    du = delta * u                                                    # (L, Din)

    negA_T = -jnp.exp(alogT_ref[...])      # (N, Din)
    er = jax.lax.broadcasted_iota(jnp.int32, (N, N), 0)
    ec = jax.lax.broadcasted_iota(jnp.int32, (N, N), 1)
    eyeN = (er == ec).astype(f32)          # turns a (1,N) row into an (N,1) col

    # ---- selective scan: fully unrolled, state carried in vregs ------------
    state = jnp.zeros((N, Din), f32)
    for l in range(L):                     # L is a Python int -> static unroll
        d_row = delta[l:l + 1, :]          # (1, Din) static value slices
        du_row = du[l:l + 1, :]            # (1, Din)
        b_row = Bm[l:l + 1, :]             # (1, N)
        c_row = Cm[l:l + 1, :]             # (1, N)
        # row -> column for B via identity-mask reduce: one tiny (8,8) XLU op,
        # off the serial critical path (cheaper/safer than transpose + width-1
        # lane slices at N=8).
        b_col = jnp.sum(eyeN * b_row, axis=1, keepdims=True)          # (N, 1)
        dA = jnp.exp(negA_T * d_row)                                  # (N, Din)
        state = dA * state + b_col * du_row                           # vreg-carried
        # y_l = C_l . state_l as a (1,N)@(N,Din) matmul (no transpose of C).
        y_s[pl.ds(l, 1), :] = jnp.dot(c_row, state, preferred_element_type=f32)

    y = y_s[...] + u * dpar_ref[...]       # (L, Din)  (+ D skip)
    mult = _silu(path1) * y                # requires S == L and D == Din
    out = jnp.dot(mult, wp, preferred_element_type=f32) + bp
    o_ref[...] = out.astype(o_ref.dtype)


def aum_forward(x, p):
    B, S, D = x.shape
    N = p["wB"].shape[1]
    Din = p["wdt"].shape[1]
    L = D
    assert S == D == Din, "AuM forward is only shape-consistent when seq==dim==dim_inner"

    # Wrapper-side (plain XLA) weight preprocessing.
    wconv_big = jnp.transpose(p["wconv"], (0, 2, 1)).reshape(D, 3 * S)  # [w_k0|w_k1|w_k2]
    wdt_full = p["wdelta"] @ p["wdt"]                                   # (D, Din) folded dt path
    bp2 = p["bp"].reshape(1, D)
    bdt2 = p["bdt"].reshape(1, Din)
    dpar2 = p["dpar"].reshape(1, Din)
    alogT = p["alog"].T                                                 # (N, Din)

    def full(shape):
        zeros = (0,) * len(shape)
        return pl.BlockSpec(shape, lambda b: zeros)

    grid_spec = pltpu.PrefetchScalarGridSpec(
        num_scalar_prefetch=0,
        grid=(B,),
        in_specs=[
            pl.BlockSpec((None, S, D), lambda b: (b, 0, 0)),   # x, one batch per step
            full((D, D)),          # wp
            full((1, D)),          # bp
            full((D, 3 * S)),      # fused conv weight [w0 | w1 | w2]
            full((D, Din)),        # wdelta @ wdt (folded dt projection)
            full((1, Din)),        # dt_proj bias
            full((D, N)),          # B projection
            full((D, N)),          # C projection
            full((N, Din)),        # A_log transposed
            full((1, Din)),        # D skip parameter
        ],
        out_specs=pl.BlockSpec((None, S, D), lambda b: (b, 0, 0)),
        scratch_shapes=[
            pltpu.VMEM((L, Din), jnp.float32),   # y accumulator (only remaining scratch)
        ],
    )
    return pl.pallas_call(
        aum_kernel,
        out_shape=jax.ShapeDtypeStruct((B, S, D), jnp.float32),
        grid_spec=grid_spec,
        # Batch elements are independent: "parallel" lets v7x shard the B grid
        # across both TensorCores; harmless on single-TC v5e/v6e.
        compiler_params=pltpu.CompilerParams(dimension_semantics=("parallel",)),
    )(x, p["wp"], bp2, wconv_big, wdt_full, bdt2, p["wB"], p["wC"], alogT, dpar2)


def aum_reference(x, p):
    """Pure-JAX mirror of the PyTorch AuM.forward (incl. zeta-style SSM)."""
    B, S, D = x.shape
    N = p["wB"].shape[1]
    Din = p["wdt"].shape[1]
    path1 = x @ p["wp"] + p["bp"]                               # proj
    xpad = jnp.pad(path1, ((0, 0), (0, 0), (1, 1)))             # Conv1d pad=1
    conv = jnp.zeros((B, D, D), jnp.float32)
    for k in range(3):
        conv = conv + jnp.einsum("oc,bcj->boj", p["wconv"][:, :, k], xpad[:, :, k:k + D])
    u = _silu(conv)                                             # (B, L, Din)
    delta = _softplus((u @ p["wdelta"]) @ p["wdt"] + p["bdt"])  # (B, L, Din)
    Bm = u @ p["wB"]
    Cm = u @ p["wC"]
    A = -jnp.exp(p["alog"])                                     # (Din, N)
    dA = jnp.exp(delta[..., None] * A[None, None])              # (B, L, Din, N)
    dBu = (delta * u)[..., None] * Bm[:, :, None, :]
    state = jnp.zeros((B, Din, N), jnp.float32)
    ys = []
    for l in range(D):
        state = dA[:, l] * state + dBu[:, l]
        ys.append(jnp.einsum("bdn,bn->bd", state, Cm[:, l]))
    y = jnp.stack(ys, axis=1) + u * p["dpar"]
    mult = _silu(path1) * y
    return mult @ p["wp"] + p["bp"]


if __name__ == "__main__":
    B = 2
    dim = 32
    d_conv = 3
    d_state = 8
    dt_rank = 8
    dim_inner = dim          # required for shape consistency
    S = dim                  # conv in_channels == seq; also required for broadcast

    key = jax.random.PRNGKey(0)
    ks = jax.random.split(key, 9)
    f32 = jnp.float32
    params = dict(
        wp=jax.random.normal(ks[0], (dim, dim), f32) / np.sqrt(dim),
        bp=jax.random.normal(ks[1], (dim,), f32) * 0.1,
        wconv=jax.random.normal(ks[2], (dim, S, d_conv), f32) / np.sqrt(S * d_conv),
        wdelta=jax.random.normal(ks[3], (dim, dt_rank), f32) / np.sqrt(dim),
        wB=jax.random.normal(ks[4], (dim, d_state), f32) / np.sqrt(dim),
        wC=jax.random.normal(ks[5], (dim, d_state), f32) / np.sqrt(dim),
        wdt=jax.random.normal(ks[6], (dt_rank, dim_inner), f32) / np.sqrt(dt_rank),
        bdt=jax.random.normal(ks[7], (dim_inner,), f32) * 0.1,
        alog=jnp.log(jnp.tile(jnp.arange(1, d_state + 1, dtype=f32)[None, :],
                              (dim_inner, 1))),                 # as in SSM.__init__
        dpar=jnp.ones((dim_inner,), f32),                       # as in SSM.__init__
    )
    x = jax.random.normal(ks[8], (B, S, dim), f32)

    out = jax.block_until_ready(aum_forward(x, params))
    ref = aum_reference(x, params)
    np.testing.assert_allclose(np.asarray(out), np.asarray(ref), rtol=3e-3, atol=3e-3)
    print("KERNEL_OK")
</pallas_src>

<mosaic_0001>
module attributes {stable_mosaic.version = 11 : i64} {
  func.func @aum_kernel(%arg0: i32, %arg1: memref<1x32x32xf32, #tpu.memory_space<vmem>>, %arg2: memref<32x32xf32, #tpu.memory_space<vmem>>, %arg3: memref<1x32xf32, #tpu.memory_space<vmem>>, %arg4: memref<32x96xf32, #tpu.memory_space<vmem>>, %arg5: memref<32x32xf32, #tpu.memory_space<vmem>>, %arg6: memref<1x32xf32, #tpu.memory_space<vmem>>, %arg7: memref<32x8xf32, #tpu.memory_space<vmem>>, %arg8: memref<32x8xf32, #tpu.memory_space<vmem>>, %arg9: memref<8x32xf32, #tpu.memory_space<vmem>>, %arg10: memref<1x32xf32, #tpu.memory_space<vmem>>, %arg11: memref<1x32x32xf32, #tpu.memory_space<vmem>>, %arg12: memref<32x32xf32, #tpu.memory_space<vmem>>) attributes {dimension_semantics = [#tpu.dimension_semantics<parallel>], iteration_bounds = array<i64: 2>, scalar_prefetch = 0 : i64, scratch_operands = 1 : i64, tpu.core_type = #tpu.core_type<tc>, window_params = [{transform_indices = @transform_0, window_bounds = array<i64: 1, 32, 32>}, {pipeline_mode = #tpu.pipeline_mode<synchronous>, transform_indices = @transform_1, window_bounds = array<i64: 32, 32>}, {pipeline_mode = #tpu.pipeline_mode<synchronous>, transform_indices = @transform_2, window_bounds = array<i64: 1, 32>}, {pipeline_mode = #tpu.pipeline_mode<synchronous>, transform_indices = @transform_3, window_bounds = array<i64: 32, 96>}, {pipeline_mode = #tpu.pipeline_mode<synchronous>, transform_indices = @transform_4, window_bounds = array<i64: 32, 32>}, {pipeline_mode = #tpu.pipeline_mode<synchronous>, transform_indices = @transform_5, window_bounds = array<i64: 1, 32>}, {pipeline_mode = #tpu.pipeline_mode<synchronous>, transform_indices = @transform_6, window_bounds = array<i64: 32, 8>}, {pipeline_mode = #tpu.pipeline_mode<synchronous>, transform_indices = @transform_7, window_bounds = array<i64: 32, 8>}, {pipeline_mode = #tpu.pipeline_mode<synchronous>, transform_indices = @transform_8, window_bounds = array<i64: 8, 32>}, {pipeline_mode = #tpu.pipeline_mode<synchronous>, transform_indices = @transform_9, window_bounds = array<i64: 1, 32>}, {transform_indices = @transform_10, window_bounds = array<i64: 1, 32, 32>}]} {
    %c0 = arith.constant 0 : index
    %c0_0 = arith.constant 0 : index
    %c0_1 = arith.constant 0 : index
    %0 = vector.load %arg1[%c0, %c0_0, %c0_1] : memref<1x32x32xf32, #tpu.memory_space<vmem>>, vector<1x32x32xf32>
    %1 = vector.shape_cast %0 : vector<1x32x32xf32> to vector<32x32xf32>
    %c0_2 = arith.constant 0 : index
    %c0_3 = arith.constant 0 : index
    %2 = vector.load %arg2[%c0_2, %c0_3] : memref<32x32xf32, #tpu.memory_space<vmem>>, vector<32x32xf32>
    %c0_4 = arith.constant 0 : index
    %c0_5 = arith.constant 0 : index
    %3 = vector.load %arg3[%c0_4, %c0_5] : memref<1x32xf32, #tpu.memory_space<vmem>>, vector<1x32xf32>
    %cst = arith.constant dense<0.000000e+00> : vector<32x32xf32>
    %4 = tpu.matmul %1, %2, %cst {dimension_numbers = #tpu.dot_dimension_numbers<[1], [0], [0], [1], [0, 0, 1, 1], [], []>, precision = #tpu.contract_precision<fp32>} : vector<32x32xf32>, vector<32x32xf32>, vector<32x32xf32> -> vector<32x32xf32>
    %5 = vector.broadcast %3 : vector<1x32xf32> to vector<32x32xf32>
    %6 = arith.addf %4, %5 : vector<32x32xf32>
    %7 = tpu.iota {dimensions = array<i32: 0>} : vector<32x32xi32>
    %8 = tpu.iota {dimensions = array<i32: 1>} : vector<32x32xi32>
    %c1_i32 = arith.constant 1 : i32
    %9 = vector.broadcast %c1_i32 : i32 to vector<32x32xi32>
    %10 = arith.subi %8, %9 : vector<32x32xi32>
    %11 = arith.cmpi eq, %7, %10 : vector<32x32xi32>
    %12 = arith.extui %11 : vector<32x32xi1> to vector<32x32xi32>
    %13 = arith.sitofp %12 : vector<32x32xi32> to vector<32x32xf32>
    %c1_i32_6 = arith.constant 1 : i32
    %14 = vector.broadcast %c1_i32_6 : i32 to vector<32x32xi32>
    %15 = arith.addi %8, %14 : vector<32x32xi32>
    %16 = arith.cmpi eq, %7, %15 : vector<32x32xi32>
    %17 = arith.extui %16 : vector<32x32xi1> to vector<32x32xi32>
    %18 = arith.sitofp %17 : vector<32x32xi32> to vector<32x32xf32>
    %cst_7 = arith.constant dense<0.000000e+00> : vector<32x32xf32>
    %19 = tpu.matmul %6, %13, %cst_7 {dimension_numbers = #tpu.dot_dimension_numbers<[1], [0], [0], [1], [0, 0, 1, 1], [], []>, precision = #tpu.contract_precision<fp32>} : vector<32x32xf32>, vector<32x32xf32>, vector<32x32xf32> -> vector<32x32xf32>
    %cst_8 = arith.constant dense<0.000000e+00> : vector<32x32xf32>
    %20 = tpu.matmul %6, %18, %cst_8 {dimension_numbers = #tpu.dot_dimension_numbers<[1], [0], [0], [1], [0, 0, 1, 1], [], []>, precision = #tpu.contract_precision<fp32>} : vector<32x32xf32>, vector<32x32xf32>, vector<32x32xf32> -> vector<32x32xf32>
    %21 = tpu.concatenate %19, %6, %20 in 0 : vector<32x32xf32>, vector<32x32xf32>, vector<32x32xf32> -> vector<96x32xf32>
    %c0_9 = arith.constant 0 : index
    %c0_10 = arith.constant 0 : index
    %22 = vector.load %arg4[%c0_9, %c0_10] : memref<32x96xf32, #tpu.memory_space<vmem>>, vector<32x96xf32>
    %cst_11 = arith.constant dense<0.000000e+00> : vector<32x32xf32>
    %23 = tpu.matmul %22, %21, %cst_11 {dimension_numbers = #tpu.dot_dimension_numbers<[1], [0], [0], [1], [0, 0, 1, 1], [], []>, precision = #tpu.contract_precision<fp32>} : vector<32x96xf32>, vector<96x32xf32>, vector<32x32xf32> -> vector<32x32xf32>
    %cst_12 = arith.constant 0.000000e+00 : f32
    %24 = vector.broadcast %cst_12 : f32 to vector<32x32xf32>
    %25 = arith.subf %24, %23 : vector<32x32xf32>
    %26 = math.exp %25 : vector<32x32xf32>
    %cst_13 = arith.constant 1.000000e+00 : f32
    %27 = vector.broadcast %cst_13 : f32 to vector<32x32xf32>
    %28 = arith.addf %27, %26 : vector<32x32xf32>
    %cst_14 = arith.constant 1.000000e+00 : f32
    %29 = vector.broadcast %cst_14 : f32 to vector<32x32xf32>
    %30 = arith.divf %29, %28 : vector<32x32xf32>
    %31 = arith.mulf %23, %30 : vector<32x32xf32>
    %c0_15 = arith.constant 0 : index
    %c0_16 = arith.constant 0 : index
    %32 = vector.load %arg5[%c0_15, %c0_16] : memref<32x32xf32, #tpu.memory_space<vmem>>, vector<32x32xf32>
    %cst_17 = arith.constant dense<0.000000e+00> : vector<32x32xf32>
    %33 = tpu.matmul %31, %32, %cst_17 {dimension_numbers = #tpu.dot_dimension_numbers<[1], [0], [0], [1], [0, 0, 1, 1], [], []>, precision = #tpu.contract_precision<fp32>} : vector<32x32xf32>, vector<32x32xf32>, vector<32x32xf32> -> vector<32x32xf32>
    %c0_18 = arith.constant 0 : index
    %c0_19 = arith.constant 0 : index
    %34 = vector.load %arg6[%c0_18, %c0_19] : memref<1x32xf32, #tpu.memory_space<vmem>>, vector<1x32xf32>
    %35 = vector.broadcast %34 : vector<1x32xf32> to vector<32x32xf32>
    %36 = arith.addf %33, %35 : vector<32x32xf32>
    %cst_20 = arith.constant 0.000000e+00 : f32
    %37 = vector.broadcast %cst_20 : f32 to vector<32x32xf32>
    %38 = arith.maximumf %36, %37 : vector<32x32xf32>
    %39 = math.absf %36 : vector<32x32xf32>
    %cst_21 = arith.constant 0.000000e+00 : f32
    %40 = vector.broadcast %cst_21 : f32 to vector<32x32xf32>
    %41 = arith.subf %40, %39 : vector<32x32xf32>
    %42 = math.exp %41 : vector<32x32xf32>
    %cst_22 = arith.constant 1.000000e+00 : f32
    %43 = vector.broadcast %cst_22 : f32 to vector<32x32xf32>
    %44 = arith.addf %43, %42 : vector<32x32xf32>
    %45 = math.log %44 : vector<32x32xf32>
    %46 = arith.addf %38, %45 : vector<32x32xf32>
    %c0_23 = arith.constant 0 : index
    %c0_24 = arith.constant 0 : index
    %47 = vector.load %arg7[%c0_23, %c0_24] : memref<32x8xf32, #tpu.memory_space<vmem>>, vector<32x8xf32>
    %cst_25 = arith.constant dense<0.000000e+00> : vector<32x8xf32>
    %48 = tpu.matmul %31, %47, %cst_25 {dimension_numbers = #tpu.dot_dimension_numbers<[1], [0], [0], [1], [0, 0, 1, 1], [], []>, precision = #tpu.contract_precision<fp32>} : vector<32x32xf32>, vector<32x8xf32>, vector<32x8xf32> -> vector<32x8xf32>
    %c0_26 = arith.constant 0 : index
    %c0_27 = arith.constant 0 : index
    %49 = vector.load %arg8[%c0_26, %c0_27] : memref<32x8xf32, #tpu.memory_space<vmem>>, vector<32x8xf32>
    %cst_28 = arith.constant dense<0.000000e+00> : vector<32x8xf32>
    %50 = tpu.matmul %31, %49, %cst_28 {dimension_numbers = #tpu.dot_dimension_numbers<[1], [0], [0], [1], [0, 0, 1, 1], [], []>, precision = #tpu.contract_precision<fp32>} : vector<32x32xf32>, vector<32x8xf32>, vector<32x8xf32> -> vector<32x8xf32>
    %51 = arith.mulf %46, %31 : vector<32x32xf32>
    %c0_29 = arith.constant 0 : index
    %c0_30 = arith.constant 0 : index
    %52 = vector.load %arg9[%c0_29, %c0_30] : memref<8x32xf32, #tpu.memory_space<vmem>>, vector<8x32xf32>
    %53 = math.exp %52 : vector<8x32xf32>
    %cst_31 = arith.constant 0.000000e+00 : f32
    %54 = vector.broadcast %cst_31 : f32 to vector<8x32xf32>
    %55 = arith.subf %54, %53 : vector<8x32xf32>
    %56 = tpu.iota {dimensions = array<i32: 0>} : vector<8x8xi32>
    %57 = tpu.iota {dimensions = array<i32: 1>} : vector<8x8xi32>
    %58 = arith.cmpi eq, %56, %57 : vector<8x8xi32>
    %59 = arith.extui %58 : vector<8x8xi1> to vector<8x8xi32>
    %60 = arith.sitofp %59 : vector<8x8xi32> to vector<8x8xf32>
    %cst_32 = arith.constant 0.000000e+00 : f32
    %61 = vector.broadcast %cst_32 : f32 to vector<8x32xf32>
    %62 = vector.extract_strided_slice %46 {offsets = [0, 0], sizes = [1, 32], strides = [1, 1]} : vector<32x32xf32> to vector<1x32xf32>
    %63 = vector.extract_strided_slice %51 {offsets = [0, 0], sizes = [1, 32], strides = [1, 1]} : vector<32x32xf32> to vector<1x32xf32>
    %64 = vector.extract_strided_slice %48 {offsets = [0, 0], sizes = [1, 8], strides = [1, 1]} : vector<32x8xf32> to vector<1x8xf32>
    %65 = vector.extract_strided_slice %50 {offsets = [0, 0], sizes = [1, 8], strides = [1, 1]} : vector<32x8xf32> to vector<1x8xf32>
    %66 = vector.broadcast %64 : vector<1x8xf32> to vector<8x8xf32>
    %67 = arith.mulf %60, %66 : vector<8x8xf32>
    %cst_33 = arith.constant dense<0.000000e+00> : vector<8xf32>
    %68 = vector.multi_reduction <add>, %67, %cst_33 [1] : vector<8x8xf32> to vector<8xf32>
    %69 = vector.shape_cast %68 : vector<8xf32> to vector<8x1xf32>
    %70 = vector.broadcast %62 : vector<1x32xf32> to vector<8x32xf32>
    %71 = arith.mulf %55, %70 : vector<8x32xf32>
    %72 = math.exp %71 : vector<8x32xf32>
    %73 = arith.mulf %72, %61 : vector<8x32xf32>
    %74 = vector.broadcast %69 : vector<8x1xf32> to vector<8x32xf32>
    %75 = vector.broadcast %63 : vector<1x32xf32> to vector<8x32xf32>
    %76 = arith.mulf %74, %75 : vector<8x32xf32>
    %77 = arith.addf %73, %76 : vector<8x32xf32>
    %cst_34 = arith.constant dense<0.000000e+00> : vector<1x32xf32>
    %78 = tpu.matmul %65, %77, %cst_34 {dimension_numbers = #tpu.dot_dimension_numbers<[1], [0], [0], [1], [0, 0, 1, 1], [], []>, precision = #tpu.contract_precision<fp32>} : vector<1x8xf32>, vector<8x32xf32>, vector<1x32xf32> -> vector<1x32xf32>
    %c0_35 = arith.constant 0 : index
    %c0_36 = arith.constant 0 : index
    %79 = vector.load %arg12[%c0_35, %c0_36] : memref<32x32xf32, #tpu.memory_space<vmem>>, vector<1x32xf32>
    tpu.vector_store %arg12[%c0_35, %c0_36], %78 {strides = array<i32>} : memref<32x32xf32, #tpu.memory_space<vmem>>, vector<1x32xf32>,
    %80 = vector.extract_strided_slice %46 {offsets = [1, 0], sizes = [1, 32], strides = [1, 1]} : vector<32x32xf32> to vector<1x32xf32>
    %81 = vector.extract_strided_slice %51 {offsets = [1, 0], sizes = [1, 32], strides = [1, 1]} : vector<32x32xf32> to vector<1x32xf32>
    %82 = vector.extract_strided_slice %48 {offsets = [1, 0], sizes = [1, 8], strides = [1, 1]} : vector<32x8xf32> to vector<1x8xf32>
    %83 = vector.extract_strided_slice %50 {offsets = [1, 0], sizes = [1, 8], strides = [1, 1]} : vector<32x8xf32> to vector<1x8xf32>
    %84 = vector.broadcast %82 : vector<1x8xf32> to vector<8x8xf32>
    %85 = arith.mulf %60, %84 : vector<8x8xf32>
    %cst_37 = arith.constant dense<0.000000e+00> : vector<8xf32>
    %86 = vector.multi_reduction <add>, %85, %cst_37 [1] : vector<8x8xf32> to vector<8xf32>
    %87 = vector.shape_cast %86 : vector<8xf32> to vector<8x1xf32>
    %88 = vector.broadcast %80 : vector<1x32xf32> to vector<8x32xf32>
    %89 = arith.mulf %55, %88 : vector<8x32xf32>
    %90 = math.exp %89 : vector<8x32xf32>
    %91 = arith.mulf %90, %77 : vector<8x32xf32>
    %92 = vector.broadcast %87 : vector<8x1xf32> to vector<8x32xf32>
    %93 = vector.broadcast %81 : vector<1x32xf32> to vector<8x32xf32>
    %94 = arith.mulf %92, %93 : vector<8x32xf32>
    %95 = arith.addf %91, %94 : vector<8x32xf32>
    %cst_38 = arith.constant dense<0.000000e+00> : vector<1x32xf32>
    %96 = tpu.matmul %83, %95, %cst_38 {dimension_numbers = #tpu.dot_dimension_numbers<[1], [0], [0], [1], [0, 0, 1, 1], [], []>, precision = #tpu.contract_precision<fp32>} : vector<1x8xf32>, vector<8x32xf32>, vector<1x32xf32> -> vector<1x32xf32>
    %c1 = arith.constant 1 : index
    %c0_39 = arith.constant 0 : index
    %97 = vector.load %arg12[%c1, %c0_39] : memref<32x32xf32, #tpu.memory_space<vmem>>, vector<1x32xf32>
    tpu.vector_store %arg12[%c1, %c0_39], %96 {strides = array<i32>} : memref<32x32xf32, #tpu.memory_space<vmem>>, vector<1x32xf32>,
    %98 = vector.extract_strided_slice %46 {offsets = [2, 0], sizes = [1, 32], strides = [1, 1]} : vector<32x32xf32> to vector<1x32xf32>
    %99 = vector.extract_strided_slice %51 {offsets = [2, 0], sizes = [1, 32], strides = [1, 1]} : vector<32x32xf32> to vector<1x32xf32>
    %100 = vector.extract_strided_slice %48 {offsets = [2, 0], sizes = [1, 8], strides = [1, 1]} : vector<32x8xf32> to vector<1x8xf32>
    %101 = vector.extract_strided_slice %50 {offsets = [2, 0], sizes = [1, 8], strides = [1, 1]} : vector<32x8xf32> to vector<1x8xf32>
    %102 = vector.broadcast %100 : vector<1x8xf32> to vector<8x8xf32>
    %103 = arith.mulf %60, %102 : vector<8x8xf32>
    %cst_40 = arith.constant dense<0.000000e+00> : vector<8xf32>
    %104 = vector.multi_reduction <add>, %103, %cst_40 [1] : vector<8x8xf32> to vector<8xf32>
    %105 = vector.shape_cast %104 : vector<8xf32> to vector<8x1xf32>
    %106 = vector.broadcast %98 : vector<1x32xf32> to vector<8x32xf32>
    %107 = arith.mulf %55, %106 : vector<8x32xf32>
    %108 = math.exp %107 : vector<8x32xf32>
    %109 = arith.mulf %108, %95 : vector<8x32xf32>
    %110 = vector.broadcast %105 : vector<8x1xf32> to vector<8x32xf32>
    %111 = vector.broadcast %99 : vector<1x32xf32> to vector<8x32xf32>
    %112 = arith.mulf %110, %111 : vector<8x32xf32>
    %113 = arith.addf %109, %112 : vector<8x32xf32>
    %cst_41 = arith.constant dense<0.000000e+00> : vector<1x32xf32>
    %114 = tpu.matmul %101, %113, %cst_41 {dimension_numbers = #tpu.dot_dimension_numbers<[1], [0], [0], [1], [0, 0, 1, 1], [], []>, precision = #tpu.contract_precision<fp32>} : vector<1x8xf32>, vector<8x32xf32>, vector<1x32xf32> -> vector<1x32xf32>
    %c2 = arith.constant 2 : index
    %c0_42 = arith.constant 0 : index
    %115 = vector.load %arg12[%c2, %c0_42] : memref<32x32xf32, #tpu.memory_space<vmem>>, vector<1x32xf32>
    tpu.vector_store %arg12[%c2, %c0_42], %114 {strides = array<i32>} : memref<32x32xf32, #tpu.memory_space<vmem>>, vector<1x32xf32>,
    %116 = vector.extract_strided_slice %46 {offsets = [3, 0], sizes = [1, 32], strides = [1, 1]} : vector<32x32xf32> to vector<1x32xf32>
    %117 = vector.extract_strided_slice %51 {offsets = [3, 0], sizes = [1, 32], strides = [1, 1]} : vector<32x32xf32> to vector<1x32xf32>
    %118 = vector.extract_strided_slice %48 {offsets = [3, 0], sizes = [1, 8], strides = [1, 1]} : vector<32x8xf32> to vector<1x8xf32>
    %119 = vector.extract_strided_slice %50 {offsets = [3, 0], sizes = [1, 8], strides = [1, 1]} : vector<32x8xf32> to vector<1x8xf32>
    %120 = vector.broadcast %118 : vector<1x8xf32> to vector<8x8xf32>
    %121 = arith.mulf %60, %120 : vector<8x8xf32>
    %cst_43 = arith.constant dense<0.000000e+00> : vector<8xf32>
    %122 = vector.multi_reduction <add>, %121, %cst_43 [1] : vector<8x8xf32> to vector<8xf32>
    %123 = vector.shape_cast %122 : vector<8xf32> to vector<8x1xf32>
    %124 = vector.broadcast %116 : vector<1x32xf32> to vector<8x32xf32>
    %125 = arith.mulf %55, %124 : vector<8x32xf32>
    %126 = math.exp %125 : vector<8x32xf32>
    %127 = arith.mulf %126, %113 : vector<8x32xf32>
    %128 = vector.broadcast %123 : vector<8x1xf32> to vector<8x32xf32>
    %129 = vector.broadcast %117 : vector<1x32xf32> to vector<8x32xf32>
    %130 = arith.mulf %128, %129 : vector<8x32xf32>
    %131 = arith.addf %127, %130 : vector<8x32xf32>
    %cst_44 = arith.constant dense<0.000000e+00> : vector<1x32xf32>
    %132 = tpu.matmul %119, %131, %cst_44 {dimension_numbers = #tpu.dot_dimension_numbers<[1], [0], [0], [1], [0, 0, 1, 1], [], []>, precision = #tpu.contract_precision<fp32>} : vector<1x8xf32>, vector<8x32xf32>, vector<1x32xf32> -> vector<1x32xf32>
    %c3 = arith.constant 3 : index
    %c0_45 = arith.constant 0 : index
    %133 = vector.load %arg12[%c3, %c0_45] : memref<32x32xf32, #tpu.memory_space<vmem>>, vector<1x32xf32>
    tpu.vector_store %arg12[%c3, %c0_45], %132 {strides = array<i32>} : memref<32x32xf32, #tpu.memory_space<vmem>>, vector<1x32xf32>,
    %134 = vector.extract_strided_slice %46 {offsets = [4, 0], sizes = [1, 32], strides = [1, 1]} : vector<32x32xf32> to vector<1x32xf32>
    %135 = vector.extract_strided_slice %51 {offsets = [4, 0], sizes = [1, 32], strides = [1, 1]} : vector<32x32xf32> to vector<1x32xf32>
    %136 = vector.extract_strided_slice %48 {offsets = [4, 0], sizes = [1, 8], strides = [1, 1]} : vector<32x8xf32> to vector<1x8xf32>
    %137 = vector.extract_strided_slice %50 {offsets = [4, 0], sizes = [1, 8], strides = [1, 1]} : vector<32x8xf32> to vector<1x8xf32>
    %138 = vector.broadcast %136 : vector<1x8xf32> to vector<8x8xf32>
    %139 = arith.mulf %60, %138 : vector<8x8xf32>
    %cst_46 = arith.constant dense<0.000000e+00> : vector<8xf32>
    %140 = vector.multi_reduction <add>, %139, %cst_46 [1] : vector<8x8xf32> to vector<8xf32>
    %141 = vector.shape_cast %140 : vector<8xf32> to vector<8x1xf32>
    %142 = vector.broadcast %134 : vector<1x32xf32> to vector<8x32xf32>
    %143 = arith.mulf %55, %142 : vector<8x32xf32>
    %144 = math.exp %143 : vector<8x32xf32>
    %145 = arith.mulf %144, %131 : vector<8x32xf32>
    %146 = vector.broadcast %141 : vector<8x1xf32> to vector<8x32xf32>
    %147 = vector.broadcast %135 : vector<1x32xf32> to vector<8x32xf32>
    %148 = arith.mulf %146, %147 : vector<8x32xf32>
    %149 = arith.addf %145, %148 : vector<8x32xf32>
    %cst_47 = arith.constant dense<0.000000e+00> : vector<1x32xf32>
    %150 = tpu.matmul %137, %149, %cst_47 {dimension_numbers = #tpu.dot_dimension_numbers<[1], [0], [0], [1], [0, 0, 1, 1], [], []>, precision = #tpu.contract_precision<fp32>} : vector<1x8xf32>, vector<8x32xf32>, vector<1x32xf32> -> vector<1x32xf32>
    %c4 = arith.constant 4 : index
    %c0_48 = arith.constant 0 : index
    %151 = vector.load %arg12[%c4, %c0_48] : memref<32x32xf32, #tpu.memory_space<vmem>>, vector<1x32xf32>
    tpu.vector_store %arg12[%c4, %c0_48], %150 {strides = array<i32>} : memref<32x32xf32, #tpu.memory_space<vmem>>, vector<1x32xf32>,
    %152 = vector.extract_strided_slice %46 {offsets = [5, 0], sizes = [1, 32], strides = [1, 1]} : vector<32x32xf32> to vector<1x32xf32>
    %153 = vector.extract_strided_slice %51 {offsets = [5, 0], sizes = [1, 32], strides = [1, 1]} : vector<32x32xf32> to vector<1x32xf32>
    %154 = vector.extract_strided_slice %48 {offsets = [5, 0], sizes = [1, 8], strides = [1, 1]} : vector<32x8xf32> to vector<1x8xf32>
    %155 = vector.extract_strided_slice %50 {offsets = [5, 0], sizes = [1, 8], strides = [1, 1]} : vector<32x8xf32> to vector<1x8xf32>
    %156 = vector.broadcast %154 : vector<1x8xf32> to vector<8x8xf32>
    %157 = arith.mulf %60, %156 : vector<8x8xf32>
    %cst_49 = arith.constant dense<0.000000e+00> : vector<8xf32>
    %158 = vector.multi_reduction <add>, %157, %cst_49 [1] : vector<8x8xf32> to vector<8xf32>
    %159 = vector.shape_cast %158 : vector<8xf32> to vector<8x1xf32>
    %160 = vector.broadcast %152 : vector<1x32xf32> to vector<8x32xf32>
    %161 = arith.mulf %55, %160 : vector<8x32xf32>
    %162 = math.exp %161 : vector<8x32xf32>
    %163 = arith.mulf %162, %149 : vector<8x32xf32>
    %164 = vector.broadcast %159 : vector<8x1xf32> to vector<8x32xf32>
    %165 = vector.broadcast %153 : vector<1x32xf32> to vector<8x32xf32>
    %166 = arith.mulf %164, %165 : vector<8x32xf32>
    %167 = arith.addf %163, %166 : vector<8x32xf32>
    %cst_50 = arith.constant dense<0.000000e+00> : vector<1x32xf32>
    %168 = tpu.matmul %155, %167, %cst_50 {dimension_numbers = #tpu.dot_dimension_numbers<[1], [0], [0], [1], [0, 0, 1, 1], [], []>, precision = #tpu.contract_precision<fp32>} : vector<1x8xf32>, vector<8x32xf32>, vector<1x32xf32> -> vector<1x32xf32>
    %c5 = arith.constant 5 : index
    %c0_51 = arith.constant 0 : index
    %169 = vector.load %arg12[%c5, %c0_51] : memref<32x32xf32, #tpu.memory_space<vmem>>, vector<1x32xf32>
    tpu.vector_store %arg12[%c5, %c0_51], %168 {strides = array<i32>} : memref<32x32xf32, #tpu.memory_space<vmem>>, vector<1x32xf32>,
    %170 = vector.extract_strided_slice %46 {offsets = [6, 0], sizes = [1, 32], strides = [1, 1]} : vector<32x32xf32> to vector<1x32xf32>
    %171 = vector.extract_strided_slice %51 {offsets = [6, 0], sizes = [1, 32], strides = [1, 1]} : vector<32x32xf32> to vector<1x32xf32>
    %172 = vector.extract_strided_slice %48 {offsets = [6, 0], sizes = [1, 8], strides = [1, 1]} : vector<32x8xf32> to vector<1x8xf32>
    %173 = vector.extract_strided_slice %50 {offsets = [6, 0], sizes = [1, 8], strides = [1, 1]} : vector<32x8xf32> to vector<1x8xf32>
    %174 = vector.broadcast %172 : vector<1x8xf32> to vector<8x8xf32>
    %175 = arith.mulf %60, %174 : vector<8x8xf32>
    %cst_52 = arith.constant dense<0.000000e+00> : vector<8xf32>
    %176 = vector.multi_reduction <add>, %175, %cst_52 [1] : vector<8x8xf32> to vector<8xf32>
    %177 = vector.shape_cast %176 : vector<8xf32> to vector<8x1xf32>
    %178 = vector.broadcast %170 : vector<1x32xf32> to vector<8x32xf32>
    %179 = arith.mulf %55, %178 : vector<8x32xf32>
    %180 = math.exp %179 : vector<8x32xf32>
    %181 = arith.mulf %180, %167 : vector<8x32xf32>
    %182 = vector.broadcast %177 : vector<8x1xf32> to vector<8x32xf32>
    %183 = vector.broadcast %171 : vector<1x32xf32> to vector<8x32xf32>
    %184 = arith.mulf %182, %183 : vector<8x32xf32>
    %185 = arith.addf %181, %184 : vector<8x32xf32>
    %cst_53 = arith.constant dense<0.000000e+00> : vector<1x32xf32>
    %186 = tpu.matmul %173, %185, %cst_53 {dimension_numbers = #tpu.dot_dimension_numbers<[1], [0], [0], [1], [0, 0, 1, 1], [], []>, precision = #tpu.contract_precision<fp32>} : vector<1x8xf32>, vector<8x32xf32>, vector<1x32xf32> -> vector<1x32xf32>
    %c6 = arith.constant 6 : index
    %c0_54 = arith.constant 0 : index
    %187 = vector.load %arg12[%c6, %c0_54] : memref<32x32xf32, #tpu.memory_space<vmem>>, vector<1x32xf32>
    tpu.vector_store %arg12[%c6, %c0_54], %186 {strides = array<i32>} : memref<32x32xf32, #tpu.memory_space<vmem>>, vector<1x32xf32>,
    %188 = vector.extract_strided_slice %46 {offsets = [7, 0], sizes = [1, 32], strides = [1, 1]} : vector<32x32xf32> to vector<1x32xf32>
    %189 = vector.extract_strided_slice %51 {offsets = [7, 0], sizes = [1, 32], strides = [1, 1]} : vector<32x32xf32> to vector<1x32xf32>
    %190 = vector.extract_strided_slice %48 {offsets = [7, 0], sizes = [1, 8], strides = [1, 1]} : vector<32x8xf32> to vector<1x8xf32>
    %191 = vector.extract_strided_slice %50 {offsets = [7, 0], sizes = [1, 8], strides = [1, 1]} : vector<32x8xf32> to vector<1x8xf32>
    %192 = vector.broadcast %190 : vector<1x8xf32> to vector<8x8xf32>
    %193 = arith.mulf %60, %192 : vector<8x8xf32>
    %cst_55 = arith.constant dense<0.000000e+00> : vector<8xf32>
    %194 = vector.multi_reduction <add>, %193, %cst_55 [1] : vector<8x8xf32> to vector<8xf32>
    %195 = vector.shape_cast %194 : vector<8xf32> to vector<8x1xf32>
    %196 = vector.broadcast %188 : vector<1x32xf32> to vector<8x32xf32>
    %197 = arith.mulf %55, %196 : vector<8x32xf32>
    %198 = math.exp %197 : vector<8x32xf32>
    %199 = arith.mulf %198, %185 : vector<8x32xf32>
    %200 = vector.broadcast %195 : vector<8x1xf32> to vector<8x32xf32>
    %201 = vector.broadcast %189 : vector<1x32xf32> to vector<8x32xf32>
    %202 = arith.mulf %200, %201 : vector<8x32xf32>
    %203 = arith.addf %199, %202 : vector<8x32xf32>
    %cst_56 = arith.constant dense<0.000000e+00> : vector<1x32xf32>
    %204 = tpu.matmul %191, %203, %cst_56 {dimension_numbers = #tpu.dot_dimension_numbers<[1], [0], [0], [1], [0, 0, 1, 1], [], []>, precision = #tpu.contract_precision<fp32>} : vector<1x8xf32>, vector<8x32xf32>, vector<1x32xf32> -> vector<1x32xf32>
    %c7 = arith.constant 7 : index
    %c0_57 = arith.constant 0 : index
    %205 = vector.load %arg12[%c7, %c0_57] : memref<32x32xf32, #tpu.memory_space<vmem>>, vector<1x32xf32>
    tpu.vector_store %arg12[%c7, %c0_57], %204 {strides = array<i32>} : memref<32x32xf32, #tpu.memory_space<vmem>>, vector<1x32xf32>,
    %206 = vector.extract_strided_slice %46 {offsets = [8, 0], sizes = [1, 32], strides = [1, 1]} : vector<32x32xf32> to vector<1x32xf32>
    %207 = vector.extract_strided_slice %51 {offsets = [8, 0], sizes = [1, 32], strides = [1, 1]} : vector<32x32xf32> to vector<1x32xf32>
    %208 = vector.extract_strided_slice %48 {offsets = [8, 0], sizes = [1, 8], strides = [1, 1]} : vector<32x8xf32> to vector<1x8xf32>
    %209 = vector.extract_strided_slice %50 {offsets = [8, 0], sizes = [1, 8], strides = [1, 1]} : vector<32x8xf32> to vector<1x8xf32>
    %210 = vector.broadcast %208 : vector<1x8xf32> to vector<8x8xf32>
    %211 = arith.mulf %60, %210 : vector<8x8xf32>
    %cst_58 = arith.constant dense<0.000000e+00> : vector<8xf32>
    %212 = vector.multi_reduction <add>, %211, %cst_58 [1] : vector<8x8xf32> to vector<8xf32>
    %213 = vector.shape_cast %212 : vector<8xf32> to vector<8x1xf32>
    %214 = vector.broadcast %206 : vector<1x32xf32> to vector<8x32xf32>
    %215 = arith.mulf %55, %214 : vector<8x32xf32>
    %216 = math.exp %215 : vector<8x32xf32>
    %217 = arith.mulf %216, %203 : vector<8x32xf32>
    %218 = vector.broadcast %213 : vector<8x1xf32> to vector<8x32xf32>
    %219 = vector.broadcast %207 : vector<1x32xf32> to vector<8x32xf32>
    %220 = arith.mulf %218, %219 : vector<8x32xf32>
    %221 = arith.addf %217, %220 : vector<8x32xf32>
    %cst_59 = arith.constant dense<0.000000e+00> : vector<1x32xf32>
    %222 = tpu.matmul %209, %221, %cst_59 {dimension_numbers = #tpu.dot_dimension_numbers<[1], [0], [0], [1], [0, 0, 1, 1], [], []>, precision = #tpu.contract_precision<fp32>} : vector<1x8xf32>, vector<8x32xf32>, vector<1x32xf32> -> vector<1x32xf32>
    %c8 = arith.constant 8 : index
    %c0_60 = arith.constant 0 : index
    %223 = vector.load %arg12[%c8, %c0_60] : memref<32x32xf32, #tpu.memory_space<vmem>>, vector<1x32xf32>
    tpu.vector_store %arg12[%c8, %c0_60], %222 {strides = array<i32>} : memref<32x32xf32, #tpu.memory_space<vmem>>, vector<1x32xf32>,
    %224 = vector.extract_strided_slice %46 {offsets = [9, 0], sizes = [1, 32], strides = [1, 1]} : vector<32x32xf32> to vector<1x32xf32>
    %225 = vector.extract_strided_slice %51 {offsets = [9, 0], sizes = [1, 32], strides = [1, 1]} : vector<32x32xf32> to vector<1x32xf32>
    %226 = vector.extract_strided_slice %48 {offsets = [9, 0], sizes = [1, 8], strides = [1, 1]} : vector<32x8xf32> to vector<1x8xf32>
    %227 = vector.extract_strided_slice %50 {offsets = [9, 0], sizes = [1, 8], strides = [1, 1]} : vector<32x8xf32> to vector<1x8xf32>
    %228 = vector.broadcast %226 : vector<1x8xf32> to vector<8x8xf32>
    %229 = arith.mulf %60, %228 : vector<8x8xf32>
    %cst_61 = arith.constant dense<0.000000e+00> : vector<8xf32>
    %230 = vector.multi_reduction <add>, %229, %cst_61 [1] : vector<8x8xf32> to vector<8xf32>
    %231 = vector.shape_cast %230 : vector<8xf32> to vector<8x1xf32>
    %232 = vector.broadcast %224 : vector<1x32xf32> to vector<8x32xf32>
    %233 = arith.mulf %55, %232 : vector<8x32xf32>
    %234 = math.exp %233 : vector<8x32xf32>
    %235 = arith.mulf %234, %221 : vector<8x32xf32>
    %236 = vector.broadcast %231 : vector<8x1xf32> to vector<8x32xf32>
    %237 = vector.broadcast %225 : vector<1x32xf32> to vector<8x32xf32>
    %238 = arith.mulf %236, %237 : vector<8x32xf32>
    %239 = arith.addf %235, %238 : vector<8x32xf32>
    %cst_62 = arith.constant dense<0.000000e+00> : vector<1x32xf32>
    %240 = tpu.matmul %227, %239, %cst_62 {dimension_numbers = #tpu.dot_dimension_numbers<[1], [0], [0], [1], [0, 0, 1, 1], [], []>, precision = #tpu.contract_precision<fp32>} : vector<1x8xf32>, vector<8x32xf32>, vector<1x32xf32> -> vector<1x32xf32>
    %c9 = arith.constant 9 : index
    %c0_63 = arith.constant 0 : index
    %241 = vector.load %arg12[%c9, %c0_63] : memref<32x32xf32, #tpu.memory_space<vmem>>, vector<1x32xf32>
    tpu.vector_store %arg12[%c9, %c0_63], %240 {strides = array<i32>} : memref<32x32xf32, #tpu.memory_space<vmem>>, vector<1x32xf32>,
    %242 = vector.extract_strided_slice %46 {offsets = [10, 0], sizes = [1, 32], strides = [1, 1]} : vector<32x32xf32> to vector<1x32xf32>
    %243 = vector.extract_strided_slice %51 {offsets = [10, 0], sizes = [1, 32], strides = [1, 1]} : vector<32x32xf32> to vector<1x32xf32>
    %244 = vector.extract_strided_slice %48 {offsets = [10, 0], sizes = [1, 8], strides = [1, 1]} : vector<32x8xf32> to vector<1x8xf32>
    %245 = vector.extract_strided_slice %50 {offsets = [10, 0], sizes = [1, 8], strides = [1, 1]} : vector<32x8xf32> to vector<1x8xf32>
    %246 = vector.broadcast %244 : vector<1x8xf32> to vector<8x8xf32>
    %247 = arith.mulf %60, %246 : vector<8x8xf32>
    %cst_64 = arith.constant dense<0.000000e+00> : vector<8xf32>
    %248 = vector.multi_reduction <add>, %247, %cst_64 [1] : vector<8x8xf32> to vector<8xf32>
    %249 = vector.shape_cast %248 : vector<8xf32> to vector<8x1xf32>
    %250 = vector.broadcast %242 : vector<1x32xf32> to vector<8x32xf32>
    %251 = arith.mulf %55, %250 : vector<8x32xf32>
    %252 = math.exp %251 : vector<8x32xf32>
    %253 = arith.mulf %252, %239 : vector<8x32xf32>
    %254 = vector.broadcast %249 : vector<8x1xf32> to vector<8x32xf32>
    %255 = vector.broadcast %243 : vector<1x32xf32> to vector<8x32xf32>
    %256 = arith.mulf %254, %255 : vector<8x32xf32>
    %257 = arith.addf %253, %256 : vector<8x32xf32>
    %cst_65 = arith.constant dense<0.000000e+00> : vector<1x32xf32>
    %258 = tpu.matmul %245, %257, %cst_65 {dimension_numbers = #tpu.dot_dimension_numbers<[1], [0], [0], [1], [0, 0, 1, 1], [], []>, precision = #tpu.contract_precision<fp32>} : vector<1x8xf32>, vector<8x32xf32>, vector<1x32xf32> -> vector<1x32xf32>
    %c10 = arith.constant 10 : index
    %c0_66 = arith.constant 0 : index
    %259 = vector.load %arg12[%c10, %c0_66] : memref<32x32xf32, #tpu.memory_space<vmem>>, vector<1x32xf32>
    tpu.vector_store %arg12[%c10, %c0_66], %258 {strides = array<i32>} : memref<32x32xf32, #tpu.memory_space<vmem>>, vector<1x32xf32>,
    %260 = vector.extract_strided_slice %46 {offsets = [11, 0], sizes = [1, 32], strides = [1, 1]} : vector<32x32xf32> to vector<1x32xf32>
    %261 = vector.extract_strided_slice %51 {offsets = [11, 0], sizes = [1, 32], strides = [1, 1]} : vector<32x32xf32> to vector<1x32xf32>
    %262 = vector.extract_strided_slice %48 {offsets = [11, 0], sizes = [1, 8], strides = [1, 1]} : vector<32x8xf32> to vector<1x8xf32>
    %263 = vector.extract_strided_slice %50 {offsets = [11, 0], sizes = [1, 8], strides = [1, 1]} : vector<32x8xf32> to vector<1x8xf32>
    %264 = vector.broadcast %262 : vector<1x8xf32> to vector<8x8xf32>
    %265 = arith.mulf %60, %264 : vector<8x8xf32>
    %cst_67 = arith.constant dense<0.000000e+00> : vector<8xf32>
    %266 = vector.multi_reduction <add>, %265, %cst_67 [1] : vector<8x8xf32> to vector<8xf32>
    %267 = vector.shape_cast %266 : vector<8xf32> to vector<8x1xf32>
    %268 = vector.broadcast %260 : vector<1x32xf32> to vector<8x32xf32>
    %269 = arith.mulf %55, %268 : vector<8x32xf32>
    %270 = math.exp %269 : vector<8x32xf32>
    %271 = arith.mulf %270, %257 : vector<8x32xf32>
    %272 = vector.broadcast %267 : vector<8x1xf32> to vector<8x32xf32>
    %273 = vector.broadcast %261 : vector<1x32xf32> to vector<8x32xf32>
    %274 = arith.mulf %272, %273 : vector<8x32xf32>
    %275 = arith.addf %271, %274 : vector<8x32xf32>
    %cst_68 = arith.constant dense<0.000000e+00> : vector<1x32xf32>
    %276 = tpu.matmul %263, %275, %cst_68 {dimension_numbers = #tpu.dot_dimension_numbers<[1], [0], [0], [1], [0, 0, 1, 1], [], []>, precision = #tpu.contract_precision<fp32>} : vector<1x8xf32>, vector<8x32xf32>, vector<1x32xf32> -> vector<1x32xf32>
    %c11 = arith.constant 11 : index
    %c0_69 = arith.constant 0 : index
    %277 = vector.load %arg12[%c11, %c0_69] : memref<32x32xf32, #tpu.memory_space<vmem>>, vector<1x32xf32>
    tpu.vector_store %arg12[%c11, %c0_69], %276 {strides = array<i32>} : memref<32x32xf32, #tpu.memory_space<vmem>>, vector<1x32xf32>,
    %278 = vector.extract_strided_slice %46 {offsets = [12, 0], sizes = [1, 32], strides = [1, 1]} : vector<32x32xf32> to vector<1x32xf32>
    %279 = vector.extract_strided_slice %51 {offsets = [12, 0], sizes = [1, 32], strides = [1, 1]} : vector<32x32xf32> to vector<1x32xf32>
    %280 = vector.extract_strided_slice %48 {offsets = [12, 0], sizes = [1, 8], strides = [1, 1]} : vector<32x8xf32> to vector<1x8xf32>
    %281 = vector.extract_strided_slice %50 {offsets = [12, 0], sizes = [1, 8], strides = [1, 1]} : vector<32x8xf32> to vector<1x8xf32>
    %282 = vector.broadcast %280 : vector<1x8xf32> to vector<8x8xf32>
    %283 = arith.mulf %60, %282 : vector<8x8xf32>
    %cst_70 = arith.constant dense<0.000000e+00> : vector<8xf32>
    %284 = vector.multi_reduction <add>, %283, %cst_70 [1] : vector<8x8xf32> to vector<8xf32>
    %285 = vector.shape_cast %284 : vector<8xf32> to vector<8x1xf32>
    %286 = vector.broadcast %278 : vector<1x32xf32> to vector<8x32xf32>
    %287 = arith.mulf %55, %286 : vector<8x32xf32>
    %288 = math.exp %287 : vector<8x32xf32>
    %289 = arith.mulf %288, %275 : vector<8x32xf32>
    %290 = vector.broadcast %285 : vector<8x1xf32> to vector<8x32xf32>
    %291 = vector.broadcast %279 : vector<1x32xf32> to vector<8x32xf32>
    %292 = arith.mulf %290, %291 : vector<8x32xf32>
    %293 = arith.addf %289, %292 : vector<8x32xf32>
    %cst_71 = arith.constant dense<0.000000e+00> : vector<1x32xf32>
    %294 = tpu.matmul %281, %293, %cst_71 {dimension_numbers = #tpu.dot_dimension_numbers<[1], [0], [0], [1], [0, 0, 1, 1], [], []>, precision = #tpu.contract_precision<fp32>} : vector<1x8xf32>, vector<8x32xf32>, vector<1x32xf32> -> vector<1x32xf32>
    %c12 = arith.constant 12 : index
    %c0_72 = arith.constant 0 : index
    %295 = vector.load %arg12[%c12, %c0_72] : memref<32x32xf32, #tpu.memory_space<vmem>>, vector<1x32xf32>
    tpu.vector_store %arg12[%c12, %c0_72], %294 {strides = array<i32>} : memref<32x32xf32, #tpu.memory_space<vmem>>, vector<1x32xf32>,
    %296 = vector.extract_strided_slice %46 {offsets = [13, 0], sizes = [1, 32], strides = [1, 1]} : vector<32x32xf32> to vector<1x32xf32>
    %297 = vector.extract_strided_slice %51 {offsets = [13, 0], sizes = [1, 32], strides = [1, 1]} : vector<32x32xf32> to vector<1x32xf32>
    %298 = vector.extract_strided_slice %48 {offsets = [13, 0], sizes = [1, 8], strides = [1, 1]} : vector<32x8xf32> to vector<1x8xf32>
    %299 = vector.extract_strided_slice %50 {offsets = [13, 0], sizes = [1, 8], strides = [1, 1]} : vector<32x8xf32> to vector<1x8xf32>
    %300 = vector.broadcast %298 : vector<1x8xf32> to vector<8x8xf32>
    %301 = arith.mulf %60, %300 : vector<8x8xf32>
    %cst_73 = arith.constant dense<0.000000e+00> : vector<8xf32>
    %302 = vector.multi_reduction <add>, %301, %cst_73 [1] : vector<8x8xf32> to vector<8xf32>
    %303 = vector.shape_cast %302 : vector<8xf32> to vector<8x1xf32>
    %304 = vector.broadcast %296 : vector<1x32xf32> to vector<8x32xf32>
    %305 = arith.mulf %55, %304 : vector<8x32xf32>
    %306 = math.exp %305 : vector<8x32xf32>
    %307 = arith.mulf %306, %293 : vector<8x32xf32>
    %308 = vector.broadcast %303 : vector<8x1xf32> to vector<8x32xf32>
    %309 = vector.broadcast %297 : vector<1x32xf32> to vector<8x32xf32>
    %310 = arith.mulf %308, %309 : vector<8x32xf32>
    %311 = arith.addf %307, %310 : vector<8x32xf32>
    %cst_74 = arith.constant dense<0.000000e+00> : vector<1x32xf32>
    %312 = tpu.matmul %299, %311, %cst_74 {dimension_numbers = #tpu.dot_dimension_numbers<[1], [0], [0], [1], [0, 0, 1, 1], [], []>, precision = #tpu.contract_precision<fp32>} : vector<1x8xf32>, vector<8x32xf32>, vector<1x32xf32> -> vector<1x32xf32>
    %c13 = arith.constant 13 : index
    %c0_75 = arith.constant 0 : index
    %313 = vector.load %arg12[%c13, %c0_75] : memref<32x32xf32, #tpu.memory_space<vmem>>, vector<1x32xf32>
    tpu.vector_store %arg12[%c13, %c0_75], %312 {strides = array<i32>} : memref<32x32xf32, #tpu.memory_space<vmem>>, vector<1x32xf32>,
    %314 = vector.extract_strided_slice %46 {offsets = [14, 0], sizes = [1, 32], strides = [1, 1]} : vector<32x32xf32> to vector<1x32xf32>
    %315 = vector.extract_strided_slice %51 {offsets = [14, 0], sizes = [1, 32], strides = [1, 1]} : vector<32x32xf32> to vector<1x32xf32>
    %316 = vector.extract_strided_slice %48 {offsets = [14, 0], sizes = [1, 8], strides = [1, 1]} : vector<32x8xf32> to vector<1x8xf32>
    %317 = vector.extract_strided_slice %50 {offsets = [14, 0], sizes = [1, 8], strides = [1, 1]} : vector<32x8xf32> to vector<1x8xf32>
    %318 = vector.broadcast %316 : vector<1x8xf32> to vector<8x8xf32>
    %319 = arith.mulf %60, %318 : vector<8x8xf32>
    %cst_76 = arith.constant dense<0.000000e+00> : vector<8xf32>
    %320 = vector.multi_reduction <add>, %319, %cst_76 [1] : vector<8x8xf32> to vector<8xf32>
    %321 = vector.shape_cast %320 : vector<8xf32> to vector<8x1xf32>
    %322 = vector.broadcast %314 : vector<1x32xf32> to vector<8x32xf32>
    %323 = arith.mulf %55, %322 : vector<8x32xf32>
    %324 = math.exp %323 : vector<8x32xf32>
    %325 = arith.mulf %324, %311 : vector<8x32xf32>
    %326 = vector.broadcast %321 : vector<8x1xf32> to vector<8x32xf32>
    %327 = vector.broadcast %315 : vector<1x32xf32> to vector<8x32xf32>
    %328 = arith.mulf %326, %327 : vector<8x32xf32>
    %329 = arith.addf %325, %328 : vector<8x32xf32>
    %cst_77 = arith.constant dense<0.000000e+00> : vector<1x32xf32>
    %330 = tpu.matmul %317, %329, %cst_77 {dimension_numbers = #tpu.dot_dimension_numbers<[1], [0], [0], [1], [0, 0, 1, 1], [], []>, precision = #tpu.contract_precision<fp32>} : vector<1x8xf32>, vector<8x32xf32>, vector<1x32xf32> -> vector<1x32xf32>
    %c14 = arith.constant 14 : index
    %c0_78 = arith.constant 0 : index
    %331 = vector.load %arg12[%c14, %c0_78] : memref<32x32xf32, #tpu.memory_space<vmem>>, vector<1x32xf32>
    tpu.vector_store %arg12[%c14, %c0_78], %330 {strides = array<i32>} : memref<32x32xf32, #tpu.memory_space<vmem>>, vector<1x32xf32>,
    %332 = vector.extract_strided_slice %46 {offsets = [15, 0], sizes = [1, 32], strides = [1, 1]} : vector<32x32xf32> to vector<1x32xf32>
    %333 = vector.extract_strided_slice %51 {offsets = [15, 0], sizes = [1, 32], strides = [1, 1]} : vector<32x32xf32> to vector<1x32xf32>
    %334 = vector.extract_strided_slice %48 {offsets = [15, 0], sizes = [1, 8], strides = [1, 1]} : vector<32x8xf32> to vector<1x8xf32>
    %335 = vector.extract_strided_slice %50 {offsets = [15, 0], sizes = [1, 8], strides = [1, 1]} : vector<32x8xf32> to vector<1x8xf32>
    %336 = vector.broadcast %334 : vector<1x8xf32> to vector<8x8xf32>
    %337 = arith.mulf %60, %336 : vector<8x8xf32>
    %cst_79 = arith.constant dense<0.000000e+00> : vector<8xf32>
    %338 = vector.multi_reduction <add>, %337, %cst_79 [1] : vector<8x8xf32> to vector<8xf32>
    %339 = vector.shape_cast %338 : vector<8xf32> to vector<8x1xf32>
    %340 = vector.broadcast %332 : vector<1x32xf32> to vector<8x32xf32>
    %341 = arith.mulf %55, %340 : vector<8x32xf32>
    %342 = math.exp %341 : vector<8x32xf32>
    %343 = arith.mulf %342, %329 : vector<8x32xf32>
    %344 = vector.broadcast %339 : vector<8x1xf32> to vector<8x32xf32>
    %345 = vector.broadcast %333 : vector<1x32xf32> to vector<8x32xf32>
    %346 = arith.mulf %344, %345 : vector<8x32xf32>
    %347 = arith.addf %343, %346 : vector<8x32xf32>
    %cst_80 = arith.constant dense<0.000000e+00> : vector<1x32xf32>
    %348 = tpu.matmul %335, %347, %cst_80 {dimension_numbers = #tpu.dot_dimension_numbers<[1], [0], [0], [1], [0, 0, 1, 1], [], []>, precision = #tpu.contract_precision<fp32>} : vector<1x8xf32>, vector<8x32xf32>, vector<1x32xf32> -> vector<1x32xf32>
    %c15 = arith.constant 15 : index
    %c0_81 = arith.constant 0 : index
    %349 = vector.load %arg12[%c15, %c0_81] : memref<32x32xf32, #tpu.memory_space<vmem>>, vector<1x32xf32>
    tpu.vector_store %arg12[%c15, %c0_81], %348 {strides = array<i32>} : memref<32x32xf32, #tpu.memory_space<vmem>>, vector<1x32xf32>,
    %350 = vector.extract_strided_slice %46 {offsets = [16, 0], sizes = [1, 32], strides = [1, 1]} : vector<32x32xf32> to vector<1x32xf32>
    %351 = vector.extract_strided_slice %51 {offsets = [16, 0], sizes = [1, 32], strides = [1, 1]} : vector<32x32xf32> to vector<1x32xf32>
    %352 = vector.extract_strided_slice %48 {offsets = [16, 0], sizes = [1, 8], strides = [1, 1]} : vector<32x8xf32> to vector<1x8xf32>
    %353 = vector.extract_strided_slice %50 {offsets = [16, 0], sizes = [1, 8], strides = [1, 1]} : vector<32x8xf32> to vector<1x8xf32>
    %354 = vector.broadcast %352 : vector<1x8xf32> to vector<8x8xf32>
    %355 = arith.mulf %60, %354 : vector<8x8xf32>
    %cst_82 = arith.constant dense<0.000000e+00> : vector<8xf32>
    %356 = vector.multi_reduction <add>, %355, %cst_82 [1] : vector<8x8xf32> to vector<8xf32>
    %357 = vector.shape_cast %356 : vector<8xf32> to vector<8x1xf32>
    %358 = vector.broadcast %350 : vector<1x32xf32> to vector<8x32xf32>
    %359 = arith.mulf %55, %358 : vector<8x32xf32>
    %360 = math.exp %359 : vector<8x32xf32>
    %361 = arith.mulf %360, %347 : vector<8x32xf32>
    %362 = vector.broadcast %357 : vector<8x1xf32> to vector<8x32xf32>
    %363 = vector.broadcast %351 : vector<1x32xf32> to vector<8x32xf32>
    %364 = arith.mulf %362, %363 : vector<8x32xf32>
    %365 = arith.addf %361, %364 : vector<8x32xf32>
    %cst_83 = arith.constant dense<0.000000e+00> : vector<1x32xf32>
    %366 = tpu.matmul %353, %365, %cst_83 {dimension_numbers = #tpu.dot_dimension_numbers<[1], [0], [0], [1], [0, 0, 1, 1], [], []>, precision = #tpu.contract_precision<fp32>} : vector<1x8xf32>, vector<8x32xf32>, vector<1x32xf32> -> vector<1x32xf32>
    %c16 = arith.constant 16 : index
    %c0_84 = arith.constant 0 : index
    %367 = vector.load %arg12[%c16, %c0_84] : memref<32x32xf32, #tpu.memory_space<vmem>>, vector<1x32xf32>
    tpu.vector_store %arg12[%c16, %c0_84], %366 {strides = array<i32>} : memref<32x32xf32, #tpu.memory_space<vmem>>, vector<1x32xf32>,
    %368 = vector.extract_strided_slice %46 {offsets = [17, 0], sizes = [1, 32], strides = [1, 1]} : vector<32x32xf32> to vector<1x32xf32>
    %369 = vector.extract_strided_slice %51 {offsets = [17, 0], sizes = [1, 32], strides = [1, 1]} : vector<32x32xf32> to vector<1x32xf32>
    %370 = vector.extract_strided_slice %48 {offsets = [17, 0], sizes = [1, 8], strides = [1, 1]} : vector<32x8xf32> to vector<1x8xf32>
    %371 = vector.extract_strided_slice %50 {offsets = [17, 0], sizes = [1, 8], strides = [1, 1]} : vector<32x8xf32> to vector<1x8xf32>
    %372 = vector.broadcast %370 : vector<1x8xf32> to vector<8x8xf32>
    %373 = arith.mulf %60, %372 : vector<8x8xf32>
    %cst_85 = arith.constant dense<0.000000e+00> : vector<8xf32>
    %374 = vector.multi_reduction <add>, %373, %cst_85 [1] : vector<8x8xf32> to vector<8xf32>
    %375 = vector.shape_cast %374 : vector<8xf32> to vector<8x1xf32>
    %376 = vector.broadcast %368 : vector<1x32xf32> to vector<8x32xf32>
    %377 = arith.mulf %55, %376 : vector<8x32xf32>
    %378 = math.exp %377 : vector<8x32xf32>
    %379 = arith.mulf %378, %365 : vector<8x32xf32>
    %380 = vector.broadcast %375 : vector<8x1xf32> to vector<8x32xf32>
    %381 = vector.broadcast %369 : vector<1x32xf32> to vector<8x32xf32>
    %382 = arith.mulf %380, %381 : vector<8x32xf32>
    %383 = arith.addf %379, %382 : vector<8x32xf32>
    %cst_86 = arith.constant dense<0.000000e+00> : vector<1x32xf32>
    %384 = tpu.matmul %371, %383, %cst_86 {dimension_numbers = #tpu.dot_dimension_numbers<[1], [0], [0], [1], [0, 0, 1, 1], [], []>, precision = #tpu.contract_precision<fp32>} : vector<1x8xf32>, vector<8x32xf32>, vector<1x32xf32> -> vector<1x32xf32>
    %c17 = arith.constant 17 : index
    %c0_87 = arith.constant 0 : index
    %385 = vector.load %arg12[%c17, %c0_87] : memref<32x32xf32, #tpu.memory_space<vmem>>, vector<1x32xf32>
    tpu.vector_store %arg12[%c17, %c0_87], %384 {strides = array<i32>} : memref<32x32xf32, #tpu.memory_space<vmem>>, vector<1x32xf32>,
    %386 = vector.extract_strided_slice %46 {offsets = [18, 0], sizes = [1, 32], strides = [1, 1]} : vector<32x32xf32> to vector<1x32xf32>
    %387 = vector.extract_strided_slice %51 {offsets = [18, 0], sizes = [1, 32], strides = [1, 1]} : vector<32x32xf32> to vector<1x32xf32>
    %388 = vector.extract_strided_slice %48 {offsets = [18, 0], sizes = [1, 8], strides = [1, 1]} : vector<32x8xf32> to vector<1x8xf32>
    %389 = vector.extract_strided_slice %50 {offsets = [18, 0], sizes = [1, 8], strides = [1, 1]} : vector<32x8xf32> to vector<1x8xf32>
    %390 = vector.broadcast %388 : vector<1x8xf32> to vector<8x8xf32>
    %391 = arith.mulf %60, %390 : vector<8x8xf32>
    %cst_88 = arith.constant dense<0.000000e+00> : vector<8xf32>
    %392 = vector.multi_reduction <add>, %391, %cst_88 [1] : vector<8x8xf32> to vector<8xf32>
    %393 = vector.shape_cast %392 : vector<8xf32> to vector<8x1xf32>
    %394 = vector.broadcast %386 : vector<1x32xf32> to vector<8x32xf32>
    %395 = arith.mulf %55, %394 : vector<8x32xf32>
    %396 = math.exp %395 : vector<8x32xf32>
    %397 = arith.mulf %396, %383 : vector<8x32xf32>
    %398 = vector.broadcast %393 : vector<8x1xf32> to vector<8x32xf32>
    %399 = vector.broadcast %387 : vector<1x32xf32> to vector<8x32xf32>
    %400 = arith.mulf %398, %399 : vector<8x32xf32>
    %401 = arith.addf %397, %400 : vector<8x32xf32>
    %cst_89 = arith.constant dense<0.000000e+00> : vector<1x32xf32>
    %402 = tpu.matmul %389, %401, %cst_89 {dimension_numbers = #tpu.dot_dimension_numbers<[1], [0], [0], [1], [0, 0, 1, 1], [], []>, precision = #tpu.contract_precision<fp32>} : vector<1x8xf32>, vector<8x32xf32>, vector<1x32xf32> -> vector<1x32xf32>
    %c18 = arith.constant 18 : index
    %c0_90 = arith.constant 0 : index
    %403 = vector.load %arg12[%c18, %c0_90] : memref<32x32xf32, #tpu.memory_space<vmem>>, vector<1x32xf32>
    tpu.vector_store %arg12[%c18, %c0_90], %402 {strides = array<i32>} : memref<32x32xf32, #tpu.memory_space<vmem>>, vector<1x32xf32>,
    %404 = vector.extract_strided_slice %46 {offsets = [19, 0], sizes = [1, 32], strides = [1, 1]} : vector<32x32xf32> to vector<1x32xf32>
    %405 = vector.extract_strided_slice %51 {offsets = [19, 0], sizes = [1, 32], strides = [1, 1]} : vector<32x32xf32> to vector<1x32xf32>
    %406 = vector.extract_strided_slice %48 {offsets = [19, 0], sizes = [1, 8], strides = [1, 1]} : vector<32x8xf32> to vector<1x8xf32>
    %407 = vector.extract_strided_slice %50 {offsets = [19, 0], sizes = [1, 8], strides = [1, 1]} : vector<32x8xf32> to vector<1x8xf32>
    %408 = vector.broadcast %406 : vector<1x8xf32> to vector<8x8xf32>
    %409 = arith.mulf %60, %408 : vector<8x8xf32>
    %cst_91 = arith.constant dense<0.000000e+00> : vector<8xf32>
    %410 = vector.multi_reduction <add>, %409, %cst_91 [1] : vector<8x8xf32> to vector<8xf32>
    %411 = vector.shape_cast %410 : vector<8xf32> to vector<8x1xf32>
    %412 = vector.broadcast %404 : vector<1x32xf32> to vector<8x32xf32>
    %413 = arith.mulf %55, %412 : vector<8x32xf32>
    %414 = math.exp %413 : vector<8x32xf32>
    %415 = arith.mulf %414, %401 : vector<8x32xf32>
    %416 = vector.broadcast %411 : vector<8x1xf32> to vector<8x32xf32>
    %417 = vector.broadcast %405 : vector<1x32xf32> to vector<8x32xf32>
    %418 = arith.mulf %416, %417 : vector<8x32xf32>
    %419 = arith.addf %415, %418 : vector<8x32xf32>
    %cst_92 = arith.constant dense<0.000000e+00> : vector<1x32xf32>
    %420 = tpu.matmul %407, %419, %cst_92 {dimension_numbers = #tpu.dot_dimension_numbers<[1], [0], [0], [1], [0, 0, 1, 1], [], []>, precision = #tpu.contract_precision<fp32>} : vector<1x8xf32>, vector<8x32xf32>, vector<1x32xf32> -> vector<1x32xf32>
    %c19 = arith.constant 19 : index
    %c0_93 = arith.constant 0 : index
    %421 = vector.load %arg12[%c19, %c0_93] : memref<32x32xf32, #tpu.memory_space<vmem>>, vector<1x32xf32>
    tpu.vector_store %arg12[%c19, %c0_93], %420 {strides = array<i32>} : memref<32x32xf32, #tpu.memory_space<vmem>>, vector<1x32xf32>,
    %422 = vector.extract_strided_slice %46 {offsets = [20, 0], sizes = [1, 32], strides = [1, 1]} : vector<32x32xf32> to vector<1x32xf32>
    %423 = vector.extract_strided_slice %51 {offsets = [20, 0], sizes = [1, 32], strides = [1, 1]} : vector<32x32xf32> to vector<1x32xf32>
    %424 = vector.extract_strided_slice %48 {offsets = [20, 0], sizes = [1, 8], strides = [1, 1]} : vector<32x8xf32> to vector<1x8xf32>
    %425 = vector.extract_strided_slice %50 {offsets = [20, 0], sizes = [1, 8], strides = [1, 1]} : vector<32x8xf32> to vector<1x8xf32>
    %426 = vector.broadcast %424 : vector<1x8xf32> to vector<8x8xf32>
    %427 = arith.mulf %60, %426 : vector<8x8xf32>
    %cst_94 = arith.constant dense<0.000000e+00> : vector<8xf32>
    %428 = vector.multi_reduction <add>, %427, %cst_94 [1] : vector<8x8xf32> to vector<8xf32>
    %429 = vector.shape_cast %428 : vector<8xf32> to vector<8x1xf32>
    %430 = vector.broadcast %422 : vector<1x32xf32> to vector<8x32xf32>
    %431 = arith.mulf %55, %430 : vector<8x32xf32>
    %432 = math.exp %431 : vector<8x32xf32>
    %433 = arith.mulf %432, %419 : vector<8x32xf32>
    %434 = vector.broadcast %429 : vector<8x1xf32> to vector<8x32xf32>
    %435 = vector.broadcast %423 : vector<1x32xf32> to vector<8x32xf32>
    %436 = arith.mulf %434, %435 : vector<8x32xf32>
    %437 = arith.addf %433, %436 : vector<8x32xf32>
    %cst_95 = arith.constant dense<0.000000e+00> : vector<1x32xf32>
    %438 = tpu.matmul %425, %437, %cst_95 {dimension_numbers = #tpu.dot_dimension_numbers<[1], [0], [0], [1], [0, 0, 1, 1], [], []>, precision = #tpu.contract_precision<fp32>} : vector<1x8xf32>, vector<8x32xf32>, vector<1x32xf32> -> vector<1x32xf32>
    %c20 = arith.constant 20 : index
    %c0_96 = arith.constant 0 : index
    %439 = vector.load %arg12[%c20, %c0_96] : memref<32x32xf32, #tpu.memory_space<vmem>>, vector<1x32xf32>
    tpu.vector_store %arg12[%c20, %c0_96], %438 {strides = array<i32>} : memref<32x32xf32, #tpu.memory_space<vmem>>, vector<1x32xf32>,
    %440 = vector.extract_strided_slice %46 {offsets = [21, 0], sizes = [1, 32], strides = [1, 1]} : vector<32x32xf32> to vector<1x32xf32>
    %441 = vector.extract_strided_slice %51 {offsets = [21, 0], sizes = [1, 32], strides = [1, 1]} : vector<32x32xf32> to vector<1x32xf32>
    %442 = vector.extract_strided_slice %48 {offsets = [21, 0], sizes = [1, 8], strides = [1, 1]} : vector<32x8xf32> to vector<1x8xf32>
    %443 = vector.extract_strided_slice %50 {offsets = [21, 0], sizes = [1, 8], strides = [1, 1]} : vector<32x8xf32> to vector<1x8xf32>
    %444 = vector.broadcast %442 : vector<1x8xf32> to vector<8x8xf32>
    %445 = arith.mulf %60, %444 : vector<8x8xf32>
    %cst_97 = arith.constant dense<0.000000e+00> : vector<8xf32>
    %446 = vector.multi_reduction <add>, %445, %cst_97 [1] : vector<8x8xf32> to vector<8xf32>
    %447 = vector.shape_cast %446 : vector<8xf32> to vector<8x1xf32>
    %448 = vector.broadcast %440 : vector<1x32xf32> to vector<8x32xf32>
    %449 = arith.mulf %55, %448 : vector<8x32xf32>
    %450 = math.exp %449 : vector<8x32xf32>
    %451 = arith.mulf %450, %437 : vector<8x32xf32>
    %452 = vector.broadcast %447 : vector<8x1xf32> to vector<8x32xf32>
    %453 = vector.broadcast %441 : vector<1x32xf32> to vector<8x32xf32>
    %454 = arith.mulf %452, %453 : vector<8x32xf32>
    %455 = arith.addf %451, %454 : vector<8x32xf32>
    %cst_98 = arith.constant dense<0.000000e+00> : vector<1x32xf32>
    %456 = tpu.matmul %443, %455, %cst_98 {dimension_numbers = #tpu.dot_dimension_numbers<[1], [0], [0], [1], [0, 0, 1, 1], [], []>, precision = #tpu.contract_precision<fp32>} : vector<1x8xf32>, vector<8x32xf32>, vector<1x32xf32> -> vector<1x32xf32>
    %c21 = arith.constant 21 : index
    %c0_99 = arith.constant 0 : index
    %457 = vector.load %arg12[%c21, %c0_99] : memref<32x32xf32, #tpu.memory_space<vmem>>, vector<1x32xf32>
    tpu.vector_store %arg12[%c21, %c0_99], %456 {strides = array<i32>} : memref<32x32xf32, #tpu.memory_space<vmem>>, vector<1x32xf32>,
    %458 = vector.extract_strided_slice %46 {offsets = [22, 0], sizes = [1, 32], strides = [1, 1]} : vector<32x32xf32> to vector<1x32xf32>
    %459 = vector.extract_strided_slice %51 {offsets = [22, 0], sizes = [1, 32], strides = [1, 1]} : vector<32x32xf32> to vector<1x32xf32>
    %460 = vector.extract_strided_slice %48 {offsets = [22, 0], sizes = [1, 8], strides = [1, 1]} : vector<32x8xf32> to vector<1x8xf32>
    %461 = vector.extract_strided_slice %50 {offsets = [22, 0], sizes = [1, 8], strides = [1, 1]} : vector<32x8xf32> to vector<1x8xf32>
    %462 = vector.broadcast %460 : vector<1x8xf32> to vector<8x8xf32>
    %463 = arith.mulf %60, %462 : vector<8x8xf32>
    %cst_100 = arith.constant dense<0.000000e+00> : vector<8xf32>
    %464 = vector.multi_reduction <add>, %463, %cst_100 [1] : vector<8x8xf32> to vector<8xf32>
    %465 = vector.shape_cast %464 : vector<8xf32> to vector<8x1xf32>
    %466 = vector.broadcast %458 : vector<1x32xf32> to vector<8x32xf32>
    %467 = arith.mulf %55, %466 : vector<8x32xf32>
    %468 = math.exp %467 : vector<8x32xf32>
    %469 = arith.mulf %468, %455 : vector<8x32xf32>
    %470 = vector.broadcast %465 : vector<8x1xf32> to vector<8x32xf32>
    %471 = vector.broadcast %459 : vector<1x32xf32> to vector<8x32xf32>
    %472 = arith.mulf %470, %471 : vector<8x32xf32>
    %473 = arith.addf %469, %472 : vector<8x32xf32>
    %cst_101 = arith.constant dense<0.000000e+00> : vector<1x32xf32>
    %474 = tpu.matmul %461, %473, %cst_101 {dimension_numbers = #tpu.dot_dimension_numbers<[1], [0], [0], [1], [0, 0, 1, 1], [], []>, precision = #tpu.contract_precision<fp32>} : vector<1x8xf32>, vector<8x32xf32>, vector<1x32xf32> -> vector<1x32xf32>
    %c22 = arith.constant 22 : index
    %c0_102 = arith.constant 0 : index
    %475 = vector.load %arg12[%c22, %c0_102] : memref<32x32xf32, #tpu.memory_space<vmem>>, vector<1x32xf32>
    tpu.vector_store %arg12[%c22, %c0_102], %474 {strides = array<i32>} : memref<32x32xf32, #tpu.memory_space<vmem>>, vector<1x32xf32>,
    %476 = vector.extract_strided_slice %46 {offsets = [23, 0], sizes = [1, 32], strides = [1, 1]} : vector<32x32xf32> to vector<1x32xf32>
    %477 = vector.extract_strided_slice %51 {offsets = [23, 0], sizes = [1, 32], strides = [1, 1]} : vector<32x32xf32> to vector<1x32xf32>
    %478 = vector.extract_strided_slice %48 {offsets = [23, 0], sizes = [1, 8], strides = [1, 1]} : vector<32x8xf32> to vector<1x8xf32>
    %479 = vector.extract_strided_slice %50 {offsets = [23, 0], sizes = [1, 8], strides = [1, 1]} : vector<32x8xf32> to vector<1x8xf32>
    %480 = vector.broadcast %478 : vector<1x8xf32> to vector<8x8xf32>
    %481 = arith.mulf %60, %480 : vector<8x8xf32>
    %cst_103 = arith.constant dense<0.000000e+00> : vector<8xf32>
    %482 = vector.multi_reduction <add>, %481, %cst_103 [1] : vector<8x8xf32> to vector<8xf32>
    %483 = vector.shape_cast %482 : vector<8xf32> to vector<8x1xf32>
    %484 = vector.broadcast %476 : vector<1x32xf32> to vector<8x32xf32>
    %485 = arith.mulf %55, %484 : vector<8x32xf32>
    %486 = math.exp %485 : vector<8x32xf32>
    %487 = arith.mulf %486, %473 : vector<8x32xf32>
    %488 = vector.broadcast %483 : vector<8x1xf32> to vector<8x32xf32>
    %489 = vector.broadcast %477 : vector<1x32xf32> to vector<8x32xf32>
    %490 = arith.mulf %488, %489 : vector<8x32xf32>
    %491 = arith.addf %487, %490 : vector<8x32xf32>
    %cst_104 = arith.constant dense<0.000000e+00> : vector<1x32xf32>
    %492 = tpu.matmul %479, %491, %cst_104 {dimension_numbers = #tpu.dot_dimension_numbers<[1], [0], [0], [1], [0, 0, 1, 1], [], []>, precision = #tpu.contract_precision<fp32>} : vector<1x8xf32>, vector<8x32xf32>, vector<1x32xf32> -> vector<1x32xf32>
    %c23 = arith.constant 23 : index
    %c0_105 = arith.constant 0 : index
    %493 = vector.load %arg12[%c23, %c0_105] : memref<32x32xf32, #tpu.memory_space<vmem>>, vector<1x32xf32>
    tpu.vector_store %arg12[%c23, %c0_105], %492 {strides = array<i32>} : memref<32x32xf32, #tpu.memory_space<vmem>>, vector<1x32xf32>,
    %494 = vector.extract_strided_slice %46 {offsets = [24, 0], sizes = [1, 32], strides = [1, 1]} : vector<32x32xf32> to vector<1x32xf32>
    %495 = vector.extract_strided_slice %51 {offsets = [24, 0], sizes = [1, 32], strides = [1, 1]} : vector<32x32xf32> to vector<1x32xf32>
    %496 = vector.extract_strided_slice %48 {offsets = [24, 0], sizes = [1, 8], strides = [1, 1]} : vector<32x8xf32> to vector<1x8xf32>
    %497 = vector.extract_strided_slice %50 {offsets = [24, 0], sizes = [1, 8], strides = [1, 1]} : vector<32x8xf32> to vector<1x8xf32>
    %498 = vector.broadcast %496 : vector<1x8xf32> to vector<8x8xf32>
    %499 = arith.mulf %60, %498 : vector<8x8xf32>
    %cst_106 = arith.constant dense<0.000000e+00> : vector<8xf32>
    %500 = vector.multi_reduction <add>, %499, %cst_106 [1] : vector<8x8xf32> to vector<8xf32>
    %501 = vector.shape_cast %500 : vector<8xf32> to vector<8x1xf32>
    %502 = vector.broadcast %494 : vector<1x32xf32> to vector<8x32xf32>
    %503 = arith.mulf %55, %502 : vector<8x32xf32>
    %504 = math.exp %503 : vector<8x32xf32>
    %505 = arith.mulf %504, %491 : vector<8x32xf32>
    %506 = vector.broadcast %501 : vector<8x1xf32> to vector<8x32xf32>
    %507 = vector.broadcast %495 : vector<1x32xf32> to vector<8x32xf32>
    %508 = arith.mulf %506, %507 : vector<8x32xf32>
    %509 = arith.addf %505, %508 : vector<8x32xf32>
    %cst_107 = arith.constant dense<0.000000e+00> : vector<1x32xf32>
    %510 = tpu.matmul %497, %509, %cst_107 {dimension_numbers = #tpu.dot_dimension_numbers<[1], [0], [0], [1], [0, 0, 1, 1], [], []>, precision = #tpu.contract_precision<fp32>} : vector<1x8xf32>, vector<8x32xf32>, vector<1x32xf32> -> vector<1x32xf32>
    %c24 = arith.constant 24 : index
    %c0_108 = arith.constant 0 : index
    %511 = vector.load %arg12[%c24, %c0_108] : memref<32x32xf32, #tpu.memory_space<vmem>>, vector<1x32xf32>
    tpu.vector_store %arg12[%c24, %c0_108], %510 {strides = array<i32>} : memref<32x32xf32, #tpu.memory_space<vmem>>, vector<1x32xf32>,
    %512 = vector.extract_strided_slice %46 {offsets = [25, 0], sizes = [1, 32], strides = [1, 1]} : vector<32x32xf32> to vector<1x32xf32>
    %513 = vector.extract_strided_slice %51 {offsets = [25, 0], sizes = [1, 32], strides = [1, 1]} : vector<32x32xf32> to vector<1x32xf32>
    %514 = vector.extract_strided_slice %48 {offsets = [25, 0], sizes = [1, 8], strides = [1, 1]} : vector<32x8xf32> to vector<1x8xf32>
    %515 = vector.extract_strided_slice %50 {offsets = [25, 0], sizes = [1, 8], strides = [1, 1]} : vector<32x8xf32> to vector<1x8xf32>
    %516 = vector.broadcast %514 : vector<1x8xf32> to vector<8x8xf32>
    %517 = arith.mulf %60, %516 : vector<8x8xf32>
    %cst_109 = arith.constant dense<0.000000e+00> : vector<8xf32>
    %518 = vector.multi_reduction <add>, %517, %cst_109 [1] : vector<8x8xf32> to vector<8xf32>
    %519 = vector.shape_cast %518 : vector<8xf32> to vector<8x1xf32>
    %520 = vector.broadcast %512 : vector<1x32xf32> to vector<8x32xf32>
    %521 = arith.mulf %55, %520 : vector<8x32xf32>
    %522 = math.exp %521 : vector<8x32xf32>
    %523 = arith.mulf %522, %509 : vector<8x32xf32>
    %524 = vector.broadcast %519 : vector<8x1xf32> to vector<8x32xf32>
    %525 = vector.broadcast %513 : vector<1x32xf32> to vector<8x32xf32>
    %526 = arith.mulf %524, %525 : vector<8x32xf32>
    %527 = arith.addf %523, %526 : vector<8x32xf32>
    %cst_110 = arith.constant dense<0.000000e+00> : vector<1x32xf32>
    %528 = tpu.matmul %515, %527, %cst_110 {dimension_numbers = #tpu.dot_dimension_numbers<[1], [0], [0], [1], [0, 0, 1, 1], [], []>, precision = #tpu.contract_precision<fp32>} : vector<1x8xf32>, vector<8x32xf32>, vector<1x32xf32> -> vector<1x32xf32>
    %c25 = arith.constant 25 : index
    %c0_111 = arith.constant 0 : index
    %529 = vector.load %arg12[%c25, %c0_111] : memref<32x32xf32, #tpu.memory_space<vmem>>, vector<1x32xf32>
    tpu.vector_store %arg12[%c25, %c0_111], %528 {strides = array<i32>} : memref<32x32xf32, #tpu.memory_space<vmem>>, vector<1x32xf32>,
    %530 = vector.extract_strided_slice %46 {offsets = [26, 0], sizes = [1, 32], strides = [1, 1]} : vector<32x32xf32> to vector<1x32xf32>
    %531 = vector.extract_strided_slice %51 {offsets = [26, 0], sizes = [1, 32], strides = [1, 1]} : vector<32x32xf32> to vector<1x32xf32>
    %532 = vector.extract_strided_slice %48 {offsets = [26, 0], sizes = [1, 8], strides = [1, 1]} : vector<32x8xf32> to vector<1x8xf32>
    %533 = vector.extract_strided_slice %50 {offsets = [26, 0], sizes = [1, 8], strides = [1, 1]} : vector<32x8xf32> to vector<1x8xf32>
    %534 = vector.broadcast %532 : vector<1x8xf32> to vector<8x8xf32>
    %535 = arith.mulf %60, %534 : vector<8x8xf32>
    %cst_112 = arith.constant dense<0.000000e+00> : vector<8xf32>
    %536 = vector.multi_reduction <add>, %535, %cst_112 [1] : vector<8x8xf32> to vector<8xf32>
    %537 = vector.shape_cast %536 : vector<8xf32> to vector<8x1xf32>
    %538 = vector.broadcast %530 : vector<1x32xf32> to vector<8x32xf32>
    %539 = arith.mulf %55, %538 : vector<8x32xf32>
    %540 = math.exp %539 : vector<8x32xf32>
    %541 = arith.mulf %540, %527 : vector<8x32xf32>
    %542 = vector.broadcast %537 : vector<8x1xf32> to vector<8x32xf32>
    %543 = vector.broadcast %531 : vector<1x32xf32> to vector<8x32xf32>
    %544 = arith.mulf %542, %543 : vector<8x32xf32>
    %545 = arith.addf %541, %544 : vector<8x32xf32>
    %cst_113 = arith.constant dense<0.000000e+00> : vector<1x32xf32>
    %546 = tpu.matmul %533, %545, %cst_113 {dimension_numbers = #tpu.dot_dimension_numbers<[1], [0], [0], [1], [0, 0, 1, 1], [], []>, precision = #tpu.contract_precision<fp32>} : vector<1x8xf32>, vector<8x32xf32>, vector<1x32xf32> -> vector<1x32xf32>
    %c26 = arith.constant 26 : index
    %c0_114 = arith.constant 0 : index
    %547 = vector.load %arg12[%c26, %c0_114] : memref<32x32xf32, #tpu.memory_space<vmem>>, vector<1x32xf32>
    tpu.vector_store %arg12[%c26, %c0_114], %546 {strides = array<i32>} : memref<32x32xf32, #tpu.memory_space<vmem>>, vector<1x32xf32>,
    %548 = vector.extract_strided_slice %46 {offsets = [27, 0], sizes = [1, 32], strides = [1, 1]} : vector<32x32xf32> to vector<1x32xf32>
    %549 = vector.extract_strided_slice %51 {offsets = [27, 0], sizes = [1, 32], strides = [1, 1]} : vector<32x32xf32> to vector<1x32xf32>
    %550 = vector.extract_strided_slice %48 {offsets = [27, 0], sizes = [1, 8], strides = [1, 1]} : vector<32x8xf32> to vector<1x8xf32>
    %551 = vector.extract_strided_slice %50 {offsets = [27, 0], sizes = [1, 8], strides = [1, 1]} : vector<32x8xf32> to vector<1x8xf32>
    %552 = vector.broadcast %550 : vector<1x8xf32> to vector<8x8xf32>
    %553 = arith.mulf %60, %552 : vector<8x8xf32>
    %cst_115 = arith.constant dense<0.000000e+00> : vector<8xf32>
    %554 = vector.multi_reduction <add>, %553, %cst_115 [1] : vector<8x8xf32> to vector<8xf32>
    %555 = vector.shape_cast %554 : vector<8xf32> to vector<8x1xf32>
    %556 = vector.broadcast %548 : vector<1x32xf32> to vector<8x32xf32>
    %557 = arith.mulf %55, %556 : vector<8x32xf32>
    %558 = math.exp %557 : vector<8x32xf32>
    %559 = arith.mulf %558, %545 : vector<8x32xf32>
    %560 = vector.broadcast %555 : vector<8x1xf32> to vector<8x32xf32>
    %561 = vector.broadcast %549 : vector<1x32xf32> to vector<8x32xf32>
    %562 = arith.mulf %560, %561 : vector<8x32xf32>
    %563 = arith.addf %559, %562 : vector<8x32xf32>
    %cst_116 = arith.constant dense<0.000000e+00> : vector<1x32xf32>
    %564 = tpu.matmul %551, %563, %cst_116 {dimension_numbers = #tpu.dot_dimension_numbers<[1], [0], [0], [1], [0, 0, 1, 1], [], []>, precision = #tpu.contract_precision<fp32>} : vector<1x8xf32>, vector<8x32xf32>, vector<1x32xf32> -> vector<1x32xf32>
    %c27 = arith.constant 27 : index
    %c0_117 = arith.constant 0 : index
    %565 = vector.load %arg12[%c27, %c0_117] : memref<32x32xf32, #tpu.memory_space<vmem>>, vector<1x32xf32>
    tpu.vector_store %arg12[%c27, %c0_117], %564 {strides = array<i32>} : memref<32x32xf32, #tpu.memory_space<vmem>>, vector<1x32xf32>,
    %566 = vector.extract_strided_slice %46 {offsets = [28, 0], sizes = [1, 32], strides = [1, 1]} : vector<32x32xf32> to vector<1x32xf32>
    %567 = vector.extract_strided_slice %51 {offsets = [28, 0], sizes = [1, 32], strides = [1, 1]} : vector<32x32xf32> to vector<1x32xf32>
    %568 = vector.extract_strided_slice %48 {offsets = [28, 0], sizes = [1, 8], strides = [1, 1]} : vector<32x8xf32> to vector<1x8xf32>
    %569 = vector.extract_strided_slice %50 {offsets = [28, 0], sizes = [1, 8], strides = [1, 1]} : vector<32x8xf32> to vector<1x8xf32>
    %570 = vector.broadcast %568 : vector<1x8xf32> to vector<8x8xf32>
    %571 = arith.mulf %60, %570 : vector<8x8xf32>
    %cst_118 = arith.constant dense<0.000000e+00> : vector<8xf32>
    %572 = vector.multi_reduction <add>, %571, %cst_118 [1] : vector<8x8xf32> to vector<8xf32>
    %573 = vector.shape_cast %572 : vector<8xf32> to vector<8x1xf32>
    %574 = vector.broadcast %566 : vector<1x32xf32> to vector<8x32xf32>
    %575 = arith.mulf %55, %574 : vector<8x32xf32>
    %576 = math.exp %575 : vector<8x32xf32>
    %577 = arith.mulf %576, %563 : vector<8x32xf32>
    %578 = vector.broadcast %573 : vector<8x1xf32> to vector<8x32xf32>
    %579 = vector.broadcast %567 : vector<1x32xf32> to vector<8x32xf32>
    %580 = arith.mulf %578, %579 : vector<8x32xf32>
    %581 = arith.addf %577, %580 : vector<8x32xf32>
    %cst_119 = arith.constant dense<0.000000e+00> : vector<1x32xf32>
    %582 = tpu.matmul %569, %581, %cst_119 {dimension_numbers = #tpu.dot_dimension_numbers<[1], [0], [0], [1], [0, 0, 1, 1], [], []>, precision = #tpu.contract_precision<fp32>} : vector<1x8xf32>, vector<8x32xf32>, vector<1x32xf32> -> vector<1x32xf32>
    %c28 = arith.constant 28 : index
    %c0_120 = arith.constant 0 : index
    %583 = vector.load %arg12[%c28, %c0_120] : memref<32x32xf32, #tpu.memory_space<vmem>>, vector<1x32xf32>
    tpu.vector_store %arg12[%c28, %c0_120], %582 {strides = array<i32>} : memref<32x32xf32, #tpu.memory_space<vmem>>, vector<1x32xf32>,
    %584 = vector.extract_strided_slice %46 {offsets = [29, 0], sizes = [1, 32], strides = [1, 1]} : vector<32x32xf32> to vector<1x32xf32>
    %585 = vector.extract_strided_slice %51 {offsets = [29, 0], sizes = [1, 32], strides = [1, 1]} : vector<32x32xf32> to vector<1x32xf32>
    %586 = vector.extract_strided_slice %48 {offsets = [29, 0], sizes = [1, 8], strides = [1, 1]} : vector<32x8xf32> to vector<1x8xf32>
    %587 = vector.extract_strided_slice %50 {offsets = [29, 0], sizes = [1, 8], strides = [1, 1]} : vector<32x8xf32> to vector<1x8xf32>
    %588 = vector.broadcast %586 : vector<1x8xf32> to vector<8x8xf32>
    %589 = arith.mulf %60, %588 : vector<8x8xf32>
    %cst_121 = arith.constant dense<0.000000e+00> : vector<8xf32>
    %590 = vector.multi_reduction <add>, %589, %cst_121 [1] : vector<8x8xf32> to vector<8xf32>
    %591 = vector.shape_cast %590 : vector<8xf32> to vector<8x1xf32>
    %592 = vector.broadcast %584 : vector<1x32xf32> to vector<8x32xf32>
    %593 = arith.mulf %55, %592 : vector<8x32xf32>
    %594 = math.exp %593 : vector<8x32xf32>
    %595 = arith.mulf %594, %581 : vector<8x32xf32>
    %596 = vector.broadcast %591 : vector<8x1xf32> to vector<8x32xf32>
    %597 = vector.broadcast %585 : vector<1x32xf32> to vector<8x32xf32>
    %598 = arith.mulf %596, %597 : vector<8x32xf32>
    %599 = arith.addf %595, %598 : vector<8x32xf32>
    %cst_122 = arith.constant dense<0.000000e+00> : vector<1x32xf32>
    %600 = tpu.matmul %587, %599, %cst_122 {dimension_numbers = #tpu.dot_dimension_numbers<[1], [0], [0], [1], [0, 0, 1, 1], [], []>, precision = #tpu.contract_precision<fp32>} : vector<1x8xf32>, vector<8x32xf32>, vector<1x32xf32> -> vector<1x32xf32>
    %c29 = arith.constant 29 : index
    %c0_123 = arith.constant 0 : index
    %601 = vector.load %arg12[%c29, %c0_123] : memref<32x32xf32, #tpu.memory_space<vmem>>, vector<1x32xf32>
    tpu.vector_store %arg12[%c29, %c0_123], %600 {strides = array<i32>} : memref<32x32xf32, #tpu.memory_space<vmem>>, vector<1x32xf32>,
    %602 = vector.extract_strided_slice %46 {offsets = [30, 0], sizes = [1, 32], strides = [1, 1]} : vector<32x32xf32> to vector<1x32xf32>
    %603 = vector.extract_strided_slice %51 {offsets = [30, 0], sizes = [1, 32], strides = [1, 1]} : vector<32x32xf32> to vector<1x32xf32>
    %604 = vector.extract_strided_slice %48 {offsets = [30, 0], sizes = [1, 8], strides = [1, 1]} : vector<32x8xf32> to vector<1x8xf32>
    %605 = vector.extract_strided_slice %50 {offsets = [30, 0], sizes = [1, 8], strides = [1, 1]} : vector<32x8xf32> to vector<1x8xf32>
    %606 = vector.broadcast %604 : vector<1x8xf32> to vector<8x8xf32>
    %607 = arith.mulf %60, %606 : vector<8x8xf32>
    %cst_124 = arith.constant dense<0.000000e+00> : vector<8xf32>
    %608 = vector.multi_reduction <add>, %607, %cst_124 [1] : vector<8x8xf32> to vector<8xf32>
    %609 = vector.shape_cast %608 : vector<8xf32> to vector<8x1xf32>
    %610 = vector.broadcast %602 : vector<1x32xf32> to vector<8x32xf32>
    %611 = arith.mulf %55, %610 : vector<8x32xf32>
    %612 = math.exp %611 : vector<8x32xf32>
    %613 = arith.mulf %612, %599 : vector<8x32xf32>
    %614 = vector.broadcast %609 : vector<8x1xf32> to vector<8x32xf32>
    %615 = vector.broadcast %603 : vector<1x32xf32> to vector<8x32xf32>
    %616 = arith.mulf %614, %615 : vector<8x32xf32>
    %617 = arith.addf %613, %616 : vector<8x32xf32>
    %cst_125 = arith.constant dense<0.000000e+00> : vector<1x32xf32>
    %618 = tpu.matmul %605, %617, %cst_125 {dimension_numbers = #tpu.dot_dimension_numbers<[1], [0], [0], [1], [0, 0, 1, 1], [], []>, precision = #tpu.contract_precision<fp32>} : vector<1x8xf32>, vector<8x32xf32>, vector<1x32xf32> -> vector<1x32xf32>
    %c30 = arith.constant 30 : index
    %c0_126 = arith.constant 0 : index
    %619 = vector.load %arg12[%c30, %c0_126] : memref<32x32xf32, #tpu.memory_space<vmem>>, vector<1x32xf32>
    tpu.vector_store %arg12[%c30, %c0_126], %618 {strides = array<i32>} : memref<32x32xf32, #tpu.memory_space<vmem>>, vector<1x32xf32>,
    %620 = vector.extract_strided_slice %46 {offsets = [31, 0], sizes = [1, 32], strides = [1, 1]} : vector<32x32xf32> to vector<1x32xf32>
    %621 = vector.extract_strided_slice %51 {offsets = [31, 0], sizes = [1, 32], strides = [1, 1]} : vector<32x32xf32> to vector<1x32xf32>
    %622 = vector.extract_strided_slice %48 {offsets = [31, 0], sizes = [1, 8], strides = [1, 1]} : vector<32x8xf32> to vector<1x8xf32>
    %623 = vector.extract_strided_slice %50 {offsets = [31, 0], sizes = [1, 8], strides = [1, 1]} : vector<32x8xf32> to vector<1x8xf32>
    %624 = vector.broadcast %622 : vector<1x8xf32> to vector<8x8xf32>
    %625 = arith.mulf %60, %624 : vector<8x8xf32>
    %cst_127 = arith.constant dense<0.000000e+00> : vector<8xf32>
    %626 = vector.multi_reduction <add>, %625, %cst_127 [1] : vector<8x8xf32> to vector<8xf32>
    %627 = vector.shape_cast %626 : vector<8xf32> to vector<8x1xf32>
    %628 = vector.broadcast %620 : vector<1x32xf32> to vector<8x32xf32>
    %629 = arith.mulf %55, %628 : vector<8x32xf32>
    %630 = math.exp %629 : vector<8x32xf32>
    %631 = arith.mulf %630, %617 : vector<8x32xf32>
    %632 = vector.broadcast %627 : vector<8x1xf32> to vector<8x32xf32>
    %633 = vector.broadcast %621 : vector<1x32xf32> to vector<8x32xf32>
    %634 = arith.mulf %632, %633 : vector<8x32xf32>
    %635 = arith.addf %631, %634 : vector<8x32xf32>
    %cst_128 = arith.constant dense<0.000000e+00> : vector<1x32xf32>
    %636 = tpu.matmul %623, %635, %cst_128 {dimension_numbers = #tpu.dot_dimension_numbers<[1], [0], [0], [1], [0, 0, 1, 1], [], []>, precision = #tpu.contract_precision<fp32>} : vector<1x8xf32>, vector<8x32xf32>, vector<1x32xf32> -> vector<1x32xf32>
    %c31 = arith.constant 31 : index
    %c0_129 = arith.constant 0 : index
    %637 = vector.load %arg12[%c31, %c0_129] : memref<32x32xf32, #tpu.memory_space<vmem>>, vector<1x32xf32>
    tpu.vector_store %arg12[%c31, %c0_129], %636 {strides = array<i32>} : memref<32x32xf32, #tpu.memory_space<vmem>>, vector<1x32xf32>,
    %c0_130 = arith.constant 0 : index
    %c0_131 = arith.constant 0 : index
    %638 = vector.load %arg12[%c0_130, %c0_131] : memref<32x32xf32, #tpu.memory_space<vmem>>, vector<32x32xf32>
    %c0_132 = arith.constant 0 : index
    %c0_133 = arith.constant 0 : index
    %639 = vector.load %arg10[%c0_132, %c0_133] : memref<1x32xf32, #tpu.memory_space<vmem>>, vector<1x32xf32>
    %640 = vector.broadcast %639 : vector<1x32xf32> to vector<32x32xf32>
    %641 = arith.mulf %31, %640 : vector<32x32xf32>
    %642 = arith.addf %638, %641 : vector<32x32xf32>
    %cst_134 = arith.constant 0.000000e+00 : f32
    %643 = vector.broadcast %cst_134 : f32 to vector<32x32xf32>
    %644 = arith.subf %643, %6 : vector<32x32xf32>
    %645 = math.exp %644 : vector<32x32xf32>
    %cst_135 = arith.constant 1.000000e+00 : f32
    %646 = vector.broadcast %cst_135 : f32 to vector<32x32xf32>
    %647 = arith.addf %646, %645 : vector<32x32xf32>
    %cst_136 = arith.constant 1.000000e+00 : f32
    %648 = vector.broadcast %cst_136 : f32 to vector<32x32xf32>
    %649 = arith.divf %648, %647 : vector<32x32xf32>
    %650 = arith.mulf %6, %649 : vector<32x32xf32>
    %651 = arith.mulf %650, %642 : vector<32x32xf32>
    %cst_137 = arith.constant dense<0.000000e+00> : vector<32x32xf32>
    %652 = tpu.matmul %651, %2, %cst_137 {dimension_numbers = #tpu.dot_dimension_numbers<[1], [0], [0], [1], [0, 0, 1, 1], [], []>, precision = #tpu.contract_precision<fp32>} : vector<32x32xf32>, vector<32x32xf32>, vector<32x32xf32> -> vector<32x32xf32>
    %653 = vector.broadcast %3 : vector<1x32xf32> to vector<32x32xf32>
    %654 = arith.addf %652, %653 : vector<32x32xf32>
    %c0_138 = arith.constant 0 : index
    %c0_139 = arith.constant 0 : index
    %c0_140 = arith.constant 0 : index
    %655 = vector.load %arg11[%c0_138, %c0_139, %c0_140] : memref<1x32x32xf32, #tpu.memory_space<vmem>>, vector<1x32x32xf32>
    %656 = vector.shape_cast %655 : vector<1x32x32xf32> to vector<32x32xf32>
    %657 = vector.shape_cast %654 : vector<32x32xf32> to vector<1x32x32xf32>
    tpu.vector_store %arg11[%c0_138, %c0_139, %c0_140], %657 {strides = array<i32>} : memref<1x32x32xf32, #tpu.memory_space<vmem>>, vector<1x32x32xf32>,
    return
  }
  func.func @transform_0(%arg0: i32) -> (i32, i32, i32) {
    %c0_i32 = arith.constant 0 : i32
    %c0_i32_0 = arith.constant 0 : i32
    %c0_i32_1 = arith.constant 0 : i32
    return %arg0, %c0_i32, %c0_i32_0 : i32, i32, i32
  }
  func.func @transform_1(%arg0: i32) -> (i32, i32) {
    %c0_i32 = arith.constant 0 : i32
    %c0_i32_0 = arith.constant 0 : i32
    %c0_i32_1 = arith.constant 0 : i32
    return %c0_i32, %c0_i32_0 : i32, i32
  }
  func.func @transform_2(%arg0: i32) -> (i32, i32) {
    %c0_i32 = arith.constant 0 : i32
    %c0_i32_0 = arith.constant 0 : i32
    %c0_i32_1 = arith.constant 0 : i32
    return %c0_i32, %c0_i32_0 : i32, i32
  }
  func.func @transform_3(%arg0: i32) -> (i32, i32) {
    %c0_i32 = arith.constant 0 : i32
    %c0_i32_0 = arith.constant 0 : i32
    %c0_i32_1 = arith.constant 0 : i32
    return %c0_i32, %c0_i32_0 : i32, i32
  }
  func.func @transform_4(%arg0: i32) -> (i32, i32) {
    %c0_i32 = arith.constant 0 : i32
    %c0_i32_0 = arith.constant 0 : i32
    %c0_i32_1 = arith.constant 0 : i32
    return %c0_i32, %c0_i32_0 : i32, i32
  }
  func.func @transform_5(%arg0: i32) -> (i32, i32) {
    %c0_i32 = arith.constant 0 : i32
    %c0_i32_0 = arith.constant 0 : i32
    %c0_i32_1 = arith.constant 0 : i32
    return %c0_i32, %c0_i32_0 : i32, i32
  }
  func.func @transform_6(%arg0: i32) -> (i32, i32) {
    %c0_i32 = arith.constant 0 : i32
    %c0_i32_0 = arith.constant 0 : i32
    %c0_i32_1 = arith.constant 0 : i32
    return %c0_i32, %c0_i32_0 : i32, i32
  }
  func.func @transform_7(%arg0: i32) -> (i32, i32) {
    %c0_i32 = arith.constant 0 : i32
    %c0_i32_0 = arith.constant 0 : i32
    %c0_i32_1 = arith.constant 0 : i32
    return %c0_i32, %c0_i32_0 : i32, i32
  }
  func.func @transform_8(%arg0: i32) -> (i32, i32) {
    %c0_i32 = arith.constant 0 : i32
    %c0_i32_0 = arith.constant 0 : i32
    %c0_i32_1 = arith.constant 0 : i32
    return %c0_i32, %c0_i32_0 : i32, i32
  }
  func.func @transform_9(%arg0: i32) -> (i32, i32) {
    %c0_i32 = arith.constant 0 : i32
    %c0_i32_0 = arith.constant 0 : i32
    %c0_i32_1 = arith.constant 0 : i32
    return %c0_i32, %c0_i32_0 : i32, i32
  }
  func.func @transform_10(%arg0: i32) -> (i32, i32, i32) {
    %c0_i32 = arith.constant 0 : i32
    %c0_i32_0 = arith.constant 0 : i32
    %c0_i32_1 = arith.constant 0 : i32
    return %arg0, %c0_i32, %c0_i32_0 : i32, i32, i32
  }
}

</mosaic_0001>

<llo_original>
// kernel: tpu_custom_call.1
$region0: #{tpu_custom_call.1}
  #allocation0 [shape = 'u32[]', space=smem, size = 0x4, offset = 0x4, fixed_abs, tag = 'smem constant byte address 0x4 - core index']
  #allocation1 [shape = 'u32[72,128]{1,0:T(1,128)}', space=vmem, size = 0x9000, scoped, tag = 'internal scratch']
  #allocation2 [shape = 'f32[32,32]{1,0:T(8,128)}', space=vmem, size = 0x4000, scoped, tag = 'scratch operand']
  %s0 = inlined_call_operand.vmem [shape: f32[2,32,32], index: 0, kind: input, shape index: {}]
  %s1 = inlined_call_operand.hbm [shape: f32[32,32], index: 1, kind: input, shape index: {}]
  %s2 = inlined_call_operand.vmem [shape: f32[1,32], index: 2, kind: input, shape index: {}]
  %s3 = inlined_call_operand.hbm [shape: f32[32,96], index: 3, kind: input, shape index: {}]
  %s4 = inlined_call_operand.hbm [shape: f32[32,32], index: 4, kind: input, shape index: {}]
  %s5 = inlined_call_operand.vmem [shape: f32[1,32], index: 5, kind: input, shape index: {}]
  %s6 = inlined_call_operand.vmem [shape: f32[32,8], index: 6, kind: input, shape index: {}]
  %s7 = inlined_call_operand.vmem [shape: f32[32,8], index: 7, kind: input, shape index: {}]
  %s8 = inlined_call_operand.vmem [shape: f32[8,32], index: 8, kind: input, shape index: {}]
  %s9 = inlined_call_operand.vmem [shape: f32[1,32], index: 9, kind: input, shape index: {}]
  %s10 = inlined_call_operand.hbm [shape: f32[2,32,32], index: 10, kind: output, shape index: {}]
  %s11 = sld [smem:[#allocation0]]
  $region85: #{tpu_custom_call.1} parent=0
    _
  %s13 = ssub.s32 1, %s11
  %s14 = scalar_select 0, %s13, %s11
  $region1: #{tpu_custom_call.1} parent=0
    #allocation3 [shape = 'u8[16384]{0}', space=vmem, size = 0x4000, scoped, tag = 'input window, operand 1, single buffered']
    #allocation4 [shape = 's32[2]{0}', space=sflag, size = 0x8, scoped, tag = 'scoped memory for tpu_custom_call.1']
    #allocation5 [shape = 's32[2]{0}', space=sflag, size = 0x8, scoped, tag = 'scoped memory for tpu_custom_call.1']
    #allocation6 [shape = 'u8[16384]{0}', space=vmem, size = 0x4000, scoped, tag = 'input window, operand 3, single buffered']
    #allocation7 [shape = 's32[1]{0}', space=sflag, size = 0x4, scoped, tag = 'scoped memory for tpu_custom_call.1']
    #allocation8 [shape = 'u8[16384]{0}', space=vmem, size = 0x4000, scoped, tag = 'input window, operand 4, single buffered']
    #allocation9 [shape = 'u8[32768]{0}', space=vmem, size = 0x8000, scoped, tag = 'output window, operand 0']
    %15 = vsyncpa [#allocation4], 0
    %16 = vsyncpa [#allocation7], 0
    %17 = vsyncpa [#allocation5], 0
    %s18 = scalar_lea.sflag [#allocation5], 1
    %19 = vsyncpa %s18, 0
    loop: start=0, step=1, limit=4
    $region2: #{tpu_custom_call.1} parent=1 // loop_pre_header
      _
    $region3: #{tpu_custom_call.1} parent=1 // loop_header
      %s21 = sphi 0, %s25
      %p22 = scmp.ge.s32.totalorder %s21, 4
      %s31 = sphi 0, %s33
      %s34 = sphi 0, %s31
      %s35 = sphi 0, %s34
      %s51 = sphi 0, %s35
      %s55 = sphi 0, %s55
      %s57 = sphi 0, %s55
      %s58 = sphi 0, %s57
      %s72 = sphi 0, %s58
      %s76 = sphi 0, %s76
      %s78 = sphi 0, %s76
      %s79 = sphi 0, %s78
      %s93 = sphi 0, %s79
      %s97 = sphi 0, %s97
      %s99 = sphi 0, %s97
      %s100 = sphi 0, %s99
      %s114 = sphi 0, %s100
      %s118 = sphi 0, %s118
      %s120 = sphi 0, %s118
      %s121 = sphi 0, %s120
      %s135 = sphi 0, %s121
      %s139 = sphi 0, %s139
      %s141 = sphi 0, %s139
      %s142 = sphi 0, %s141
      %s156 = sphi 0, %s142
      %s160 = sphi 0, %s160
      %s162 = sphi 0, %s160
      %s163 = sphi 0, %s162
      %s177 = sphi 0, %s163
      %s181 = sphi 0, %s181
      %s183 = sphi 0, %s181
      %s184 = sphi 0, %s183
      %s198 = sphi 0, %s184
      %s202 = sphi 0, %s202
      %s204 = sphi 0, %s202
      %s205 = sphi 0, %s204
      %s219 = sphi 0, %s205
      %s223 = sphi 0, %s223
      %s225 = sphi 0, %s223
      %s226 = sphi 0, %s225
      %s240 = sphi 0, %s226
      %s246 = sphi 0, %s248
      %s249 = sphi 0, %s246
      %s250 = sphi 0, %s249
      %s266 = sphi 0, %s250
    $region4: #{tpu_custom_call.1} parent=1 // loop_header_branch
      %24 = sbr.rel (%p22) target = $region8
    $region5: #{tpu_custom_call.1} parent=1 // loop_body
      %s26 = ssub.s32 %s21, 1
      %s27 = ssub.s32 %s21, 2
      %s28 = sadd.s32 %s21, 1
      %s29 = ssub.s32 %s21, %s28
      %p30 = scmp.eq.s32.totalorder %s29, 0
      %s32 = sadd.s32 %s31, 1
      %s33 = scalar_select %p30, %s31, %s32
      %p36 = pneg %p30
      %p37 = scmp.eq.s32.totalorder %s21, 1
      %p38 = por %p36, %p37
      %p39 = scmp.ne.s32.totalorder %s31, %s34
      %p40 = scmp.eq.s32.totalorder %s21, 0
      %p41 = por %p39, %p40
      %p42 = scmp.ne.s32.totalorder %s31, %s34
      %p43 = scmp.eq.s32.totalorder %s26, 1
      %p44 = por %p42, %p43
      %p45 = scmp.ne.s32.totalorder %s34, %s35
      %p46 = scmp.eq.s32.totalorder %s26, 0
      %p47 = por %p45, %p46
      %p48 = scmp.ne.s32.totalorder %s34, %s35
      %p49 = scmp.eq.s32.totalorder %s27, 1
      %p50 = por %p48, %p49
      %p52 = scmp.ne.s32.totalorder %s35, %s51
      %p53 = scmp.eq.s32.totalorder %s27, 0
      %p54 = por %p52, %p53
      %s56 = sadd.s32 %s55, 1
      %p59 = scmp.eq.s32.totalorder %s21, 1
      %p60 = scmp.ne.s32.totalorder %s55, %s57
      %p61 = scmp.eq.s32.totalorder %s21, 0
      %p62 = por %p60, %p61
      %p63 = scmp.ne.s32.totalorder %s55, %s57
      %p64 = scmp.eq.s32.totalorder %s26, 1
      %p65 = por %p63, %p64
      %p66 = scmp.ne.s32.totalorder %s57, %s58
      %p67 = scmp.eq.s32.totalorder %s26, 0
      %p68 = por %p66, %p67
      %p69 = scmp.ne.s32.totalorder %s57, %s58
      %p70 = scmp.eq.s32.totalorder %s27, 1
      %p71 = por %p69, %p70
      %p73 = scmp.ne.s32.totalorder %s58, %s72
      %p74 = scmp.eq.s32.totalorder %s27, 0
      %p75 = por %p73, %p74
      %s77 = sadd.s32 %s76, 1
      %p80 = scmp.eq.s32.totalorder %s21, 1
      %p81 = scmp.ne.s32.totalorder %s76, %s78
      %p82 = scmp.eq.s32.totalorder %s21, 0
      %p83 = por %p81, %p82
      %p84 = scmp.ne.s32.totalorder %s76, %s78
      %p85 = scmp.eq.s32.totalorder %s26, 1
      %p86 = por %p84, %p85
      %p87 = scmp.ne.s32.totalorder %s78, %s79
      %p88 = scmp.eq.s32.totalorder %s26, 0
      %p89 = por %p87, %p88
      %p90 = scmp.ne.s32.totalorder %s78, %s79
      %p91 = scmp.eq.s32.totalorder %s27, 1
      %p92 = por %p90, %p91
      %p94 = scmp.ne.s32.totalorder %s79, %s93
      %p95 = scmp.eq.s32.totalorder %s27, 0
      %p96 = por %p94, %p95
      %s98 = sadd.s32 %s97, 1
      %p101 = scmp.eq.s32.totalorder %s21, 1
      %p102 = scmp.ne.s32.totalorder %s97, %s99
      %p103 = scmp.eq.s32.totalorder %s21, 0
      %p104 = por %p102, %p103
      %p105 = scmp.ne.s32.totalorder %s97, %s99
      %p106 = scmp.eq.s32.totalorder %s26, 1
      %p107 = por %p105, %p106
      %p108 = scmp.ne.s32.totalorder %s99, %s100
      %p109 = scmp.eq.s32.totalorder %s26, 0
      %p110 = por %p108, %p109
      %p111 = scmp.ne.s32.totalorder %s99, %s100
      %p112 = scmp.eq.s32.totalorder %s27, 1
      %p113 = por %p111, %p112
      %p115 = scmp.ne.s32.totalorder %s100, %s114
      %p116 = scmp.eq.s32.totalorder %s27, 0
      %p117 = por %p115, %p116
      %s119 = sadd.s32 %s118, 1
      %p122 = scmp.eq.s32.totalorder %s21, 1
      %p123 = scmp.ne.s32.totalorder %s118, %s120
      %p124 = scmp.eq.s32.totalorder %s21, 0
      %p125 = por %p123, %p124
      %p126 = scmp.ne.s32.totalorder %s118, %s120
      %p127 = scmp.eq.s32.totalorder %s26, 1
      %p128 = por %p126, %p127
      %p129 = scmp.ne.s32.totalorder %s120, %s121
      %p130 = scmp.eq.s32.totalorder %s26, 0
      %p131 = por %p129, %p130
      %p132 = scmp.ne.s32.totalorder %s120, %s121
      %p133 = scmp.eq.s32.totalorder %s27, 1
      %p134 = por %p132, %p133
      %p136 = scmp.ne.s32.totalorder %s121, %s135
      %p137 = scmp.eq.s32.totalorder %s27, 0
      %p138 = por %p136, %p137
      %s140 = sadd.s32 %s139, 1
      %p143 = scmp.eq.s32.totalorder %s21, 1
      %p144 = scmp.ne.s32.totalorder %s139, %s141
      %p145 = scmp.eq.s32.totalorder %s21, 0
      %p146 = por %p144, %p145
      %p147 = scmp.ne.s32.totalorder %s139, %s141
      %p148 = scmp.eq.s32.totalorder %s26, 1
      %p149 = por %p147, %p148
      %p150 = scmp.ne.s32.totalorder %s141, %s142
      %p151 = scmp.eq.s32.totalorder %s26, 0
      %p152 = por %p150, %p151
      %p153 = scmp.ne.s32.totalorder %s141, %s142
      %p154 = scmp.eq.s32.totalorder %s27, 1
      %p155 = por %p153, %p154
      %p157 = scmp.ne.s32.totalorder %s142, %s156
      %p158 = scmp.eq.s32.totalorder %s27, 0
      %p159 = por %p157, %p158
      %s161 = sadd.s32 %s160, 1
      %p164 = scmp.eq.s32.totalorder %s21, 1
      %p165 = scmp.ne.s32.totalorder %s160, %s162
      %p166 = scmp.eq.s32.totalorder %s21, 0
      %p167 = por %p165, %p166
      %p168 = scmp.ne.s32.totalorder %s160, %s162
      %p169 = scmp.eq.s32.totalorder %s26, 1
      %p170 = por %p168, %p169
      %p171 = scmp.ne.s32.totalorder %s162, %s163
      %p172 = scmp.eq.s32.totalorder %s26, 0
      %p173 = por %p171, %p172
      %p174 = scmp.ne.s32.totalorder %s162, %s163
      %p175 = scmp.eq.s32.totalorder %s27, 1
      %p176 = por %p174, %p175
      %p178 = scmp.ne.s32.totalorder %s163, %s177
      %p179 = scmp.eq.s32.totalorder %s27, 0
      %p180 = por %p178, %p179
      %s182 = sadd.s32 %s181, 1
      %p185 = scmp.eq.s32.totalorder %s21, 1
      %p186 = scmp.ne.s32.totalorder %s181, %s183
      %p187 = scmp.eq.s32.totalorder %s21, 0
      %p188 = por %p186, %p187
      %p189 = scmp.ne.s32.totalorder %s181, %s183
      %p190 = scmp.eq.s32.totalorder %s26, 1
      %p191 = por %p189, %p190
      %p192 = scmp.ne.s32.totalorder %s183, %s184
      %p193 = scmp.eq.s32.totalorder %s26, 0
      %p194 = por %p192, %p193
      %p195 = scmp.ne.s32.totalorder %s183, %s184
      %p196 = scmp.eq.s32.totalorder %s27, 1
      %p197 = por %p195, %p196
      %p199 = scmp.ne.s32.totalorder %s184, %s198
      %p200 = scmp.eq.s32.totalorder %s27, 0
      %p201 = por %p199, %p200
      %s203 = sadd.s32 %s202, 1
      %p206 = scmp.eq.s32.totalorder %s21, 1
      %p207 = scmp.ne.s32.totalorder %s202, %s204
      %p208 = scmp.eq.s32.totalorder %s21, 0
      %p209 = por %p207, %p208
      %p210 = scmp.ne.s32.totalorder %s202, %s204
      %p211 = scmp.eq.s32.totalorder %s26, 1
      %p212 = por %p210, %p211
      %p213 = scmp.ne.s32.totalorder %s204, %s205
      %p214 = scmp.eq.s32.totalorder %s26, 0
      %p215 = por %p213, %p214
      %p216 = scmp.ne.s32.totalorder %s204, %s205
      %p217 = scmp.eq.s32.totalorder %s27, 1
      %p218 = por %p216, %p217
      %p220 = scmp.ne.s32.totalorder %s205, %s219
      %p221 = scmp.eq.s32.totalorder %s27, 0
      %p222 = por %p220, %p221
      %s224 = sadd.s32 %s223, 1
      %p227 = scmp.eq.s32.totalorder %s21, 1
      %p228 = scmp.ne.s32.totalorder %s223, %s225
      %p229 = scmp.eq.s32.totalorder %s21, 0
      %p230 = por %p228, %p229
      %p231 = scmp.ne.s32.totalorder %s223, %s225
      %p232 = scmp.eq.s32.totalorder %s26, 1
      %p233 = por %p231, %p232
      %p234 = scmp.ne.s32.totalorder %s225, %s226
      %p235 = scmp.eq.s32.totalorder %s26, 0
      %p236 = por %p234, %p235
      %p237 = scmp.ne.s32.totalorder %s225, %s226
      %p238 = scmp.eq.s32.totalorder %s27, 1
      %p239 = por %p237, %p238
      %p241 = scmp.ne.s32.totalorder %s226, %s240
      %p242 = scmp.eq.s32.totalorder %s27, 0
      %p243 = por %p241, %p242
      %s244 = ssub.s32 %s21, %s28
      %p245 = scmp.eq.s32.totalorder %s244, 0
      %s247 = sadd.s32 %s246, 1
      %s248 = scalar_select %p245, %s246, %s247
      %p251 = pneg %p245
      %p252 = scmp.eq.s32.totalorder %s21, 1
      %p253 = por %p251, %p252
      %p254 = scmp.ne.s32.totalorder %s246, %s249
      %p255 = scmp.eq.s32.totalorder %s21, 0
      %p256 = por %p254, %p255
      %p257 = scmp.ne.s32.totalorder %s246, %s249
      %p258 = scmp.eq.s32.totalorder %s26, 1
      %p259 = por %p257, %p258
      %p260 = scmp.ne.s32.totalorder %s249, %s250
      %p261 = scmp.eq.s32.totalorder %s26, 0
      %p262 = por %p260, %p261
      %p263 = scmp.ne.s32.totalorder %s249, %s250
      %p264 = scmp.eq.s32.totalorder %s27, 1
      %p265 = por %p263, %p264
      %p267 = scmp.ne.s32.totalorder %s250, %s266
      %p268 = scmp.eq.s32.totalorder %s27, 0
      %p269 = por %p267, %p268
      %p270 = scmp.le.s32.totalorder 1, %s21
      %p271 = scmp.lt.s32.totalorder %s21, 3
      %p272 = pnand %p270, %p271
      %p273 = pneg %p272
      // Predicated region
      $region9: #{tpu_custom_call.1} parent=5 // pred_check
        _
      $region10: #{tpu_custom_call.1} parent=5 // pred_check_branch
        %275 = sbr.rel (%p272) target = $region12
      $region11: #{tpu_custom_call.1} parent=5 // pred_region
        %s276 = ssub.s32 %s21, 1
        // Predicated region
        $region13: #{tpu_custom_call.1} parent=11 // pred_check
          %p277 = pneg %p68
        $region14: #{tpu_custom_call.1} parent=11 // pred_check_branch
          %279 = sbr.rel (%p277) target = $region16
        $region15: #{tpu_custom_call.1} parent=11 // pred_region
          %281 = vsyncadd [#allocation4], 0
          %s282 = sshll.u32 %s1, 4
          %s283 = int_to_ptr.hbm [resolvable:$true] %s282
          %s284 = sshll.u32 [#allocation3], 4
          %s285 = int_to_ptr.vmem [resolvable:$true] %s284
          %290 = dma.hbm_to_vmem [thread:$0]  %s283, 512, %s285, [#allocation4], 128, 128, 8
        $region16: #{tpu_custom_call.1} parent=11 // pred_fallthru
          _
        // Predicated region
        $region17: #{tpu_custom_call.1} parent=11 // pred_check
          %p291 = pneg %p89
        $region18: #{tpu_custom_call.1} parent=11 // pred_check_branch
          %293 = sbr.rel (%p291) target = $region20
        $region19: #{tpu_custom_call.1} parent=11 // pred_region
          _
        $region20: #{tpu_custom_call.1} parent=11 // pred_fallthru
          _
        // Predicated region
        $region21: #{tpu_custom_call.1} parent=11 // pred_check
          %p294 = pneg %p110
        $region22: #{tpu_custom_call.1} parent=11 // pred_check_branch
          %296 = sbr.rel (%p294) target = $region24
        $region23: #{tpu_custom_call.1} parent=11 // pred_region
          %298 = vsyncadd [#allocation7], 0
          %s299 = sshll.u32 %s3, 4
          %s300 = int_to_ptr.hbm [resolvable:$true] %s299
          %s301 = sshll.u32 [#allocation6], 4
          %s302 = int_to_ptr.vmem [resolvable:$true] %s301
          %307 = dma.hbm_to_vmem [thread:$0]  %s300, 512, %s302, [#allocation7], 128, 128, 8
        $region24: #{tpu_custom_call.1} parent=11 // pred_fallthru
          _
        // Predicated region
        $region25: #{tpu_custom_call.1} parent=11 // pred_check
          %p308 = pneg %p131
        $region26: #{tpu_custom_call.1} parent=11 // pred_check_branch
          %310 = sbr.rel (%p308) target = $region28
        $region27: #{tpu_custom_call.1} parent=11 // pred_region
          %312 = vsyncadd [#allocation7], 0
          %s313 = sshll.u32 %s4, 4
          %s314 = int_to_ptr.hbm [resolvable:$true] %s313
          %s315 = sshll.u32 [#allocation8], 4
          %s316 = int_to_ptr.vmem [resolvable:$true] %s315
          %321 = dma.hbm_to_vmem [thread:$0]  %s314, 512, %s316, [#allocation7], 128, 128, 8
        $region28: #{tpu_custom_call.1} parent=11 // pred_fallthru
          _
        // Predicated region
        $region29: #{tpu_custom_call.1} parent=11 // pred_check
          %p322 = pneg %p152
        $region30: #{tpu_custom_call.1} parent=11 // pred_check_branch
          %324 = sbr.rel (%p322) target = $region32
        $region31: #{tpu_custom_call.1} parent=11 // pred_region
          _
        $region32: #{tpu_custom_call.1} parent=11 // pred_fallthru
          _
        // Predicated region
        $region33: #{tpu_custom_call.1} parent=11 // pred_check
          %p325 = pneg %p173
        $region34: #{tpu_custom_call.1} parent=11 // pred_check_branch
          %327 = sbr.rel (%p325) target = $region36
        $region35: #{tpu_custom_call.1} parent=11 // pred_region
          _
        $region36: #{tpu_custom_call.1} parent=11 // pred_fallthru
          _
        // Predicated region
        $region37: #{tpu_custom_call.1} parent=11 // pred_check
          %p328 = pneg %p194
        $region38: #{tpu_custom_call.1} parent=11 // pred_check_branch
          %330 = sbr.rel (%p328) target = $region40
        $region39: #{tpu_custom_call.1} parent=11 // pred_region
          _
        $region40: #{tpu_custom_call.1} parent=11 // pred_fallthru
          _
        // Predicated region
        $region41: #{tpu_custom_call.1} parent=11 // pred_check
          %p331 = pneg %p215
        $region42: #{tpu_custom_call.1} parent=11 // pred_check_branch
          %333 = sbr.rel (%p331) target = $region44
        $region43: #{tpu_custom_call.1} parent=11 // pred_region
          _
        $region44: #{tpu_custom_call.1} parent=11 // pred_fallthru
          _
        // Predicated region
        $region45: #{tpu_custom_call.1} parent=11 // pred_check
          %p334 = pneg %p236
        $region46: #{tpu_custom_call.1} parent=11 // pred_check_branch
          %336 = sbr.rel (%p334) target = $region48
        $region47: #{tpu_custom_call.1} parent=11 // pred_region
          _
        $region48: #{tpu_custom_call.1} parent=11 // pred_fallthru
          _
      $region12: #{tpu_custom_call.1} parent=5 // pred_fallthru
        _
      %p337 = scmp.lt.s32.totalorder %s21, 2
      // Predicated region
      $region49: #{tpu_custom_call.1} parent=5 // pred_check
        %p338 = pneg %p337
      $region50: #{tpu_custom_call.1} parent=5 // pred_check_branch
        %340 = sbr.rel (%p338) target = $region52
      $region51: #{tpu_custom_call.1} parent=5 // pred_region
        // Predicated region
        $region53: #{tpu_custom_call.1} parent=51 // pred_check
          %p341 = pneg %p41
        $region54: #{tpu_custom_call.1} parent=51 // pred_check_branch
          %343 = sbr.rel (%p341) target = $region56
        $region55: #{tpu_custom_call.1} parent=51 // pred_region
          %p344 = scmp.lt.s32.totalorder %s21, 1
          %s345 = scalar_select %p344, %s21, 1
          %s346 = smul.addr %s345, 4
          %s347 = smul.addr %s346, 8
          %s348 = scalar_lea.vmem %s0, %s347
        $region56: #{tpu_custom_call.1} parent=51 // pred_fallthru
          _
      $region52: #{tpu_custom_call.1} parent=5 // pred_fallthru
        _
      %p349 = scmp.le.s32.totalorder 1, %s21
      %p350 = scmp.lt.s32.totalorder %s21, 3
      %p351 = pnand %p349, %p350
      %p352 = pneg %p351
      // Predicated region
      $region57: #{tpu_custom_call.1} parent=5 // pred_check
        _
      $region58: #{tpu_custom_call.1} parent=5 // pred_check_branch
        %354 = sbr.rel (%p351) target = $region60
      $region59: #{tpu_custom_call.1} parent=5 // pred_region
        %s355 = ssub.s32 %s21, 1
        // Predicated region
        $region61: #{tpu_custom_call.1} parent=59 // pred_check
          %p356 = pneg %p68
        $region62: #{tpu_custom_call.1} parent=59 // pred_check_branch
          %358 = sbr.rel (%p356) target = $region64
        $region63: #{tpu_custom_call.1} parent=59 // pred_region
          %360 = dma.done [#allocation4], 512
        $region64: #{tpu_custom_call.1} parent=59 // pred_fallthru
          _
        // Predicated region
        $region65: #{tpu_custom_call.1} parent=59 // pred_check
          %p361 = pneg %p110
        $region66: #{tpu_custom_call.1} parent=59 // pred_check_branch
          %363 = sbr.rel (%p361) target = $region68
        $region67: #{tpu_custom_call.1} parent=59 // pred_region
          %365 = dma.done [#allocation7], 512
        $region68: #{tpu_custom_call.1} parent=59 // pred_fallthru
          _
        // Predicated region
        $region69: #{tpu_custom_call.1} parent=59 // pred_check
          %p366 = pneg %p131
        $region70: #{tpu_custom_call.1} parent=59 // pred_check_branch
          %368 = sbr.rel (%p366) target = $region72
        $region71: #{tpu_custom_call.1} parent=59 // pred_region
          %370 = dma.done [#allocation7], 512
        $region72: #{tpu_custom_call.1} parent=59 // pred_fallthru
          _
        %p371 = scmp.lt.s32.totalorder %s26, 1
        %s372 = scalar_select %p371, %s26, 1
        %s373 = smul.addr %s372, 4
        %s374 = smul.addr %s373, 8
        %s375 = scalar_lea.vmem %s0, %s374
        %p376 = pneg %p47
        %p377 = pneg %p44
        %p378 = pneg %p68
        %p379 = pneg %p65
        %p380 = pneg %p89
        %p381 = pneg %p86
        %p382 = pneg %p110
        %p383 = pneg %p107
        %p384 = pneg %p131
        %p385 = pneg %p128
        %p386 = pneg %p152
        %p387 = pneg %p149
        %p388 = pneg %p173
        %p389 = pneg %p170
        %p390 = pneg %p194
        %p391 = pneg %p191
        %p392 = pneg %p215
        %p393 = pneg %p212
        %p394 = pneg %p236
        %p395 = pneg %p233
        %p396 = pneg %p262
        %p397 = pneg %p259
        %s398 = sand.u32 %s249, 1
        %s399 = scalar_lea.sflag [#allocation5], %s398
        %s400 = sand.u32 %s249, 1
        %s401 = smul.addr %s400, 32
        %s402 = scalar_lea.vmem [#allocation9], %s401
        %p403 = scmp.lt.s32.totalorder %s26, 1
        %s404 = scalar_select %p403, %s26, 1
        %s405 = smul.addr %s404, 4
        %s406 = smul.addr %s405, 8
        %s407 = scalar_lea.vmem %s0, %s406
        %v408 = vld [vmem:[%s407] sm:$0xff]
        %v409 = vld [vmem:[%s407 + $0x8] sm:$0xff]
        %v410 = vld [vmem:[%s407 + $0x10] sm:$0xff]
        %v411 = vld [vmem:[%s407 + $0x18] sm:$0xff]
        %v412 = vld [vmem:[#allocation3] sm:$0xff]
        %v413 = vld [vmem:[#allocation3 + $0x8] sm:$0xff]
        %v414 = vld [vmem:[#allocation3 + $0x10] sm:$0xff]
        %v415 = vld [vmem:[#allocation3 + $0x18] sm:$0xff]
        %v416 = vld [vmem:[%s2] sm:$0x1]
        %v418 = vperm.slane %v416, 0
        %vm420 = vcmask 261120
        %v422 = vsel %vm420, %v408, 0
        %v425 = vsel %vm420, %v409, 0
        %v428 = vsel %vm420, %v410, 0
        %v431 = vsel %vm420, %v411, 0
        %433 = vmatpush.msra.mxu0 0.0
        %434 = vmatpush.msra.mxu0 0.0
        %435 = vmatpush.msra.mxu0 0.0
        %436 = vmatpush.msra.mxu0 0.0
        %437 = vmatpush.msra.mxu0 0.0
        %438 = vmatpush.msra.mxu0 0.0
        %439 = vmatpush.msra.mxu0 0.0
        %440 = vmatpush.msra.mxu0 0.0
        %441 = vmatpush.msra.mxu0 0.0
        %442 = vmatpush.msra.mxu0 0.0
        %443 = vmatpush.msra.mxu0 0.0
        %444 = vmatpush.msra.mxu0 0.0
        %v445 = vand.u32 %v415, 4294901760
        %446 = vmatpush.msra.mxu0 %v445
        %v447 = vand.u32 %v414, 4294901760
        %448 = vmatpush.msra.mxu0 %v447
        %v449 = vand.u32 %v413, 4294901760
        %450 = vmatpush.msra.mxu0 %v449
        %v451 = vand.u32 %v412, 4294901760
        %452 = vmatpush.msra.mxu0 %v451
        %v453 = vand.u32 %v422, 4294901760
        %v454 = vsub.f32 %v422, %v453
        %v455 = vand.u32 %v454, 4294901760
        %v456 = vsub.f32 %v454, %v455
        %v457 = vand.u32 %v456, 4294901760
        %458 = vmatmul.f32.gmra.mxu0 %v457
        %v459 = vpop.f32.mrf.mxu0
        %v460 = vadd.f32 %v418, %v459
        %v461 = vand.u32 %v425, 4294901760
        %v462 = vsub.f32 %v425, %v461
        %v463 = vand.u32 %v462, 4294901760
        %v464 = vsub.f32 %v462, %v463
        %v465 = vand.u32 %v464, 4294901760
        %466 = vmatmul.f32.gmra.mxu0 %v465
        %v467 = vpop.f32.mrf.mxu0
        %v468 = vadd.f32 %v418, %v467
        %v469 = vand.u32 %v428, 4294901760
        %v470 = vsub.f32 %v428, %v469
        %v471 = vand.u32 %v470, 4294901760
        %v472 = vsub.f32 %v470, %v471
        %v473 = vand.u32 %v472, 4294901760
        %474 = vmatmul.f32.gmra.mxu0 %v473
        %v475 = vpop.f32.mrf.mxu0
        %v476 = vadd.f32 %v418, %v475
        %v477 = vand.u32 %v431, 4294901760
        %v478 = vsub.f32 %v431, %v477
        %v479 = vand.u32 %v478, 4294901760
        %v480 = vsub.f32 %v478, %v479
        %v481 = vand.u32 %v480, 4294901760
        %482 = vmatmul.f32.gmra.mxu0 %v481
        %v483 = vpop.f32.mrf.mxu0
        %v484 = vadd.f32 %v418, %v483
        %485 = vdwg.mxu0
        %486 = vmatpush.msra.mxu0 0.0
        %487 = vmatpush.msra.mxu0 0.0
        %488 = vmatpush.msra.mxu0 0.0
        %489 = vmatpush.msra.mxu0 0.0
        %490 = vmatpush.msra.mxu0 0.0
        %491 = vmatpush.msra.mxu0 0.0
        %492 = vmatpush.msra.mxu0 0.0
        %493 = vmatpush.msra.mxu0 0.0
        %494 = vmatpush.msra.mxu0 0.0
        %495 = vmatpush.msra.mxu0 0.0
        %496 = vmatpush.msra.mxu0 0.0
        %497 = vmatpush.msra.mxu0 0.0
        %v498 = vand.u32 %v415, 4294901760
        %v499 = vsub.f32 %v415, %v498
        %v500 = vand.u32 %v499, 4294901760
        %v501 = vsub.f32 %v499, %v500
        %v502 = vand.u32 %v501, 4294901760
        %503 = vmatpush.msra.mxu0 %v502
        %v504 = vand.u32 %v414, 4294901760
        %v505 = vsub.f32 %v414, %v504
        %v506 = vand.u32 %v505, 4294901760
        %v507 = vsub.f32 %v505, %v506
        %v508 = vand.u32 %v507, 4294901760
        %509 = vmatpush.msra.mxu0 %v508
        %v510 = vand.u32 %v413, 4294901760
        %v511 = vsub.f32 %v413, %v510
        %v512 = vand.u32 %v511, 4294901760
        %v513 = vsub.f32 %v511, %v512
        %v514 = vand.u32 %v513, 4294901760
        %515 = vmatpush.msra.mxu0 %v514
        %v516 = vand.u32 %v412, 4294901760
        %v517 = vsub.f32 %v412, %v516
        %v518 = vand.u32 %v517, 4294901760
        %v519 = vsub.f32 %v517, %v518
        %v520 = vand.u32 %v519, 4294901760
        %521 = vmatpush.msra.mxu0 %v520
        %v522 = vand.u32 %v422, 4294901760
        %523 = vmatmul.f32.gmra.mxu0 %v522
        %v524 = vpop.f32.mrf.mxu0
        %v525 = vadd.f32 %v460, %v524
        %v526 = vand.u32 %v425, 4294901760
        %527 = vmatmul.f32.gmra.mxu0 %v526
        %v528 = vpop.f32.mrf.mxu0
        %v529 = vadd.f32 %v468, %v528
        %v530 = vand.u32 %v428, 4294901760
        %531 = vmatmul.f32.gmra.mxu0 %v530
        %v532 = vpop.f32.mrf.mxu0
        %v533 = vadd.f32 %v476, %v532
        %v534 = vand.u32 %v431, 4294901760
        %535 = vmatmul.f32.gmra.mxu0 %v534
        %v536 = vpop.f32.mrf.mxu0
        %v537 = vadd.f32 %v484, %v536
        %538 = vdwg.mxu0
        %539 = vmatpush.msra.mxu0 0.0
        %540 = vmatpush.msra.mxu0 0.0
        %541 = vmatpush.msra.mxu0 0.0
        %542 = vmatpush.msra.mxu0 0.0
        %543 = vmatpush.msra.mxu0 0.0
        %544 = vmatpush.msra.mxu0 0.0
        %545 = vmatpush.msra.mxu0 0.0
        %546 = vmatpush.msra.mxu0 0.0
        %547 = vmatpush.msra.mxu0 0.0
        %548 = vmatpush.msra.mxu0 0.0
        %549 = vmatpush.msra.mxu0 0.0
        %550 = vmatpush.msra.mxu0 0.0
        %v551 = vand.u32 %v415, 4294901760
        %v552 = vsub.f32 %v415, %v551
        %553 = vmatpush.msra.mxu0 %v552
        %v554 = vand.u32 %v414, 4294901760
        %v555 = vsub.f32 %v414, %v554
        %556 = vmatpush.msra.mxu0 %v555
        %v557 = vand.u32 %v413, 4294901760
        %v558 = vsub.f32 %v413, %v557
        %559 = vmatpush.msra.mxu0 %v558
        %v560 = vand.u32 %v412, 4294901760
        %v561 = vsub.f32 %v412, %v560
        %562 = vmatpush.msra.mxu0 %v561
        %v563 = vand.u32 %v422, 4294901760
        %v564 = vsub.f32 %v422, %v563
        %565 = vmatmul.f32.gmra.mxu0 %v564
        %v566 = vpop.f32.mrf.mxu0
        %v567 = vadd.f32 %v525, %v566
        %v568 = vand.u32 %v425, 4294901760
        %v569 = vsub.f32 %v425, %v568
        %570 = vmatmul.f32.gmra.mxu0 %v569
        %v571 = vpop.f32.mrf.mxu0
        %v572 = vadd.f32 %v529, %v571
        %v573 = vand.u32 %v428, 4294901760
        %v574 = vsub.f32 %v428, %v573
        %575 = vmatmul.f32.gmra.mxu0 %v574
        %v576 = vpop.f32.mrf.mxu0
        %v577 = vadd.f32 %v533, %v576
        %v578 = vand.u32 %v431, 4294901760
        %v579 = vsub.f32 %v431, %v578
        %580 = vmatmul.f32.gmra.mxu0 %v579
        %v581 = vpop.f32.mrf.mxu0
        %v582 = vadd.f32 %v537, %v581
        %583 = vdwg.mxu0
        %584 = vmatpush.msra.mxu0 0.0
        %585 = vmatpush.msra.mxu0 0.0
        %586 = vmatpush.msra.mxu0 0.0
        %587 = vmatpush.msra.mxu0 0.0
        %588 = vmatpush.msra.mxu0 0.0
        %589 = vmatpush.msra.mxu0 0.0
        %590 = vmatpush.msra.mxu0 0.0
        %591 = vmatpush.msra.mxu0 0.0
        %592 = vmatpush.msra.mxu0 0.0
        %593 = vmatpush.msra.mxu0 0.0
        %594 = vmatpush.msra.mxu0 0.0
        %595 = vmatpush.msra.mxu0 0.0
        %v596 = vand.u32 %v415, 4294901760
        %597 = vmatpush.msra.mxu0 %v596
        %v598 = vand.u32 %v414, 4294901760
        %599 = vmatpush.msra.mxu0 %v598
        %v600 = vand.u32 %v413, 4294901760
        %601 = vmatpush.msra.mxu0 %v600
        %v602 = vand.u32 %v412, 4294901760
        %603 = vmatpush.msra.mxu0 %v602
        %v604 = vand.u32 %v422, 4294901760
        %v605 = vsub.f32 %v422, %v604
        %v606 = vand.u32 %v605, 4294901760
        %607 = vmatmul.f32.gmra.mxu0 %v606
        %v608 = vpop.f32.mrf.mxu0
        %v609 = vadd.f32 %v567, %v608
        %v610 = vand.u32 %v425, 4294901760
        %v611 = vsub.f32 %v425, %v610
        %v612 = vand.u32 %v611, 4294901760
        %613 = vmatmul.f32.gmra.mxu0 %v612
        %v614 = vpop.f32.mrf.mxu0
        %v615 = vadd.f32 %v572, %v614
        %v616 = vand.u32 %v428, 4294901760
        %v617 = vsub.f32 %v428, %v616
        %v618 = vand.u32 %v617, 4294901760
        %619 = vmatmul.f32.gmra.mxu0 %v618
        %v620 = vpop.f32.mrf.mxu0
        %v621 = vadd.f32 %v577, %v620
        %v622 = vand.u32 %v431, 4294901760
        %v623 = vsub.f32 %v431, %v622
        %v624 = vand.u32 %v623, 4294901760
        %625 = vmatmul.f32.gmra.mxu0 %v624
        %v626 = vpop.f32.mrf.mxu0
        %v627 = vadd.f32 %v582, %v626
        %628 = vdwg.mxu0
        %629 = vmatpush.msra.mxu0 0.0
        %630 = vmatpush.msra.mxu0 0.0
        %631 = vmatpush.msra.mxu0 0.0
        %632 = vmatpush.msra.mxu0 0.0
        %633 = vmatpush.msra.mxu0 0.0
        %634 = vmatpush.msra.mxu0 0.0
        %635 = vmatpush.msra.mxu0 0.0
        %636 = vmatpush.msra.mxu0 0.0
        %637 = vmatpush.msra.mxu0 0.0
        %638 = vmatpush.msra.mxu0 0.0
        %639 = vmatpush.msra.mxu0 0.0
        %640 = vmatpush.msra.mxu0 0.0
        %v641 = vand.u32 %v415, 4294901760
        %v642 = vsub.f32 %v415, %v641
        %v643 = vand.u32 %v642, 4294901760
        %644 = vmatpush.msra.mxu0 %v643
        %v645 = vand.u32 %v414, 4294901760
        %v646 = vsub.f32 %v414, %v645
        %v647 = vand.u32 %v646, 4294901760
        %648 = vmatpush.msra.mxu0 %v647
        %v649 = vand.u32 %v413, 4294901760
        %v650 = vsub.f32 %v413, %v649
        %v651 = vand.u32 %v650, 4294901760
        %652 = vmatpush.msra.mxu0 %v651
        %v653 = vand.u32 %v412, 4294901760
        %v654 = vsub.f32 %v412, %v653
        %v655 = vand.u32 %v654, 4294901760
        %656 = vmatpush.msra.mxu0 %v655
        %v657 = vand.u32 %v422, 4294901760
        %658 = vmatmul.f32.gmra.mxu0 %v657
        %v659 = vpop.f32.mrf.mxu0
        %v660 = vadd.f32 %v609, %v659
        %v661 = vand.u32 %v425, 4294901760
        %662 = vmatmul.f32.gmra.mxu0 %v661
        %v663 = vpop.f32.mrf.mxu0
        %v664 = vadd.f32 %v615, %v663
        %v665 = vand.u32 %v428, 4294901760
        %666 = vmatmul.f32.gmra.mxu0 %v665
        %v667 = vpop.f32.mrf.mxu0
        %v668 = vadd.f32 %v621, %v667
        %v669 = vand.u32 %v431, 4294901760
        %670 = vmatmul.f32.gmra.mxu0 %v669
        %v671 = vpop.f32.mrf.mxu0
        %v672 = vadd.f32 %v627, %v671
        %673 = vdwg.mxu0
        %674 = vmatpush.msra.mxu0 0.0
        %675 = vmatpush.msra.mxu0 0.0
        %676 = vmatpush.msra.mxu0 0.0
        %677 = vmatpush.msra.mxu0 0.0
        %678 = vmatpush.msra.mxu0 0.0
        %679 = vmatpush.msra.mxu0 0.0
        %680 = vmatpush.msra.mxu0 0.0
        %681 = vmatpush.msra.mxu0 0.0
        %682 = vmatpush.msra.mxu0 0.0
        %683 = vmatpush.msra.mxu0 0.0
        %684 = vmatpush.msra.mxu0 0.0
        %685 = vmatpush.msra.mxu0 0.0
        %v686 = vand.u32 %v415, 4294901760
        %687 = vmatpush.msra.mxu0 %v686
        %v688 = vand.u32 %v414, 4294901760
        %689 = vmatpush.msra.mxu0 %v688
        %v690 = vand.u32 %v413, 4294901760
        %691 = vmatpush.msra.mxu0 %v690
        %v692 = vand.u32 %v412, 4294901760
        %693 = vmatpush.msra.mxu0 %v692
        %v694 = vand.u32 %v422, 4294901760
        %695 = vmatmul.f32.gmra.mxu0 %v694
        %v696 = vpop.f32.mrf.mxu0
        %v697 = vadd.f32 %v660, %v696
        %v698 = vand.u32 %v425, 4294901760
        %699 = vmatmul.f32.gmra.mxu0 %v698
        %v700 = vpop.f32.mrf.mxu0
        %v701 = vadd.f32 %v664, %v700
        %v702 = vand.u32 %v428, 4294901760
        %703 = vmatmul.f32.gmra.mxu0 %v702
        %v704 = vpop.f32.mrf.mxu0
        %v705 = vadd.f32 %v668, %v704
        %v706 = vand.u32 %v431, 4294901760
        %707 = vmatmul.f32.gmra.mxu0 %v706
        %v708 = vpop.f32.mrf.mxu0
        %v709 = vadd.f32 %v672, %v708
        %710 = vdwg.mxu0
        %v711 = vlaneseq
        %v712 = vshrl.u32 %v711, 7
        %v713 = vadd.s32 %v712, 8
        %v714 = vadd.s32 %v712, 16
        %v715 = vadd.s32 %v712, 24
        %v716 = vlaneseq
        %v717 = vand.u32 %v716, 127
        %v718 = vsub.s32 %v717, 1
        %vm719 = vcmp.eq.s32.totalorder %v712, %v718
        %vm720 = vcmp.eq.s32.totalorder %v713, %v718
        %vm721 = vcmp.eq.s32.totalorder %v714, %v718
        %vm722 = vcmp.eq.s32.totalorder %v715, %v718
        %v723 = vsel %vm719, 1, 0
        %v724 = vsel %vm720, 1, 0
        %v725 = vsel %vm721, 1, 0
        %v726 = vsel %vm722, 1, 0
        %v727 = vcvt.s32.f32 %v723
        %v728 = vcvt.s32.f32 %v724
        %v729 = vcvt.s32.f32 %v725
        %v730 = vcvt.s32.f32 %v726
        %v731 = vadd.s32 %v717, 1
        %vm732 = vcmp.eq.s32.totalorder %v712, %v731
        %vm733 = vcmp.eq.s32.totalorder %v713, %v731
        %vm734 = vcmp.eq.s32.totalorder %v714, %v731
        %vm735 = vcmp.eq.s32.totalorder %v715, %v731
        %v736 = vsel %vm732, 1, 0
        %v737 = vsel %vm733, 1, 0
        %v738 = vsel %vm734, 1, 0
        %v739 = vsel %vm735, 1, 0
        %v740 = vcvt.s32.f32 %v736
        %v741 = vcvt.s32.f32 %v737
        %v742 = vcvt.s32.f32 %v738
        %v743 = vcvt.s32.f32 %v739
        %v745 = vsel %vm420, %v697, 0
        %v748 = vsel %vm420, %v701, 0
        %v751 = vsel %vm420, %v705, 0
        %v754 = vsel %vm420, %v709, 0
        %756 = vmatpush.msra.mxu0 0.0
        %757 = vmatpush.msra.mxu0 0.0
        %758 = vmatpush.msra.mxu0 0.0
        %759 = vmatpush.msra.mxu0 0.0
        %760 = vmatpush.msra.mxu0 0.0
        %761 = vmatpush.msra.mxu0 0.0
        %762 = vmatpush.msra.mxu0 0.0
        %763 = vmatpush.msra.mxu0 0.0
        %764 = vmatpush.msra.mxu0 0.0
        %765 = vmatpush.msra.mxu0 0.0
        %766 = vmatpush.msra.mxu0 0.0
        %767 = vmatpush.msra.mxu0 0.0
        %v768 = vand.u32 %v730, 4294901760
        %769 = vmatpush.msra.mxu0 %v768
        %v770 = vand.u32 %v729, 4294901760
        %771 = vmatpush.msra.mxu0 %v770
        %v772 = vand.u32 %v728, 4294901760
        %773 = vmatpush.msra.mxu0 %v772
        %v774 = vand.u32 %v727, 4294901760
        %775 = vmatpush.msra.mxu0 %v774
        %v776 = vand.u32 %v745, 4294901760
        %v777 = vsub.f32 %v745, %v776
        %v778 = vand.u32 %v777, 4294901760
        %v779 = vsub.f32 %v777, %v778
        %v780 = vand.u32 %v779, 4294901760
        %781 = vmatmul.f32.gmra.mxu0 %v780
        %v782 = vpop.f32.mrf.mxu0
        %v783 = vadd.f32 0.0, %v782
        %v784 = vand.u32 %v748, 4294901760
        %v785 = vsub.f32 %v748, %v784
        %v786 = vand.u32 %v785, 4294901760
        %v787 = vsub.f32 %v785, %v786
        %v788 = vand.u32 %v787, 4294901760
        %789 = vmatmul.f32.gmra.mxu0 %v788
        %v790 = vpop.f32.mrf.mxu0
        %v791 = vadd.f32 0.0, %v790
        %v792 = vand.u32 %v751, 4294901760
        %v793 = vsub.f32 %v751, %v792
        %v794 = vand.u32 %v793, 4294901760
        %v795 = vsub.f32 %v793, %v794
        %v796 = vand.u32 %v795, 4294901760
        %797 = vmatmul.f32.gmra.mxu0 %v796
        %v798 = vpop.f32.mrf.mxu0
        %v799 = vadd.f32 0.0, %v798
        %v800 = vand.u32 %v754, 4294901760
        %v801 = vsub.f32 %v754, %v800
        %v802 = vand.u32 %v801, 4294901760
        %v803 = vsub.f32 %v801, %v802
        %v804 = vand.u32 %v803, 4294901760
        %805 = vmatmul.f32.gmra.mxu0 %v804
        %v806 = vpop.f32.mrf.mxu0
        %v807 = vadd.f32 0.0, %v806
        %808 = vdwg.mxu0
        %809 = vmatpush.msra.mxu0 0.0
        %810 = vmatpush.msra.mxu0 0.0
        %811 = vmatpush.msra.mxu0 0.0
        %812 = vmatpush.msra.mxu0 0.0
        %813 = vmatpush.msra.mxu0 0.0
        %814 = vmatpush.msra.mxu0 0.0
        %815 = vmatpush.msra.mxu0 0.0
        %816 = vmatpush.msra.mxu0 0.0
        %817 = vmatpush.msra.mxu0 0.0
        %818 = vmatpush.msra.mxu0 0.0
        %819 = vmatpush.msra.mxu0 0.0
        %820 = vmatpush.msra.mxu0 0.0
        %v821 = vand.u32 %v730, 4294901760
        %v822 = vsub.f32 %v730, %v821
        %v823 = vand.u32 %v822, 4294901760
        %v824 = vsub.f32 %v822, %v823
        %v825 = vand.u32 %v824, 4294901760
        %826 = vmatpush.msra.mxu0 %v825
        %v827 = vand.u32 %v729, 4294901760
        %v828 = vsub.f32 %v729, %v827
        %v829 = vand.u32 %v828, 4294901760
        %v830 = vsub.f32 %v828, %v829
        %v831 = vand.u32 %v830, 4294901760
        %832 = vmatpush.msra.mxu0 %v831
        %v833 = vand.u32 %v728, 4294901760
        %v834 = vsub.f32 %v728, %v833
        %v835 = vand.u32 %v834, 4294901760
        %v836 = vsub.f32 %v834, %v835
        %v837 = vand.u32 %v836, 4294901760
        %838 = vmatpush.msra.mxu0 %v837
        %v839 = vand.u32 %v727, 4294901760
        %v840 = vsub.f32 %v727, %v839
        %v841 = vand.u32 %v840, 4294901760
        %v842 = vsub.f32 %v840, %v841
        %v843 = vand.u32 %v842, 4294901760
        %844 = vmatpush.msra.mxu0 %v843
        %v845 = vand.u32 %v745, 4294901760
        %846 = vmatmul.f32.gmra.mxu0 %v845
        %v847 = vpop.f32.mrf.mxu0
        %v848 = vadd.f32 %v783, %v847
        %v849 = vand.u32 %v748, 4294901760
        %850 = vmatmul.f32.gmra.mxu0 %v849
        %v851 = vpop.f32.mrf.mxu0
        %v852 = vadd.f32 %v791, %v851
        %v853 = vand.u32 %v751, 4294901760
        %854 = vmatmul.f32.gmra.mxu0 %v853
        %v855 = vpop.f32.mrf.mxu0
        %v856 = vadd.f32 %v799, %v855
        %v857 = vand.u32 %v754, 4294901760
        %858 = vmatmul.f32.gmra.mxu0 %v857
        %v859 = vpop.f32.mrf.mxu0
        %v860 = vadd.f32 %v807, %v859
        %861 = vdwg.mxu0
        %862 = vmatpush.msra.mxu0 0.0
        %863 = vmatpush.msra.mxu0 0.0
        %864 = vmatpush.msra.mxu0 0.0
        %865 = vmatpush.msra.mxu0 0.0
        %866 = vmatpush.msra.mxu0 0.0
        %867 = vmatpush.msra.mxu0 0.0
        %868 = vmatpush.msra.mxu0 0.0
        %869 = vmatpush.msra.mxu0 0.0
        %870 = vmatpush.msra.mxu0 0.0
        %871 = vmatpush.msra.mxu0 0.0
        %872 = vmatpush.msra.mxu0 0.0
        %873 = vmatpush.msra.mxu0 0.0
        %v874 = vand.u32 %v730, 4294901760
        %v875 = vsub.f32 %v730, %v874
        %876 = vmatpush.msra.mxu0 %v875
        %v877 = vand.u32 %v729, 4294901760
        %v878 = vsub.f32 %v729, %v877
        %879 = vmatpush.msra.mxu0 %v878
        %v880 = vand.u32 %v728, 4294901760
        %v881 = vsub.f32 %v728, %v880
        %882 = vmatpush.msra.mxu0 %v881
        %v883 = vand.u32 %v727, 4294901760
        %v884 = vsub.f32 %v727, %v883
        %885 = vmatpush.msra.mxu0 %v884
        %v886 = vand.u32 %v745, 4294901760
        %v887 = vsub.f32 %v745, %v886
        %888 = vmatmul.f32.gmra.mxu0 %v887
        %v889 = vpop.f32.mrf.mxu0
        %v890 = vadd.f32 %v848, %v889
        %v891 = vand.u32 %v748, 4294901760
        %v892 = vsub.f32 %v748, %v891
        %893 = vmatmul.f32.gmra.mxu0 %v892
        %v894 = vpop.f32.mrf.mxu0
        %v895 = vadd.f32 %v852, %v894
        %v896 = vand.u32 %v751, 4294901760
        %v897 = vsub.f32 %v751, %v896
        %898 = vmatmul.f32.gmra.mxu0 %v897
        %v899 = vpop.f32.mrf.mxu0
        %v900 = vadd.f32 %v856, %v899
        %v901 = vand.u32 %v754, 4294901760
        %v902 = vsub.f32 %v754, %v901
        %903 = vmatmul.f32.gmra.mxu0 %v902
        %v904 = vpop.f32.mrf.mxu0
        %v905 = vadd.f32 %v860, %v904
        %906 = vdwg.mxu0
        %907 = vmatpush.msra.mxu0 0.0
        %908 = vmatpush.msra.mxu0 0.0
        %909 = vmatpush.msra.mxu0 0.0
        %910 = vmatpush.msra.mxu0 0.0
        %911 = vmatpush.msra.mxu0 0.0
        %912 = vmatpush.msra.mxu0 0.0
        %913 = vmatpush.msra.mxu0 0.0
        %914 = vmatpush.msra.mxu0 0.0
        %915 = vmatpush.msra.mxu0 0.0
        %916 = vmatpush.msra.mxu0 0.0
        %917 = vmatpush.msra.mxu0 0.0
        %918 = vmatpush.msra.mxu0 0.0
        %v919 = vand.u32 %v730, 4294901760
        %920 = vmatpush.msra.mxu0 %v919
        %v921 = vand.u32 %v729, 4294901760
        %922 = vmatpush.msra.mxu0 %v921
        %v923 = vand.u32 %v728, 4294901760
        %924 = vmatpush.msra.mxu0 %v923
        %v925 = vand.u32 %v727, 4294901760
        %926 = vmatpush.msra.mxu0 %v925
        %v927 = vand.u32 %v745, 4294901760
        %v928 = vsub.f32 %v745, %v927
        %v929 = vand.u32 %v928, 4294901760
        %930 = vmatmul.f32.gmra.mxu0 %v929
        %v931 = vpop.f32.mrf.mxu0
        %v932 = vadd.f32 %v890, %v931
        %v933 = vand.u32 %v748, 4294901760
        %v934 = vsub.f32 %v748, %v933
        %v935 = vand.u32 %v934, 4294901760
        %936 = vmatmul.f32.gmra.mxu0 %v935
        %v937 = vpop.f32.mrf.mxu0
        %v938 = vadd.f32 %v895, %v937
        %v939 = vand.u32 %v751, 4294901760
        %v940 = vsub.f32 %v751, %v939
        %v941 = vand.u32 %v940, 4294901760
        %942 = vmatmul.f32.gmra.mxu0 %v941
        %v943 = vpop.f32.mrf.mxu0
        %v944 = vadd.f32 %v900, %v943
        %v945 = vand.u32 %v754, 4294901760
        %v946 = vsub.f32 %v754, %v945
        %v947 = vand.u32 %v946, 4294901760
        %948 = vmatmul.f32.gmra.mxu0 %v947
        %v949 = vpop.f32.mrf.mxu0
        %v950 = vadd.f32 %v905, %v949
        %951 = vdwg.mxu0
        %952 = vmatpush.msra.mxu0 0.0
        %953 = vmatpush.msra.mxu0 0.0
        %954 = vmatpush.msra.mxu0 0.0
        %955 = vmatpush.msra.mxu0 0.0
        %956 = vmatpush.msra.mxu0 0.0
        %957 = vmatpush.msra.mxu0 0.0
        %958 = vmatpush.msra.mxu0 0.0
        %959 = vmatpush.msra.mxu0 0.0
        %960 = vmatpush.msra.mxu0 0.0
        %961 = vmatpush.msra.mxu0 0.0
        %962 = vmatpush.msra.mxu0 0.0
        %963 = vmatpush.msra.mxu0 0.0
        %v964 = vand.u32 %v730, 4294901760
        %v965 = vsub.f32 %v730, %v964
        %v966 = vand.u32 %v965, 4294901760
        %967 = vmatpush.msra.mxu0 %v966
        %v968 = vand.u32 %v729, 4294901760
        %v969 = vsub.f32 %v729, %v968
        %v970 = vand.u32 %v969, 4294901760
        %971 = vmatpush.msra.mxu0 %v970
        %v972 = vand.u32 %v728, 4294901760
        %v973 = vsub.f32 %v728, %v972
        %v974 = vand.u32 %v973, 4294901760
        %975 = vmatpush.msra.mxu0 %v974
        %v976 = vand.u32 %v727, 4294901760
        %v977 = vsub.f32 %v727, %v976
        %v978 = vand.u32 %v977, 4294901760
        %979 = vmatpush.msra.mxu0 %v978
        %v980 = vand.u32 %v745, 4294901760
        %981 = vmatmul.f32.gmra.mxu0 %v980
        %v982 = vpop.f32.mrf.mxu0
        %v983 = vadd.f32 %v932, %v982
        %v984 = vand.u32 %v748, 4294901760
        %985 = vmatmul.f32.gmra.mxu0 %v984
        %v986 = vpop.f32.mrf.mxu0
        %v987 = vadd.f32 %v938, %v986
        %v988 = vand.u32 %v751, 4294901760
        %989 = vmatmul.f32.gmra.mxu0 %v988
        %v990 = vpop.f32.mrf.mxu0
        %v991 = vadd.f32 %v944, %v990
        %v992 = vand.u32 %v754, 4294901760
        %993 = vmatmul.f32.gmra.mxu0 %v992
        %v994 = vpop.f32.mrf.mxu0
        %v995 = vadd.f32 %v950, %v994
        %996 = vdwg.mxu0
        %997 = vmatpush.msra.mxu0 0.0
        %998 = vmatpush.msra.mxu0 0.0
        %999 = vmatpush.msra.mxu0 0.0
        %1000 = vmatpush.msra.mxu0 0.0
        %1001 = vmatpush.msra.mxu0 0.0
        %1002 = vmatpush.msra.mxu0 0.0
        %1003 = vmatpush.msra.mxu0 0.0
        %1004 = vmatpush.msra.mxu0 0.0
        %1005 = vmatpush.msra.mxu0 0.0
        %1006 = vmatpush.msra.mxu0 0.0
        %1007 = vmatpush.msra.mxu0 0.0
        %1008 = vmatpush.msra.mxu0 0.0
        %v1009 = vand.u32 %v730, 4294901760
        %1010 = vmatpush.msra.mxu0 %v1009
        %v1011 = vand.u32 %v729, 4294901760
        %1012 = vmatpush.msra.mxu0 %v1011
        %v1013 = vand.u32 %v728, 4294901760
        %1014 = vmatpush.msra.mxu0 %v1013
        %v1015 = vand.u32 %v727, 4294901760
        %1016 = vmatpush.msra.mxu0 %v1015
        %v1017 = vand.u32 %v745, 4294901760
        %1018 = vmatmul.f32.gmra.mxu0 %v1017
        %v1019 = vpop.f32.mrf.mxu0
        %v1020 = vadd.f32 %v983, %v1019
        %v1021 = vand.u32 %v748, 4294901760
        %1022 = vmatmul.f32.gmra.mxu0 %v1021
        %v1023 = vpop.f32.mrf.mxu0
        %v1024 = vadd.f32 %v987, %v1023
        %v1025 = vand.u32 %v751, 4294901760
        %1026 = vmatmul.f32.gmra.mxu0 %v1025
        %v1027 = vpop.f32.mrf.mxu0
        %v1028 = vadd.f32 %v991, %v1027
        %v1029 = vand.u32 %v754, 4294901760
        %1030 = vmatmul.f32.gmra.mxu0 %v1029
        %v1031 = vpop.f32.mrf.mxu0
        %v1032 = vadd.f32 %v995, %v1031
        %1033 = vdwg.mxu0
        %1034 = vmatpush.msra.mxu0 0.0
        %1035 = vmatpush.msra.mxu0 0.0
        %1036 = vmatpush.msra.mxu0 0.0
        %1037 = vmatpush.msra.mxu0 0.0
        %1038 = vmatpush.msra.mxu0 0.0
        %1039 = vmatpush.msra.mxu0 0.0
        %1040 = vmatpush.msra.mxu0 0.0
        %1041 = vmatpush.msra.mxu0 0.0
        %1042 = vmatpush.msra.mxu0 0.0
        %1043 = vmatpush.msra.mxu0 0.0
        %1044 = vmatpush.msra.mxu0 0.0
        %1045 = vmatpush.msra.mxu0 0.0
        %v1046 = vand.u32 %v743, 4294901760
        %1047 = vmatpush.msra.mxu0 %v1046
        %v1048 = vand.u32 %v742, 4294901760
        %1049 = vmatpush.msra.mxu0 %v1048
        %v1050 = vand.u32 %v741, 4294901760
        %1051 = vmatpush.msra.mxu0 %v1050
        %v1052 = vand.u32 %v740, 4294901760
        %1053 = vmatpush.msra.mxu0 %v1052
        %v1054 = vand.u32 %v745, 4294901760
        %v1055 = vsub.f32 %v745, %v1054
        %v1056 = vand.u32 %v1055, 4294901760
        %v1057 = vsub.f32 %v1055, %v1056
        %v1058 = vand.u32 %v1057, 4294901760
        %1059 = vmatmul.f32.gmra.mxu0 %v1058
        %v1060 = vpop.f32.mrf.mxu0
        %v1061 = vadd.f32 0.0, %v1060
        %v1062 = vand.u32 %v748, 4294901760
        %v1063 = vsub.f32 %v748, %v1062
        %v1064 = vand.u32 %v1063, 4294901760
        %v1065 = vsub.f32 %v1063, %v1064
        %v1066 = vand.u32 %v1065, 4294901760
        %1067 = vmatmul.f32.gmra.mxu0 %v1066
        %v1068 = vpop.f32.mrf.mxu0
        %v1069 = vadd.f32 0.0, %v1068
        %v1070 = vand.u32 %v751, 4294901760
        %v1071 = vsub.f32 %v751, %v1070
        %v1072 = vand.u32 %v1071, 4294901760
        %v1073 = vsub.f32 %v1071, %v1072
        %v1074 = vand.u32 %v1073, 4294901760
        %1075 = vmatmul.f32.gmra.mxu0 %v1074
        %v1076 = vpop.f32.mrf.mxu0
        %v1077 = vadd.f32 0.0, %v1076
        %v1078 = vand.u32 %v754, 4294901760
        %v1079 = vsub.f32 %v754, %v1078
        %v1080 = vand.u32 %v1079, 4294901760
        %v1081 = vsub.f32 %v1079, %v1080
        %v1082 = vand.u32 %v1081, 4294901760
        %1083 = vmatmul.f32.gmra.mxu0 %v1082
        %v1084 = vpop.f32.mrf.mxu0
        %v1085 = vadd.f32 0.0, %v1084
        %1086 = vdwg.mxu0
        %1087 = vmatpush.msra.mxu0 0.0
        %1088 = vmatpush.msra.mxu0 0.0
        %1089 = vmatpush.msra.mxu0 0.0
        %1090 = vmatpush.msra.mxu0 0.0
        %1091 = vmatpush.msra.mxu0 0.0
        %1092 = vmatpush.msra.mxu0 0.0
        %1093 = vmatpush.msra.mxu0 0.0
        %1094 = vmatpush.msra.mxu0 0.0
        %1095 = vmatpush.msra.mxu0 0.0
        %1096 = vmatpush.msra.mxu0 0.0
        %1097 = vmatpush.msra.mxu0 0.0
        %1098 = vmatpush.msra.mxu0 0.0
        %v1099 = vand.u32 %v743, 4294901760
        %v1100 = vsub.f32 %v743, %v1099
        %v1101 = vand.u32 %v1100, 4294901760
        %v1102 = vsub.f32 %v1100, %v1101
        %v1103 = vand.u32 %v1102, 4294901760
        %1104 = vmatpush.msra.mxu0 %v1103
        %v1105 = vand.u32 %v742, 4294901760
        %v1106 = vsub.f32 %v742, %v1105
        %v1107 = vand.u32 %v1106, 4294901760
        %v1108 = vsub.f32 %v1106, %v1107
        %v1109 = vand.u32 %v1108, 4294901760
        %1110 = vmatpush.msra.mxu0 %v1109
        %v1111 = vand.u32 %v741, 4294901760
        %v1112 = vsub.f32 %v741, %v1111
        %v1113 = vand.u32 %v1112, 4294901760
        %v1114 = vsub.f32 %v1112, %v1113
        %v1115 = vand.u32 %v1114, 4294901760
        %1116 = vmatpush.msra.mxu0 %v1115
        %v1117 = vand.u32 %v740, 4294901760
        %v1118 = vsub.f32 %v740, %v1117
        %v1119 = vand.u32 %v1118, 4294901760
        %v1120 = vsub.f32 %v1118, %v1119
        %v1121 = vand.u32 %v1120, 4294901760
        %1122 = vmatpush.msra.mxu0 %v1121
        %v1123 = vand.u32 %v745, 4294901760
        %1124 = vmatmul.f32.gmra.mxu0 %v1123
        %v1125 = vpop.f32.mrf.mxu0
        %v1126 = vadd.f32 %v1061, %v1125
        %v1127 = vand.u32 %v748, 4294901760
        %1128 = vmatmul.f32.gmra.mxu0 %v1127
        %v1129 = vpop.f32.mrf.mxu0
        %v1130 = vadd.f32 %v1069, %v1129
        %v1131 = vand.u32 %v751, 4294901760
        %1132 = vmatmul.f32.gmra.mxu0 %v1131
        %v1133 = vpop.f32.mrf.mxu0
        %v1134 = vadd.f32 %v1077, %v1133
        %v1135 = vand.u32 %v754, 4294901760
        %1136 = vmatmul.f32.gmra.mxu0 %v1135
        %v1137 = vpop.f32.mrf.mxu0
        %v1138 = vadd.f32 %v1085, %v1137
        %1139 = vdwg.mxu0
        %1140 = vmatpush.msra.mxu0 0.0
        %1141 = vmatpush.msra.mxu0 0.0
        %1142 = vmatpush.msra.mxu0 0.0
        %1143 = vmatpush.msra.mxu0 0.0
        %1144 = vmatpush.msra.mxu0 0.0
        %1145 = vmatpush.msra.mxu0 0.0
        %1146 = vmatpush.msra.mxu0 0.0
        %1147 = vmatpush.msra.mxu0 0.0
        %1148 = vmatpush.msra.mxu0 0.0
        %1149 = vmatpush.msra.mxu0 0.0
        %1150 = vmatpush.msra.mxu0 0.0
        %1151 = vmatpush.msra.mxu0 0.0
        %v1152 = vand.u32 %v743, 4294901760
        %v1153 = vsub.f32 %v743, %v1152
        %1154 = vmatpush.msra.mxu0 %v1153
        %v1155 = vand.u32 %v742, 4294901760
        %v1156 = vsub.f32 %v742, %v1155
        %1157 = vmatpush.msra.mxu0 %v1156
        %v1158 = vand.u32 %v741, 4294901760
        %v1159 = vsub.f32 %v741, %v1158
        %1160 = vmatpush.msra.mxu0 %v1159
        %v1161 = vand.u32 %v740, 4294901760
        %v1162 = vsub.f32 %v740, %v1161
        %1163 = vmatpush.msra.mxu0 %v1162
        %v1164 = vand.u32 %v745, 4294901760
        %v1165 = vsub.f32 %v745, %v1164
        %1166 = vmatmul.f32.gmra.mxu0 %v1165
        %v1167 = vpop.f32.mrf.mxu0
        %v1168 = vadd.f32 %v1126, %v1167
        %v1169 = vand.u32 %v748, 4294901760
        %v1170 = vsub.f32 %v748, %v1169
        %1171 = vmatmul.f32.gmra.mxu0 %v1170
        %v1172 = vpop.f32.mrf.mxu0
        %v1173 = vadd.f32 %v1130, %v1172
        %v1174 = vand.u32 %v751, 4294901760
        %v1175 = vsub.f32 %v751, %v1174
        %1176 = vmatmul.f32.gmra.mxu0 %v1175
        %v1177 = vpop.f32.mrf.mxu0
        %v1178 = vadd.f32 %v1134, %v1177
        %v1179 = vand.u32 %v754, 4294901760
        %v1180 = vsub.f32 %v754, %v1179
        %1181 = vmatmul.f32.gmra.mxu0 %v1180
        %v1182 = vpop.f32.mrf.mxu0
        %v1183 = vadd.f32 %v1138, %v1182
        %1184 = vdwg.mxu0
        %1185 = vmatpush.msra.mxu0 0.0
        %1186 = vmatpush.msra.mxu0 0.0
        %1187 = vmatpush.msra.mxu0 0.0
        %1188 = vmatpush.msra.mxu0 0.0
        %1189 = vmatpush.msra.mxu0 0.0
        %1190 = vmatpush.msra.mxu0 0.0
        %1191 = vmatpush.msra.mxu0 0.0
        %1192 = vmatpush.msra.mxu0 0.0
        %1193 = vmatpush.msra.mxu0 0.0
        %1194 = vmatpush.msra.mxu0 0.0
        %1195 = vmatpush.msra.mxu0 0.0
        %1196 = vmatpush.msra.mxu0 0.0
        %v1197 = vand.u32 %v743, 4294901760
        %1198 = vmatpush.msra.mxu0 %v1197
        %v1199 = vand.u32 %v742, 4294901760
        %1200 = vmatpush.msra.mxu0 %v1199
        %v1201 = vand.u32 %v741, 4294901760
        %1202 = vmatpush.msra.mxu0 %v1201
        %v1203 = vand.u32 %v740, 4294901760
        %1204 = vmatpush.msra.mxu0 %v1203
        %v1205 = vand.u32 %v745, 4294901760
        %v1206 = vsub.f32 %v745, %v1205
        %v1207 = vand.u32 %v1206, 4294901760
        %1208 = vmatmul.f32.gmra.mxu0 %v1207
        %v1209 = vpop.f32.mrf.mxu0
        %v1210 = vadd.f32 %v1168, %v1209
        %v1211 = vand.u32 %v748, 4294901760
        %v1212 = vsub.f32 %v748, %v1211
        %v1213 = vand.u32 %v1212, 4294901760
        %1214 = vmatmul.f32.gmra.mxu0 %v1213
        %v1215 = vpop.f32.mrf.mxu0
        %v1216 = vadd.f32 %v1173, %v1215
        %v1217 = vand.u32 %v751, 4294901760
        %v1218 = vsub.f32 %v751, %v1217
        %v1219 = vand.u32 %v1218, 4294901760
        %1220 = vmatmul.f32.gmra.mxu0 %v1219
        %v1221 = vpop.f32.mrf.mxu0
        %v1222 = vadd.f32 %v1178, %v1221
        %v1223 = vand.u32 %v754, 4294901760
        %v1224 = vsub.f32 %v754, %v1223
        %v1225 = vand.u32 %v1224, 4294901760
        %1226 = vmatmul.f32.gmra.mxu0 %v1225
        %v1227 = vpop.f32.mrf.mxu0
        %v1228 = vadd.f32 %v1183, %v1227
        %1229 = vdwg.mxu0
        %1230 = vmatpush.msra.mxu0 0.0
        %1231 = vmatpush.msra.mxu0 0.0
        %1232 = vmatpush.msra.mxu0 0.0
        %1233 = vmatpush.msra.mxu0 0.0
        %1234 = vmatpush.msra.mxu0 0.0
        %1235 = vmatpush.msra.mxu0 0.0
        %1236 = vmatpush.msra.mxu0 0.0
        %1237 = vmatpush.msra.mxu0 0.0
        %1238 = vmatpush.msra.mxu0 0.0
        %1239 = vmatpush.msra.mxu0 0.0
        %1240 = vmatpush.msra.mxu0 0.0
        %1241 = vmatpush.msra.mxu0 0.0
        %v1242 = vand.u32 %v743, 4294901760
        %v1243 = vsub.f32 %v743, %v1242
        %v1244 = vand.u32 %v1243, 4294901760
        %1245 = vmatpush.msra.mxu0 %v1244
        %v1246 = vand.u32 %v742, 4294901760
        %v1247 = vsub.f32 %v742, %v1246
        %v1248 = vand.u32 %v1247, 4294901760
        %1249 = vmatpush.msra.mxu0 %v1248
        %v1250 = vand.u32 %v741, 4294901760
        %v1251 = vsub.f32 %v741, %v1250
        %v1252 = vand.u32 %v1251, 4294901760
        %1253 = vmatpush.msra.mxu0 %v1252
        %v1254 = vand.u32 %v740, 4294901760
        %v1255 = vsub.f32 %v740, %v1254
        %v1256 = vand.u32 %v1255, 4294901760
        %1257 = vmatpush.msra.mxu0 %v1256
        %v1258 = vand.u32 %v745, 4294901760
        %1259 = vmatmul.f32.gmra.mxu0 %v1258
        %v1260 = vpop.f32.mrf.mxu0
        %v1261 = vadd.f32 %v1210, %v1260
        %v1262 = vand.u32 %v748, 4294901760
        %1263 = vmatmul.f32.gmra.mxu0 %v1262
        %v1264 = vpop.f32.mrf.mxu0
        %v1265 = vadd.f32 %v1216, %v1264
        %v1266 = vand.u32 %v751, 4294901760
        %1267 = vmatmul.f32.gmra.mxu0 %v1266
        %v1268 = vpop.f32.mrf.mxu0
        %v1269 = vadd.f32 %v1222, %v1268
        %v1270 = vand.u32 %v754, 4294901760
        %1271 = vmatmul.f32.gmra.mxu0 %v1270
        %v1272 = vpop.f32.mrf.mxu0
        %v1273 = vadd.f32 %v1228, %v1272
        %1274 = vdwg.mxu0
        %1275 = vmatpush.msra.mxu0 0.0
        %1276 = vmatpush.msra.mxu0 0.0
        %1277 = vmatpush.msra.mxu0 0.0
        %1278 = vmatpush.msra.mxu0 0.0
        %1279 = vmatpush.msra.mxu0 0.0
        %1280 = vmatpush.msra.mxu0 0.0
        %1281 = vmatpush.msra.mxu0 0.0
        %1282 = vmatpush.msra.mxu0 0.0
        %1283 = vmatpush.msra.mxu0 0.0
        %1284 = vmatpush.msra.mxu0 0.0
        %1285 = vmatpush.msra.mxu0 0.0
        %1286 = vmatpush.msra.mxu0 0.0
        %v1287 = vand.u32 %v743, 4294901760
        %1288 = vmatpush.msra.mxu0 %v1287
        %v1289 = vand.u32 %v742, 4294901760
        %1290 = vmatpush.msra.mxu0 %v1289
        %v1291 = vand.u32 %v741, 4294901760
        %1292 = vmatpush.msra.mxu0 %v1291
        %v1293 = vand.u32 %v740, 4294901760
        %1294 = vmatpush.msra.mxu0 %v1293
        %v1295 = vand.u32 %v745, 4294901760
        %1296 = vmatmul.f32.gmra.mxu0 %v1295
        %v1297 = vpop.f32.mrf.mxu0
        %v1298 = vadd.f32 %v1261, %v1297
        %v1299 = vand.u32 %v748, 4294901760
        %1300 = vmatmul.f32.gmra.mxu0 %v1299
        %v1301 = vpop.f32.mrf.mxu0
        %v1302 = vadd.f32 %v1265, %v1301
        %v1303 = vand.u32 %v751, 4294901760
        %1304 = vmatmul.f32.gmra.mxu0 %v1303
        %v1305 = vpop.f32.mrf.mxu0
        %v1306 = vadd.f32 %v1269, %v1305
        %v1307 = vand.u32 %v754, 4294901760
        %1308 = vmatmul.f32.gmra.mxu0 %v1307
        %v1309 = vpop.f32.mrf.mxu0
        %v1310 = vadd.f32 %v1273, %v1309
        %1311 = vdwg.mxu0
        %v1312 = vld [vmem:[#allocation6] sm:$0xff]
        %v1313 = vld [vmem:[#allocation6 + $0x8] sm:$0xff]
        %v1314 = vld [vmem:[#allocation6 + $0x10] sm:$0xff]
        %v1315 = vld [vmem:[#allocation6 + $0x18] sm:$0xff]
        %vm1316 = vcmask 785408
        %v1318 = vsel %vm1316, %v1312, 0
        %v1321 = vsel %vm1316, %v1313, 0
        %v1324 = vsel %vm1316, %v1314, 0
        %v1327 = vsel %vm1316, %v1315, 0
        %1329 = vmatpush.msra.mxu0 0.0
        %1330 = vmatpush.msra.mxu0 0.0
        %1331 = vmatpush.msra.mxu0 0.0
        %1332 = vmatpush.msra.mxu0 0.0
        %v1333 = vand.u32 %v1310, 4294901760
        %1334 = vmatpush.msra.mxu0 %v1333
        %v1335 = vand.u32 %v1306, 4294901760
        %1336 = vmatpush.msra.mxu0 %v1335
        %v1337 = vand.u32 %v1302, 4294901760
        %1338 = vmatpush.msra.mxu0 %v1337
        %v1339 = vand.u32 %v1298, 4294901760
        %1340 = vmatpush.msra.mxu0 %v1339
        %v1341 = vand.u32 %v709, 4294901760
        %1342 = vmatpush.msra.mxu0 %v1341
        %v1343 = vand.u32 %v705, 4294901760
        %1344 = vmatpush.msra.mxu0 %v1343
        %v1345 = vand.u32 %v701, 4294901760
        %1346 = vmatpush.msra.mxu0 %v1345
        %v1347 = vand.u32 %v697, 4294901760
        %1348 = vmatpush.msra.mxu0 %v1347
        %v1349 = vand.u32 %v1032, 4294901760
        %1350 = vmatpush.msra.mxu0 %v1349
        %v1351 = vand.u32 %v1028, 4294901760
        %1352 = vmatpush.msra.mxu0 %v1351
        %v1353 = vand.u32 %v1024, 4294901760
        %1354 = vmatpush.msra.mxu0 %v1353
        %v1355 = vand.u32 %v1020, 4294901760
        %1356 = vmatpush.msra.mxu0 %v1355
        %v1357 = vand.u32 %v1318, 4294901760
        %v1358 = vsub.f32 %v1318, %v1357
        %v1359 = vand.u32 %v1358, 4294901760
        %v1360 = vsub.f32 %v1358, %v1359
        %v1361 = vand.u32 %v1360, 4294901760
        %1362 = vmatmul.f32.gmra.mxu0 %v1361
        %v1363 = vpop.f32.mrf.mxu0
        %v1364 = vadd.f32 0.0, %v1363
        %v1365 = vand.u32 %v1321, 4294901760
        %v1366 = vsub.f32 %v1321, %v1365
        %v1367 = vand.u32 %v1366, 4294901760
        %v1368 = vsub.f32 %v1366, %v1367
        %v1369 = vand.u32 %v1368, 4294901760
        %1370 = vmatmul.f32.gmra.mxu0 %v1369
        %v1371 = vpop.f32.mrf.mxu0
        %v1372 = vadd.f32 0.0, %v1371
        %v1373 = vand.u32 %v1324, 4294901760
        %v1374 = vsub.f32 %v1324, %v1373
        %v1375 = vand.u32 %v1374, 4294901760
        %v1376 = vsub.f32 %v1374, %v1375
        %v1377 = vand.u32 %v1376, 4294901760
        %1378 = vmatmul.f32.gmra.mxu0 %v1377
        %v1379 = vpop.f32.mrf.mxu0
        %v1380 = vadd.f32 0.0, %v1379
        %v1381 = vand.u32 %v1327, 4294901760
        %v1382 = vsub.f32 %v1327, %v1381
        %v1383 = vand.u32 %v1382, 4294901760
        %v1384 = vsub.f32 %v1382, %v1383
        %v1385 = vand.u32 %v1384, 4294901760
        %1386 = vmatmul.f32.gmra.mxu0 %v1385
        %v1387 = vpop.f32.mrf.mxu0
        %v1388 = vadd.f32 0.0, %v1387
        %1389 = vdwg.mxu0
        %1390 = vmatpush.msra.mxu0 0.0
        %1391 = vmatpush.msra.mxu0 0.0
        %1392 = vmatpush.msra.mxu0 0.0
        %1393 = vmatpush.msra.mxu0 0.0
        %v1394 = vand.u32 %v1310, 4294901760
        %v1395 = vsub.f32 %v1310, %v1394
        %v1396 = vand.u32 %v1395, 4294901760
        %v1397 = vsub.f32 %v1395, %v1396
        %v1398 = vand.u32 %v1397, 4294901760
        %1399 = vmatpush.msra.mxu0 %v1398
        %v1400 = vand.u32 %v1306, 4294901760
        %v1401 = vsub.f32 %v1306, %v1400
        %v1402 = vand.u32 %v1401, 4294901760
        %v1403 = vsub.f32 %v1401, %v1402
        %v1404 = vand.u32 %v1403, 4294901760
        %1405 = vmatpush.msra.mxu0 %v1404
        %v1406 = vand.u32 %v1302, 4294901760
        %v1407 = vsub.f32 %v1302, %v1406
        %v1408 = vand.u32 %v1407, 4294901760
        %v1409 = vsub.f32 %v1407, %v1408
        %v1410 = vand.u32 %v1409, 4294901760
        %1411 = vmatpush.msra.mxu0 %v1410
        %v1412 = vand.u32 %v1298, 4294901760
        %v1413 = vsub.f32 %v1298, %v1412
        %v1414 = vand.u32 %v1413, 4294901760
        %v1415 = vsub.f32 %v1413, %v1414
        %v1416 = vand.u32 %v1415, 4294901760
        %1417 = vmatpush.msra.mxu0 %v1416
        %v1418 = vand.u32 %v709, 4294901760
        %v1419 = vsub.f32 %v709, %v1418
        %v1420 = vand.u32 %v1419, 4294901760
        %v1421 = vsub.f32 %v1419, %v1420
        %v1422 = vand.u32 %v1421, 4294901760
        %1423 = vmatpush.msra.mxu0 %v1422
        %v1424 = vand.u32 %v705, 4294901760
        %v1425 = vsub.f32 %v705, %v1424
        %v1426 = vand.u32 %v1425, 4294901760
        %v1427 = vsub.f32 %v1425, %v1426
        %v1428 = vand.u32 %v1427, 4294901760
        %1429 = vmatpush.msra.mxu0 %v1428
        %v1430 = vand.u32 %v701, 4294901760
        %v1431 = vsub.f32 %v701, %v1430
        %v1432 = vand.u32 %v1431, 4294901760
        %v1433 = vsub.f32 %v1431, %v1432
        %v1434 = vand.u32 %v1433, 4294901760
        %1435 = vmatpush.msra.mxu0 %v1434
        %v1436 = vand.u32 %v697, 4294901760
        %v1437 = vsub.f32 %v697, %v1436
        %v1438 = vand.u32 %v1437, 4294901760
        %v1439 = vsub.f32 %v1437, %v1438
        %v1440 = vand.u32 %v1439, 4294901760
        %1441 = vmatpush.msra.mxu0 %v1440
        %v1442 = vand.u32 %v1032, 4294901760
        %v1443 = vsub.f32 %v1032, %v1442
        %v1444 = vand.u32 %v1443, 4294901760
        %v1445 = vsub.f32 %v1443, %v1444
        %v1446 = vand.u32 %v1445, 4294901760
        %1447 = vmatpush.msra.mxu0 %v1446
        %v1448 = vand.u32 %v1028, 4294901760
        %v1449 = vsub.f32 %v1028, %v1448
        %v1450 = vand.u32 %v1449, 4294901760
        %v1451 = vsub.f32 %v1449, %v1450
        %v1452 = vand.u32 %v1451, 4294901760
        %1453 = vmatpush.msra.mxu0 %v1452
        %v1454 = vand.u32 %v1024, 4294901760
        %v1455 = vsub.f32 %v1024, %v1454
        %v1456 = vand.u32 %v1455, 4294901760
        %v1457 = vsub.f32 %v1455, %v1456
        %v1458 = vand.u32 %v1457, 4294901760
        %1459 = vmatpush.msra.mxu0 %v1458
        %v1460 = vand.u32 %v1020, 4294901760
        %v1461 = vsub.f32 %v1020, %v1460
        %v1462 = vand.u32 %v1461, 4294901760
        %v1463 = vsub.f32 %v1461, %v1462
        %v1464 = vand.u32 %v1463, 4294901760
        %1465 = vmatpush.msra.mxu0 %v1464
        %v1466 = vand.u32 %v1318, 4294901760
        %1467 = vmatmul.f32.gmra.mxu0 %v1466
        %v1468 = vpop.f32.mrf.mxu0
        %v1469 = vadd.f32 %v1364, %v1468
        %v1470 = vand.u32 %v1321, 4294901760
        %1471 = vmatmul.f32.gmra.mxu0 %v1470
        %v1472 = vpop.f32.mrf.mxu0
        %v1473 = vadd.f32 %v1372, %v1472
        %v1474 = vand.u32 %v1324, 4294901760
        %1475 = vmatmul.f32.gmra.mxu0 %v1474
        %v1476 = vpop.f32.mrf.mxu0
        %v1477 = vadd.f32 %v1380, %v1476
        %v1478 = vand.u32 %v1327, 4294901760
        %1479 = vmatmul.f32.gmra.mxu0 %v1478
        %v1480 = vpop.f32.mrf.mxu0
        %v1481 = vadd.f32 %v1388, %v1480
        %1482 = vdwg.mxu0
        %1483 = vmatpush.msra.mxu0 0.0
        %1484 = vmatpush.msra.mxu0 0.0
        %1485 = vmatpush.msra.mxu0 0.0
        %1486 = vmatpush.msra.mxu0 0.0
        %v1487 = vand.u32 %v1310, 4294901760
        %v1488 = vsub.f32 %v1310, %v1487
        %1489 = vmatpush.msra.mxu0 %v1488
        %v1490 = vand.u32 %v1306, 4294901760
        %v1491 = vsub.f32 %v1306, %v1490
        %1492 = vmatpush.msra.mxu0 %v1491
        %v1493 = vand.u32 %v1302, 4294901760
        %v1494 = vsub.f32 %v1302, %v1493
        %1495 = vmatpush.msra.mxu0 %v1494
        %v1496 = vand.u32 %v1298, 4294901760
        %v1497 = vsub.f32 %v1298, %v1496
        %1498 = vmatpush.msra.mxu0 %v1497
        %v1499 = vand.u32 %v709, 4294901760
        %v1500 = vsub.f32 %v709, %v1499
        %1501 = vmatpush.msra.mxu0 %v1500
        %v1502 = vand.u32 %v705, 4294901760
        %v1503 = vsub.f32 %v705, %v1502
        %1504 = vmatpush.msra.mxu0 %v1503
        %v1505 = vand.u32 %v701, 4294901760
        %v1506 = vsub.f32 %v701, %v1505
        %1507 = vmatpush.msra.mxu0 %v1506
        %v1508 = vand.u32 %v697, 4294901760
        %v1509 = vsub.f32 %v697, %v1508
        %1510 = vmatpush.msra.mxu0 %v1509
        %v1511 = vand.u32 %v1032, 4294901760
        %v1512 = vsub.f32 %v1032, %v1511
        %1513 = vmatpush.msra.mxu0 %v1512
        %v1514 = vand.u32 %v1028, 4294901760
        %v1515 = vsub.f32 %v1028, %v1514
        %1516 = vmatpush.msra.mxu0 %v1515
        %v1517 = vand.u32 %v1024, 4294901760
        %v1518 = vsub.f32 %v1024, %v1517
        %1519 = vmatpush.msra.mxu0 %v1518
        %v1520 = vand.u32 %v1020, 4294901760
        %v1521 = vsub.f32 %v1020, %v1520
        %1522 = vmatpush.msra.mxu0 %v1521
        %v1523 = vand.u32 %v1318, 4294901760
        %v1524 = vsub.f32 %v1318, %v1523
        %1525 = vmatmul.f32.gmra.mxu0 %v1524
        %v1526 = vpop.f32.mrf.mxu0
        %v1527 = vadd.f32 %v1469, %v1526
        %v1528 = vand.u32 %v1321, 4294901760
        %v1529 = vsub.f32 %v1321, %v1528
        %1530 = vmatmul.f32.gmra.mxu0 %v1529
        %v1531 = vpop.f32.mrf.mxu0
        %v1532 = vadd.f32 %v1473, %v1531
        %v1533 = vand.u32 %v1324, 4294901760
        %v1534 = vsub.f32 %v1324, %v1533
        %1535 = vmatmul.f32.gmra.mxu0 %v1534
        %v1536 = vpop.f32.mrf.mxu0
        %v1537 = vadd.f32 %v1477, %v1536
        %v1538 = vand.u32 %v1327, 4294901760
        %v1539 = vsub.f32 %v1327, %v1538
        %1540 = vmatmul.f32.gmra.mxu0 %v1539
        %v1541 = vpop.f32.mrf.mxu0
        %v1542 = vadd.f32 %v1481, %v1541
        %1543 = vdwg.mxu0
        %1544 = vmatpush.msra.mxu0 0.0
        %1545 = vmatpush.msra.mxu0 0.0
        %1546 = vmatpush.msra.mxu0 0.0
        %1547 = vmatpush.msra.mxu0 0.0
        %v1548 = vand.u32 %v1310, 4294901760
        %1549 = vmatpush.msra.mxu0 %v1548
        %v1550 = vand.u32 %v1306, 4294901760
        %1551 = vmatpush.msra.mxu0 %v1550
        %v1552 = vand.u32 %v1302, 4294901760
        %1553 = vmatpush.msra.mxu0 %v1552
        %v1554 = vand.u32 %v1298, 4294901760
        %1555 = vmatpush.msra.mxu0 %v1554
        %v1556 = vand.u32 %v709, 4294901760
        %1557 = vmatpush.msra.mxu0 %v1556
        %v1558 = vand.u32 %v705, 4294901760
        %1559 = vmatpush.msra.mxu0 %v1558
        %v1560 = vand.u32 %v701, 4294901760
        %1561 = vmatpush.msra.mxu0 %v1560
        %v1562 = vand.u32 %v697, 4294901760
        %1563 = vmatpush.msra.mxu0 %v1562
        %v1564 = vand.u32 %v1032, 4294901760
        %1565 = vmatpush.msra.mxu0 %v1564
        %v1566 = vand.u32 %v1028, 4294901760
        %1567 = vmatpush.msra.mxu0 %v1566
        %v1568 = vand.u32 %v1024, 4294901760
        %1569 = vmatpush.msra.mxu0 %v1568
        %v1570 = vand.u32 %v1020, 4294901760
        %1571 = vmatpush.msra.mxu0 %v1570
        %v1572 = vand.u32 %v1318, 4294901760
        %v1573 = vsub.f32 %v1318, %v1572
        %v1574 = vand.u32 %v1573, 4294901760
        %1575 = vmatmul.f32.gmra.mxu0 %v1574
        %v1576 = vpop.f32.mrf.mxu0
        %v1577 = vadd.f32 %v1527, %v1576
        %v1578 = vand.u32 %v1321, 4294901760
        %v1579 = vsub.f32 %v1321, %v1578
        %v1580 = vand.u32 %v1579, 4294901760
        %1581 = vmatmul.f32.gmra.mxu0 %v1580
        %v1582 = vpop.f32.mrf.mxu0
        %v1583 = vadd.f32 %v1532, %v1582
        %v1584 = vand.u32 %v1324, 4294901760
        %v1585 = vsub.f32 %v1324, %v1584
        %v1586 = vand.u32 %v1585, 4294901760
        %1587 = vmatmul.f32.gmra.mxu0 %v1586
        %v1588 = vpop.f32.mrf.mxu0
        %v1589 = vadd.f32 %v1537, %v1588
        %v1590 = vand.u32 %v1327, 4294901760
        %v1591 = vsub.f32 %v1327, %v1590
        %v1592 = vand.u32 %v1591, 4294901760
        %1593 = vmatmul.f32.gmra.mxu0 %v1592
        %v1594 = vpop.f32.mrf.mxu0
        %v1595 = vadd.f32 %v1542, %v1594
        %1596 = vdwg.mxu0
        %1597 = vmatpush.msra.mxu0 0.0
        %1598 = vmatpush.msra.mxu0 0.0
        %1599 = vmatpush.msra.mxu0 0.0
        %1600 = vmatpush.msra.mxu0 0.0
        %v1601 = vand.u32 %v1310, 4294901760
        %v1602 = vsub.f32 %v1310, %v1601
        %v1603 = vand.u32 %v1602, 4294901760
        %1604 = vmatpush.msra.mxu0 %v1603
        %v1605 = vand.u32 %v1306, 4294901760
        %v1606 = vsub.f32 %v1306, %v1605
        %v1607 = vand.u32 %v1606, 4294901760
        %1608 = vmatpush.msra.mxu0 %v1607
        %v1609 = vand.u32 %v1302, 4294901760
        %v1610 = vsub.f32 %v1302, %v1609
        %v1611 = vand.u32 %v1610, 4294901760
        %1612 = vmatpush.msra.mxu0 %v1611
        %v1613 = vand.u32 %v1298, 4294901760
        %v1614 = vsub.f32 %v1298, %v1613
        %v1615 = vand.u32 %v1614, 4294901760
        %1616 = vmatpush.msra.mxu0 %v1615
        %v1617 = vand.u32 %v709, 4294901760
        %v1618 = vsub.f32 %v709, %v1617
        %v1619 = vand.u32 %v1618, 4294901760
        %1620 = vmatpush.msra.mxu0 %v1619
        %v1621 = vand.u32 %v705, 4294901760
        %v1622 = vsub.f32 %v705, %v1621
        %v1623 = vand.u32 %v1622, 4294901760
        %1624 = vmatpush.msra.mxu0 %v1623
        %v1625 = vand.u32 %v701, 4294901760
        %v1626 = vsub.f32 %v701, %v1625
        %v1627 = vand.u32 %v1626, 4294901760
        %1628 = vmatpush.msra.mxu0 %v1627
        %v1629 = vand.u32 %v697, 4294901760
        %v1630 = vsub.f32 %v697, %v1629
        %v1631 = vand.u32 %v1630, 4294901760
        %1632 = vmatpush.msra.mxu0 %v1631
        %v1633 = vand.u32 %v1032, 4294901760
        %v1634 = vsub.f32 %v1032, %v1633
        %v1635 = vand.u32 %v1634, 4294901760
        %1636 = vmatpush.msra.mxu0 %v1635
        %v1637 = vand.u32 %v1028, 4294901760
        %v1638 = vsub.f32 %v1028, %v1637
        %v1639 = vand.u32 %v1638, 4294901760
        %1640 = vmatpush.msra.mxu0 %v1639
        %v1641 = vand.u32 %v1024, 4294901760
        %v1642 = vsub.f32 %v1024, %v1641
        %v1643 = vand.u32 %v1642, 4294901760
        %1644 = vmatpush.msra.mxu0 %v1643
        %v1645 = vand.u32 %v1020, 4294901760
        %v1646 = vsub.f32 %v1020, %v1645
        %v1647 = vand.u32 %v1646, 4294901760
        %1648 = vmatpush.msra.mxu0 %v1647
        %v1649 = vand.u32 %v1318, 4294901760
        %1650 = vmatmul.f32.gmra.mxu0 %v1649
        %v1651 = vpop.f32.mrf.mxu0
        %v1652 = vadd.f32 %v1577, %v1651
        %v1653 = vand.u32 %v1321, 4294901760
        %1654 = vmatmul.f32.gmra.mxu0 %v1653
        %v1655 = vpop.f32.mrf.mxu0
        %v1656 = vadd.f32 %v1583, %v1655
        %v1657 = vand.u32 %v1324, 4294901760
        %1658 = vmatmul.f32.gmra.mxu0 %v1657
        %v1659 = vpop.f32.mrf.mxu0
        %v1660 = vadd.f32 %v1589, %v1659
        %v1661 = vand.u32 %v1327, 4294901760
        %1662 = vmatmul.f32.gmra.mxu0 %v1661
        %v1663 = vpop.f32.mrf.mxu0
        %v1664 = vadd.f32 %v1595, %v1663
        %1665 = vdwg.mxu0
        %1666 = vmatpush.msra.mxu0 0.0
        %1667 = vmatpush.msra.mxu0 0.0
        %1668 = vmatpush.msra.mxu0 0.0
        %1669 = vmatpush.msra.mxu0 0.0
        %v1670 = vand.u32 %v1310, 4294901760
        %1671 = vmatpush.msra.mxu0 %v1670
        %v1672 = vand.u32 %v1306, 4294901760
        %1673 = vmatpush.msra.mxu0 %v1672
        %v1674 = vand.u32 %v1302, 4294901760
        %1675 = vmatpush.msra.mxu0 %v1674
        %v1676 = vand.u32 %v1298, 4294901760
        %1677 = vmatpush.msra.mxu0 %v1676
        %v1678 = vand.u32 %v709, 4294901760
        %1679 = vmatpush.msra.mxu0 %v1678
        %v1680 = vand.u32 %v705, 4294901760
        %1681 = vmatpush.msra.mxu0 %v1680
        %v1682 = vand.u32 %v701, 4294901760
        %1683 = vmatpush.msra.mxu0 %v1682
        %v1684 = vand.u32 %v697, 4294901760
        %1685 = vmatpush.msra.mxu0 %v1684
        %v1686 = vand.u32 %v1032, 4294901760
        %1687 = vmatpush.msra.mxu0 %v1686
        %v1688 = vand.u32 %v1028, 4294901760
        %1689 = vmatpush.msra.mxu0 %v1688
        %v1690 = vand.u32 %v1024, 4294901760
        %1691 = vmatpush.msra.mxu0 %v1690
        %v1692 = vand.u32 %v1020, 4294901760
        %1693 = vmatpush.msra.mxu0 %v1692
        %v1694 = vand.u32 %v1318, 4294901760
        %1695 = vmatmul.f32.gmra.mxu0 %v1694
        %v1696 = vpop.f32.mrf.mxu0
        %v1697 = vadd.f32 %v1652, %v1696
        %v1698 = vand.u32 %v1321, 4294901760
        %1699 = vmatmul.f32.gmra.mxu0 %v1698
        %v1700 = vpop.f32.mrf.mxu0
        %v1701 = vadd.f32 %v1656, %v1700
        %v1702 = vand.u32 %v1324, 4294901760
        %1703 = vmatmul.f32.gmra.mxu0 %v1702
        %v1704 = vpop.f32.mrf.mxu0
        %v1705 = vadd.f32 %v1660, %v1704
        %v1706 = vand.u32 %v1327, 4294901760
        %1707 = vmatmul.f32.gmra.mxu0 %v1706
        %v1708 = vpop.f32.mrf.mxu0
        %v1709 = vadd.f32 %v1664, %v1708
        %1710 = vdwg.mxu0
        %v1711 = vsub.f32 0.0, %v1697
        %v1712 = vsub.f32 0.0, %v1701
        %v1713 = vsub.f32 0.0, %v1705
        %v1714 = vsub.f32 0.0, %v1709
        %v1715 = vmul.f32 %v1711, 1.442695
        %v1716 = vpow.pop %v1715
        %v1717 = vmul.f32 %v1712, 1.442695
        %v1718 = vpow.pop %v1717
        %v1719 = vmul.f32 %v1713, 1.442695
        %v1720 = vpow.pop %v1719
        %v1721 = vmul.f32 %v1714, 1.442695
        %v1722 = vpow.pop %v1721
        %v1723 = vadd.f32 %v1716, 1.0
        %v1724 = vadd.f32 %v1718, 1.0
        %v1725 = vadd.f32 %v1720, 1.0
        %v1726 = vadd.f32 %v1722, 1.0
        %v1727 = vrcp.pop %v1723
        %v1728 = vmul.f32 %v1723, %v1727
        %v1729 = vsub.f32 1.0, %v1728
        %v1730 = vmul.f32 %v1727, %v1729
        %v1731 = vadd.f32 %v1727, %v1730
        %vm1732 = vweird.f32 %v1723
        %vm1733 = vweird.f32 %v1727
        %vm1734 = vmor %vm1732, %vm1733
        %v1735 = vsel %vm1734, %v1727, %v1731
        %v1736 = vand.u32 2147483647, %v1723
        %vm1737 = vcmp.eq.f32.partialorder %v1736, 8.507059e+37
        %v1738 = vand.u32 %v1723, 2147483648
        %v1739 = vor.u32 1.1754944e-38, %v1738
        %v1740 = vsel %vm1737, %v1739, %v1735
        %v1741 = vmul.f32 1.0, %v1740
        %v1742 = vrcp.pop %v1724
        %v1743 = vmul.f32 %v1724, %v1742
        %v1744 = vsub.f32 1.0, %v1743
        %v1745 = vmul.f32 %v1742, %v1744
        %v1746 = vadd.f32 %v1742, %v1745
        %vm1747 = vweird.f32 %v1724
        %vm1748 = vweird.f32 %v1742
        %vm1749 = vmor %vm1747, %vm1748
        %v1750 = vsel %vm1749, %v1742, %v1746
        %v1751 = vand.u32 2147483647, %v1724
        %vm1752 = vcmp.eq.f32.partialorder %v1751, 8.507059e+37
        %v1753 = vand.u32 %v1724, 2147483648
        %v1754 = vor.u32 1.1754944e-38, %v1753
        %v1755 = vsel %vm1752, %v1754, %v1750
        %v1756 = vmul.f32 1.0, %v1755
        %v1757 = vrcp.pop %v1725
        %v1758 = vmul.f32 %v1725, %v1757
        %v1759 = vsub.f32 1.0, %v1758
        %v1760 = vmul.f32 %v1757, %v1759
        %v1761 = vadd.f32 %v1757, %v1760
        %vm1762 = vweird.f32 %v1725
        %vm1763 = vweird.f32 %v1757
        %vm1764 = vmor %vm1762, %vm1763
        %v1765 = vsel %vm1764, %v1757, %v1761
        %v1766 = vand.u32 2147483647, %v1725
        %vm1767 = vcmp.eq.f32.partialorder %v1766, 8.507059e+37
        %v1768 = vand.u32 %v1725, 2147483648
        %v1769 = vor.u32 1.1754944e-38, %v1768
        %v1770 = vsel %vm1767, %v1769, %v1765
        %v1771 = vmul.f32 1.0, %v1770
        %v1772 = vrcp.pop %v1726
        %v1773 = vmul.f32 %v1726, %v1772
        %v1774 = vsub.f32 1.0, %v1773
        %v1775 = vmul.f32 %v1772, %v1774
        %v1776 = vadd.f32 %v1772, %v1775
        %vm1777 = vweird.f32 %v1726
        %vm1778 = vweird.f32 %v1772
        %vm1779 = vmor %vm1777, %vm1778
        %v1780 = vsel %vm1779, %v1772, %v1776
        %v1781 = vand.u32 2147483647, %v1726
        %vm1782 = vcmp.eq.f32.partialorder %v1781, 8.507059e+37
        %v1783 = vand.u32 %v1726, 2147483648
        %v1784 = vor.u32 1.1754944e-38, %v1783
        %v1785 = vsel %vm1782, %v1784, %v1780
        %v1786 = vmul.f32 1.0, %v1785
        %v1787 = vmul.f32 %v1697, %v1741
        %v1788 = vmul.f32 %v1701, %v1756
        %v1789 = vmul.f32 %v1705, %v1771
        %v1790 = vmul.f32 %v1709, %v1786
        %v1791 = vld [vmem:[#allocation8] sm:$0xff]
        %v1792 = vld [vmem:[#allocation8 + $0x8] sm:$0xff]
        %v1793 = vld [vmem:[#allocation8 + $0x10] sm:$0xff]
        %v1794 = vld [vmem:[#allocation8 + $0x18] sm:$0xff]
        %v1795 = vld [vmem:[%s5] sm:$0x1]
        %v1797 = vperm.slane %v1795, 0
        %v1800 = vsel %vm420, %v1787, 0
        %v1803 = vsel %vm420, %v1788, 0
        %v1806 = vsel %vm420, %v1789, 0
        %v1809 = vsel %vm420, %v1790, 0
        %1811 = vmatpush.msra.mxu0 0.0
        %1812 = vmatpush.msra.mxu0 0.0
        %1813 = vmatpush.msra.mxu0 0.0
        %1814 = vmatpush.msra.mxu0 0.0
        %1815 = vmatpush.msra.mxu0 0.0
        %1816 = vmatpush.msra.mxu0 0.0
        %1817 = vmatpush.msra.mxu0 0.0
        %1818 = vmatpush.msra.mxu0 0.0
        %1819 = vmatpush.msra.mxu0 0.0
        %1820 = vmatpush.msra.mxu0 0.0
        %1821 = vmatpush.msra.mxu0 0.0
        %1822 = vmatpush.msra.mxu0 0.0
        %v1823 = vand.u32 %v1794, 4294901760
        %1824 = vmatpush.msra.mxu0 %v1823
        %v1825 = vand.u32 %v1793, 4294901760
        %1826 = vmatpush.msra.mxu0 %v1825
        %v1827 = vand.u32 %v1792, 4294901760
        %1828 = vmatpush.msra.mxu0 %v1827
        %v1829 = vand.u32 %v1791, 4294901760
        %1830 = vmatpush.msra.mxu0 %v1829
        %v1831 = vand.u32 %v1800, 4294901760
        %v1832 = vsub.f32 %v1800, %v1831
        %v1833 = vand.u32 %v1832, 4294901760
        %v1834 = vsub.f32 %v1832, %v1833
        %v1835 = vand.u32 %v1834, 4294901760
        %1836 = vmatmul.f32.gmra.mxu0 %v1835
        %v1837 = vpop.f32.mrf.mxu0
        %v1838 = vadd.f32 %v1797, %v1837
        %v1839 = vand.u32 %v1803, 4294901760
        %v1840 = vsub.f32 %v1803, %v1839
        %v1841 = vand.u32 %v1840, 4294901760
        %v1842 = vsub.f32 %v1840, %v1841
        %v1843 = vand.u32 %v1842, 4294901760
        %1844 = vmatmul.f32.gmra.mxu0 %v1843
        %v1845 = vpop.f32.mrf.mxu0
        %v1846 = vadd.f32 %v1797, %v1845
        %v1847 = vand.u32 %v1806, 4294901760
        %v1848 = vsub.f32 %v1806, %v1847
        %v1849 = vand.u32 %v1848, 4294901760
        %v1850 = vsub.f32 %v1848, %v1849
        %v1851 = vand.u32 %v1850, 4294901760
        %1852 = vmatmul.f32.gmra.mxu0 %v1851
        %v1853 = vpop.f32.mrf.mxu0
        %v1854 = vadd.f32 %v1797, %v1853
        %v1855 = vand.u32 %v1809, 4294901760
        %v1856 = vsub.f32 %v1809, %v1855
        %v1857 = vand.u32 %v1856, 4294901760
        %v1858 = vsub.f32 %v1856, %v1857
        %v1859 = vand.u32 %v1858, 4294901760
        %1860 = vmatmul.f32.gmra.mxu0 %v1859
        %v1861 = vpop.f32.mrf.mxu0
        %v1862 = vadd.f32 %v1797, %v1861
        %1863 = vdwg.mxu0
        %1864 = vmatpush.msra.mxu0 0.0
        %1865 = vmatpush.msra.mxu0 0.0
        %1866 = vmatpush.msra.mxu0 0.0
        %1867 = vmatpush.msra.mxu0 0.0
        %1868 = vmatpush.msra.mxu0 0.0
        %1869 = vmatpush.msra.mxu0 0.0
        %1870 = vmatpush.msra.mxu0 0.0
        %1871 = vmatpush.msra.mxu0 0.0
        %1872 = vmatpush.msra.mxu0 0.0
        %1873 = vmatpush.msra.mxu0 0.0
        %1874 = vmatpush.msra.mxu0 0.0
        %1875 = vmatpush.msra.mxu0 0.0
        %v1876 = vand.u32 %v1794, 4294901760
        %v1877 = vsub.f32 %v1794, %v1876
        %v1878 = vand.u32 %v1877, 4294901760
        %v1879 = vsub.f32 %v1877, %v1878
        %v1880 = vand.u32 %v1879, 4294901760
        %1881 = vmatpush.msra.mxu0 %v1880
        %v1882 = vand.u32 %v1793, 4294901760
        %v1883 = vsub.f32 %v1793, %v1882
        %v1884 = vand.u32 %v1883, 4294901760
        %v1885 = vsub.f32 %v1883, %v1884
        %v1886 = vand.u32 %v1885, 4294901760
        %1887 = vmatpush.msra.mxu0 %v1886
        %v1888 = vand.u32 %v1792, 4294901760
        %v1889 = vsub.f32 %v1792, %v1888
        %v1890 = vand.u32 %v1889, 4294901760
        %v1891 = vsub.f32 %v1889, %v1890
        %v1892 = vand.u32 %v1891, 4294901760
        %1893 = vmatpush.msra.mxu0 %v1892
        %v1894 = vand.u32 %v1791, 4294901760
        %v1895 = vsub.f32 %v1791, %v1894
        %v1896 = vand.u32 %v1895, 4294901760
        %v1897 = vsub.f32 %v1895, %v1896
        %v1898 = vand.u32 %v1897, 4294901760
        %1899 = vmatpush.msra.mxu0 %v1898
        %v1900 = vand.u32 %v1800, 4294901760
        %1901 = vmatmul.f32.gmra.mxu0 %v1900
        %v1902 = vpop.f32.mrf.mxu0
        %v1903 = vadd.f32 %v1838, %v1902
        %v1904 = vand.u32 %v1803, 4294901760
        %1905 = vmatmul.f32.gmra.mxu0 %v1904
        %v1906 = vpop.f32.mrf.mxu0
        %v1907 = vadd.f32 %v1846, %v1906
        %v1908 = vand.u32 %v1806, 4294901760
        %1909 = vmatmul.f32.gmra.mxu0 %v1908
        %v1910 = vpop.f32.mrf.mxu0
        %v1911 = vadd.f32 %v1854, %v1910
        %v1912 = vand.u32 %v1809, 4294901760
        %1913 = vmatmul.f32.gmra.mxu0 %v1912
        %v1914 = vpop.f32.mrf.mxu0
        %v1915 = vadd.f32 %v1862, %v1914
        %1916 = vdwg.mxu0
        %1917 = vmatpush.msra.mxu0 0.0
        %1918 = vmatpush.msra.mxu0 0.0
        %1919 = vmatpush.msra.mxu0 0.0
        %1920 = vmatpush.msra.mxu0 0.0
        %1921 = vmatpush.msra.mxu0 0.0
        %1922 = vmatpush.msra.mxu0 0.0
        %1923 = vmatpush.msra.mxu0 0.0
        %1924 = vmatpush.msra.mxu0 0.0
        %1925 = vmatpush.msra.mxu0 0.0
        %1926 = vmatpush.msra.mxu0 0.0
        %1927 = vmatpush.msra.mxu0 0.0
        %1928 = vmatpush.msra.mxu0 0.0
        %v1929 = vand.u32 %v1794, 4294901760
        %v1930 = vsub.f32 %v1794, %v1929
        %1931 = vmatpush.msra.mxu0 %v1930
        %v1932 = vand.u32 %v1793, 4294901760
        %v1933 = vsub.f32 %v1793, %v1932
        %1934 = vmatpush.msra.mxu0 %v1933
        %v1935 = vand.u32 %v1792, 4294901760
        %v1936 = vsub.f32 %v1792, %v1935
        %1937 = vmatpush.msra.mxu0 %v1936
        %v1938 = vand.u32 %v1791, 4294901760
        %v1939 = vsub.f32 %v1791, %v1938
        %1940 = vmatpush.msra.mxu0 %v1939
        %v1941 = vand.u32 %v1800, 4294901760
        %v1942 = vsub.f32 %v1800, %v1941
        %1943 = vmatmul.f32.gmra.mxu0 %v1942
        %v1944 = vpop.f32.mrf.mxu0
        %v1945 = vadd.f32 %v1903, %v1944
        %v1946 = vand.u32 %v1803, 4294901760
        %v1947 = vsub.f32 %v1803, %v1946
        %1948 = vmatmul.f32.gmra.mxu0 %v1947
        %v1949 = vpop.f32.mrf.mxu0
        %v1950 = vadd.f32 %v1907, %v1949
        %v1951 = vand.u32 %v1806, 4294901760
        %v1952 = vsub.f32 %v1806, %v1951
        %1953 = vmatmul.f32.gmra.mxu0 %v1952
        %v1954 = vpop.f32.mrf.mxu0
        %v1955 = vadd.f32 %v1911, %v1954
        %v1956 = vand.u32 %v1809, 4294901760
        %v1957 = vsub.f32 %v1809, %v1956
        %1958 = vmatmul.f32.gmra.mxu0 %v1957
        %v1959 = vpop.f32.mrf.mxu0
        %v1960 = vadd.f32 %v1915, %v1959
        %1961 = vdwg.mxu0
        %1962 = vmatpush.msra.mxu0 0.0
        %1963 = vmatpush.msra.mxu0 0.0
        %1964 = vmatpush.msra.mxu0 0.0
        %1965 = vmatpush.msra.mxu0 0.0
        %1966 = vmatpush.msra.mxu0 0.0
        %1967 = vmatpush.msra.mxu0 0.0
        %1968 = vmatpush.msra.mxu0 0.0
        %1969 = vmatpush.msra.mxu0 0.0
        %1970 = vmatpush.msra.mxu0 0.0
        %1971 = vmatpush.msra.mxu0 0.0
        %1972 = vmatpush.msra.mxu0 0.0
        %1973 = vmatpush.msra.mxu0 0.0
        %v1974 = vand.u32 %v1794, 4294901760
        %1975 = vmatpush.msra.mxu0 %v1974
        %v1976 = vand.u32 %v1793, 4294901760
        %1977 = vmatpush.msra.mxu0 %v1976
        %v1978 = vand.u32 %v1792, 4294901760
        %1979 = vmatpush.msra.mxu0 %v1978
        %v1980 = vand.u32 %v1791, 4294901760
        %1981 = vmatpush.msra.mxu0 %v1980
        %v1982 = vand.u32 %v1800, 4294901760
        %v1983 = vsub.f32 %v1800, %v1982
        %v1984 = vand.u32 %v1983, 4294901760
        %1985 = vmatmul.f32.gmra.mxu0 %v1984
        %v1986 = vpop.f32.mrf.mxu0
        %v1987 = vadd.f32 %v1945, %v1986
        %v1988 = vand.u32 %v1803, 4294901760
        %v1989 = vsub.f32 %v1803, %v1988
        %v1990 = vand.u32 %v1989, 4294901760
        %1991 = vmatmul.f32.gmra.mxu0 %v1990
        %v1992 = vpop.f32.mrf.mxu0
        %v1993 = vadd.f32 %v1950, %v1992
        %v1994 = vand.u32 %v1806, 4294901760
        %v1995 = vsub.f32 %v1806, %v1994
        %v1996 = vand.u32 %v1995, 4294901760
        %1997 = vmatmul.f32.gmra.mxu0 %v1996
        %v1998 = vpop.f32.mrf.mxu0
        %v1999 = vadd.f32 %v1955, %v1998
        %v2000 = vand.u32 %v1809, 4294901760
        %v2001 = vsub.f32 %v1809, %v2000
        %v2002 = vand.u32 %v2001, 4294901760
        %2003 = vmatmul.f32.gmra.mxu0 %v2002
        %v2004 = vpop.f32.mrf.mxu0
        %v2005 = vadd.f32 %v1960, %v2004
        %2006 = vdwg.mxu0
        %2007 = vmatpush.msra.mxu0 0.0
        %2008 = vmatpush.msra.mxu0 0.0
        %2009 = vmatpush.msra.mxu0 0.0
        %2010 = vmatpush.msra.mxu0 0.0
        %2011 = vmatpush.msra.mxu0 0.0
        %2012 = vmatpush.msra.mxu0 0.0
        %2013 = vmatpush.msra.mxu0 0.0
        %2014 = vmatpush.msra.mxu0 0.0
        %2015 = vmatpush.msra.mxu0 0.0
        %2016 = vmatpush.msra.mxu0 0.0
        %2017 = vmatpush.msra.mxu0 0.0
        %2018 = vmatpush.msra.mxu0 0.0
        %v2019 = vand.u32 %v1794, 4294901760
        %v2020 = vsub.f32 %v1794, %v2019
        %v2021 = vand.u32 %v2020, 4294901760
        %2022 = vmatpush.msra.mxu0 %v2021
        %v2023 = vand.u32 %v1793, 4294901760
        %v2024 = vsub.f32 %v1793, %v2023
        %v2025 = vand.u32 %v2024, 4294901760
        %2026 = vmatpush.msra.mxu0 %v2025
        %v2027 = vand.u32 %v1792, 4294901760
        %v2028 = vsub.f32 %v1792, %v2027
        %v2029 = vand.u32 %v2028, 4294901760
        %2030 = vmatpush.msra.mxu0 %v2029
        %v2031 = vand.u32 %v1791, 4294901760
        %v2032 = vsub.f32 %v1791, %v2031
        %v2033 = vand.u32 %v2032, 4294901760
        %2034 = vmatpush.msra.mxu0 %v2033
        %v2035 = vand.u32 %v1800, 4294901760
        %2036 = vmatmul.f32.gmra.mxu0 %v2035
        %v2037 = vpop.f32.mrf.mxu0
        %v2038 = vadd.f32 %v1987, %v2037
        %v2039 = vand.u32 %v1803, 4294901760
        %2040 = vmatmul.f32.gmra.mxu0 %v2039
        %v2041 = vpop.f32.mrf.mxu0
        %v2042 = vadd.f32 %v1993, %v2041
        %v2043 = vand.u32 %v1806, 4294901760
        %2044 = vmatmul.f32.gmra.mxu0 %v2043
        %v2045 = vpop.f32.mrf.mxu0
        %v2046 = vadd.f32 %v1999, %v2045
        %v2047 = vand.u32 %v1809, 4294901760
        %2048 = vmatmul.f32.gmra.mxu0 %v2047
        %v2049 = vpop.f32.mrf.mxu0
        %v2050 = vadd.f32 %v2005, %v2049
        %2051 = vdwg.mxu0
        %2052 = vmatpush.msra.mxu0 0.0
        %2053 = vmatpush.msra.mxu0 0.0
        %2054 = vmatpush.msra.mxu0 0.0
        %2055 = vmatpush.msra.mxu0 0.0
        %2056 = vmatpush.msra.mxu0 0.0
        %2057 = vmatpush.msra.mxu0 0.0
        %2058 = vmatpush.msra.mxu0 0.0
        %2059 = vmatpush.msra.mxu0 0.0
        %2060 = vmatpush.msra.mxu0 0.0
        %2061 = vmatpush.msra.mxu0 0.0
        %2062 = vmatpush.msra.mxu0 0.0
        %2063 = vmatpush.msra.mxu0 0.0
        %v2064 = vand.u32 %v1794, 4294901760
        %2065 = vmatpush.msra.mxu0 %v2064
        %v2066 = vand.u32 %v1793, 4294901760
        %2067 = vmatpush.msra.mxu0 %v2066
        %v2068 = vand.u32 %v1792, 4294901760
        %2069 = vmatpush.msra.mxu0 %v2068
        %v2070 = vand.u32 %v1791, 4294901760
        %2071 = vmatpush.msra.mxu0 %v2070
        %v2072 = vand.u32 %v1800, 4294901760
        %2073 = vmatmul.f32.gmra.mxu0 %v2072
        %v2074 = vpop.f32.mrf.mxu0
        %v2075 = vadd.f32 %v2038, %v2074
        %v2076 = vand.u32 %v1803, 4294901760
        %2077 = vmatmul.f32.gmra.mxu0 %v2076
        %v2078 = vpop.f32.mrf.mxu0
        %v2079 = vadd.f32 %v2042, %v2078
        %v2080 = vand.u32 %v1806, 4294901760
        %2081 = vmatmul.f32.gmra.mxu0 %v2080
        %v2082 = vpop.f32.mrf.mxu0
        %v2083 = vadd.f32 %v2046, %v2082
        %v2084 = vand.u32 %v1809, 4294901760
        %2085 = vmatmul.f32.gmra.mxu0 %v2084
        %v2086 = vpop.f32.mrf.mxu0
        %v2087 = vadd.f32 %v2050, %v2086
        %2088 = vdwg.mxu0
        %v2089 = vmax.f32 %v2075, 0.0
        %v2090 = vmax.f32 %v2079, 0.0
        %v2091 = vmax.f32 %v2083, 0.0
        %v2092 = vmax.f32 %v2087, 0.0
        %v2093 = vand.u32 2147483647, %v2075
        %v2094 = vand.u32 2147483647, %v2079
        %v2095 = vand.u32 2147483647, %v2083
        %v2096 = vand.u32 2147483647, %v2087
        %v2097 = vsub.f32 0.0, %v2093
        %v2098 = vsub.f32 0.0, %v2094
        %v2099 = vsub.f32 0.0, %v2095
        %v2100 = vsub.f32 0.0, %v2096
        %v2101 = vmul.f32 %v2097, 1.442695
        %v2102 = vpow.pop %v2101
        %v2103 = vmul.f32 %v2098, 1.442695
        %v2104 = vpow.pop %v2103
        %v2105 = vmul.f32 %v2099, 1.442695
        %v2106 = vpow.pop %v2105
        %v2107 = vmul.f32 %v2100, 1.442695
        %v2108 = vpow.pop %v2107
        %v2109 = vadd.f32 %v2102, 1.0
        %v2110 = vadd.f32 %v2104, 1.0
        %v2111 = vadd.f32 %v2106, 1.0
        %v2112 = vadd.f32 %v2108, 1.0
        %v2113 = vlog2.pop %v2109
        %v2114 = vmul.f32 %v2113, 0.6931472
        %v2115 = vlog2.pop %v2110
        %v2116 = vmul.f32 %v2115, 0.6931472
        %v2117 = vlog2.pop %v2111
        %v2118 = vmul.f32 %v2117, 0.6931472
        %v2119 = vlog2.pop %v2112
        %v2120 = vmul.f32 %v2119, 0.6931472
        %v2121 = vadd.f32 %v2089, %v2114
        %v2122 = vadd.f32 %v2090, %v2116
        %v2123 = vadd.f32 %v2091, %v2118
        %v2124 = vadd.f32 %v2092, %v2120
        %v2125 = vld [vmem:[%s6] sm:$0xff]
        %v2126 = vld [vmem:[%s6 + $0x8] sm:$0xff]
        %v2127 = vld [vmem:[%s6 + $0x10] sm:$0xff]
        %v2128 = vld [vmem:[%s6 + $0x18] sm:$0xff]
        %2129 = vmatpush.msra.mxu0 0.0
        %2130 = vmatpush.msra.mxu0 0.0
        %2131 = vmatpush.msra.mxu0 0.0
        %2132 = vmatpush.msra.mxu0 0.0
        %2133 = vmatpush.msra.mxu0 0.0
        %2134 = vmatpush.msra.mxu0 0.0
        %2135 = vmatpush.msra.mxu0 0.0
        %2136 = vmatpush.msra.mxu0 0.0
        %2137 = vmatpush.msra.mxu0 0.0
        %2138 = vmatpush.msra.mxu0 0.0
        %2139 = vmatpush.msra.mxu0 0.0
        %2140 = vmatpush.msra.mxu0 0.0
        %v2141 = vand.u32 %v2128, 4294901760
        %2142 = vmatpush.msra.mxu0 %v2141
        %v2143 = vand.u32 %v2127, 4294901760
        %2144 = vmatpush.msra.mxu0 %v2143
        %v2145 = vand.u32 %v2126, 4294901760
        %2146 = vmatpush.msra.mxu0 %v2145
        %v2147 = vand.u32 %v2125, 4294901760
        %2148 = vmatpush.msra.mxu0 %v2147
        %v2149 = vand.u32 %v1800, 4294901760
        %v2150 = vsub.f32 %v1800, %v2149
        %v2151 = vand.u32 %v2150, 4294901760
        %v2152 = vsub.f32 %v2150, %v2151
        %v2153 = vand.u32 %v2152, 4294901760
        %2154 = vmatmul.f32.gmra.mxu0 %v2153
        %v2155 = vpop.f32.mrf.mxu0
        %v2156 = vadd.f32 0.0, %v2155
        %v2157 = vand.u32 %v1803, 4294901760
        %v2158 = vsub.f32 %v1803, %v2157
        %v2159 = vand.u32 %v2158, 4294901760
        %v2160 = vsub.f32 %v2158, %v2159
        %v2161 = vand.u32 %v2160, 4294901760
        %2162 = vmatmul.f32.gmra.mxu0 %v2161
        %v2163 = vpop.f32.mrf.mxu0
        %v2164 = vadd.f32 0.0, %v2163
        %v2165 = vand.u32 %v1806, 4294901760
        %v2166 = vsub.f32 %v1806, %v2165
        %v2167 = vand.u32 %v2166, 4294901760
        %v2168 = vsub.f32 %v2166, %v2167
        %v2169 = vand.u32 %v2168, 4294901760
        %2170 = vmatmul.f32.gmra.mxu0 %v2169
        %v2171 = vpop.f32.mrf.mxu0
        %v2172 = vadd.f32 0.0, %v2171
        %v2173 = vand.u32 %v1809, 4294901760
        %v2174 = vsub.f32 %v1809, %v2173
        %v2175 = vand.u32 %v2174, 4294901760
        %v2176 = vsub.f32 %v2174, %v2175
        %v2177 = vand.u32 %v2176, 4294901760
        %2178 = vmatmul.f32.gmra.mxu0 %v2177
        %v2179 = vpop.f32.mrf.mxu0
        %v2180 = vadd.f32 0.0, %v2179
        %2181 = vdwg.mxu0
        %2182 = vmatpush.msra.mxu0 0.0
        %2183 = vmatpush.msra.mxu0 0.0
        %2184 = vmatpush.msra.mxu0 0.0
        %2185 = vmatpush.msra.mxu0 0.0
        %2186 = vmatpush.msra.mxu0 0.0
        %2187 = vmatpush.msra.mxu0 0.0
        %2188 = vmatpush.msra.mxu0 0.0
        %2189 = vmatpush.msra.mxu0 0.0
        %2190 = vmatpush.msra.mxu0 0.0
        %2191 = vmatpush.msra.mxu0 0.0
        %2192 = vmatpush.msra.mxu0 0.0
        %2193 = vmatpush.msra.mxu0 0.0
        %v2194 = vand.u32 %v2128, 4294901760
        %v2195 = vsub.f32 %v2128, %v2194
        %v2196 = vand.u32 %v2195, 4294901760
        %v2197 = vsub.f32 %v2195, %v2196
        %v2198 = vand.u32 %v2197, 4294901760
        %2199 = vmatpush.msra.mxu0 %v2198
        %v2200 = vand.u32 %v2127, 4294901760
        %v2201 = vsub.f32 %v2127, %v2200
        %v2202 = vand.u32 %v2201, 4294901760
        %v2203 = vsub.f32 %v2201, %v2202
        %v2204 = vand.u32 %v2203, 4294901760
        %2205 = vmatpush.msra.mxu0 %v2204
        %v2206 = vand.u32 %v2126, 4294901760
        %v2207 = vsub.f32 %v2126, %v2206
        %v2208 = vand.u32 %v2207, 4294901760
        %v2209 = vsub.f32 %v2207, %v2208
        %v2210 = vand.u32 %v2209, 4294901760
        %2211 = vmatpush.msra.mxu0 %v2210
        %v2212 = vand.u32 %v2125, 4294901760
        %v2213 = vsub.f32 %v2125, %v2212
        %v2214 = vand.u32 %v2213, 4294901760
        %v2215 = vsub.f32 %v2213, %v2214
        %v2216 = vand.u32 %v2215, 4294901760
        %2217 = vmatpush.msra.mxu0 %v2216
        %v2218 = vand.u32 %v1800, 4294901760
        %2219 = vmatmul.f32.gmra.mxu0 %v2218
        %v2220 = vpop.f32.mrf.mxu0
        %v2221 = vadd.f32 %v2156, %v2220
        %v2222 = vand.u32 %v1803, 4294901760
        %2223 = vmatmul.f32.gmra.mxu0 %v2222
        %v2224 = vpop.f32.mrf.mxu0
        %v2225 = vadd.f32 %v2164, %v2224
        %v2226 = vand.u32 %v1806, 4294901760
        %2227 = vmatmul.f32.gmra.mxu0 %v2226
        %v2228 = vpop.f32.mrf.mxu0
        %v2229 = vadd.f32 %v2172, %v2228
        %v2230 = vand.u32 %v1809, 4294901760
        %2231 = vmatmul.f32.gmra.mxu0 %v2230
        %v2232 = vpop.f32.mrf.mxu0
        %v2233 = vadd.f32 %v2180, %v2232
        %2234 = vdwg.mxu0
        %2235 = vmatpush.msra.mxu0 0.0
        %2236 = vmatpush.msra.mxu0 0.0
        %2237 = vmatpush.msra.mxu0 0.0
        %2238 = vmatpush.msra.mxu0 0.0
        %2239 = vmatpush.msra.mxu0 0.0
        %2240 = vmatpush.msra.mxu0 0.0
        %2241 = vmatpush.msra.mxu0 0.0
        %2242 = vmatpush.msra.mxu0 0.0
        %2243 = vmatpush.msra.mxu0 0.0
        %2244 = vmatpush.msra.mxu0 0.0
        %2245 = vmatpush.msra.mxu0 0.0
        %2246 = vmatpush.msra.mxu0 0.0
        %v2247 = vand.u32 %v2128, 4294901760
        %v2248 = vsub.f32 %v2128, %v2247
        %2249 = vmatpush.msra.mxu0 %v2248
        %v2250 = vand.u32 %v2127, 4294901760
        %v2251 = vsub.f32 %v2127, %v2250
        %2252 = vmatpush.msra.mxu0 %v2251
        %v2253 = vand.u32 %v2126, 4294901760
        %v2254 = vsub.f32 %v2126, %v2253
        %2255 = vmatpush.msra.mxu0 %v2254
        %v2256 = vand.u32 %v2125, 4294901760
        %v2257 = vsub.f32 %v2125, %v2256
        %2258 = vmatpush.msra.mxu0 %v2257
        %v2259 = vand.u32 %v1800, 4294901760
        %v2260 = vsub.f32 %v1800, %v2259
        %2261 = vmatmul.f32.gmra.mxu0 %v2260
        %v2262 = vpop.f32.mrf.mxu0
        %v2263 = vadd.f32 %v2221, %v2262
        %v2264 = vand.u32 %v1803, 4294901760
        %v2265 = vsub.f32 %v1803, %v2264
        %2266 = vmatmul.f32.gmra.mxu0 %v2265
        %v2267 = vpop.f32.mrf.mxu0
        %v2268 = vadd.f32 %v2225, %v2267
        %v2269 = vand.u32 %v1806, 4294901760
        %v2270 = vsub.f32 %v1806, %v2269
        %2271 = vmatmul.f32.gmra.mxu0 %v2270
        %v2272 = vpop.f32.mrf.mxu0
        %v2273 = vadd.f32 %v2229, %v2272
        %v2274 = vand.u32 %v1809, 4294901760
        %v2275 = vsub.f32 %v1809, %v2274
        %2276 = vmatmul.f32.gmra.mxu0 %v2275
        %v2277 = vpop.f32.mrf.mxu0
        %v2278 = vadd.f32 %v2233, %v2277
        %2279 = vdwg.mxu0
        %2280 = vmatpush.msra.mxu0 0.0
        %2281 = vmatpush.msra.mxu0 0.0
        %2282 = vmatpush.msra.mxu0 0.0
        %2283 = vmatpush.msra.mxu0 0.0
        %2284 = vmatpush.msra.mxu0 0.0
        %2285 = vmatpush.msra.mxu0 0.0
        %2286 = vmatpush.msra.mxu0 0.0
        %2287 = vmatpush.msra.mxu0 0.0
        %2288 = vmatpush.msra.mxu0 0.0
        %2289 = vmatpush.msra.mxu0 0.0
        %2290 = vmatpush.msra.mxu0 0.0
        %2291 = vmatpush.msra.mxu0 0.0
        %v2292 = vand.u32 %v2128, 4294901760
        %2293 = vmatpush.msra.mxu0 %v2292
        %v2294 = vand.u32 %v2127, 4294901760
        %2295 = vmatpush.msra.mxu0 %v2294
        %v2296 = vand.u32 %v2126, 4294901760
        %2297 = vmatpush.msra.mxu0 %v2296
        %v2298 = vand.u32 %v2125, 4294901760
        %2299 = vmatpush.msra.mxu0 %v2298
        %v2300 = vand.u32 %v1800, 4294901760
        %v2301 = vsub.f32 %v1800, %v2300
        %v2302 = vand.u32 %v2301, 4294901760
        %2303 = vmatmul.f32.gmra.mxu0 %v2302
        %v2304 = vpop.f32.mrf.mxu0
        %v2305 = vadd.f32 %v2263, %v2304
        %v2306 = vand.u32 %v1803, 4294901760
        %v2307 = vsub.f32 %v1803, %v2306
        %v2308 = vand.u32 %v2307, 4294901760
        %2309 = vmatmul.f32.gmra.mxu0 %v2308
        %v2310 = vpop.f32.mrf.mxu0
        %v2311 = vadd.f32 %v2268, %v2310
        %v2312 = vand.u32 %v1806, 4294901760
        %v2313 = vsub.f32 %v1806, %v2312
        %v2314 = vand.u32 %v2313, 4294901760
        %2315 = vmatmul.f32.gmra.mxu0 %v2314
        %v2316 = vpop.f32.mrf.mxu0
        %v2317 = vadd.f32 %v2273, %v2316
        %v2318 = vand.u32 %v1809, 4294901760
        %v2319 = vsub.f32 %v1809, %v2318
        %v2320 = vand.u32 %v2319, 4294901760
        %2321 = vmatmul.f32.gmra.mxu0 %v2320
        %v2322 = vpop.f32.mrf.mxu0
        %v2323 = vadd.f32 %v2278, %v2322
        %2324 = vdwg.mxu0
        %2325 = vmatpush.msra.mxu0 0.0
        %2326 = vmatpush.msra.mxu0 0.0
        %2327 = vmatpush.msra.mxu0 0.0
        %2328 = vmatpush.msra.mxu0 0.0
        %2329 = vmatpush.msra.mxu0 0.0
        %2330 = vmatpush.msra.mxu0 0.0
        %2331 = vmatpush.msra.mxu0 0.0
        %2332 = vmatpush.msra.mxu0 0.0
        %2333 = vmatpush.msra.mxu0 0.0
        %2334 = vmatpush.msra.mxu0 0.0
        %2335 = vmatpush.msra.mxu0 0.0
        %2336 = vmatpush.msra.mxu0 0.0
        %v2337 = vand.u32 %v2128, 4294901760
        %v2338 = vsub.f32 %v2128, %v2337
        %v2339 = vand.u32 %v2338, 4294901760
        %2340 = vmatpush.msra.mxu0 %v2339
        %v2341 = vand.u32 %v2127, 4294901760
        %v2342 = vsub.f32 %v2127, %v2341
        %v2343 = vand.u32 %v2342, 4294901760
        %2344 = vmatpush.msra.mxu0 %v2343
        %v2345 = vand.u32 %v2126, 4294901760
        %v2346 = vsub.f32 %v2126, %v2345
        %v2347 = vand.u32 %v2346, 4294901760
        %2348 = vmatpush.msra.mxu0 %v2347
        %v2349 = vand.u32 %v2125, 4294901760
        %v2350 = vsub.f32 %v2125, %v2349
        %v2351 = vand.u32 %v2350, 4294901760
        %2352 = vmatpush.msra.mxu0 %v2351
        %v2353 = vand.u32 %v1800, 4294901760
        %2354 = vmatmul.f32.gmra.mxu0 %v2353
        %v2355 = vpop.f32.mrf.mxu0
        %v2356 = vadd.f32 %v2305, %v2355
        %v2357 = vand.u32 %v1803, 4294901760
        %2358 = vmatmul.f32.gmra.mxu0 %v2357
        %v2359 = vpop.f32.mrf.mxu0
        %v2360 = vadd.f32 %v2311, %v2359
        %v2361 = vand.u32 %v1806, 4294901760
        %2362 = vmatmul.f32.gmra.mxu0 %v2361
        %v2363 = vpop.f32.mrf.mxu0
        %v2364 = vadd.f32 %v2317, %v2363
        %v2365 = vand.u32 %v1809, 4294901760
        %2366 = vmatmul.f32.gmra.mxu0 %v2365
        %v2367 = vpop.f32.mrf.mxu0
        %v2368 = vadd.f32 %v2323, %v2367
        %2369 = vdwg.mxu0
        %2370 = vmatpush.msra.mxu0 0.0
        %2371 = vmatpush.msra.mxu0 0.0
        %2372 = vmatpush.msra.mxu0 0.0
        %2373 = vmatpush.msra.mxu0 0.0
        %2374 = vmatpush.msra.mxu0 0.0
        %2375 = vmatpush.msra.mxu0 0.0
        %2376 = vmatpush.msra.mxu0 0.0
        %2377 = vmatpush.msra.mxu0 0.0
        %2378 = vmatpush.msra.mxu0 0.0
        %2379 = vmatpush.msra.mxu0 0.0
        %2380 = vmatpush.msra.mxu0 0.0
        %2381 = vmatpush.msra.mxu0 0.0
        %v2382 = vand.u32 %v2128, 4294901760
        %2383 = vmatpush.msra.mxu0 %v2382
        %v2384 = vand.u32 %v2127, 4294901760
        %2385 = vmatpush.msra.mxu0 %v2384
        %v2386 = vand.u32 %v2126, 4294901760
        %2387 = vmatpush.msra.mxu0 %v2386
        %v2388 = vand.u32 %v2125, 4294901760
        %2389 = vmatpush.msra.mxu0 %v2388
        %v2390 = vand.u32 %v1800, 4294901760
        %2391 = vmatmul.f32.gmra.mxu0 %v2390
        %v2392 = vpop.f32.mrf.mxu0
        %v2393 = vadd.f32 %v2356, %v2392
        %v2394 = vand.u32 %v1803, 4294901760
        %2395 = vmatmul.f32.gmra.mxu0 %v2394
        %v2396 = vpop.f32.mrf.mxu0
        %v2397 = vadd.f32 %v2360, %v2396
        %v2398 = vand.u32 %v1806, 4294901760
        %2399 = vmatmul.f32.gmra.mxu0 %v2398
        %v2400 = vpop.f32.mrf.mxu0
        %v2401 = vadd.f32 %v2364, %v2400
        %v2402 = vand.u32 %v1809, 4294901760
        %2403 = vmatmul.f32.gmra.mxu0 %v2402
        %v2404 = vpop.f32.mrf.mxu0
        %v2405 = vadd.f32 %v2368, %v2404
        %2406 = vdwg.mxu0
        %v2407 = vld [vmem:[%s7] sm:$0xff]
        %v2408 = vld [vmem:[%s7 + $0x8] sm:$0xff]
        %v2409 = vld [vmem:[%s7 + $0x10] sm:$0xff]
        %v2410 = vld [vmem:[%s7 + $0x18] sm:$0xff]
        %2411 = vmatpush.msra.mxu0 0.0
        %2412 = vmatpush.msra.mxu0 0.0
        %2413 = vmatpush.msra.mxu0 0.0
        %2414 = vmatpush.msra.mxu0 0.0
        %2415 = vmatpush.msra.mxu0 0.0
        %2416 = vmatpush.msra.mxu0 0.0
        %2417 = vmatpush.msra.mxu0 0.0
        %2418 = vmatpush.msra.mxu0 0.0
        %2419 = vmatpush.msra.mxu0 0.0
        %2420 = vmatpush.msra.mxu0 0.0
        %2421 = vmatpush.msra.mxu0 0.0
        %2422 = vmatpush.msra.mxu0 0.0
        %v2423 = vand.u32 %v2410, 4294901760
        %2424 = vmatpush.msra.mxu0 %v2423
        %v2425 = vand.u32 %v2409, 4294901760
        %2426 = vmatpush.msra.mxu0 %v2425
        %v2427 = vand.u32 %v2408, 4294901760
        %2428 = vmatpush.msra.mxu0 %v2427
        %v2429 = vand.u32 %v2407, 4294901760
        %2430 = vmatpush.msra.mxu0 %v2429
        %v2431 = vand.u32 %v1800, 4294901760
        %v2432 = vsub.f32 %v1800, %v2431
        %v2433 = vand.u32 %v2432, 4294901760
        %v2434 = vsub.f32 %v2432, %v2433
        %v2435 = vand.u32 %v2434, 4294901760
        %2436 = vmatmul.f32.gmra.mxu0 %v2435
        %v2437 = vpop.f32.mrf.mxu0
        %v2438 = vadd.f32 0.0, %v2437
        %v2439 = vand.u32 %v1803, 4294901760
        %v2440 = vsub.f32 %v1803, %v2439
        %v2441 = vand.u32 %v2440, 4294901760
        %v2442 = vsub.f32 %v2440, %v2441
        %v2443 = vand.u32 %v2442, 4294901760
        %2444 = vmatmul.f32.gmra.mxu0 %v2443
        %v2445 = vpop.f32.mrf.mxu0
        %v2446 = vadd.f32 0.0, %v2445
        %v2447 = vand.u32 %v1806, 4294901760
        %v2448 = vsub.f32 %v1806, %v2447
        %v2449 = vand.u32 %v2448, 4294901760
        %v2450 = vsub.f32 %v2448, %v2449
        %v2451 = vand.u32 %v2450, 4294901760
        %2452 = vmatmul.f32.gmra.mxu0 %v2451
        %v2453 = vpop.f32.mrf.mxu0
        %v2454 = vadd.f32 0.0, %v2453
        %v2455 = vand.u32 %v1809, 4294901760
        %v2456 = vsub.f32 %v1809, %v2455
        %v2457 = vand.u32 %v2456, 4294901760
        %v2458 = vsub.f32 %v2456, %v2457
        %v2459 = vand.u32 %v2458, 4294901760
        %2460 = vmatmul.f32.gmra.mxu0 %v2459
        %v2461 = vpop.f32.mrf.mxu0
        %v2462 = vadd.f32 0.0, %v2461
        %2463 = vdwg.mxu0
        %2464 = vmatpush.msra.mxu0 0.0
        %2465 = vmatpush.msra.mxu0 0.0
        %2466 = vmatpush.msra.mxu0 0.0
        %2467 = vmatpush.msra.mxu0 0.0
        %2468 = vmatpush.msra.mxu0 0.0
        %2469 = vmatpush.msra.mxu0 0.0
        %2470 = vmatpush.msra.mxu0 0.0
        %2471 = vmatpush.msra.mxu0 0.0
        %2472 = vmatpush.msra.mxu0 0.0
        %2473 = vmatpush.msra.mxu0 0.0
        %2474 = vmatpush.msra.mxu0 0.0
        %2475 = vmatpush.msra.mxu0 0.0
        %v2476 = vand.u32 %v2410, 4294901760
        %v2477 = vsub.f32 %v2410, %v2476
        %v2478 = vand.u32 %v2477, 4294901760
        %v2479 = vsub.f32 %v2477, %v2478
        %v2480 = vand.u32 %v2479, 4294901760
        %2481 = vmatpush.msra.mxu0 %v2480
        %v2482 = vand.u32 %v2409, 4294901760
        %v2483 = vsub.f32 %v2409, %v2482
        %v2484 = vand.u32 %v2483, 4294901760
        %v2485 = vsub.f32 %v2483, %v2484
        %v2486 = vand.u32 %v2485, 4294901760
        %2487 = vmatpush.msra.mxu0 %v2486
        %v2488 = vand.u32 %v2408, 4294901760
        %v2489 = vsub.f32 %v2408, %v2488
        %v2490 = vand.u32 %v2489, 4294901760
        %v2491 = vsub.f32 %v2489, %v2490
        %v2492 = vand.u32 %v2491, 4294901760
        %2493 = vmatpush.msra.mxu0 %v2492
        %v2494 = vand.u32 %v2407, 4294901760
        %v2495 = vsub.f32 %v2407, %v2494
        %v2496 = vand.u32 %v2495, 4294901760
        %v2497 = vsub.f32 %v2495, %v2496
        %v2498 = vand.u32 %v2497, 4294901760
        %2499 = vmatpush.msra.mxu0 %v2498
        %v2500 = vand.u32 %v1800, 4294901760
        %2501 = vmatmul.f32.gmra.mxu0 %v2500
        %v2502 = vpop.f32.mrf.mxu0
        %v2503 = vadd.f32 %v2438, %v2502
        %v2504 = vand.u32 %v1803, 4294901760
        %2505 = vmatmul.f32.gmra.mxu0 %v2504
        %v2506 = vpop.f32.mrf.mxu0
        %v2507 = vadd.f32 %v2446, %v2506
        %v2508 = vand.u32 %v1806, 4294901760
        %2509 = vmatmul.f32.gmra.mxu0 %v2508
        %v2510 = vpop.f32.mrf.mxu0
        %v2511 = vadd.f32 %v2454, %v2510
        %v2512 = vand.u32 %v1809, 4294901760
        %2513 = vmatmul.f32.gmra.mxu0 %v2512
        %v2514 = vpop.f32.mrf.mxu0
        %v2515 = vadd.f32 %v2462, %v2514
        %2516 = vdwg.mxu0
        %2517 = vmatpush.msra.mxu0 0.0
        %2518 = vmatpush.msra.mxu0 0.0
        %2519 = vmatpush.msra.mxu0 0.0
        %2520 = vmatpush.msra.mxu0 0.0
        %2521 = vmatpush.msra.mxu0 0.0
        %2522 = vmatpush.msra.mxu0 0.0
        %2523 = vmatpush.msra.mxu0 0.0
        %2524 = vmatpush.msra.mxu0 0.0
        %2525 = vmatpush.msra.mxu0 0.0
        %2526 = vmatpush.msra.mxu0 0.0
        %2527 = vmatpush.msra.mxu0 0.0
        %2528 = vmatpush.msra.mxu0 0.0
        %v2529 = vand.u32 %v2410, 4294901760
        %v2530 = vsub.f32 %v2410, %v2529
        %2531 = vmatpush.msra.mxu0 %v2530
        %v2532 = vand.u32 %v2409, 4294901760
        %v2533 = vsub.f32 %v2409, %v2532
        %2534 = vmatpush.msra.mxu0 %v2533
        %v2535 = vand.u32 %v2408, 4294901760
        %v2536 = vsub.f32 %v2408, %v2535
        %2537 = vmatpush.msra.mxu0 %v2536
        %v2538 = vand.u32 %v2407, 4294901760
        %v2539 = vsub.f32 %v2407, %v2538
        %2540 = vmatpush.msra.mxu0 %v2539
        %v2541 = vand.u32 %v1800, 4294901760
        %v2542 = vsub.f32 %v1800, %v2541
        %2543 = vmatmul.f32.gmra.mxu0 %v2542
        %v2544 = vpop.f32.mrf.mxu0
        %v2545 = vadd.f32 %v2503, %v2544
        %v2546 = vand.u32 %v1803, 4294901760
        %v2547 = vsub.f32 %v1803, %v2546
        %2548 = vmatmul.f32.gmra.mxu0 %v2547
        %v2549 = vpop.f32.mrf.mxu0
        %v2550 = vadd.f32 %v2507, %v2549
        %v2551 = vand.u32 %v1806, 4294901760
        %v2552 = vsub.f32 %v1806, %v2551
        %2553 = vmatmul.f32.gmra.mxu0 %v2552
        %v2554 = vpop.f32.mrf.mxu0
        %v2555 = vadd.f32 %v2511, %v2554
        %v2556 = vand.u32 %v1809, 4294901760
        %v2557 = vsub.f32 %v1809, %v2556
        %2558 = vmatmul.f32.gmra.mxu0 %v2557
        %v2559 = vpop.f32.mrf.mxu0
        %v2560 = vadd.f32 %v2515, %v2559
        %2561 = vdwg.mxu0
        %2562 = vmatpush.msra.mxu0 0.0
        %2563 = vmatpush.msra.mxu0 0.0
        %2564 = vmatpush.msra.mxu0 0.0
        %2565 = vmatpush.msra.mxu0 0.0
        %2566 = vmatpush.msra.mxu0 0.0
        %2567 = vmatpush.msra.mxu0 0.0
        %2568 = vmatpush.msra.mxu0 0.0
        %2569 = vmatpush.msra.mxu0 0.0
        %2570 = vmatpush.msra.mxu0 0.0
        %2571 = vmatpush.msra.mxu0 0.0
        %2572 = vmatpush.msra.mxu0 0.0
        %2573 = vmatpush.msra.mxu0 0.0
        %v2574 = vand.u32 %v2410, 4294901760
        %2575 = vmatpush.msra.mxu0 %v2574
        %v2576 = vand.u32 %v2409, 4294901760
        %2577 = vmatpush.msra.mxu0 %v2576
        %v2578 = vand.u32 %v2408, 4294901760
        %2579 = vmatpush.msra.mxu0 %v2578
        %v2580 = vand.u32 %v2407, 4294901760
        %2581 = vmatpush.msra.mxu0 %v2580
        %v2582 = vand.u32 %v1800, 4294901760
        %v2583 = vsub.f32 %v1800, %v2582
        %v2584 = vand.u32 %v2583, 4294901760
        %2585 = vmatmul.f32.gmra.mxu0 %v2584
        %v2586 = vpop.f32.mrf.mxu0
        %v2587 = vadd.f32 %v2545, %v2586
        %v2588 = vand.u32 %v1803, 4294901760
        %v2589 = vsub.f32 %v1803, %v2588
        %v2590 = vand.u32 %v2589, 4294901760
        %2591 = vmatmul.f32.gmra.mxu0 %v2590
        %v2592 = vpop.f32.mrf.mxu0
        %v2593 = vadd.f32 %v2550, %v2592
        %v2594 = vand.u32 %v1806, 4294901760
        %v2595 = vsub.f32 %v1806, %v2594
        %v2596 = vand.u32 %v2595, 4294901760
        %2597 = vmatmul.f32.gmra.mxu0 %v2596
        %v2598 = vpop.f32.mrf.mxu0
        %v2599 = vadd.f32 %v2555, %v2598
        %v2600 = vand.u32 %v1809, 4294901760
        %v2601 = vsub.f32 %v1809, %v2600
        %v2602 = vand.u32 %v2601, 4294901760
        %2603 = vmatmul.f32.gmra.mxu0 %v2602
        %v2604 = vpop.f32.mrf.mxu0
        %v2605 = vadd.f32 %v2560, %v2604
        %2606 = vdwg.mxu0
        %2607 = vmatpush.msra.mxu0 0.0
        %2608 = vmatpush.msra.mxu0 0.0
        %2609 = vmatpush.msra.mxu0 0.0
        %2610 = vmatpush.msra.mxu0 0.0
        %2611 = vmatpush.msra.mxu0 0.0
        %2612 = vmatpush.msra.mxu0 0.0
        %2613 = vmatpush.msra.mxu0 0.0
        %2614 = vmatpush.msra.mxu0 0.0
        %2615 = vmatpush.msra.mxu0 0.0
        %2616 = vmatpush.msra.mxu0 0.0
        %2617 = vmatpush.msra.mxu0 0.0
        %2618 = vmatpush.msra.mxu0 0.0
        %v2619 = vand.u32 %v2410, 4294901760
        %v2620 = vsub.f32 %v2410, %v2619
        %v2621 = vand.u32 %v2620, 4294901760
        %2622 = vmatpush.msra.mxu0 %v2621
        %v2623 = vand.u32 %v2409, 4294901760
        %v2624 = vsub.f32 %v2409, %v2623
        %v2625 = vand.u32 %v2624, 4294901760
        %2626 = vmatpush.msra.mxu0 %v2625
        %v2627 = vand.u32 %v2408, 4294901760
        %v2628 = vsub.f32 %v2408, %v2627
        %v2629 = vand.u32 %v2628, 4294901760
        %2630 = vmatpush.msra.mxu0 %v2629
        %v2631 = vand.u32 %v2407, 4294901760
        %v2632 = vsub.f32 %v2407, %v2631
        %v2633 = vand.u32 %v2632, 4294901760
        %2634 = vmatpush.msra.mxu0 %v2633
        %v2635 = vand.u32 %v1800, 4294901760
        %2636 = vmatmul.f32.gmra.mxu0 %v2635
        %v2637 = vpop.f32.mrf.mxu0
        %v2638 = vadd.f32 %v2587, %v2637
        %v2639 = vand.u32 %v1803, 4294901760
        %2640 = vmatmul.f32.gmra.mxu0 %v2639
        %v2641 = vpop.f32.mrf.mxu0
        %v2642 = vadd.f32 %v2593, %v2641
        %v2643 = vand.u32 %v1806, 4294901760
        %2644 = vmatmul.f32.gmra.mxu0 %v2643
        %v2645 = vpop.f32.mrf.mxu0
        %v2646 = vadd.f32 %v2599, %v2645
        %v2647 = vand.u32 %v1809, 4294901760
        %2648 = vmatmul.f32.gmra.mxu0 %v2647
        %v2649 = vpop.f32.mrf.mxu0
        %v2650 = vadd.f32 %v2605, %v2649
        %2651 = vdwg.mxu0
        %2652 = vmatpush.msra.mxu0 0.0
        %2653 = vmatpush.msra.mxu0 0.0
        %2654 = vmatpush.msra.mxu0 0.0
        %2655 = vmatpush.msra.mxu0 0.0
        %2656 = vmatpush.msra.mxu0 0.0
        %2657 = vmatpush.msra.mxu0 0.0
        %2658 = vmatpush.msra.mxu0 0.0
        %2659 = vmatpush.msra.mxu0 0.0
        %2660 = vmatpush.msra.mxu0 0.0
        %2661 = vmatpush.msra.mxu0 0.0
        %2662 = vmatpush.msra.mxu0 0.0
        %2663 = vmatpush.msra.mxu0 0.0
        %v2664 = vand.u32 %v2410, 4294901760
        %2665 = vmatpush.msra.mxu0 %v2664
        %v2666 = vand.u32 %v2409, 4294901760
        %2667 = vmatpush.msra.mxu0 %v2666
        %v2668 = vand.u32 %v2408, 4294901760
        %2669 = vmatpush.msra.mxu0 %v2668
        %v2670 = vand.u32 %v2407, 4294901760
        %2671 = vmatpush.msra.mxu0 %v2670
        %v2672 = vand.u32 %v1800, 4294901760
        %2673 = vmatmul.f32.gmra.mxu0 %v2672
        %v2674 = vpop.f32.mrf.mxu0
        %v2675 = vadd.f32 %v2638, %v2674
        %v2676 = vand.u32 %v1803, 4294901760
        %2677 = vmatmul.f32.gmra.mxu0 %v2676
        %v2678 = vpop.f32.mrf.mxu0
        %v2679 = vadd.f32 %v2642, %v2678
        %v2680 = vand.u32 %v1806, 4294901760
        %2681 = vmatmul.f32.gmra.mxu0 %v2680
        %v2682 = vpop.f32.mrf.mxu0
        %v2683 = vadd.f32 %v2646, %v2682
        %v2684 = vand.u32 %v1809, 4294901760
        %2685 = vmatmul.f32.gmra.mxu0 %v2684
        %v2686 = vpop.f32.mrf.mxu0
        %v2687 = vadd.f32 %v2650, %v2686
        %2688 = vdwg.mxu0
        %v2689 = vmul.f32 %v2121, %v1787
        %v2690 = vmul.f32 %v2122, %v1788
        %v2691 = vmul.f32 %v2123, %v1789
        %v2692 = vmul.f32 %v2124, %v1790
        %v2693 = vld [vmem:[%s8] sm:$0xff]
        %v2694 = vmul.f32 %v2693, 1.442695
        %v2695 = vpow.pop %v2694
        %v2696 = vsub.f32 0.0, %v2695
        %vm2697 = vcmp.eq.s32.totalorder %v712, %v717
        %v2698 = vsel %vm2697, 1, 0
        %v2699 = vcvt.s32.f32 %v2698
        %v2700 = vperm.slane %v2393, 0
        %v2701 = vmul.f32 %v2699, %v2700
        %vm2702 = vcmask 64512
        %v2703 = vsel %vm2702, %v2701, 0.0
        %2704 = vadd.xlane.f32.xlu0 %v2703
        %v2705 = vpop.xlane.xlu0 %2704
        %v2706 = vperm.slane %v2121, 0
        %v2707 = vmul.f32 %v2696, %v2706
        %v2708 = vmul.f32 %v2707, 1.442695
        %v2709 = vpow.pop %v2708
        %v2710 = vmul.f32 %v2709, 0.0
        %v2711 = vperm.slane %v2689, 0
        %v2712 = vmul.f32 %v2705, %v2711
        %v2713 = vadd.f32 %v2710, %v2712
        %v2715 = vsel %vm2702, %v2675, 0
        %2717 = vmatpush.msra.mxu0 0.0
        %2718 = vmatpush.msra.mxu0 0.0
        %2719 = vmatpush.msra.mxu0 0.0
        %2720 = vmatpush.msra.mxu0 0.0
        %2721 = vmatpush.msra.mxu0 0.0
        %2722 = vmatpush.msra.mxu0 0.0
        %2723 = vmatpush.msra.mxu0 0.0
        %2724 = vmatpush.msra.mxu0 0.0
        %2725 = vmatpush.msra.mxu0 0.0
        %2726 = vmatpush.msra.mxu0 0.0
        %2727 = vmatpush.msra.mxu0 0.0
        %2728 = vmatpush.msra.mxu0 0.0
        %2729 = vmatpush.msra.mxu0 0.0
        %2730 = vmatpush.msra.mxu0 0.0
        %2731 = vmatpush.msra.mxu0 0.0
        %v2732 = vand.u32 %v2713, 4294901760
        %2733 = vmatpush.msra.mxu0 %v2732
        %v2734 = vand.u32 %v2715, 4294901760
        %v2735 = vsub.f32 %v2715, %v2734
        %v2736 = vand.u32 %v2735, 4294901760
        %v2737 = vsub.f32 %v2735, %v2736
        %v2738 = vand.u32 %v2737, 4294901760
        %2739 = vmatmul.f32.gmra.mxu0 %v2738
        %v2740 = vpop.f32.mrf.mxu0
        %v2741 = vadd.f32 0.0, %v2740
        %2742 = vdwg.mxu0
        %2743 = vmatpush.msra.mxu0 0.0
        %2744 = vmatpush.msra.mxu0 0.0
        %2745 = vmatpush.msra.mxu0 0.0
        %2746 = vmatpush.msra.mxu0 0.0
        %2747 = vmatpush.msra.mxu0 0.0
        %2748 = vmatpush.msra.mxu0 0.0
        %2749 = vmatpush.msra.mxu0 0.0
        %2750 = vmatpush.msra.mxu0 0.0
        %2751 = vmatpush.msra.mxu0 0.0
        %2752 = vmatpush.msra.mxu0 0.0
        %2753 = vmatpush.msra.mxu0 0.0
        %2754 = vmatpush.msra.mxu0 0.0
        %2755 = vmatpush.msra.mxu0 0.0
        %2756 = vmatpush.msra.mxu0 0.0
        %2757 = vmatpush.msra.mxu0 0.0
        %v2758 = vand.u32 %v2713, 4294901760
        %v2759 = vsub.f32 %v2713, %v2758
        %v2760 = vand.u32 %v2759, 4294901760
        %v2761 = vsub.f32 %v2759, %v2760
        %v2762 = vand.u32 %v2761, 4294901760
        %2763 = vmatpush.msra.mxu0 %v2762
        %v2764 = vand.u32 %v2715, 4294901760
        %2765 = vmatmul.f32.gmra.mxu0 %v2764
        %v2766 = vpop.f32.mrf.mxu0
        %v2767 = vadd.f32 %v2741, %v2766
        %2768 = vdwg.mxu0
        %2769 = vmatpush.msra.mxu0 0.0
        %2770 = vmatpush.msra.mxu0 0.0
        %2771 = vmatpush.msra.mxu0 0.0
        %2772 = vmatpush.msra.mxu0 0.0
        %2773 = vmatpush.msra.mxu0 0.0
        %2774 = vmatpush.msra.mxu0 0.0
        %2775 = vmatpush.msra.mxu0 0.0
        %2776 = vmatpush.msra.mxu0 0.0
        %2777 = vmatpush.msra.mxu0 0.0
        %2778 = vmatpush.msra.mxu0 0.0
        %2779 = vmatpush.msra.mxu0 0.0
        %2780 = vmatpush.msra.mxu0 0.0
        %2781 = vmatpush.msra.mxu0 0.0
        %2782 = vmatpush.msra.mxu0 0.0
        %2783 = vmatpush.msra.mxu0 0.0
        %v2784 = vand.u32 %v2713, 4294901760
        %v2785 = vsub.f32 %v2713, %v2784
        %2786 = vmatpush.msra.mxu0 %v2785
        %v2787 = vand.u32 %v2715, 4294901760
        %v2788 = vsub.f32 %v2715, %v2787
        %2789 = vmatmul.f32.gmra.mxu0 %v2788
        %v2790 = vpop.f32.mrf.mxu0
        %v2791 = vadd.f32 %v2767, %v2790
        %2792 = vdwg.mxu0
        %2793 = vmatpush.msra.mxu0 0.0
        %2794 = vmatpush.msra.mxu0 0.0
        %2795 = vmatpush.msra.mxu0 0.0
        %2796 = vmatpush.msra.mxu0 0.0
        %2797 = vmatpush.msra.mxu0 0.0
        %2798 = vmatpush.msra.mxu0 0.0
        %2799 = vmatpush.msra.mxu0 0.0
        %2800 = vmatpush.msra.mxu0 0.0
        %2801 = vmatpush.msra.mxu0 0.0
        %2802 = vmatpush.msra.mxu0 0.0
        %2803 = vmatpush.msra.mxu0 0.0
        %2804 = vmatpush.msra.mxu0 0.0
        %2805 = vmatpush.msra.mxu0 0.0
        %2806 = vmatpush.msra.mxu0 0.0
        %2807 = vmatpush.msra.mxu0 0.0
        %v2808 = vand.u32 %v2713, 4294901760
        %2809 = vmatpush.msra.mxu0 %v2808
        %v2810 = vand.u32 %v2715, 4294901760
        %v2811 = vsub.f32 %v2715, %v2810
        %v2812 = vand.u32 %v2811, 4294901760
        %2813 = vmatmul.f32.gmra.mxu0 %v2812
        %v2814 = vpop.f32.mrf.mxu0
        %v2815 = vadd.f32 %v2791, %v2814
        %2816 = vdwg.mxu0
        %2817 = vmatpush.msra.mxu0 0.0
        %2818 = vmatpush.msra.mxu0 0.0
        %2819 = vmatpush.msra.mxu0 0.0
        %2820 = vmatpush.msra.mxu0 0.0
        %2821 = vmatpush.msra.mxu0 0.0
        %2822 = vmatpush.msra.mxu0 0.0
        %2823 = vmatpush.msra.mxu0 0.0
        %2824 = vmatpush.msra.mxu0 0.0
        %2825 = vmatpush.msra.mxu0 0.0
        %2826 = vmatpush.msra.mxu0 0.0
        %2827 = vmatpush.msra.mxu0 0.0
        %2828 = vmatpush.msra.mxu0 0.0
        %2829 = vmatpush.msra.mxu0 0.0
        %2830 = vmatpush.msra.mxu0 0.0
        %2831 = vmatpush.msra.mxu0 0.0
        %v2832 = vand.u32 %v2713, 4294901760
        %v2833 = vsub.f32 %v2713, %v2832
        %v2834 = vand.u32 %v2833, 4294901760
        %2835 = vmatpush.msra.mxu0 %v2834
        %v2836 = vand.u32 %v2715, 4294901760
        %2837 = vmatmul.f32.gmra.mxu0 %v2836
        %v2838 = vpop.f32.mrf.mxu0
        %v2839 = vadd.f32 %v2815, %v2838
        %2840 = vdwg.mxu0
        %2841 = vmatpush.msra.mxu0 0.0
        %2842 = vmatpush.msra.mxu0 0.0
        %2843 = vmatpush.msra.mxu0 0.0
        %2844 = vmatpush.msra.mxu0 0.0
        %2845 = vmatpush.msra.mxu0 0.0
        %2846 = vmatpush.msra.mxu0 0.0
        %2847 = vmatpush.msra.mxu0 0.0
        %2848 = vmatpush.msra.mxu0 0.0
        %2849 = vmatpush.msra.mxu0 0.0
        %2850 = vmatpush.msra.mxu0 0.0
        %2851 = vmatpush.msra.mxu0 0.0
        %2852 = vmatpush.msra.mxu0 0.0
        %2853 = vmatpush.msra.mxu0 0.0
        %2854 = vmatpush.msra.mxu0 0.0
        %2855 = vmatpush.msra.mxu0 0.0
        %v2856 = vand.u32 %v2713, 4294901760
        %2857 = vmatpush.msra.mxu0 %v2856
        %v2858 = vand.u32 %v2715, 4294901760
        %2859 = vmatmul.f32.gmra.mxu0 %v2858
        %v2860 = vpop.f32.mrf.mxu0
        %v2861 = vadd.f32 %v2839, %v2860
        %2862 = vdwg.mxu0
        %vm2863 = vcmask 253952
        %2864 = vst.msk [vmem:[#allocation2] sm:$0x1] %vm2863, %v2861
        %v2865 = vperm.slane %v2393, 1
        %v2866 = vmul.f32 %v2699, %v2865
        %v2867 = vsel %vm2702, %v2866, 0.0
        %2868 = vadd.xlane.f32.xlu0 %v2867
        %v2869 = vpop.xlane.xlu0 %2868
        %v2870 = vperm.slane %v2121, 1
        %v2871 = vmul.f32 %v2696, %v2870
        %v2872 = vmul.f32 %v2871, 1.442695
        %v2873 = vpow.pop %v2872
        %v2874 = vmul.f32 %v2873, %v2713
        %v2875 = vperm.slane %v2689, 1
        %v2876 = vmul.f32 %v2869, %v2875
        %v2877 = vadd.f32 %v2874, %v2876
        %v2878 = vrot.slane %v2675, 1
        %v2879 = vsel %vm2702, %v2878, 0
        %2881 = vmatpush.msra.mxu0 0.0
        %2882 = vmatpush.msra.mxu0 0.0
        %2883 = vmatpush.msra.mxu0 0.0
        %2884 = vmatpush.msra.mxu0 0.0
        %2885 = vmatpush.msra.mxu0 0.0
        %2886 = vmatpush.msra.mxu0 0.0
        %2887 = vmatpush.msra.mxu0 0.0
        %2888 = vmatpush.msra.mxu0 0.0
        %2889 = vmatpush.msra.mxu0 0.0
        %2890 = vmatpush.msra.mxu0 0.0
        %2891 = vmatpush.msra.mxu0 0.0
        %2892 = vmatpush.msra.mxu0 0.0
        %2893 = vmatpush.msra.mxu0 0.0
        %2894 = vmatpush.msra.mxu0 0.0
        %2895 = vmatpush.msra.mxu0 0.0
        %v2896 = vand.u32 %v2877, 4294901760
        %2897 = vmatpush.msra.mxu0 %v2896
        %v2898 = vand.u32 %v2879, 4294901760
        %v2899 = vsub.f32 %v2879, %v2898
        %v2900 = vand.u32 %v2899, 4294901760
        %v2901 = vsub.f32 %v2899, %v2900
        %v2902 = vand.u32 %v2901, 4294901760
        %2903 = vmatmul.f32.gmra.mxu0 %v2902
        %v2904 = vpop.f32.mrf.mxu0
        %v2905 = vadd.f32 0.0, %v2904
        %2906 = vdwg.mxu0
        %2907 = vmatpush.msra.mxu0 0.0
        %2908 = vmatpush.msra.mxu0 0.0
        %2909 = vmatpush.msra.mxu0 0.0
        %2910 = vmatpush.msra.mxu0 0.0
        %2911 = vmatpush.msra.mxu0 0.0
        %2912 = vmatpush.msra.mxu0 0.0
        %2913 = vmatpush.msra.mxu0 0.0
        %2914 = vmatpush.msra.mxu0 0.0
        %2915 = vmatpush.msra.mxu0 0.0
        %2916 = vmatpush.msra.mxu0 0.0
        %2917 = vmatpush.msra.mxu0 0.0
        %2918 = vmatpush.msra.mxu0 0.0
        %2919 = vmatpush.msra.mxu0 0.0
        %2920 = vmatpush.msra.mxu0 0.0
        %2921 = vmatpush.msra.mxu0 0.0
        %v2922 = vand.u32 %v2877, 4294901760
        %v2923 = vsub.f32 %v2877, %v2922
        %v2924 = vand.u32 %v2923, 4294901760
        %v2925 = vsub.f32 %v2923, %v2924
        %v2926 = vand.u32 %v2925, 4294901760
        %2927 = vmatpush.msra.mxu0 %v2926
        %v2928 = vand.u32 %v2879, 4294901760
        %2929 = vmatmul.f32.gmra.mxu0 %v2928
        %v2930 = vpop.f32.mrf.mxu0
        %v2931 = vadd.f32 %v2905, %v2930
        %2932 = vdwg.mxu0
        %2933 = vmatpush.msra.mxu0 0.0
        %2934 = vmatpush.msra.mxu0 0.0
        %2935 = vmatpush.msra.mxu0 0.0
        %2936 = vmatpush.msra.mxu0 0.0
        %2937 = vmatpush.msra.mxu0 0.0
        %2938 = vmatpush.msra.mxu0 0.0
        %2939 = vmatpush.msra.mxu0 0.0
        %2940 = vmatpush.msra.mxu0 0.0
        %2941 = vmatpush.msra.mxu0 0.0
        %2942 = vmatpush.msra.mxu0 0.0
        %2943 = vmatpush.msra.mxu0 0.0
        %2944 = vmatpush.msra.mxu0 0.0
        %2945 = vmatpush.msra.mxu0 0.0
        %2946 = vmatpush.msra.mxu0 0.0
        %2947 = vmatpush.msra.mxu0 0.0
        %v2948 = vand.u32 %v2877, 4294901760
        %v2949 = vsub.f32 %v2877, %v2948
        %2950 = vmatpush.msra.mxu0 %v2949
        %v2951 = vand.u32 %v2879, 4294901760
        %v2952 = vsub.f32 %v2879, %v2951
        %2953 = vmatmul.f32.gmra.mxu0 %v2952
        %v2954 = vpop.f32.mrf.mxu0
        %v2955 = vadd.f32 %v2931, %v2954
        %2956 = vdwg.mxu0
        %2957 = vmatpush.msra.mxu0 0.0
        %2958 = vmatpush.msra.mxu0 0.0
        %2959 = vmatpush.msra.mxu0 0.0
        %2960 = vmatpush.msra.mxu0 0.0
        %2961 = vmatpush.msra.mxu0 0.0
        %2962 = vmatpush.msra.mxu0 0.0
        %2963 = vmatpush.msra.mxu0 0.0
        %2964 = vmatpush.msra.mxu0 0.0
        %2965 = vmatpush.msra.mxu0 0.0
        %2966 = vmatpush.msra.mxu0 0.0
        %2967 = vmatpush.msra.mxu0 0.0
        %2968 = vmatpush.msra.mxu0 0.0
        %2969 = vmatpush.msra.mxu0 0.0
        %2970 = vmatpush.msra.mxu0 0.0
        %2971 = vmatpush.msra.mxu0 0.0
        %v2972 = vand.u32 %v2877, 4294901760
        %2973 = vmatpush.msra.mxu0 %v2972
        %v2974 = vand.u32 %v2879, 4294901760
        %v2975 = vsub.f32 %v2879, %v2974
        %v2976 = vand.u32 %v2975, 4294901760
        %2977 = vmatmul.f32.gmra.mxu0 %v2976
        %v2978 = vpop.f32.mrf.mxu0
        %v2979 = vadd.f32 %v2955, %v2978
        %2980 = vdwg.mxu0
        %2981 = vmatpush.msra.mxu0 0.0
        %2982 = vmatpush.msra.mxu0 0.0
        %2983 = vmatpush.msra.mxu0 0.0
        %2984 = vmatpush.msra.mxu0 0.0
        %2985 = vmatpush.msra.mxu0 0.0
        %2986 = vmatpush.msra.mxu0 0.0
        %2987 = vmatpush.msra.mxu0 0.0
        %2988 = vmatpush.msra.mxu0 0.0
        %2989 = vmatpush.msra.mxu0 0.0
        %2990 = vmatpush.msra.mxu0 0.0
        %2991 = vmatpush.msra.mxu0 0.0
        %2992 = vmatpush.msra.mxu0 0.0
        %2993 = vmatpush.msra.mxu0 0.0
        %2994 = vmatpush.msra.mxu0 0.0
        %2995 = vmatpush.msra.mxu0 0.0
        %v2996 = vand.u32 %v2877, 4294901760
        %v2997 = vsub.f32 %v2877, %v2996
        %v2998 = vand.u32 %v2997, 4294901760
        %2999 = vmatpush.msra.mxu0 %v2998
        %v3000 = vand.u32 %v2879, 4294901760
        %3001 = vmatmul.f32.gmra.mxu0 %v3000
        %v3002 = vpop.f32.mrf.mxu0
        %v3003 = vadd.f32 %v2979, %v3002
        %3004 = vdwg.mxu0
        %3005 = vmatpush.msra.mxu0 0.0
        %3006 = vmatpush.msra.mxu0 0.0
        %3007 = vmatpush.msra.mxu0 0.0
        %3008 = vmatpush.msra.mxu0 0.0
        %3009 = vmatpush.msra.mxu0 0.0
        %3010 = vmatpush.msra.mxu0 0.0
        %3011 = vmatpush.msra.mxu0 0.0
        %3012 = vmatpush.msra.mxu0 0.0
        %3013 = vmatpush.msra.mxu0 0.0
        %3014 = vmatpush.msra.mxu0 0.0
        %3015 = vmatpush.msra.mxu0 0.0
        %3016 = vmatpush.msra.mxu0 0.0
        %3017 = vmatpush.msra.mxu0 0.0
        %3018 = vmatpush.msra.mxu0 0.0
        %3019 = vmatpush.msra.mxu0 0.0
        %v3020 = vand.u32 %v2877, 4294901760
        %3021 = vmatpush.msra.mxu0 %v3020
        %v3022 = vand.u32 %v2879, 4294901760
        %3023 = vmatmul.f32.gmra.mxu0 %v3022
        %v3024 = vpop.f32.mrf.mxu0
        %v3025 = vadd.f32 %v3003, %v3024
        %3026 = vdwg.mxu0
        %3027 = vst.msk [vmem:[#allocation2 + $0x1] sm:$0x1] %vm2863, %v3025
        %v3028 = vperm.slane %v2393, 2
        %v3029 = vmul.f32 %v2699, %v3028
        %v3030 = vsel %vm2702, %v3029, 0.0
        %3031 = vadd.xlane.f32.xlu0 %v3030
        %v3032 = vpop.xlane.xlu0 %3031
        %v3033 = vperm.slane %v2121, 2
        %v3034 = vmul.f32 %v2696, %v3033
        %v3035 = vmul.f32 %v3034, 1.442695
        %v3036 = vpow.pop %v3035
        %v3037 = vmul.f32 %v3036, %v2877
        %v3038 = vperm.slane %v2689, 2
        %v3039 = vmul.f32 %v3032, %v3038
        %v3040 = vadd.f32 %v3037, %v3039
        %v3041 = vrot.slane %v2675, 2
        %v3042 = vsel %vm2702, %v3041, 0
        %3044 = vmatpush.msra.mxu0 0.0
        %3045 = vmatpush.msra.mxu0 0.0
        %3046 = vmatpush.msra.mxu0 0.0
        %3047 = vmatpush.msra.mxu0 0.0
        %3048 = vmatpush.msra.mxu0 0.0
        %3049 = vmatpush.msra.mxu0 0.0
        %3050 = vmatpush.msra.mxu0 0.0
        %3051 = vmatpush.msra.mxu0 0.0
        %3052 = vmatpush.msra.mxu0 0.0
        %3053 = vmatpush.msra.mxu0 0.0
        %3054 = vmatpush.msra.mxu0 0.0
        %3055 = vmatpush.msra.mxu0 0.0
        %3056 = vmatpush.msra.mxu0 0.0
        %3057 = vmatpush.msra.mxu0 0.0
        %3058 = vmatpush.msra.mxu0 0.0
        %v3059 = vand.u32 %v3040, 4294901760
        %3060 = vmatpush.msra.mxu0 %v3059
        %v3061 = vand.u32 %v3042, 4294901760
        %v3062 = vsub.f32 %v3042, %v3061
        %v3063 = vand.u32 %v3062, 4294901760
        %v3064 = vsub.f32 %v3062, %v3063
        %v3065 = vand.u32 %v3064, 4294901760
        %3066 = vmatmul.f32.gmra.mxu0 %v3065
        %v3067 = vpop.f32.mrf.mxu0
        %v3068 = vadd.f32 0.0, %v3067
        %3069 = vdwg.mxu0
        %3070 = vmatpush.msra.mxu0 0.0
        %3071 = vmatpush.msra.mxu0 0.0
        %3072 = vmatpush.msra.mxu0 0.0
        %3073 = vmatpush.msra.mxu0 0.0
        %3074 = vmatpush.msra.mxu0 0.0
        %3075 = vmatpush.msra.mxu0 0.0
        %3076 = vmatpush.msra.mxu0 0.0
        %3077 = vmatpush.msra.mxu0 0.0
        %3078 = vmatpush.msra.mxu0 0.0
        %3079 = vmatpush.msra.mxu0 0.0
        %3080 = vmatpush.msra.mxu0 0.0
        %3081 = vmatpush.msra.mxu0 0.0
        %3082 = vmatpush.msra.mxu0 0.0
        %3083 = vmatpush.msra.mxu0 0.0
        %3084 = vmatpush.msra.mxu0 0.0
        %v3085 = vand.u32 %v3040, 4294901760
        %v3086 = vsub.f32 %v3040, %v3085
        %v3087 = vand.u32 %v3086, 4294901760
        %v3088 = vsub.f32 %v3086, %v3087
        %v3089 = vand.u32 %v3088, 4294901760
        %3090 = vmatpush.msra.mxu0 %v3089
        %v3091 = vand.u32 %v3042, 4294901760
        %3092 = vmatmul.f32.gmra.mxu0 %v3091
        %v3093 = vpop.f32.mrf.mxu0
        %v3094 = vadd.f32 %v3068, %v3093
        %3095 = vdwg.mxu0
        %3096 = vmatpush.msra.mxu0 0.0
        %3097 = vmatpush.msra.mxu0 0.0
        %3098 = vmatpush.msra.mxu0 0.0
        %3099 = vmatpush.msra.mxu0 0.0
        %3100 = vmatpush.msra.mxu0 0.0
        %3101 = vmatpush.msra.mxu0 0.0
        %3102 = vmatpush.msra.mxu0 0.0
        %3103 = vmatpush.msra.mxu0 0.0
        %3104 = vmatpush.msra.mxu0 0.0
        %3105 = vmatpush.msra.mxu0 0.0
        %3106 = vmatpush.msra.mxu0 0.0
        %3107 = vmatpush.msra.mxu0 0.0
        %3108 = vmatpush.msra.mxu0 0.0
        %3109 = vmatpush.msra.mxu0 0.0
        %3110 = vmatpush.msra.mxu0 0.0
        %v3111 = vand.u32 %v3040, 4294901760
        %v3112 = vsub.f32 %v3040, %v3111
        %3113 = vmatpush.msra.mxu0 %v3112
        %v3114 = vand.u32 %v3042, 4294901760
        %v3115 = vsub.f32 %v3042, %v3114
        %3116 = vmatmul.f32.gmra.mxu0 %v3115
        %v3117 = vpop.f32.mrf.mxu0
        %v3118 = vadd.f32 %v3094, %v3117
        %3119 = vdwg.mxu0
        %3120 = vmatpush.msra.mxu0 0.0
        %3121 = vmatpush.msra.mxu0 0.0
        %3122 = vmatpush.msra.mxu0 0.0
        %3123 = vmatpush.msra.mxu0 0.0
        %3124 = vmatpush.msra.mxu0 0.0
        %3125 = vmatpush.msra.mxu0 0.0
        %3126 = vmatpush.msra.mxu0 0.0
        %3127 = vmatpush.msra.mxu0 0.0
        %3128 = vmatpush.msra.mxu0 0.0
        %3129 = vmatpush.msra.mxu0 0.0
        %3130 = vmatpush.msra.mxu0 0.0
        %3131 = vmatpush.msra.mxu0 0.0
        %3132 = vmatpush.msra.mxu0 0.0
        %3133 = vmatpush.msra.mxu0 0.0
        %3134 = vmatpush.msra.mxu0 0.0
        %v3135 = vand.u32 %v3040, 4294901760
        %3136 = vmatpush.msra.mxu0 %v3135
        %v3137 = vand.u32 %v3042, 4294901760
        %v3138 = vsub.f32 %v3042, %v3137
        %v3139 = vand.u32 %v3138, 4294901760
        %3140 = vmatmul.f32.gmra.mxu0 %v3139
        %v3141 = vpop.f32.mrf.mxu0
        %v3142 = vadd.f32 %v3118, %v3141
        %3143 = vdwg.mxu0
        %3144 = vmatpush.msra.mxu0 0.0
        %3145 = vmatpush.msra.mxu0 0.0
        %3146 = vmatpush.msra.mxu0 0.0
        %3147 = vmatpush.msra.mxu0 0.0
        %3148 = vmatpush.msra.mxu0 0.0
        %3149 = vmatpush.msra.mxu0 0.0
        %3150 = vmatpush.msra.mxu0 0.0
        %3151 = vmatpush.msra.mxu0 0.0
        %3152 = vmatpush.msra.mxu0 0.0
        %3153 = vmatpush.msra.mxu0 0.0
        %3154 = vmatpush.msra.mxu0 0.0
        %3155 = vmatpush.msra.mxu0 0.0
        %3156 = vmatpush.msra.mxu0 0.0
        %3157 = vmatpush.msra.mxu0 0.0
        %3158 = vmatpush.msra.mxu0 0.0
        %v3159 = vand.u32 %v3040, 4294901760
        %v3160 = vsub.f32 %v3040, %v3159
        %v3161 = vand.u32 %v3160, 4294901760
        %3162 = vmatpush.msra.mxu0 %v3161
        %v3163 = vand.u32 %v3042, 4294901760
        %3164 = vmatmul.f32.gmra.mxu0 %v3163
        %v3165 = vpop.f32.mrf.mxu0
        %v3166 = vadd.f32 %v3142, %v3165
        %3167 = vdwg.mxu0
        %3168 = vmatpush.msra.mxu0 0.0
        %3169 = vmatpush.msra.mxu0 0.0
        %3170 = vmatpush.msra.mxu0 0.0
        %3171 = vmatpush.msra.mxu0 0.0
        %3172 = vmatpush.msra.mxu0 0.0
        %3173 = vmatpush.msra.mxu0 0.0
        %3174 = vmatpush.msra.mxu0 0.0
        %3175 = vmatpush.msra.mxu0 0.0
        %3176 = vmatpush.msra.mxu0 0.0
        %3177 = vmatpush.msra.mxu0 0.0
        %3178 = vmatpush.msra.mxu0 0.0
        %3179 = vmatpush.msra.mxu0 0.0
        %3180 = vmatpush.msra.mxu0 0.0
        %3181 = vmatpush.msra.mxu0 0.0
        %3182 = vmatpush.msra.mxu0 0.0
        %v3183 = vand.u32 %v3040, 4294901760
        %3184 = vmatpush.msra.mxu0 %v3183
        %v3185 = vand.u32 %v3042, 4294901760
        %3186 = vmatmul.f32.gmra.mxu0 %v3185
        %v3187 = vpop.f32.mrf.mxu0
        %v3188 = vadd.f32 %v3166, %v3187
        %3189 = vdwg.mxu0
        %3190 = vst.msk [vmem:[#allocation2 + $0x2] sm:$0x1] %vm2863, %v3188
        %v3191 = vperm.slane %v2393, 3
        %v3192 = vmul.f32 %v2699, %v3191
        %v3193 = vsel %vm2702, %v3192, 0.0
        %3194 = vadd.xlane.f32.xlu0 %v3193
        %v3195 = vpop.xlane.xlu0 %3194
        %v3196 = vperm.slane %v2121, 3
        %v3197 = vmul.f32 %v2696, %v3196
        %v3198 = vmul.f32 %v3197, 1.442695
        %v3199 = vpow.pop %v3198
        %v3200 = vmul.f32 %v3199, %v3040
        %v3201 = vperm.slane %v2689, 3
        %v3202 = vmul.f32 %v3195, %v3201
        %v3203 = vadd.f32 %v3200, %v3202
        %v3204 = vrot.slane %v2675, 3
        %v3205 = vsel %vm2702, %v3204, 0
        %3207 = vmatpush.msra.mxu0 0.0
        %3208 = vmatpush.msra.mxu0 0.0
        %3209 = vmatpush.msra.mxu0 0.0
        %3210 = vmatpush.msra.mxu0 0.0
        %3211 = vmatpush.msra.mxu0 0.0
        %3212 = vmatpush.msra.mxu0 0.0
        %3213 = vmatpush.msra.mxu0 0.0
        %3214 = vmatpush.msra.mxu0 0.0
        %3215 = vmatpush.msra.mxu0 0.0
        %3216 = vmatpush.msra.mxu0 0.0
        %3217 = vmatpush.msra.mxu0 0.0
        %3218 = vmatpush.msra.mxu0 0.0
        %3219 = vmatpush.msra.mxu0 0.0
        %3220 = vmatpush.msra.mxu0 0.0
        %3221 = vmatpush.msra.mxu0 0.0
        %v3222 = vand.u32 %v3203, 4294901760
        %3223 = vmatpush.msra.mxu0 %v3222
        %v3224 = vand.u32 %v3205, 4294901760
        %v3225 = vsub.f32 %v3205, %v3224
        %v3226 = vand.u32 %v3225, 4294901760
        %v3227 = vsub.f32 %v3225, %v3226
        %v3228 = vand.u32 %v3227, 4294901760
        %3229 = vmatmul.f32.gmra.mxu0 %v3228
        %v3230 = vpop.f32.mrf.mxu0
        %v3231 = vadd.f32 0.0, %v3230
        %3232 = vdwg.mxu0
        %3233 = vmatpush.msra.mxu0 0.0
        %3234 = vmatpush.msra.mxu0 0.0
        %3235 = vmatpush.msra.mxu0 0.0
        %3236 = vmatpush.msra.mxu0 0.0
        %3237 = vmatpush.msra.mxu0 0.0
        %3238 = vmatpush.msra.mxu0 0.0
        %3239 = vmatpush.msra.mxu0 0.0
        %3240 = vmatpush.msra.mxu0 0.0
        %3241 = vmatpush.msra.mxu0 0.0
        %3242 = vmatpush.msra.mxu0 0.0
        %3243 = vmatpush.msra.mxu0 0.0
        %3244 = vmatpush.msra.mxu0 0.0
        %3245 = vmatpush.msra.mxu0 0.0
        %3246 = vmatpush.msra.mxu0 0.0
        %3247 = vmatpush.msra.mxu0 0.0
        %v3248 = vand.u32 %v3203, 4294901760
        %v3249 = vsub.f32 %v3203, %v3248
        %v3250 = vand.u32 %v3249, 4294901760
        %v3251 = vsub.f32 %v3249, %v3250
        %v3252 = vand.u32 %v3251, 4294901760
        %3253 = vmatpush.msra.mxu0 %v3252
        %v3254 = vand.u32 %v3205, 4294901760
        %3255 = vmatmul.f32.gmra.mxu0 %v3254
        %v3256 = vpop.f32.mrf.mxu0
        %v3257 = vadd.f32 %v3231, %v3256
        %3258 = vdwg.mxu0
        %3259 = vmatpush.msra.mxu0 0.0
        %3260 = vmatpush.msra.mxu0 0.0
        %3261 = vmatpush.msra.mxu0 0.0
        %3262 = vmatpush.msra.mxu0 0.0
        %3263 = vmatpush.msra.mxu0 0.0
        %3264 = vmatpush.msra.mxu0 0.0
        %3265 = vmatpush.msra.mxu0 0.0
        %3266 = vmatpush.msra.mxu0 0.0
        %3267 = vmatpush.msra.mxu0 0.0
        %3268 = vmatpush.msra.mxu0 0.0
        %3269 = vmatpush.msra.mxu0 0.0
        %3270 = vmatpush.msra.mxu0 0.0
        %3271 = vmatpush.msra.mxu0 0.0
        %3272 = vmatpush.msra.mxu0 0.0
        %3273 = vmatpush.msra.mxu0 0.0
        %v3274 = vand.u32 %v3203, 4294901760
        %v3275 = vsub.f32 %v3203, %v3274
        %3276 = vmatpush.msra.mxu0 %v3275
        %v3277 = vand.u32 %v3205, 4294901760
        %v3278 = vsub.f32 %v3205, %v3277
        %3279 = vmatmul.f32.gmra.mxu0 %v3278
        %v3280 = vpop.f32.mrf.mxu0
        %v3281 = vadd.f32 %v3257, %v3280
        %3282 = vdwg.mxu0
        %3283 = vmatpush.msra.mxu0 0.0
        %3284 = vmatpush.msra.mxu0 0.0
        %3285 = vmatpush.msra.mxu0 0.0
        %3286 = vmatpush.msra.mxu0 0.0
        %3287 = vmatpush.msra.mxu0 0.0
        %3288 = vmatpush.msra.mxu0 0.0
        %3289 = vmatpush.msra.mxu0 0.0
        %3290 = vmatpush.msra.mxu0 0.0
        %3291 = vmatpush.msra.mxu0 0.0
        %3292 = vmatpush.msra.mxu0 0.0
        %3293 = vmatpush.msra.mxu0 0.0
        %3294 = vmatpush.msra.mxu0 0.0
        %3295 = vmatpush.msra.mxu0 0.0
        %3296 = vmatpush.msra.mxu0 0.0
        %3297 = vmatpush.msra.mxu0 0.0
        %v3298 = vand.u32 %v3203, 4294901760
        %3299 = vmatpush.msra.mxu0 %v3298
        %v3300 = vand.u32 %v3205, 4294901760
        %v3301 = vsub.f32 %v3205, %v3300
        %v3302 = vand.u32 %v3301, 4294901760
        %3303 = vmatmul.f32.gmra.mxu0 %v3302
        %v3304 = vpop.f32.mrf.mxu0
        %v3305 = vadd.f32 %v3281, %v3304
        %3306 = vdwg.mxu0
        %3307 = vmatpush.msra.mxu0 0.0
        %3308 = vmatpush.msra.mxu0 0.0
        %3309 = vmatpush.msra.mxu0 0.0
        %3310 = vmatpush.msra.mxu0 0.0
        %3311 = vmatpush.msra.mxu0 0.0
        %3312 = vmatpush.msra.mxu0 0.0
        %3313 = vmatpush.msra.mxu0 0.0
        %3314 = vmatpush.msra.mxu0 0.0
        %3315 = vmatpush.msra.mxu0 0.0
        %3316 = vmatpush.msra.mxu0 0.0
        %3317 = vmatpush.msra.mxu0 0.0
        %3318 = vmatpush.msra.mxu0 0.0
        %3319 = vmatpush.msra.mxu0 0.0
        %3320 = vmatpush.msra.mxu0 0.0
        %3321 = vmatpush.msra.mxu0 0.0
        %v3322 = vand.u32 %v3203, 4294901760
        %v3323 = vsub.f32 %v3203, %v3322
        %v3324 = vand.u32 %v3323, 4294901760
        %3325 = vmatpush.msra.mxu0 %v3324
        %v3326 = vand.u32 %v3205, 4294901760
        %3327 = vmatmul.f32.gmra.mxu0 %v3326
        %v3328 = vpop.f32.mrf.mxu0
        %v3329 = vadd.f32 %v3305, %v3328
        %3330 = vdwg.mxu0
        %3331 = vmatpush.msra.mxu0 0.0
        %3332 = vmatpush.msra.mxu0 0.0
        %3333 = vmatpush.msra.mxu0 0.0
        %3334 = vmatpush.msra.mxu0 0.0
        %3335 = vmatpush.msra.mxu0 0.0
        %3336 = vmatpush.msra.mxu0 0.0
        %3337 = vmatpush.msra.mxu0 0.0
        %3338 = vmatpush.msra.mxu0 0.0
        %3339 = vmatpush.msra.mxu0 0.0
        %3340 = vmatpush.msra.mxu0 0.0
        %3341 = vmatpush.msra.mxu0 0.0
        %3342 = vmatpush.msra.mxu0 0.0
        %3343 = vmatpush.msra.mxu0 0.0
        %3344 = vmatpush.msra.mxu0 0.0
        %3345 = vmatpush.msra.mxu0 0.0
        %v3346 = vand.u32 %v3203, 4294901760
        %3347 = vmatpush.msra.mxu0 %v3346
        %v3348 = vand.u32 %v3205, 4294901760
        %3349 = vmatmul.f32.gmra.mxu0 %v3348
        %v3350 = vpop.f32.mrf.mxu0
        %v3351 = vadd.f32 %v3329, %v3350
        %3352 = vdwg.mxu0
        %3353 = vst.msk [vmem:[#allocation2 + $0x3] sm:$0x1] %vm2863, %v3351
        %v3354 = vperm.slane %v2393, 4
        %v3355 = vmul.f32 %v2699, %v3354
        %v3356 = vsel %vm2702, %v3355, 0.0
        %3357 = vadd.xlane.f32.xlu0 %v3356
        %v3358 = vpop.xlane.xlu0 %3357
        %v3359 = vperm.slane %v2121, 4
        %v3360 = vmul.f32 %v2696, %v3359
        %v3361 = vmul.f32 %v3360, 1.442695
        %v3362 = vpow.pop %v3361
        %v3363 = vmul.f32 %v3362, %v3203
        %v3364 = vperm.slane %v2689, 4
        %v3365 = vmul.f32 %v3358, %v3364
        %v3366 = vadd.f32 %v3363, %v3365
        %v3367 = vrot.slane %v2675, 4
        %v3368 = vsel %vm2702, %v3367, 0
        %3370 = vmatpush.msra.mxu0 0.0
        %3371 = vmatpush.msra.mxu0 0.0
        %3372 = vmatpush.msra.mxu0 0.0
        %3373 = vmatpush.msra.mxu0 0.0
        %3374 = vmatpush.msra.mxu0 0.0
        %3375 = vmatpush.msra.mxu0 0.0
        %3376 = vmatpush.msra.mxu0 0.0
        %3377 = vmatpush.msra.mxu0 0.0
        %3378 = vmatpush.msra.mxu0 0.0
        %3379 = vmatpush.msra.mxu0 0.0
        %3380 = vmatpush.msra.mxu0 0.0
        %3381 = vmatpush.msra.mxu0 0.0
        %3382 = vmatpush.msra.mxu0 0.0
        %3383 = vmatpush.msra.mxu0 0.0
        %3384 = vmatpush.msra.mxu0 0.0
        %v3385 = vand.u32 %v3366, 4294901760
        %3386 = vmatpush.msra.mxu0 %v3385
        %v3387 = vand.u32 %v3368, 4294901760
        %v3388 = vsub.f32 %v3368, %v3387
        %v3389 = vand.u32 %v3388, 4294901760
        %v3390 = vsub.f32 %v3388, %v3389
        %v3391 = vand.u32 %v3390, 4294901760
        %3392 = vmatmul.f32.gmra.mxu0 %v3391
        %v3393 = vpop.f32.mrf.mxu0
        %v3394 = vadd.f32 0.0, %v3393
        %3395 = vdwg.mxu0
        %3396 = vmatpush.msra.mxu0 0.0
        %3397 = vmatpush.msra.mxu0 0.0
        %3398 = vmatpush.msra.mxu0 0.0
        %3399 = vmatpush.msra.mxu0 0.0
        %3400 = vmatpush.msra.mxu0 0.0
        %3401 = vmatpush.msra.mxu0 0.0
        %3402 = vmatpush.msra.mxu0 0.0
        %3403 = vmatpush.msra.mxu0 0.0
        %3404 = vmatpush.msra.mxu0 0.0
        %3405 = vmatpush.msra.mxu0 0.0
        %3406 = vmatpush.msra.mxu0 0.0
        %3407 = vmatpush.msra.mxu0 0.0
        %3408 = vmatpush.msra.mxu0 0.0
        %3409 = vmatpush.msra.mxu0 0.0
        %3410 = vmatpush.msra.mxu0 0.0
        %v3411 = vand.u32 %v3366, 4294901760
        %v3412 = vsub.f32 %v3366, %v3411
        %v3413 = vand.u32 %v3412, 4294901760
        %v3414 = vsub.f32 %v3412, %v3413
        %v3415 = vand.u32 %v3414, 4294901760
        %3416 = vmatpush.msra.mxu0 %v3415
        %v3417 = vand.u32 %v3368, 4294901760
        %3418 = vmatmul.f32.gmra.mxu0 %v3417
        %v3419 = vpop.f32.mrf.mxu0
        %v3420 = vadd.f32 %v3394, %v3419
        %3421 = vdwg.mxu0
        %3422 = vmatpush.msra.mxu0 0.0
        %3423 = vmatpush.msra.mxu0 0.0
        %3424 = vmatpush.msra.mxu0 0.0
        %3425 = vmatpush.msra.mxu0 0.0
        %3426 = vmatpush.msra.mxu0 0.0
        %3427 = vmatpush.msra.mxu0 0.0
        %3428 = vmatpush.msra.mxu0 0.0
        %3429 = vmatpush.msra.mxu0 0.0
        %3430 = vmatpush.msra.mxu0 0.0
        %3431 = vmatpush.msra.mxu0 0.0
        %3432 = vmatpush.msra.mxu0 0.0
        %3433 = vmatpush.msra.mxu0 0.0
        %3434 = vmatpush.msra.mxu0 0.0
        %3435 = vmatpush.msra.mxu0 0.0
        %3436 = vmatpush.msra.mxu0 0.0
        %v3437 = vand.u32 %v3366, 4294901760
        %v3438 = vsub.f32 %v3366, %v3437
        %3439 = vmatpush.msra.mxu0 %v3438
        %v3440 = vand.u32 %v3368, 4294901760
        %v3441 = vsub.f32 %v3368, %v3440
        %3442 = vmatmul.f32.gmra.mxu0 %v3441
        %v3443 = vpop.f32.mrf.mxu0
        %v3444 = vadd.f32 %v3420, %v3443
        %3445 = vdwg.mxu0
        %3446 = vmatpush.msra.mxu0 0.0
        %3447 = vmatpush.msra.mxu0 0.0
        %3448 = vmatpush.msra.mxu0 0.0
        %3449 = vmatpush.msra.mxu0 0.0
        %3450 = vmatpush.msra.mxu0 0.0
        %3451 = vmatpush.msra.mxu0 0.0
        %3452 = vmatpush.msra.mxu0 0.0
        %3453 = vmatpush.msra.mxu0 0.0
        %3454 = vmatpush.msra.mxu0 0.0
        %3455 = vmatpush.msra.mxu0 0.0
        %3456 = vmatpush.msra.mxu0 0.0
        %3457 = vmatpush.msra.mxu0 0.0
        %3458 = vmatpush.msra.mxu0 0.0
        %3459 = vmatpush.msra.mxu0 0.0
        %3460 = vmatpush.msra.mxu0 0.0
        %v3461 = vand.u32 %v3366, 4294901760
        %3462 = vmatpush.msra.mxu0 %v3461
        %v3463 = vand.u32 %v3368, 4294901760
        %v3464 = vsub.f32 %v3368, %v3463
        %v3465 = vand.u32 %v3464, 4294901760
        %3466 = vmatmul.f32.gmra.mxu0 %v3465
        %v3467 = vpop.f32.mrf.mxu0
        %v3468 = vadd.f32 %v3444, %v3467
        %3469 = vdwg.mxu0
        %3470 = vmatpush.msra.mxu0 0.0
        %3471 = vmatpush.msra.mxu0 0.0
        %3472 = vmatpush.msra.mxu0 0.0
        %3473 = vmatpush.msra.mxu0 0.0
        %3474 = vmatpush.msra.mxu0 0.0
        %3475 = vmatpush.msra.mxu0 0.0
        %3476 = vmatpush.msra.mxu0 0.0
        %3477 = vmatpush.msra.mxu0 0.0
        %3478 = vmatpush.msra.mxu0 0.0
        %3479 = vmatpush.msra.mxu0 0.0
        %3480 = vmatpush.msra.mxu0 0.0
        %3481 = vmatpush.msra.mxu0 0.0
        %3482 = vmatpush.msra.mxu0 0.0
        %3483 = vmatpush.msra.mxu0 0.0
        %3484 = vmatpush.msra.mxu0 0.0
        %v3485 = vand.u32 %v3366, 4294901760
        %v3486 = vsub.f32 %v3366, %v3485
        %v3487 = vand.u32 %v3486, 4294901760
        %3488 = vmatpush.msra.mxu0 %v3487
        %v3489 = vand.u32 %v3368, 4294901760
        %3490 = vmatmul.f32.gmra.mxu0 %v3489
        %v3491 = vpop.f32.mrf.mxu0
        %v3492 = vadd.f32 %v3468, %v3491
        %3493 = vdwg.mxu0
        %3494 = vmatpush.msra.mxu0 0.0
        %3495 = vmatpush.msra.mxu0 0.0
        %3496 = vmatpush.msra.mxu0 0.0
        %3497 = vmatpush.msra.mxu0 0.0
        %3498 = vmatpush.msra.mxu0 0.0
        %3499 = vmatpush.msra.mxu0 0.0
        %3500 = vmatpush.msra.mxu0 0.0
        %3501 = vmatpush.msra.mxu0 0.0
        %3502 = vmatpush.msra.mxu0 0.0
        %3503 = vmatpush.msra.mxu0 0.0
        %3504 = vmatpush.msra.mxu0 0.0
        %3505 = vmatpush.msra.mxu0 0.0
        %3506 = vmatpush.msra.mxu0 0.0
        %3507 = vmatpush.msra.mxu0 0.0
        %3508 = vmatpush.msra.mxu0 0.0
        %v3509 = vand.u32 %v3366, 4294901760
        %3510 = vmatpush.msra.mxu0 %v3509
        %v3511 = vand.u32 %v3368, 4294901760
        %3512 = vmatmul.f32.gmra.mxu0 %v3511
        %v3513 = vpop.f32.mrf.mxu0
        %v3514 = vadd.f32 %v3492, %v3513
        %3515 = vdwg.mxu0
        %3516 = vst.msk [vmem:[#allocation2 + $0x4] sm:$0x1] %vm2863, %v3514
        %v3517 = vperm.slane %v2393, 5
        %v3518 = vmul.f32 %v2699, %v3517
        %v3519 = vsel %vm2702, %v3518, 0.0
        %3520 = vadd.xlane.f32.xlu0 %v3519
        %v3521 = vpop.xlane.xlu0 %3520
        %v3522 = vperm.slane %v2121, 5
        %v3523 = vmul.f32 %v2696, %v3522
        %v3524 = vmul.f32 %v3523, 1.442695
        %v3525 = vpow.pop %v3524
        %v3526 = vmul.f32 %v3525, %v3366
        %v3527 = vperm.slane %v2689, 5
        %v3528 = vmul.f32 %v3521, %v3527
        %v3529 = vadd.f32 %v3526, %v3528
        %v3530 = vrot.slane %v2675, 5
        %v3531 = vsel %vm2702, %v3530, 0
        %3533 = vmatpush.msra.mxu0 0.0
        %3534 = vmatpush.msra.mxu0 0.0
        %3535 = vmatpush.msra.mxu0 0.0
        %3536 = vmatpush.msra.mxu0 0.0
        %3537 = vmatpush.msra.mxu0 0.0
        %3538 = vmatpush.msra.mxu0 0.0
        %3539 = vmatpush.msra.mxu0 0.0
        %3540 = vmatpush.msra.mxu0 0.0
        %3541 = vmatpush.msra.mxu0 0.0
        %3542 = vmatpush.msra.mxu0 0.0
        %3543 = vmatpush.msra.mxu0 0.0
        %3544 = vmatpush.msra.mxu0 0.0
        %3545 = vmatpush.msra.mxu0 0.0
        %3546 = vmatpush.msra.mxu0 0.0
        %3547 = vmatpush.msra.mxu0 0.0
        %v3548 = vand.u32 %v3529, 4294901760
        %3549 = vmatpush.msra.mxu0 %v3548
        %v3550 = vand.u32 %v3531, 4294901760
        %v3551 = vsub.f32 %v3531, %v3550
        %v3552 = vand.u32 %v3551, 4294901760
        %v3553 = vsub.f32 %v3551, %v3552
        %v3554 = vand.u32 %v3553, 4294901760
        %3555 = vmatmul.f32.gmra.mxu0 %v3554
        %v3556 = vpop.f32.mrf.mxu0
        %v3557 = vadd.f32 0.0, %v3556
        %3558 = vdwg.mxu0
        %3559 = vmatpush.msra.mxu0 0.0
        %3560 = vmatpush.msra.mxu0 0.0
        %3561 = vmatpush.msra.mxu0 0.0
        %3562 = vmatpush.msra.mxu0 0.0
        %3563 = vmatpush.msra.mxu0 0.0
        %3564 = vmatpush.msra.mxu0 0.0
        %3565 = vmatpush.msra.mxu0 0.0
        %3566 = vmatpush.msra.mxu0 0.0
        %3567 = vmatpush.msra.mxu0 0.0
        %3568 = vmatpush.msra.mxu0 0.0
        %3569 = vmatpush.msra.mxu0 0.0
        %3570 = vmatpush.msra.mxu0 0.0
        %3571 = vmatpush.msra.mxu0 0.0
        %3572 = vmatpush.msra.mxu0 0.0
        %3573 = vmatpush.msra.mxu0 0.0
        %v3574 = vand.u32 %v3529, 4294901760
        %v3575 = vsub.f32 %v3529, %v3574
        %v3576 = vand.u32 %v3575, 4294901760
        %v3577 = vsub.f32 %v3575, %v3576
        %v3578 = vand.u32 %v3577, 4294901760
        %3579 = vmatpush.msra.mxu0 %v3578
        %v3580 = vand.u32 %v3531, 4294901760
        %3581 = vmatmul.f32.gmra.mxu0 %v3580
        %v3582 = vpop.f32.mrf.mxu0
        %v3583 = vadd.f32 %v3557, %v3582
        %3584 = vdwg.mxu0
        %3585 = vmatpush.msra.mxu0 0.0
        %3586 = vmatpush.msra.mxu0 0.0
        %3587 = vmatpush.msra.mxu0 0.0
        %3588 = vmatpush.msra.mxu0 0.0
        %3589 = vmatpush.msra.mxu0 0.0
        %3590 = vmatpush.msra.mxu0 0.0
        %3591 = vmatpush.msra.mxu0 0.0
        %3592 = vmatpush.msra.mxu0 0.0
        %3593 = vmatpush.msra.mxu0 0.0
        %3594 = vmatpush.msra.mxu0 0.0
        %3595 = vmatpush.msra.mxu0 0.0
        %3596 = vmatpush.msra.mxu0 0.0
        %3597 = vmatpush.msra.mxu0 0.0
        %3598 = vmatpush.msra.mxu0 0.0
        %3599 = vmatpush.msra.mxu0 0.0
        %v3600 = vand.u32 %v3529, 4294901760
        %v3601 = vsub.f32 %v3529, %v3600
        %3602 = vmatpush.msra.mxu0 %v3601
        %v3603 = vand.u32 %v3531, 4294901760
        %v3604 = vsub.f32 %v3531, %v3603
        %3605 = vmatmul.f32.gmra.mxu0 %v3604
        %v3606 = vpop.f32.mrf.mxu0
        %v3607 = vadd.f32 %v3583, %v3606
        %3608 = vdwg.mxu0
        %3609 = vmatpush.msra.mxu0 0.0
        %3610 = vmatpush.msra.mxu0 0.0
        %3611 = vmatpush.msra.mxu0 0.0
        %3612 = vmatpush.msra.mxu0 0.0
        %3613 = vmatpush.msra.mxu0 0.0
        %3614 = vmatpush.msra.mxu0 0.0
        %3615 = vmatpush.msra.mxu0 0.0
        %3616 = vmatpush.msra.mxu0 0.0
        %3617 = vmatpush.msra.mxu0 0.0
        %3618 = vmatpush.msra.mxu0 0.0
        %3619 = vmatpush.msra.mxu0 0.0
        %3620 = vmatpush.msra.mxu0 0.0
        %3621 = vmatpush.msra.mxu0 0.0
        %3622 = vmatpush.msra.mxu0 0.0
        %3623 = vmatpush.msra.mxu0 0.0
        %v3624 = vand.u32 %v3529, 4294901760
        %3625 = vmatpush.msra.mxu0 %v3624
        %v3626 = vand.u32 %v3531, 4294901760
        %v3627 = vsub.f32 %v3531, %v3626
        %v3628 = vand.u32 %v3627, 4294901760
        %3629 = vmatmul.f32.gmra.mxu0 %v3628
        %v3630 = vpop.f32.mrf.mxu0
        %v3631 = vadd.f32 %v3607, %v3630
        %3632 = vdwg.mxu0
        %3633 = vmatpush.msra.mxu0 0.0
        %3634 = vmatpush.msra.mxu0 0.0
        %3635 = vmatpush.msra.mxu0 0.0
        %3636 = vmatpush.msra.mxu0 0.0
        %3637 = vmatpush.msra.mxu0 0.0
        %3638 = vmatpush.msra.mxu0 0.0
        %3639 = vmatpush.msra.mxu0 0.0
        %3640 = vmatpush.msra.mxu0 0.0
        %3641 = vmatpush.msra.mxu0 0.0
        %3642 = vmatpush.msra.mxu0 0.0
        %3643 = vmatpush.msra.mxu0 0.0
        %3644 = vmatpush.msra.mxu0 0.0
        %3645 = vmatpush.msra.mxu0 0.0
        %3646 = vmatpush.msra.mxu0 0.0
        %3647 = vmatpush.msra.mxu0 0.0
        %v3648 = vand.u32 %v3529, 4294901760
        %v3649 = vsub.f32 %v3529, %v3648
        %v3650 = vand.u32 %v3649, 4294901760
        %3651 = vmatpush.msra.mxu0 %v3650
        %v3652 = vand.u32 %v3531, 4294901760
        %3653 = vmatmul.f32.gmra.mxu0 %v3652
        %v3654 = vpop.f32.mrf.mxu0
        %v3655 = vadd.f32 %v3631, %v3654
        %3656 = vdwg.mxu0
        %3657 = vmatpush.msra.mxu0 0.0
        %3658 = vmatpush.msra.mxu0 0.0
        %3659 = vmatpush.msra.mxu0 0.0
        %3660 = vmatpush.msra.mxu0 0.0
        %3661 = vmatpush.msra.mxu0 0.0
        %3662 = vmatpush.msra.mxu0 0.0
        %3663 = vmatpush.msra.mxu0 0.0
        %3664 = vmatpush.msra.mxu0 0.0
        %3665 = vmatpush.msra.mxu0 0.0
        %3666 = vmatpush.msra.mxu0 0.0
        %3667 = vmatpush.msra.mxu0 0.0
        %3668 = vmatpush.msra.mxu0 0.0
        %3669 = vmatpush.msra.mxu0 0.0
        %3670 = vmatpush.msra.mxu0 0.0
        %3671 = vmatpush.msra.mxu0 0.0
        %v3672 = vand.u32 %v3529, 4294901760
        %3673 = vmatpush.msra.mxu0 %v3672
        %v3674 = vand.u32 %v3531, 4294901760
        %3675 = vmatmul.f32.gmra.mxu0 %v3674
        %v3676 = vpop.f32.mrf.mxu0
        %v3677 = vadd.f32 %v3655, %v3676
        %3678 = vdwg.mxu0
        %3679 = vst.msk [vmem:[#allocation2 + $0x5] sm:$0x1] %vm2863, %v3677
        %v3680 = vperm.slane %v2393, 6
        %v3681 = vmul.f32 %v2699, %v3680
        %v3682 = vsel %vm2702, %v3681, 0.0
        %3683 = vadd.xlane.f32.xlu0 %v3682
        %v3684 = vpop.xlane.xlu0 %3683
        %v3685 = vperm.slane %v2121, 6
        %v3686 = vmul.f32 %v2696, %v3685
        %v3687 = vmul.f32 %v3686, 1.442695
        %v3688 = vpow.pop %v3687
        %v3689 = vmul.f32 %v3688, %v3529
        %v3690 = vperm.slane %v2689, 6
        %v3691 = vmul.f32 %v3684, %v3690
        %v3692 = vadd.f32 %v3689, %v3691
        %v3693 = vrot.slane %v2675, 6
        %v3694 = vsel %vm2702, %v3693, 0
        %3696 = vmatpush.msra.mxu0 0.0
        %3697 = vmatpush.msra.mxu0 0.0
        %3698 = vmatpush.msra.mxu0 0.0
        %3699 = vmatpush.msra.mxu0 0.0
        %3700 = vmatpush.msra.mxu0 0.0
        %3701 = vmatpush.msra.mxu0 0.0
        %3702 = vmatpush.msra.mxu0 0.0
        %3703 = vmatpush.msra.mxu0 0.0
        %3704 = vmatpush.msra.mxu0 0.0
        %3705 = vmatpush.msra.mxu0 0.0
        %3706 = vmatpush.msra.mxu0 0.0
        %3707 = vmatpush.msra.mxu0 0.0
        %3708 = vmatpush.msra.mxu0 0.0
        %3709 = vmatpush.msra.mxu0 0.0
        %3710 = vmatpush.msra.mxu0 0.0
        %v3711 = vand.u32 %v3692, 4294901760
        %3712 = vmatpush.msra.mxu0 %v3711
        %v3713 = vand.u32 %v3694, 4294901760
        %v3714 = vsub.f32 %v3694, %v3713
        %v3715 = vand.u32 %v3714, 4294901760
        %v3716 = vsub.f32 %v3714, %v3715
        %v3717 = vand.u32 %v3716, 4294901760
        %3718 = vmatmul.f32.gmra.mxu0 %v3717
        %v3719 = vpop.f32.mrf.mxu0
        %v3720 = vadd.f32 0.0, %v3719
        %3721 = vdwg.mxu0
        %3722 = vmatpush.msra.mxu0 0.0
        %3723 = vmatpush.msra.mxu0 0.0
        %3724 = vmatpush.msra.mxu0 0.0
        %3725 = vmatpush.msra.mxu0 0.0
        %3726 = vmatpush.msra.mxu0 0.0
        %3727 = vmatpush.msra.mxu0 0.0
        %3728 = vmatpush.msra.mxu0 0.0
        %3729 = vmatpush.msra.mxu0 0.0
        %3730 = vmatpush.msra.mxu0 0.0
        %3731 = vmatpush.msra.mxu0 0.0
        %3732 = vmatpush.msra.mxu0 0.0
        %3733 = vmatpush.msra.mxu0 0.0
        %3734 = vmatpush.msra.mxu0 0.0
        %3735 = vmatpush.msra.mxu0 0.0
        %3736 = vmatpush.msra.mxu0 0.0
        %v3737 = vand.u32 %v3692, 4294901760
        %v3738 = vsub.f32 %v3692, %v3737
        %v3739 = vand.u32 %v3738, 4294901760
        %v3740 = vsub.f32 %v3738, %v3739
        %v3741 = vand.u32 %v3740, 4294901760
        %3742 = vmatpush.msra.mxu0 %v3741
        %v3743 = vand.u32 %v3694, 4294901760
        %3744 = vmatmul.f32.gmra.mxu0 %v3743
        %v3745 = vpop.f32.mrf.mxu0
        %v3746 = vadd.f32 %v3720, %v3745
        %3747 = vdwg.mxu0
        %3748 = vmatpush.msra.mxu0 0.0
        %3749 = vmatpush.msra.mxu0 0.0
        %3750 = vmatpush.msra.mxu0 0.0
        %3751 = vmatpush.msra.mxu0 0.0
        %3752 = vmatpush.msra.mxu0 0.0
        %3753 = vmatpush.msra.mxu0 0.0
        %3754 = vmatpush.msra.mxu0 0.0
        %3755 = vmatpush.msra.mxu0 0.0
        %3756 = vmatpush.msra.mxu0 0.0
        %3757 = vmatpush.msra.mxu0 0.0
        %3758 = vmatpush.msra.mxu0 0.0
        %3759 = vmatpush.msra.mxu0 0.0
        %3760 = vmatpush.msra.mxu0 0.0
        %3761 = vmatpush.msra.mxu0 0.0
        %3762 = vmatpush.msra.mxu0 0.0
        %v3763 = vand.u32 %v3692, 4294901760
        %v3764 = vsub.f32 %v3692, %v3763
        %3765 = vmatpush.msra.mxu0 %v3764
        %v3766 = vand.u32 %v3694, 4294901760
        %v3767 = vsub.f32 %v3694, %v3766
        %3768 = vmatmul.f32.gmra.mxu0 %v3767
        %v3769 = vpop.f32.mrf.mxu0
        %v3770 = vadd.f32 %v3746, %v3769
        %3771 = vdwg.mxu0
        %3772 = vmatpush.msra.mxu0 0.0
        %3773 = vmatpush.msra.mxu0 0.0
        %3774 = vmatpush.msra.mxu0 0.0
        %3775 = vmatpush.msra.mxu0 0.0
        %3776 = vmatpush.msra.mxu0 0.0
        %3777 = vmatpush.msra.mxu0 0.0
        %3778 = vmatpush.msra.mxu0 0.0
        %3779 = vmatpush.msra.mxu0 0.0
        %3780 = vmatpush.msra.mxu0 0.0
        %3781 = vmatpush.msra.mxu0 0.0
        %3782 = vmatpush.msra.mxu0 0.0
        %3783 = vmatpush.msra.mxu0 0.0
        %3784 = vmatpush.msra.mxu0 0.0
        %3785 = vmatpush.msra.mxu0 0.0
        %3786 = vmatpush.msra.mxu0 0.0
        %v3787 = vand.u32 %v3692, 4294901760
        %3788 = vmatpush.msra.mxu0 %v3787
        %v3789 = vand.u32 %v3694, 4294901760
        %v3790 = vsub.f32 %v3694, %v3789
        %v3791 = vand.u32 %v3790, 4294901760
        %3792 = vmatmul.f32.gmra.mxu0 %v3791
        %v3793 = vpop.f32.mrf.mxu0
        %v3794 = vadd.f32 %v3770, %v3793
        %3795 = vdwg.mxu0
        %3796 = vmatpush.msra.mxu0 0.0
        %3797 = vmatpush.msra.mxu0 0.0
        %3798 = vmatpush.msra.mxu0 0.0
        %3799 = vmatpush.msra.mxu0 0.0
        %3800 = vmatpush.msra.mxu0 0.0
        %3801 = vmatpush.msra.mxu0 0.0
        %3802 = vmatpush.msra.mxu0 0.0
        %3803 = vmatpush.msra.mxu0 0.0
        %3804 = vmatpush.msra.mxu0 0.0
        %3805 = vmatpush.msra.mxu0 0.0
        %3806 = vmatpush.msra.mxu0 0.0
        %3807 = vmatpush.msra.mxu0 0.0
        %3808 = vmatpush.msra.mxu0 0.0
        %3809 = vmatpush.msra.mxu0 0.0
        %3810 = vmatpush.msra.mxu0 0.0
        %v3811 = vand.u32 %v3692, 4294901760
        %v3812 = vsub.f32 %v3692, %v3811
        %v3813 = vand.u32 %v3812, 4294901760
        %3814 = vmatpush.msra.mxu0 %v3813
        %v3815 = vand.u32 %v3694, 4294901760
        %3816 = vmatmul.f32.gmra.mxu0 %v3815
        %v3817 = vpop.f32.mrf.mxu0
        %v3818 = vadd.f32 %v3794, %v3817
        %3819 = vdwg.mxu0
        %3820 = vmatpush.msra.mxu0 0.0
        %3821 = vmatpush.msra.mxu0 0.0
        %3822 = vmatpush.msra.mxu0 0.0
        %3823 = vmatpush.msra.mxu0 0.0
        %3824 = vmatpush.msra.mxu0 0.0
        %3825 = vmatpush.msra.mxu0 0.0
        %3826 = vmatpush.msra.mxu0 0.0
        %3827 = vmatpush.msra.mxu0 0.0
        %3828 = vmatpush.msra.mxu0 0.0
        %3829 = vmatpush.msra.mxu0 0.0
        %3830 = vmatpush.msra.mxu0 0.0
        %3831 = vmatpush.msra.mxu0 0.0
        %3832 = vmatpush.msra.mxu0 0.0
        %3833 = vmatpush.msra.mxu0 0.0
        %3834 = vmatpush.msra.mxu0 0.0
        %v3835 = vand.u32 %v3692, 4294901760
        %3836 = vmatpush.msra.mxu0 %v3835
        %v3837 = vand.u32 %v3694, 4294901760
        %3838 = vmatmul.f32.gmra.mxu0 %v3837
        %v3839 = vpop.f32.mrf.mxu0
        %v3840 = vadd.f32 %v3818, %v3839
        %3841 = vdwg.mxu0
        %3842 = vst.msk [vmem:[#allocation2 + $0x6] sm:$0x1] %vm2863, %v3840
        %v3843 = vperm.slane %v2393, 7
        %v3844 = vmul.f32 %v2699, %v3843
        %v3845 = vsel %vm2702, %v3844, 0.0
        %3846 = vadd.xlane.f32.xlu0 %v3845
        %v3847 = vpop.xlane.xlu0 %3846
        %v3848 = vperm.slane %v2121, 7
        %v3849 = vmul.f32 %v2696, %v3848
        %v3850 = vmul.f32 %v3849, 1.442695
        %v3851 = vpow.pop %v3850
        %v3852 = vmul.f32 %v3851, %v3692
        %v3853 = vperm.slane %v2689, 7
        %v3854 = vmul.f32 %v3847, %v3853
        %v3855 = vadd.f32 %v3852, %v3854
        %v3856 = vrot.slane %v2675, 7
        %v3857 = vsel %vm2702, %v3856, 0
        %3859 = vmatpush.msra.mxu0 0.0
        %3860 = vmatpush.msra.mxu0 0.0
        %3861 = vmatpush.msra.mxu0 0.0
        %3862 = vmatpush.msra.mxu0 0.0
        %3863 = vmatpush.msra.mxu0 0.0
        %3864 = vmatpush.msra.mxu0 0.0
        %3865 = vmatpush.msra.mxu0 0.0
        %3866 = vmatpush.msra.mxu0 0.0
        %3867 = vmatpush.msra.mxu0 0.0
        %3868 = vmatpush.msra.mxu0 0.0
        %3869 = vmatpush.msra.mxu0 0.0
        %3870 = vmatpush.msra.mxu0 0.0
        %3871 = vmatpush.msra.mxu0 0.0
        %3872 = vmatpush.msra.mxu0 0.0
        %3873 = vmatpush.msra.mxu0 0.0
        %v3874 = vand.u32 %v3855, 4294901760
        %3875 = vmatpush.msra.mxu0 %v3874
        %v3876 = vand.u32 %v3857, 4294901760
        %v3877 = vsub.f32 %v3857, %v3876
        %v3878 = vand.u32 %v3877, 4294901760
        %v3879 = vsub.f32 %v3877, %v3878
        %v3880 = vand.u32 %v3879, 4294901760
        %3881 = vmatmul.f32.gmra.mxu0 %v3880
        %v3882 = vpop.f32.mrf.mxu0
        %v3883 = vadd.f32 0.0, %v3882
        %3884 = vdwg.mxu0
        %3885 = vmatpush.msra.mxu0 0.0
        %3886 = vmatpush.msra.mxu0 0.0
        %3887 = vmatpush.msra.mxu0 0.0
        %3888 = vmatpush.msra.mxu0 0.0
        %3889 = vmatpush.msra.mxu0 0.0
        %3890 = vmatpush.msra.mxu0 0.0
        %3891 = vmatpush.msra.mxu0 0.0
        %3892 = vmatpush.msra.mxu0 0.0
        %3893 = vmatpush.msra.mxu0 0.0
        %3894 = vmatpush.msra.mxu0 0.0
        %3895 = vmatpush.msra.mxu0 0.0
        %3896 = vmatpush.msra.mxu0 0.0
        %3897 = vmatpush.msra.mxu0 0.0
        %3898 = vmatpush.msra.mxu0 0.0
        %3899 = vmatpush.msra.mxu0 0.0
        %v3900 = vand.u32 %v3855, 4294901760
        %v3901 = vsub.f32 %v3855, %v3900
        %v3902 = vand.u32 %v3901, 4294901760
        %v3903 = vsub.f32 %v3901, %v3902
        %v3904 = vand.u32 %v3903, 4294901760
        %3905 = vmatpush.msra.mxu0 %v3904
        %v3906 = vand.u32 %v3857, 4294901760
        %3907 = vmatmul.f32.gmra.mxu0 %v3906
        %v3908 = vpop.f32.mrf.mxu0
        %v3909 = vadd.f32 %v3883, %v3908
        %3910 = vdwg.mxu0
        %3911 = vmatpush.msra.mxu0 0.0
        %3912 = vmatpush.msra.mxu0 0.0
        %3913 = vmatpush.msra.mxu0 0.0
        %3914 = vmatpush.msra.mxu0 0.0
        %3915 = vmatpush.msra.mxu0 0.0
        %3916 = vmatpush.msra.mxu0 0.0
        %3917 = vmatpush.msra.mxu0 0.0
        %3918 = vmatpush.msra.mxu0 0.0
        %3919 = vmatpush.msra.mxu0 0.0
        %3920 = vmatpush.msra.mxu0 0.0
        %3921 = vmatpush.msra.mxu0 0.0
        %3922 = vmatpush.msra.mxu0 0.0
        %3923 = vmatpush.msra.mxu0 0.0
        %3924 = vmatpush.msra.mxu0 0.0
        %3925 = vmatpush.msra.mxu0 0.0
        %v3926 = vand.u32 %v3855, 4294901760
        %v3927 = vsub.f32 %v3855, %v3926
        %3928 = vmatpush.msra.mxu0 %v3927
        %v3929 = vand.u32 %v3857, 4294901760
        %v3930 = vsub.f32 %v3857, %v3929
        %3931 = vmatmul.f32.gmra.mxu0 %v3930
        %v3932 = vpop.f32.mrf.mxu0
        %v3933 = vadd.f32 %v3909, %v3932
        %3934 = vdwg.mxu0
        %3935 = vmatpush.msra.mxu0 0.0
        %3936 = vmatpush.msra.mxu0 0.0
        %3937 = vmatpush.msra.mxu0 0.0
        %3938 = vmatpush.msra.mxu0 0.0
        %3939 = vmatpush.msra.mxu0 0.0
        %3940 = vmatpush.msra.mxu0 0.0
        %3941 = vmatpush.msra.mxu0 0.0
        %3942 = vmatpush.msra.mxu0 0.0
        %3943 = vmatpush.msra.mxu0 0.0
        %3944 = vmatpush.msra.mxu0 0.0
        %3945 = vmatpush.msra.mxu0 0.0
        %3946 = vmatpush.msra.mxu0 0.0
        %3947 = vmatpush.msra.mxu0 0.0
        %3948 = vmatpush.msra.mxu0 0.0
        %3949 = vmatpush.msra.mxu0 0.0
        %v3950 = vand.u32 %v3855, 4294901760
        %3951 = vmatpush.msra.mxu0 %v3950
        %v3952 = vand.u32 %v3857, 4294901760
        %v3953 = vsub.f32 %v3857, %v3952
        %v3954 = vand.u32 %v3953, 4294901760
        %3955 = vmatmul.f32.gmra.mxu0 %v3954
        %v3956 = vpop.f32.mrf.mxu0
        %v3957 = vadd.f32 %v3933, %v3956
        %3958 = vdwg.mxu0
        %3959 = vmatpush.msra.mxu0 0.0
        %3960 = vmatpush.msra.mxu0 0.0
        %3961 = vmatpush.msra.mxu0 0.0
        %3962 = vmatpush.msra.mxu0 0.0
        %3963 = vmatpush.msra.mxu0 0.0
        %3964 = vmatpush.msra.mxu0 0.0
        %3965 = vmatpush.msra.mxu0 0.0
        %3966 = vmatpush.msra.mxu0 0.0
        %3967 = vmatpush.msra.mxu0 0.0
        %3968 = vmatpush.msra.mxu0 0.0
        %3969 = vmatpush.msra.mxu0 0.0
        %3970 = vmatpush.msra.mxu0 0.0
        %3971 = vmatpush.msra.mxu0 0.0
        %3972 = vmatpush.msra.mxu0 0.0
        %3973 = vmatpush.msra.mxu0 0.0
        %v3974 = vand.u32 %v3855, 4294901760
        %v3975 = vsub.f32 %v3855, %v3974
        %v3976 = vand.u32 %v3975, 4294901760
        %3977 = vmatpush.msra.mxu0 %v3976
        %v3978 = vand.u32 %v3857, 4294901760
        %3979 = vmatmul.f32.gmra.mxu0 %v3978
        %v3980 = vpop.f32.mrf.mxu0
        %v3981 = vadd.f32 %v3957, %v3980
        %3982 = vdwg.mxu0
        %3983 = vmatpush.msra.mxu0 0.0
        %3984 = vmatpush.msra.mxu0 0.0
        %3985 = vmatpush.msra.mxu0 0.0
        %3986 = vmatpush.msra.mxu0 0.0
        %3987 = vmatpush.msra.mxu0 0.0
        %3988 = vmatpush.msra.mxu0 0.0
        %3989 = vmatpush.msra.mxu0 0.0
        %3990 = vmatpush.msra.mxu0 0.0
        %3991 = vmatpush.msra.mxu0 0.0
        %3992 = vmatpush.msra.mxu0 0.0
        %3993 = vmatpush.msra.mxu0 0.0
        %3994 = vmatpush.msra.mxu0 0.0
        %3995 = vmatpush.msra.mxu0 0.0
        %3996 = vmatpush.msra.mxu0 0.0
        %3997 = vmatpush.msra.mxu0 0.0
        %v3998 = vand.u32 %v3855, 4294901760
        %3999 = vmatpush.msra.mxu0 %v3998
        %v4000 = vand.u32 %v3857, 4294901760
        %4001 = vmatmul.f32.gmra.mxu0 %v4000
        %v4002 = vpop.f32.mrf.mxu0
        %v4003 = vadd.f32 %v3981, %v4002
        %4004 = vdwg.mxu0
        %4005 = vst.msk [vmem:[#allocation2 + $0x7] sm:$0x1] %vm2863, %v4003
        %v4006 = vperm.slane %v2397, 0
        %v4007 = vmul.f32 %v2699, %v4006
        %v4008 = vsel %vm2702, %v4007, 0.0
        %4009 = vadd.xlane.f32.xlu0 %v4008
        %v4010 = vpop.xlane.xlu0 %4009
        %v4011 = vperm.slane %v2122, 0
        %v4012 = vmul.f32 %v2696, %v4011
        %v4013 = vmul.f32 %v4012, 1.442695
        %v4014 = vpow.pop %v4013
        %v4015 = vmul.f32 %v4014, %v3855
        %v4016 = vperm.slane %v2690, 0
        %v4017 = vmul.f32 %v4010, %v4016
        %v4018 = vadd.f32 %v4015, %v4017
        %v4020 = vsel %vm2702, %v2679, 0
        %4022 = vmatpush.msra.mxu0 0.0
        %4023 = vmatpush.msra.mxu0 0.0
        %4024 = vmatpush.msra.mxu0 0.0
        %4025 = vmatpush.msra.mxu0 0.0
        %4026 = vmatpush.msra.mxu0 0.0
        %4027 = vmatpush.msra.mxu0 0.0
        %4028 = vmatpush.msra.mxu0 0.0
        %4029 = vmatpush.msra.mxu0 0.0
        %4030 = vmatpush.msra.mxu0 0.0
        %4031 = vmatpush.msra.mxu0 0.0
        %4032 = vmatpush.msra.mxu0 0.0
        %4033 = vmatpush.msra.mxu0 0.0
        %4034 = vmatpush.msra.mxu0 0.0
        %4035 = vmatpush.msra.mxu0 0.0
        %4036 = vmatpush.msra.mxu0 0.0
        %v4037 = vand.u32 %v4018, 4294901760
        %4038 = vmatpush.msra.mxu0 %v4037
        %v4039 = vand.u32 %v4020, 4294901760
        %v4040 = vsub.f32 %v4020, %v4039
        %v4041 = vand.u32 %v4040, 4294901760
        %v4042 = vsub.f32 %v4040, %v4041
        %v4043 = vand.u32 %v4042, 4294901760
        %4044 = vmatmul.f32.gmra.mxu0 %v4043
        %v4045 = vpop.f32.mrf.mxu0
        %v4046 = vadd.f32 0.0, %v4045
        %4047 = vdwg.mxu0
        %4048 = vmatpush.msra.mxu0 0.0
        %4049 = vmatpush.msra.mxu0 0.0
        %4050 = vmatpush.msra.mxu0 0.0
        %4051 = vmatpush.msra.mxu0 0.0
        %4052 = vmatpush.msra.mxu0 0.0
        %4053 = vmatpush.msra.mxu0 0.0
        %4054 = vmatpush.msra.mxu0 0.0
        %4055 = vmatpush.msra.mxu0 0.0
        %4056 = vmatpush.msra.mxu0 0.0
        %4057 = vmatpush.msra.mxu0 0.0
        %4058 = vmatpush.msra.mxu0 0.0
        %4059 = vmatpush.msra.mxu0 0.0
        %4060 = vmatpush.msra.mxu0 0.0
        %4061 = vmatpush.msra.mxu0 0.0
        %4062 = vmatpush.msra.mxu0 0.0
        %v4063 = vand.u32 %v4018, 4294901760
        %v4064 = vsub.f32 %v4018, %v4063
        %v4065 = vand.u32 %v4064, 4294901760
        %v4066 = vsub.f32 %v4064, %v4065
        %v4067 = vand.u32 %v4066, 4294901760
        %4068 = vmatpush.msra.mxu0 %v4067
        %v4069 = vand.u32 %v4020, 4294901760
        %4070 = vmatmul.f32.gmra.mxu0 %v4069
        %v4071 = vpop.f32.mrf.mxu0
        %v4072 = vadd.f32 %v4046, %v4071
        %4073 = vdwg.mxu0
        %4074 = vmatpush.msra.mxu0 0.0
        %4075 = vmatpush.msra.mxu0 0.0
        %4076 = vmatpush.msra.mxu0 0.0
        %4077 = vmatpush.msra.mxu0 0.0
        %4078 = vmatpush.msra.mxu0 0.0
        %4079 = vmatpush.msra.mxu0 0.0
        %4080 = vmatpush.msra.mxu0 0.0
        %4081 = vmatpush.msra.mxu0 0.0
        %4082 = vmatpush.msra.mxu0 0.0
        %4083 = vmatpush.msra.mxu0 0.0
        %4084 = vmatpush.msra.mxu0 0.0
        %4085 = vmatpush.msra.mxu0 0.0
        %4086 = vmatpush.msra.mxu0 0.0
        %4087 = vmatpush.msra.mxu0 0.0
        %4088 = vmatpush.msra.mxu0 0.0
        %v4089 = vand.u32 %v4018, 4294901760
        %v4090 = vsub.f32 %v4018, %v4089
        %4091 = vmatpush.msra.mxu0 %v4090
        %v4092 = vand.u32 %v4020, 4294901760
        %v4093 = vsub.f32 %v4020, %v4092
        %4094 = vmatmul.f32.gmra.mxu0 %v4093
        %v4095 = vpop.f32.mrf.mxu0
        %v4096 = vadd.f32 %v4072, %v4095
        %4097 = vdwg.mxu0
        %4098 = vmatpush.msra.mxu0 0.0
        %4099 = vmatpush.msra.mxu0 0.0
        %4100 = vmatpush.msra.mxu0 0.0
        %4101 = vmatpush.msra.mxu0 0.0
        %4102 = vmatpush.msra.mxu0 0.0
        %4103 = vmatpush.msra.mxu0 0.0
        %4104 = vmatpush.msra.mxu0 0.0
        %4105 = vmatpush.msra.mxu0 0.0
        %4106 = vmatpush.msra.mxu0 0.0
        %4107 = vmatpush.msra.mxu0 0.0
        %4108 = vmatpush.msra.mxu0 0.0
        %4109 = vmatpush.msra.mxu0 0.0
        %4110 = vmatpush.msra.mxu0 0.0
        %4111 = vmatpush.msra.mxu0 0.0
        %4112 = vmatpush.msra.mxu0 0.0
        %v4113 = vand.u32 %v4018, 4294901760
        %4114 = vmatpush.msra.mxu0 %v4113
        %v4115 = vand.u32 %v4020, 4294901760
        %v4116 = vsub.f32 %v4020, %v4115
        %v4117 = vand.u32 %v4116, 4294901760
        %4118 = vmatmul.f32.gmra.mxu0 %v4117
        %v4119 = vpop.f32.mrf.mxu0
        %v4120 = vadd.f32 %v4096, %v4119
        %4121 = vdwg.mxu0
        %4122 = vmatpush.msra.mxu0 0.0
        %4123 = vmatpush.msra.mxu0 0.0
        %4124 = vmatpush.msra.mxu0 0.0
        %4125 = vmatpush.msra.mxu0 0.0
        %4126 = vmatpush.msra.mxu0 0.0
        %4127 = vmatpush.msra.mxu0 0.0
        %4128 = vmatpush.msra.mxu0 0.0
        %4129 = vmatpush.msra.mxu0 0.0
        %4130 = vmatpush.msra.mxu0 0.0
        %4131 = vmatpush.msra.mxu0 0.0
        %4132 = vmatpush.msra.mxu0 0.0
        %4133 = vmatpush.msra.mxu0 0.0
        %4134 = vmatpush.msra.mxu0 0.0
        %4135 = vmatpush.msra.mxu0 0.0
        %4136 = vmatpush.msra.mxu0 0.0
        %v4137 = vand.u32 %v4018, 4294901760
        %v4138 = vsub.f32 %v4018, %v4137
        %v4139 = vand.u32 %v4138, 4294901760
        %4140 = vmatpush.msra.mxu0 %v4139
        %v4141 = vand.u32 %v4020, 4294901760
        %4142 = vmatmul.f32.gmra.mxu0 %v4141
        %v4143 = vpop.f32.mrf.mxu0
        %v4144 = vadd.f32 %v4120, %v4143
        %4145 = vdwg.mxu0
        %4146 = vmatpush.msra.mxu0 0.0
        %4147 = vmatpush.msra.mxu0 0.0
        %4148 = vmatpush.msra.mxu0 0.0
        %4149 = vmatpush.msra.mxu0 0.0
        %4150 = vmatpush.msra.mxu0 0.0
        %4151 = vmatpush.msra.mxu0 0.0
        %4152 = vmatpush.msra.mxu0 0.0
        %4153 = vmatpush.msra.mxu0 0.0
        %4154 = vmatpush.msra.mxu0 0.0
        %4155 = vmatpush.msra.mxu0 0.0
        %4156 = vmatpush.msra.mxu0 0.0
        %4157 = vmatpush.msra.mxu0 0.0
        %4158 = vmatpush.msra.mxu0 0.0
        %4159 = vmatpush.msra.mxu0 0.0
        %4160 = vmatpush.msra.mxu0 0.0
        %v4161 = vand.u32 %v4018, 4294901760
        %4162 = vmatpush.msra.mxu0 %v4161
        %v4163 = vand.u32 %v4020, 4294901760
        %4164 = vmatmul.f32.gmra.mxu0 %v4163
        %v4165 = vpop.f32.mrf.mxu0
        %v4166 = vadd.f32 %v4144, %v4165
        %4167 = vdwg.mxu0
        %4168 = vst.msk [vmem:[#allocation2 + $0x8] sm:$0x1] %vm2863, %v4166
        %v4169 = vperm.slane %v2397, 1
        %v4170 = vmul.f32 %v2699, %v4169
        %v4171 = vsel %vm2702, %v4170, 0.0
        %4172 = vadd.xlane.f32.xlu0 %v4171
        %v4173 = vpop.xlane.xlu0 %4172
        %v4174 = vperm.slane %v2122, 1
        %v4175 = vmul.f32 %v2696, %v4174
        %v4176 = vmul.f32 %v4175, 1.442695
        %v4177 = vpow.pop %v4176
        %v4178 = vmul.f32 %v4177, %v4018
        %v4179 = vperm.slane %v2690, 1
        %v4180 = vmul.f32 %v4173, %v4179
        %v4181 = vadd.f32 %v4178, %v4180
        %v4182 = vrot.slane %v2679, 1
        %v4183 = vsel %vm2702, %v4182, 0
        %4185 = vmatpush.msra.mxu0 0.0
        %4186 = vmatpush.msra.mxu0 0.0
        %4187 = vmatpush.msra.mxu0 0.0
        %4188 = vmatpush.msra.mxu0 0.0
        %4189 = vmatpush.msra.mxu0 0.0
        %4190 = vmatpush.msra.mxu0 0.0
        %4191 = vmatpush.msra.mxu0 0.0
        %4192 = vmatpush.msra.mxu0 0.0
        %4193 = vmatpush.msra.mxu0 0.0
        %4194 = vmatpush.msra.mxu0 0.0
        %4195 = vmatpush.msra.mxu0 0.0
        %4196 = vmatpush.msra.mxu0 0.0
        %4197 = vmatpush.msra.mxu0 0.0
        %4198 = vmatpush.msra.mxu0 0.0
        %4199 = vmatpush.msra.mxu0 0.0
        %v4200 = vand.u32 %v4181, 4294901760
        %4201 = vmatpush.msra.mxu0 %v4200
        %v4202 = vand.u32 %v4183, 4294901760
        %v4203 = vsub.f32 %v4183, %v4202
        %v4204 = vand.u32 %v4203, 4294901760
        %v4205 = vsub.f32 %v4203, %v4204
        %v4206 = vand.u32 %v4205, 4294901760
        %4207 = vmatmul.f32.gmra.mxu0 %v4206
        %v4208 = vpop.f32.mrf.mxu0
        %v4209 = vadd.f32 0.0, %v4208
        %4210 = vdwg.mxu0
        %4211 = vmatpush.msra.mxu0 0.0
        %4212 = vmatpush.msra.mxu0 0.0
        %4213 = vmatpush.msra.mxu0 0.0
        %4214 = vmatpush.msra.mxu0 0.0
        %4215 = vmatpush.msra.mxu0 0.0
        %4216 = vmatpush.msra.mxu0 0.0
        %4217 = vmatpush.msra.mxu0 0.0
        %4218 = vmatpush.msra.mxu0 0.0
        %4219 = vmatpush.msra.mxu0 0.0
        %4220 = vmatpush.msra.mxu0 0.0
        %4221 = vmatpush.msra.mxu0 0.0
        %4222 = vmatpush.msra.mxu0 0.0
        %4223 = vmatpush.msra.mxu0 0.0
        %4224 = vmatpush.msra.mxu0 0.0
        %4225 = vmatpush.msra.mxu0 0.0
        %v4226 = vand.u32 %v4181, 4294901760
        %v4227 = vsub.f32 %v4181, %v4226
        %v4228 = vand.u32 %v4227, 4294901760
        %v4229 = vsub.f32 %v4227, %v4228
        %v4230 = vand.u32 %v4229, 4294901760
        %4231 = vmatpush.msra.mxu0 %v4230
        %v4232 = vand.u32 %v4183, 4294901760
        %4233 = vmatmul.f32.gmra.mxu0 %v4232
        %v4234 = vpop.f32.mrf.mxu0
        %v4235 = vadd.f32 %v4209, %v4234
        %4236 = vdwg.mxu0
        %4237 = vmatpush.msra.mxu0 0.0
        %4238 = vmatpush.msra.mxu0 0.0
        %4239 = vmatpush.msra.mxu0 0.0
        %4240 = vmatpush.msra.mxu0 0.0
        %4241 = vmatpush.msra.mxu0 0.0
        %4242 = vmatpush.msra.mxu0 0.0
        %4243 = vmatpush.msra.mxu0 0.0
        %4244 = vmatpush.msra.mxu0 0.0
        %4245 = vmatpush.msra.mxu0 0.0
        %4246 = vmatpush.msra.mxu0 0.0
        %4247 = vmatpush.msra.mxu0 0.0
        %4248 = vmatpush.msra.mxu0 0.0
        %4249 = vmatpush.msra.mxu0 0.0
        %4250 = vmatpush.msra.mxu0 0.0
        %4251 = vmatpush.msra.mxu0 0.0
        %v4252 = vand.u32 %v4181, 4294901760
        %v4253 = vsub.f32 %v4181, %v4252
        %4254 = vmatpush.msra.mxu0 %v4253
        %v4255 = vand.u32 %v4183, 4294901760
        %v4256 = vsub.f32 %v4183, %v4255
        %4257 = vmatmul.f32.gmra.mxu0 %v4256
        %v4258 = vpop.f32.mrf.mxu0
        %v4259 = vadd.f32 %v4235, %v4258
        %4260 = vdwg.mxu0
        %4261 = vmatpush.msra.mxu0 0.0
        %4262 = vmatpush.msra.mxu0 0.0
        %4263 = vmatpush.msra.mxu0 0.0
        %4264 = vmatpush.msra.mxu0 0.0
        %4265 = vmatpush.msra.mxu0 0.0
        %4266 = vmatpush.msra.mxu0 0.0
        %4267 = vmatpush.msra.mxu0 0.0
        %4268 = vmatpush.msra.mxu0 0.0
        %4269 = vmatpush.msra.mxu0 0.0
        %4270 = vmatpush.msra.mxu0 0.0
        %4271 = vmatpush.msra.mxu0 0.0
        %4272 = vmatpush.msra.mxu0 0.0
        %4273 = vmatpush.msra.mxu0 0.0
        %4274 = vmatpush.msra.mxu0 0.0
        %4275 = vmatpush.msra.mxu0 0.0
        %v4276 = vand.u32 %v4181, 4294901760
        %4277 = vmatpush.msra.mxu0 %v4276
        %v4278 = vand.u32 %v4183, 4294901760
        %v4279 = vsub.f32 %v4183, %v4278
        %v4280 = vand.u32 %v4279, 4294901760
        %4281 = vmatmul.f32.gmra.mxu0 %v4280
        %v4282 = vpop.f32.mrf.mxu0
        %v4283 = vadd.f32 %v4259, %v4282
        %4284 = vdwg.mxu0
        %4285 = vmatpush.msra.mxu0 0.0
        %4286 = vmatpush.msra.mxu0 0.0
        %4287 = vmatpush.msra.mxu0 0.0
        %4288 = vmatpush.msra.mxu0 0.0
        %4289 = vmatpush.msra.mxu0 0.0
        %4290 = vmatpush.msra.mxu0 0.0
        %4291 = vmatpush.msra.mxu0 0.0
        %4292 = vmatpush.msra.mxu0 0.0
        %4293 = vmatpush.msra.mxu0 0.0
        %4294 = vmatpush.msra.mxu0 0.0
        %4295 = vmatpush.msra.mxu0 0.0
        %4296 = vmatpush.msra.mxu0 0.0
        %4297 = vmatpush.msra.mxu0 0.0
        %4298 = vmatpush.msra.mxu0 0.0
        %4299 = vmatpush.msra.mxu0 0.0
        %v4300 = vand.u32 %v4181, 4294901760
        %v4301 = vsub.f32 %v4181, %v4300
        %v4302 = vand.u32 %v4301, 4294901760
        %4303 = vmatpush.msra.mxu0 %v4302
        %v4304 = vand.u32 %v4183, 4294901760
        %4305 = vmatmul.f32.gmra.mxu0 %v4304
        %v4306 = vpop.f32.mrf.mxu0
        %v4307 = vadd.f32 %v4283, %v4306
        %4308 = vdwg.mxu0
        %4309 = vmatpush.msra.mxu0 0.0
        %4310 = vmatpush.msra.mxu0 0.0
        %4311 = vmatpush.msra.mxu0 0.0
        %4312 = vmatpush.msra.mxu0 0.0
        %4313 = vmatpush.msra.mxu0 0.0
        %4314 = vmatpush.msra.mxu0 0.0
        %4315 = vmatpush.msra.mxu0 0.0
        %4316 = vmatpush.msra.mxu0 0.0
        %4317 = vmatpush.msra.mxu0 0.0
        %4318 = vmatpush.msra.mxu0 0.0
        %4319 = vmatpush.msra.mxu0 0.0
        %4320 = vmatpush.msra.mxu0 0.0
        %4321 = vmatpush.msra.mxu0 0.0
        %4322 = vmatpush.msra.mxu0 0.0
        %4323 = vmatpush.msra.mxu0 0.0
        %v4324 = vand.u32 %v4181, 4294901760
        %4325 = vmatpush.msra.mxu0 %v4324
        %v4326 = vand.u32 %v4183, 4294901760
        %4327 = vmatmul.f32.gmra.mxu0 %v4326
        %v4328 = vpop.f32.mrf.mxu0
        %v4329 = vadd.f32 %v4307, %v4328
        %4330 = vdwg.mxu0
        %4331 = vst.msk [vmem:[#allocation2 + $0x9] sm:$0x1] %vm2863, %v4329
        %v4332 = vperm.slane %v2397, 2
        %v4333 = vmul.f32 %v2699, %v4332
        %v4334 = vsel %vm2702, %v4333, 0.0
        %4335 = vadd.xlane.f32.xlu0 %v4334
        %v4336 = vpop.xlane.xlu0 %4335
        %v4337 = vperm.slane %v2122, 2
        %v4338 = vmul.f32 %v2696, %v4337
        %v4339 = vmul.f32 %v4338, 1.442695
        %v4340 = vpow.pop %v4339
        %v4341 = vmul.f32 %v4340, %v4181
        %v4342 = vperm.slane %v2690, 2
        %v4343 = vmul.f32 %v4336, %v4342
        %v4344 = vadd.f32 %v4341, %v4343
        %v4345 = vrot.slane %v2679, 2
        %v4346 = vsel %vm2702, %v4345, 0
        %4348 = vmatpush.msra.mxu0 0.0
        %4349 = vmatpush.msra.mxu0 0.0
        %4350 = vmatpush.msra.mxu0 0.0
        %4351 = vmatpush.msra.mxu0 0.0
        %4352 = vmatpush.msra.mxu0 0.0
        %4353 = vmatpush.msra.mxu0 0.0
        %4354 = vmatpush.msra.mxu0 0.0
        %4355 = vmatpush.msra.mxu0 0.0
        %4356 = vmatpush.msra.mxu0 0.0
        %4357 = vmatpush.msra.mxu0 0.0
        %4358 = vmatpush.msra.mxu0 0.0
        %4359 = vmatpush.msra.mxu0 0.0
        %4360 = vmatpush.msra.mxu0 0.0
        %4361 = vmatpush.msra.mxu0 0.0
        %4362 = vmatpush.msra.mxu0 0.0
        %v4363 = vand.u32 %v4344, 4294901760
        %4364 = vmatpush.msra.mxu0 %v4363
        %v4365 = vand.u32 %v4346, 4294901760
        %v4366 = vsub.f32 %v4346, %v4365
        %v4367 = vand.u32 %v4366, 4294901760
        %v4368 = vsub.f32 %v4366, %v4367
        %v4369 = vand.u32 %v4368, 4294901760
        %4370 = vmatmul.f32.gmra.mxu0 %v4369
        %v4371 = vpop.f32.mrf.mxu0
        %v4372 = vadd.f32 0.0, %v4371
        %4373 = vdwg.mxu0
        %4374 = vmatpush.msra.mxu0 0.0
        %4375 = vmatpush.msra.mxu0 0.0
        %4376 = vmatpush.msra.mxu0 0.0
        %4377 = vmatpush.msra.mxu0 0.0
        %4378 = vmatpush.msra.mxu0 0.0
        %4379 = vmatpush.msra.mxu0 0.0
        %4380 = vmatpush.msra.mxu0 0.0
        %4381 = vmatpush.msra.mxu0 0.0
        %4382 = vmatpush.msra.mxu0 0.0
        %4383 = vmatpush.msra.mxu0 0.0
        %4384 = vmatpush.msra.mxu0 0.0
        %4385 = vmatpush.msra.mxu0 0.0
        %4386 = vmatpush.msra.mxu0 0.0
        %4387 = vmatpush.msra.mxu0 0.0
        %4388 = vmatpush.msra.mxu0 0.0
        %v4389 = vand.u32 %v4344, 4294901760
        %v4390 = vsub.f32 %v4344, %v4389
        %v4391 = vand.u32 %v4390, 4294901760
        %v4392 = vsub.f32 %v4390, %v4391
        %v4393 = vand.u32 %v4392, 4294901760
        %4394 = vmatpush.msra.mxu0 %v4393
        %v4395 = vand.u32 %v4346, 4294901760
        %4396 = vmatmul.f32.gmra.mxu0 %v4395
        %v4397 = vpop.f32.mrf.mxu0
        %v4398 = vadd.f32 %v4372, %v4397
        %4399 = vdwg.mxu0
        %4400 = vmatpush.msra.mxu0 0.0
        %4401 = vmatpush.msra.mxu0 0.0
        %4402 = vmatpush.msra.mxu0 0.0
        %4403 = vmatpush.msra.mxu0 0.0
        %4404 = vmatpush.msra.mxu0 0.0
        %4405 = vmatpush.msra.mxu0 0.0
        %4406 = vmatpush.msra.mxu0 0.0
        %4407 = vmatpush.msra.mxu0 0.0
        %4408 = vmatpush.msra.mxu0 0.0
        %4409 = vmatpush.msra.mxu0 0.0
        %4410 = vmatpush.msra.mxu0 0.0
        %4411 = vmatpush.msra.mxu0 0.0
        %4412 = vmatpush.msra.mxu0 0.0
        %4413 = vmatpush.msra.mxu0 0.0
        %4414 = vmatpush.msra.mxu0 0.0
        %v4415 = vand.u32 %v4344, 4294901760
        %v4416 = vsub.f32 %v4344, %v4415
        %4417 = vmatpush.msra.mxu0 %v4416
        %v4418 = vand.u32 %v4346, 4294901760
        %v4419 = vsub.f32 %v4346, %v4418
        %4420 = vmatmul.f32.gmra.mxu0 %v4419
        %v4421 = vpop.f32.mrf.mxu0
        %v4422 = vadd.f32 %v4398, %v4421
        %4423 = vdwg.mxu0
        %4424 = vmatpush.msra.mxu0 0.0
        %4425 = vmatpush.msra.mxu0 0.0
        %4426 = vmatpush.msra.mxu0 0.0
        %4427 = vmatpush.msra.mxu0 0.0
        %4428 = vmatpush.msra.mxu0 0.0
        %4429 = vmatpush.msra.mxu0 0.0
        %4430 = vmatpush.msra.mxu0 0.0
        %4431 = vmatpush.msra.mxu0 0.0
        %4432 = vmatpush.msra.mxu0 0.0
        %4433 = vmatpush.msra.mxu0 0.0
        %4434 = vmatpush.msra.mxu0 0.0
        %4435 = vmatpush.msra.mxu0 0.0
        %4436 = vmatpush.msra.mxu0 0.0
        %4437 = vmatpush.msra.mxu0 0.0
        %4438 = vmatpush.msra.mxu0 0.0
        %v4439 = vand.u32 %v4344, 4294901760
        %4440 = vmatpush.msra.mxu0 %v4439
        %v4441 = vand.u32 %v4346, 4294901760
        %v4442 = vsub.f32 %v4346, %v4441
        %v4443 = vand.u32 %v4442, 4294901760
        %4444 = vmatmul.f32.gmra.mxu0 %v4443
        %v4445 = vpop.f32.mrf.mxu0
        %v4446 = vadd.f32 %v4422, %v4445
        %4447 = vdwg.mxu0
        %4448 = vmatpush.msra.mxu0 0.0
        %4449 = vmatpush.msra.mxu0 0.0
        %4450 = vmatpush.msra.mxu0 0.0
        %4451 = vmatpush.msra.mxu0 0.0
        %4452 = vmatpush.msra.mxu0 0.0
        %4453 = vmatpush.msra.mxu0 0.0
        %4454 = vmatpush.msra.mxu0 0.0
        %4455 = vmatpush.msra.mxu0 0.0
        %4456 = vmatpush.msra.mxu0 0.0
        %4457 = vmatpush.msra.mxu0 0.0
        %4458 = vmatpush.msra.mxu0 0.0
        %4459 = vmatpush.msra.mxu0 0.0
        %4460 = vmatpush.msra.mxu0 0.0
        %4461 = vmatpush.msra.mxu0 0.0
        %4462 = vmatpush.msra.mxu0 0.0
        %v4463 = vand.u32 %v4344, 4294901760
        %v4464 = vsub.f32 %v4344, %v4463
        %v4465 = vand.u32 %v4464, 4294901760
        %4466 = vmatpush.msra.mxu0 %v4465
        %v4467 = vand.u32 %v4346, 4294901760
        %4468 = vmatmul.f32.gmra.mxu0 %v4467
        %v4469 = vpop.f32.mrf.mxu0
        %v4470 = vadd.f32 %v4446, %v4469
        %4471 = vdwg.mxu0
        %4472 = vmatpush.msra.mxu0 0.0
        %4473 = vmatpush.msra.mxu0 0.0
        %4474 = vmatpush.msra.mxu0 0.0
        %4475 = vmatpush.msra.mxu0 0.0
        %4476 = vmatpush.msra.mxu0 0.0
        %4477 = vmatpush.msra.mxu0 0.0
        %4478 = vmatpush.msra.mxu0 0.0
        %4479 = vmatpush.msra.mxu0 0.0
        %4480 = vmatpush.msra.mxu0 0.0
        %4481 = vmatpush.msra.mxu0 0.0
        %4482 = vmatpush.msra.mxu0 0.0
        %4483 = vmatpush.msra.mxu0 0.0
        %4484 = vmatpush.msra.mxu0 0.0
        %4485 = vmatpush.msra.mxu0 0.0
        %4486 = vmatpush.msra.mxu0 0.0
        %v4487 = vand.u32 %v4344, 4294901760
        %4488 = vmatpush.msra.mxu0 %v4487
        %v4489 = vand.u32 %v4346, 4294901760
        %4490 = vmatmul.f32.gmra.mxu0 %v4489
        %v4491 = vpop.f32.mrf.mxu0
        %v4492 = vadd.f32 %v4470, %v4491
        %4493 = vdwg.mxu0
        %4494 = vst.msk [vmem:[#allocation2 + $0xa] sm:$0x1] %vm2863, %v4492
        %v4495 = vperm.slane %v2397, 3
        %v4496 = vmul.f32 %v2699, %v4495
        %v4497 = vsel %vm2702, %v4496, 0.0
        %4498 = vadd.xlane.f32.xlu0 %v4497
        %v4499 = vpop.xlane.xlu0 %4498
        %v4500 = vperm.slane %v2122, 3
        %v4501 = vmul.f32 %v2696, %v4500
        %v4502 = vmul.f32 %v4501, 1.442695
        %v4503 = vpow.pop %v4502
        %v4504 = vmul.f32 %v4503, %v4344
        %v4505 = vperm.slane %v2690, 3
        %v4506 = vmul.f32 %v4499, %v4505
        %v4507 = vadd.f32 %v4504, %v4506
        %v4508 = vrot.slane %v2679, 3
        %v4509 = vsel %vm2702, %v4508, 0
        %4511 = vmatpush.msra.mxu0 0.0
        %4512 = vmatpush.msra.mxu0 0.0
        %4513 = vmatpush.msra.mxu0 0.0
        %4514 = vmatpush.msra.mxu0 0.0
        %4515 = vmatpush.msra.mxu0 0.0
        %4516 = vmatpush.msra.mxu0 0.0
        %4517 = vmatpush.msra.mxu0 0.0
        %4518 = vmatpush.msra.mxu0 0.0
        %4519 = vmatpush.msra.mxu0 0.0
        %4520 = vmatpush.msra.mxu0 0.0
        %4521 = vmatpush.msra.mxu0 0.0
        %4522 = vmatpush.msra.mxu0 0.0
        %4523 = vmatpush.msra.mxu0 0.0
        %4524 = vmatpush.msra.mxu0 0.0
        %4525 = vmatpush.msra.mxu0 0.0
        %v4526 = vand.u32 %v4507, 4294901760
        %4527 = vmatpush.msra.mxu0 %v4526
        %v4528 = vand.u32 %v4509, 4294901760
        %v4529 = vsub.f32 %v4509, %v4528
        %v4530 = vand.u32 %v4529, 4294901760
        %v4531 = vsub.f32 %v4529, %v4530
        %v4532 = vand.u32 %v4531, 4294901760
        %4533 = vmatmul.f32.gmra.mxu0 %v4532
        %v4534 = vpop.f32.mrf.mxu0
        %v4535 = vadd.f32 0.0, %v4534
        %4536 = vdwg.mxu0
        %4537 = vmatpush.msra.mxu0 0.0
        %4538 = vmatpush.msra.mxu0 0.0
        %4539 = vmatpush.msra.mxu0 0.0
        %4540 = vmatpush.msra.mxu0 0.0
        %4541 = vmatpush.msra.mxu0 0.0
        %4542 = vmatpush.msra.mxu0 0.0
        %4543 = vmatpush.msra.mxu0 0.0
        %4544 = vmatpush.msra.mxu0 0.0
        %4545 = vmatpush.msra.mxu0 0.0
        %4546 = vmatpush.msra.mxu0 0.0
        %4547 = vmatpush.msra.mxu0 0.0
        %4548 = vmatpush.msra.mxu0 0.0
        %4549 = vmatpush.msra.mxu0 0.0
        %4550 = vmatpush.msra.mxu0 0.0
        %4551 = vmatpush.msra.mxu0 0.0
        %v4552 = vand.u32 %v4507, 4294901760
        %v4553 = vsub.f32 %v4507, %v4552
        %v4554 = vand.u32 %v4553, 4294901760
        %v4555 = vsub.f32 %v4553, %v4554
        %v4556 = vand.u32 %v4555, 4294901760
        %4557 = vmatpush.msra.mxu0 %v4556
        %v4558 = vand.u32 %v4509, 4294901760
        %4559 = vmatmul.f32.gmra.mxu0 %v4558
        %v4560 = vpop.f32.mrf.mxu0
        %v4561 = vadd.f32 %v4535, %v4560
        %4562 = vdwg.mxu0
        %4563 = vmatpush.msra.mxu0 0.0
        %4564 = vmatpush.msra.mxu0 0.0
        %4565 = vmatpush.msra.mxu0 0.0
        %4566 = vmatpush.msra.mxu0 0.0
        %4567 = vmatpush.msra.mxu0 0.0
        %4568 = vmatpush.msra.mxu0 0.0
        %4569 = vmatpush.msra.mxu0 0.0
        %4570 = vmatpush.msra.mxu0 0.0
        %4571 = vmatpush.msra.mxu0 0.0
        %4572 = vmatpush.msra.mxu0 0.0
        %4573 = vmatpush.msra.mxu0 0.0
        %4574 = vmatpush.msra.mxu0 0.0
        %4575 = vmatpush.msra.mxu0 0.0
        %4576 = vmatpush.msra.mxu0 0.0
        %4577 = vmatpush.msra.mxu0 0.0
        %v4578 = vand.u32 %v4507, 4294901760
        %v4579 = vsub.f32 %v4507, %v4578
        %4580 = vmatpush.msra.mxu0 %v4579
        %v4581 = vand.u32 %v4509, 4294901760
        %v4582 = vsub.f32 %v4509, %v4581
        %4583 = vmatmul.f32.gmra.mxu0 %v4582
        %v4584 = vpop.f32.mrf.mxu0
        %v4585 = vadd.f32 %v4561, %v4584
        %4586 = vdwg.mxu0
        %4587 = vmatpush.msra.mxu0 0.0
        %4588 = vmatpush.msra.mxu0 0.0
        %4589 = vmatpush.msra.mxu0 0.0
        %4590 = vmatpush.msra.mxu0 0.0
        %4591 = vmatpush.msra.mxu0 0.0
        %4592 = vmatpush.msra.mxu0 0.0
        %4593 = vmatpush.msra.mxu0 0.0
        %4594 = vmatpush.msra.mxu0 0.0
        %4595 = vmatpush.msra.mxu0 0.0
        %4596 = vmatpush.msra.mxu0 0.0
        %4597 = vmatpush.msra.mxu0 0.0
        %4598 = vmatpush.msra.mxu0 0.0
        %4599 = vmatpush.msra.mxu0 0.0
        %4600 = vmatpush.msra.mxu0 0.0
        %4601 = vmatpush.msra.mxu0 0.0
        %v4602 = vand.u32 %v4507, 4294901760
        %4603 = vmatpush.msra.mxu0 %v4602
        %v4604 = vand.u32 %v4509, 4294901760
        %v4605 = vsub.f32 %v4509, %v4604
        %v4606 = vand.u32 %v4605, 4294901760
        %4607 = vmatmul.f32.gmra.mxu0 %v4606
        %v4608 = vpop.f32.mrf.mxu0
        %v4609 = vadd.f32 %v4585, %v4608
        %4610 = vdwg.mxu0
        %4611 = vmatpush.msra.mxu0 0.0
        %4612 = vmatpush.msra.mxu0 0.0
        %4613 = vmatpush.msra.mxu0 0.0
        %4614 = vmatpush.msra.mxu0 0.0
        %4615 = vmatpush.msra.mxu0 0.0
        %4616 = vmatpush.msra.mxu0 0.0
        %4617 = vmatpush.msra.mxu0 0.0
        %4618 = vmatpush.msra.mxu0 0.0
        %4619 = vmatpush.msra.mxu0 0.0
        %4620 = vmatpush.msra.mxu0 0.0
        %4621 = vmatpush.msra.mxu0 0.0
        %4622 = vmatpush.msra.mxu0 0.0
        %4623 = vmatpush.msra.mxu0 0.0
        %4624 = vmatpush.msra.mxu0 0.0
        %4625 = vmatpush.msra.mxu0 0.0
        %v4626 = vand.u32 %v4507, 4294901760
        %v4627 = vsub.f32 %v4507, %v4626
        %v4628 = vand.u32 %v4627, 4294901760
        %4629 = vmatpush.msra.mxu0 %v4628
        %v4630 = vand.u32 %v4509, 4294901760
        %4631 = vmatmul.f32.gmra.mxu0 %v4630
        %v4632 = vpop.f32.mrf.mxu0
        %v4633 = vadd.f32 %v4609, %v4632
        %4634 = vdwg.mxu0
        %4635 = vmatpush.msra.mxu0 0.0
        %4636 = vmatpush.msra.mxu0 0.0
        %4637 = vmatpush.msra.mxu0 0.0
        %4638 = vmatpush.msra.mxu0 0.0
        %4639 = vmatpush.msra.mxu0 0.0
        %4640 = vmatpush.msra.mxu0 0.0
        %4641 = vmatpush.msra.mxu0 0.0
        %4642 = vmatpush.msra.mxu0 0.0
        %4643 = vmatpush.msra.mxu0 0.0
        %4644 = vmatpush.msra.mxu0 0.0
        %4645 = vmatpush.msra.mxu0 0.0
        %4646 = vmatpush.msra.mxu0 0.0
        %4647 = vmatpush.msra.mxu0 0.0
        %4648 = vmatpush.msra.mxu0 0.0
        %4649 = vmatpush.msra.mxu0 0.0
        %v4650 = vand.u32 %v4507, 4294901760
        %4651 = vmatpush.msra.mxu0 %v4650
        %v4652 = vand.u32 %v4509, 4294901760
        %4653 = vmatmul.f32.gmra.mxu0 %v4652
        %v4654 = vpop.f32.mrf.mxu0
        %v4655 = vadd.f32 %v4633, %v4654
        %4656 = vdwg.mxu0
        %4657 = vst.msk [vmem:[#allocation2 + $0xb] sm:$0x1] %vm2863, %v4655
        %v4658 = vperm.slane %v2397, 4
        %v4659 = vmul.f32 %v2699, %v4658
        %v4660 = vsel %vm2702, %v4659, 0.0
        %4661 = vadd.xlane.f32.xlu0 %v4660
        %v4662 = vpop.xlane.xlu0 %4661
        %v4663 = vperm.slane %v2122, 4
        %v4664 = vmul.f32 %v2696, %v4663
        %v4665 = vmul.f32 %v4664, 1.442695
        %v4666 = vpow.pop %v4665
        %v4667 = vmul.f32 %v4666, %v4507
        %v4668 = vperm.slane %v2690, 4
        %v4669 = vmul.f32 %v4662, %v4668
        %v4670 = vadd.f32 %v4667, %v4669
        %v4671 = vrot.slane %v2679, 4
        %v4672 = vsel %vm2702, %v4671, 0
        %4674 = vmatpush.msra.mxu0 0.0
        %4675 = vmatpush.msra.mxu0 0.0
        %4676 = vmatpush.msra.mxu0 0.0
        %4677 = vmatpush.msra.mxu0 0.0
        %4678 = vmatpush.msra.mxu0 0.0
        %4679 = vmatpush.msra.mxu0 0.0
        %4680 = vmatpush.msra.mxu0 0.0
        %4681 = vmatpush.msra.mxu0 0.0
        %4682 = vmatpush.msra.mxu0 0.0
        %4683 = vmatpush.msra.mxu0 0.0
        %4684 = vmatpush.msra.mxu0 0.0
        %4685 = vmatpush.msra.mxu0 0.0
        %4686 = vmatpush.msra.mxu0 0.0
        %4687 = vmatpush.msra.mxu0 0.0
        %4688 = vmatpush.msra.mxu0 0.0
        %v4689 = vand.u32 %v4670, 4294901760
        %4690 = vmatpush.msra.mxu0 %v4689
        %v4691 = vand.u32 %v4672, 4294901760
        %v4692 = vsub.f32 %v4672, %v4691
        %v4693 = vand.u32 %v4692, 4294901760
        %v4694 = vsub.f32 %v4692, %v4693
        %v4695 = vand.u32 %v4694, 4294901760
        %4696 = vmatmul.f32.gmra.mxu0 %v4695
        %v4697 = vpop.f32.mrf.mxu0
        %v4698 = vadd.f32 0.0, %v4697
        %4699 = vdwg.mxu0
        %4700 = vmatpush.msra.mxu0 0.0
        %4701 = vmatpush.msra.mxu0 0.0
        %4702 = vmatpush.msra.mxu0 0.0
        %4703 = vmatpush.msra.mxu0 0.0
        %4704 = vmatpush.msra.mxu0 0.0
        %4705 = vmatpush.msra.mxu0 0.0
        %4706 = vmatpush.msra.mxu0 0.0
        %4707 = vmatpush.msra.mxu0 0.0
        %4708 = vmatpush.msra.mxu0 0.0
        %4709 = vmatpush.msra.mxu0 0.0
        %4710 = vmatpush.msra.mxu0 0.0
        %4711 = vmatpush.msra.mxu0 0.0
        %4712 = vmatpush.msra.mxu0 0.0
        %4713 = vmatpush.msra.mxu0 0.0
        %4714 = vmatpush.msra.mxu0 0.0
        %v4715 = vand.u32 %v4670, 4294901760
        %v4716 = vsub.f32 %v4670, %v4715
        %v4717 = vand.u32 %v4716, 4294901760
        %v4718 = vsub.f32 %v4716, %v4717
        %v4719 = vand.u32 %v4718, 4294901760
        %4720 = vmatpush.msra.mxu0 %v4719
        %v4721 = vand.u32 %v4672, 4294901760
        %4722 = vmatmul.f32.gmra.mxu0 %v4721
        %v4723 = vpop.f32.mrf.mxu0
        %v4724 = vadd.f32 %v4698, %v4723
        %4725 = vdwg.mxu0
        %4726 = vmatpush.msra.mxu0 0.0
        %4727 = vmatpush.msra.mxu0 0.0
        %4728 = vmatpush.msra.mxu0 0.0
        %4729 = vmatpush.msra.mxu0 0.0
        %4730 = vmatpush.msra.mxu0 0.0
        %4731 = vmatpush.msra.mxu0 0.0
        %4732 = vmatpush.msra.mxu0 0.0
        %4733 = vmatpush.msra.mxu0 0.0
        %4734 = vmatpush.msra.mxu0 0.0
        %4735 = vmatpush.msra.mxu0 0.0
        %4736 = vmatpush.msra.mxu0 0.0
        %4737 = vmatpush.msra.mxu0 0.0
        %4738 = vmatpush.msra.mxu0 0.0
        %4739 = vmatpush.msra.mxu0 0.0
        %4740 = vmatpush.msra.mxu0 0.0
        %v4741 = vand.u32 %v4670, 4294901760
        %v4742 = vsub.f32 %v4670, %v4741
        %4743 = vmatpush.msra.mxu0 %v4742
        %v4744 = vand.u32 %v4672, 4294901760
        %v4745 = vsub.f32 %v4672, %v4744
        %4746 = vmatmul.f32.gmra.mxu0 %v4745
        %v4747 = vpop.f32.mrf.mxu0
        %v4748 = vadd.f32 %v4724, %v4747
        %4749 = vdwg.mxu0
        %4750 = vmatpush.msra.mxu0 0.0
        %4751 = vmatpush.msra.mxu0 0.0
        %4752 = vmatpush.msra.mxu0 0.0
        %4753 = vmatpush.msra.mxu0 0.0
        %4754 = vmatpush.msra.mxu0 0.0
        %4755 = vmatpush.msra.mxu0 0.0
        %4756 = vmatpush.msra.mxu0 0.0
        %4757 = vmatpush.msra.mxu0 0.0
        %4758 = vmatpush.msra.mxu0 0.0
        %4759 = vmatpush.msra.mxu0 0.0
        %4760 = vmatpush.msra.mxu0 0.0
        %4761 = vmatpush.msra.mxu0 0.0
        %4762 = vmatpush.msra.mxu0 0.0
        %4763 = vmatpush.msra.mxu0 0.0
        %4764 = vmatpush.msra.mxu0 0.0
        %v4765 = vand.u32 %v4670, 4294901760
        %4766 = vmatpush.msra.mxu0 %v4765
        %v4767 = vand.u32 %v4672, 4294901760
        %v4768 = vsub.f32 %v4672, %v4767
        %v4769 = vand.u32 %v4768, 4294901760
        %4770 = vmatmul.f32.gmra.mxu0 %v4769
        %v4771 = vpop.f32.mrf.mxu0
        %v4772 = vadd.f32 %v4748, %v4771
        %4773 = vdwg.mxu0
        %4774 = vmatpush.msra.mxu0 0.0
        %4775 = vmatpush.msra.mxu0 0.0
        %4776 = vmatpush.msra.mxu0 0.0
        %4777 = vmatpush.msra.mxu0 0.0
        %4778 = vmatpush.msra.mxu0 0.0
        %4779 = vmatpush.msra.mxu0 0.0
        %4780 = vmatpush.msra.mxu0 0.0
        %4781 = vmatpush.msra.mxu0 0.0
        %4782 = vmatpush.msra.mxu0 0.0
        %4783 = vmatpush.msra.mxu0 0.0
        %4784 = vmatpush.msra.mxu0 0.0
        %4785 = vmatpush.msra.mxu0 0.0
        %4786 = vmatpush.msra.mxu0 0.0
        %4787 = vmatpush.msra.mxu0 0.0
        %4788 = vmatpush.msra.mxu0 0.0
        %v4789 = vand.u32 %v4670, 4294901760
        %v4790 = vsub.f32 %v4670, %v4789
        %v4791 = vand.u32 %v4790, 4294901760
        %4792 = vmatpush.msra.mxu0 %v4791
        %v4793 = vand.u32 %v4672, 4294901760
        %4794 = vmatmul.f32.gmra.mxu0 %v4793
        %v4795 = vpop.f32.mrf.mxu0
        %v4796 = vadd.f32 %v4772, %v4795
        %4797 = vdwg.mxu0
        %4798 = vmatpush.msra.mxu0 0.0
        %4799 = vmatpush.msra.mxu0 0.0
        %4800 = vmatpush.msra.mxu0 0.0
        %4801 = vmatpush.msra.mxu0 0.0
        %4802 = vmatpush.msra.mxu0 0.0
        %4803 = vmatpush.msra.mxu0 0.0
        %4804 = vmatpush.msra.mxu0 0.0
        %4805 = vmatpush.msra.mxu0 0.0
        %4806 = vmatpush.msra.mxu0 0.0
        %4807 = vmatpush.msra.mxu0 0.0
        %4808 = vmatpush.msra.mxu0 0.0
        %4809 = vmatpush.msra.mxu0 0.0
        %4810 = vmatpush.msra.mxu0 0.0
        %4811 = vmatpush.msra.mxu0 0.0
        %4812 = vmatpush.msra.mxu0 0.0
        %v4813 = vand.u32 %v4670, 4294901760
        %4814 = vmatpush.msra.mxu0 %v4813
        %v4815 = vand.u32 %v4672, 4294901760
        %4816 = vmatmul.f32.gmra.mxu0 %v4815
        %v4817 = vpop.f32.mrf.mxu0
        %v4818 = vadd.f32 %v4796, %v4817
        %4819 = vdwg.mxu0
        %4820 = vst.msk [vmem:[#allocation2 + $0xc] sm:$0x1] %vm2863, %v4818
        %v4821 = vperm.slane %v2397, 5
        %v4822 = vmul.f32 %v2699, %v4821
        %v4823 = vsel %vm2702, %v4822, 0.0
        %4824 = vadd.xlane.f32.xlu0 %v4823
        %v4825 = vpop.xlane.xlu0 %4824
        %v4826 = vperm.slane %v2122, 5
        %v4827 = vmul.f32 %v2696, %v4826
        %v4828 = vmul.f32 %v4827, 1.442695
        %v4829 = vpow.pop %v4828
        %v4830 = vmul.f32 %v4829, %v4670
        %v4831 = vperm.slane %v2690, 5
        %v4832 = vmul.f32 %v4825, %v4831
        %v4833 = vadd.f32 %v4830, %v4832
        %v4834 = vrot.slane %v2679, 5
        %v4835 = vsel %vm2702, %v4834, 0
        %4837 = vmatpush.msra.mxu0 0.0
        %4838 = vmatpush.msra.mxu0 0.0
        %4839 = vmatpush.msra.mxu0 0.0
        %4840 = vmatpush.msra.mxu0 0.0
        %4841 = vmatpush.msra.mxu0 0.0
        %4842 = vmatpush.msra.mxu0 0.0
        %4843 = vmatpush.msra.mxu0 0.0
        %4844 = vmatpush.msra.mxu0 0.0
        %4845 = vmatpush.msra.mxu0 0.0
        %4846 = vmatpush.msra.mxu0 0.0
        %4847 = vmatpush.msra.mxu0 0.0
        %4848 = vmatpush.msra.mxu0 0.0
        %4849 = vmatpush.msra.mxu0 0.0
        %4850 = vmatpush.msra.mxu0 0.0
        %4851 = vmatpush.msra.mxu0 0.0
        %v4852 = vand.u32 %v4833, 4294901760
        %4853 = vmatpush.msra.mxu0 %v4852
        %v4854 = vand.u32 %v4835, 4294901760
        %v4855 = vsub.f32 %v4835, %v4854
        %v4856 = vand.u32 %v4855, 4294901760
        %v4857 = vsub.f32 %v4855, %v4856
        %v4858 = vand.u32 %v4857, 4294901760
        %4859 = vmatmul.f32.gmra.mxu0 %v4858
        %v4860 = vpop.f32.mrf.mxu0
        %v4861 = vadd.f32 0.0, %v4860
        %4862 = vdwg.mxu0
        %4863 = vmatpush.msra.mxu0 0.0
        %4864 = vmatpush.msra.mxu0 0.0
        %4865 = vmatpush.msra.mxu0 0.0
        %4866 = vmatpush.msra.mxu0 0.0
        %4867 = vmatpush.msra.mxu0 0.0
        %4868 = vmatpush.msra.mxu0 0.0
        %4869 = vmatpush.msra.mxu0 0.0
        %4870 = vmatpush.msra.mxu0 0.0
        %4871 = vmatpush.msra.mxu0 0.0
        %4872 = vmatpush.msra.mxu0 0.0
        %4873 = vmatpush.msra.mxu0 0.0
        %4874 = vmatpush.msra.mxu0 0.0
        %4875 = vmatpush.msra.mxu0 0.0
        %4876 = vmatpush.msra.mxu0 0.0
        %4877 = vmatpush.msra.mxu0 0.0
        %v4878 = vand.u32 %v4833, 4294901760
        %v4879 = vsub.f32 %v4833, %v4878
        %v4880 = vand.u32 %v4879, 4294901760
        %v4881 = vsub.f32 %v4879, %v4880
        %v4882 = vand.u32 %v4881, 4294901760
        %4883 = vmatpush.msra.mxu0 %v4882
        %v4884 = vand.u32 %v4835, 4294901760
        %4885 = vmatmul.f32.gmra.mxu0 %v4884
        %v4886 = vpop.f32.mrf.mxu0
        %v4887 = vadd.f32 %v4861, %v4886
        %4888 = vdwg.mxu0
        %4889 = vmatpush.msra.mxu0 0.0
        %4890 = vmatpush.msra.mxu0 0.0
        %4891 = vmatpush.msra.mxu0 0.0
        %4892 = vmatpush.msra.mxu0 0.0
        %4893 = vmatpush.msra.mxu0 0.0
        %4894 = vmatpush.msra.mxu0 0.0
        %4895 = vmatpush.msra.mxu0 0.0
        %4896 = vmatpush.msra.mxu0 0.0
        %4897 = vmatpush.msra.mxu0 0.0
        %4898 = vmatpush.msra.mxu0 0.0
        %4899 = vmatpush.msra.mxu0 0.0
        %4900 = vmatpush.msra.mxu0 0.0
        %4901 = vmatpush.msra.mxu0 0.0
        %4902 = vmatpush.msra.mxu0 0.0
        %4903 = vmatpush.msra.mxu0 0.0
        %v4904 = vand.u32 %v4833, 4294901760
        %v4905 = vsub.f32 %v4833, %v4904
        %4906 = vmatpush.msra.mxu0 %v4905
        %v4907 = vand.u32 %v4835, 4294901760
        %v4908 = vsub.f32 %v4835, %v4907
        %4909 = vmatmul.f32.gmra.mxu0 %v4908
        %v4910 = vpop.f32.mrf.mxu0
        %v4911 = vadd.f32 %v4887, %v4910
        %4912 = vdwg.mxu0
        %4913 = vmatpush.msra.mxu0 0.0
        %4914 = vmatpush.msra.mxu0 0.0
        %4915 = vmatpush.msra.mxu0 0.0
        %4916 = vmatpush.msra.mxu0 0.0
        %4917 = vmatpush.msra.mxu0 0.0
        %4918 = vmatpush.msra.mxu0 0.0
        %4919 = vmatpush.msra.mxu0 0.0
        %4920 = vmatpush.msra.mxu0 0.0
        %4921 = vmatpush.msra.mxu0 0.0
        %4922 = vmatpush.msra.mxu0 0.0
        %4923 = vmatpush.msra.mxu0 0.0
        %4924 = vmatpush.msra.mxu0 0.0
        %4925 = vmatpush.msra.mxu0 0.0
        %4926 = vmatpush.msra.mxu0 0.0
        %4927 = vmatpush.msra.mxu0 0.0
        %v4928 = vand.u32 %v4833, 4294901760
        %4929 = vmatpush.msra.mxu0 %v4928
        %v4930 = vand.u32 %v4835, 4294901760
        %v4931 = vsub.f32 %v4835, %v4930
        %v4932 = vand.u32 %v4931, 4294901760
        %4933 = vmatmul.f32.gmra.mxu0 %v4932
        %v4934 = vpop.f32.mrf.mxu0
        %v4935 = vadd.f32 %v4911, %v4934
        %4936 = vdwg.mxu0
        %4937 = vmatpush.msra.mxu0 0.0
        %4938 = vmatpush.msra.mxu0 0.0
        %4939 = vmatpush.msra.mxu0 0.0
        %4940 = vmatpush.msra.mxu0 0.0
        %4941 = vmatpush.msra.mxu0 0.0
        %4942 = vmatpush.msra.mxu0 0.0
        %4943 = vmatpush.msra.mxu0 0.0
        %4944 = vmatpush.msra.mxu0 0.0
        %4945 = vmatpush.msra.mxu0 0.0
        %4946 = vmatpush.msra.mxu0 0.0
        %4947 = vmatpush.msra.mxu0 0.0
        %4948 = vmatpush.msra.mxu0 0.0
        %4949 = vmatpush.msra.mxu0 0.0
        %4950 = vmatpush.msra.mxu0 0.0
        %4951 = vmatpush.msra.mxu0 0.0
        %v4952 = vand.u32 %v4833, 4294901760
        %v4953 = vsub.f32 %v4833, %v4952
        %v4954 = vand.u32 %v4953, 4294901760
        %4955 = vmatpush.msra.mxu0 %v4954
        %v4956 = vand.u32 %v4835, 4294901760
        %4957 = vmatmul.f32.gmra.mxu0 %v4956
        %v4958 = vpop.f32.mrf.mxu0
        %v4959 = vadd.f32 %v4935, %v4958
        %4960 = vdwg.mxu0
        %4961 = vmatpush.msra.mxu0 0.0
        %4962 = vmatpush.msra.mxu0 0.0
        %4963 = vmatpush.msra.mxu0 0.0
        %4964 = vmatpush.msra.mxu0 0.0
        %4965 = vmatpush.msra.mxu0 0.0
        %4966 = vmatpush.msra.mxu0 0.0
        %4967 = vmatpush.msra.mxu0 0.0
        %4968 = vmatpush.msra.mxu0 0.0
        %4969 = vmatpush.msra.mxu0 0.0
        %4970 = vmatpush.msra.mxu0 0.0
        %4971 = vmatpush.msra.mxu0 0.0
        %4972 = vmatpush.msra.mxu0 0.0
        %4973 = vmatpush.msra.mxu0 0.0
        %4974 = vmatpush.msra.mxu0 0.0
        %4975 = vmatpush.msra.mxu0 0.0
        %v4976 = vand.u32 %v4833, 4294901760
        %4977 = vmatpush.msra.mxu0 %v4976
        %v4978 = vand.u32 %v4835, 4294901760
        %4979 = vmatmul.f32.gmra.mxu0 %v4978
        %v4980 = vpop.f32.mrf.mxu0
        %v4981 = vadd.f32 %v4959, %v4980
        %4982 = vdwg.mxu0
        %4983 = vst.msk [vmem:[#allocation2 + $0xd] sm:$0x1] %vm2863, %v4981
        %v4984 = vperm.slane %v2397, 6
        %v4985 = vmul.f32 %v2699, %v4984
        %v4986 = vsel %vm2702, %v4985, 0.0
        %4987 = vadd.xlane.f32.xlu0 %v4986
        %v4988 = vpop.xlane.xlu0 %4987
        %v4989 = vperm.slane %v2122, 6
        %v4990 = vmul.f32 %v2696, %v4989
        %v4991 = vmul.f32 %v4990, 1.442695
        %v4992 = vpow.pop %v4991
        %v4993 = vmul.f32 %v4992, %v4833
        %v4994 = vperm.slane %v2690, 6
        %v4995 = vmul.f32 %v4988, %v4994
        %v4996 = vadd.f32 %v4993, %v4995
        %v4997 = vrot.slane %v2679, 6
        %v4998 = vsel %vm2702, %v4997, 0
        %5000 = vmatpush.msra.mxu0 0.0
        %5001 = vmatpush.msra.mxu0 0.0
        %5002 = vmatpush.msra.mxu0 0.0
        %5003 = vmatpush.msra.mxu0 0.0
        %5004 = vmatpush.msra.mxu0 0.0
        %5005 = vmatpush.msra.mxu0 0.0
        %5006 = vmatpush.msra.mxu0 0.0
        %5007 = vmatpush.msra.mxu0 0.0
        %5008 = vmatpush.msra.mxu0 0.0
        %5009 = vmatpush.msra.mxu0 0.0
        %5010 = vmatpush.msra.mxu0 0.0
        %5011 = vmatpush.msra.mxu0 0.0
        %5012 = vmatpush.msra.mxu0 0.0
        %5013 = vmatpush.msra.mxu0 0.0
        %5014 = vmatpush.msra.mxu0 0.0
        %v5015 = vand.u32 %v4996, 4294901760
        %5016 = vmatpush.msra.mxu0 %v5015
        %v5017 = vand.u32 %v4998, 4294901760
        %v5018 = vsub.f32 %v4998, %v5017
        %v5019 = vand.u32 %v5018, 4294901760
        %v5020 = vsub.f32 %v5018, %v5019
        %v5021 = vand.u32 %v5020, 4294901760
        %5022 = vmatmul.f32.gmra.mxu0 %v5021
        %v5023 = vpop.f32.mrf.mxu0
        %v5024 = vadd.f32 0.0, %v5023
        %5025 = vdwg.mxu0
        %5026 = vmatpush.msra.mxu0 0.0
        %5027 = vmatpush.msra.mxu0 0.0
        %5028 = vmatpush.msra.mxu0 0.0
        %5029 = vmatpush.msra.mxu0 0.0
        %5030 = vmatpush.msra.mxu0 0.0
        %5031 = vmatpush.msra.mxu0 0.0
        %5032 = vmatpush.msra.mxu0 0.0
        %5033 = vmatpush.msra.mxu0 0.0
        %5034 = vmatpush.msra.mxu0 0.0
        %5035 = vmatpush.msra.mxu0 0.0
        %5036 = vmatpush.msra.mxu0 0.0
        %5037 = vmatpush.msra.mxu0 0.0
        %5038 = vmatpush.msra.mxu0 0.0
        %5039 = vmatpush.msra.mxu0 0.0
        %5040 = vmatpush.msra.mxu0 0.0
        %v5041 = vand.u32 %v4996, 4294901760
        %v5042 = vsub.f32 %v4996, %v5041
        %v5043 = vand.u32 %v5042, 4294901760
        %v5044 = vsub.f32 %v5042, %v5043
        %v5045 = vand.u32 %v5044, 4294901760
        %5046 = vmatpush.msra.mxu0 %v5045
        %v5047 = vand.u32 %v4998, 4294901760
        %5048 = vmatmul.f32.gmra.mxu0 %v5047
        %v5049 = vpop.f32.mrf.mxu0
        %v5050 = vadd.f32 %v5024, %v5049
        %5051 = vdwg.mxu0
        %5052 = vmatpush.msra.mxu0 0.0
        %5053 = vmatpush.msra.mxu0 0.0
        %5054 = vmatpush.msra.mxu0 0.0
        %5055 = vmatpush.msra.mxu0 0.0
        %5056 = vmatpush.msra.mxu0 0.0
        %5057 = vmatpush.msra.mxu0 0.0
        %5058 = vmatpush.msra.mxu0 0.0
        %5059 = vmatpush.msra.mxu0 0.0
        %5060 = vmatpush.msra.mxu0 0.0
        %5061 = vmatpush.msra.mxu0 0.0
        %5062 = vmatpush.msra.mxu0 0.0
        %5063 = vmatpush.msra.mxu0 0.0
        %5064 = vmatpush.msra.mxu0 0.0
        %5065 = vmatpush.msra.mxu0 0.0
        %5066 = vmatpush.msra.mxu0 0.0
        %v5067 = vand.u32 %v4996, 4294901760
        %v5068 = vsub.f32 %v4996, %v5067
        %5069 = vmatpush.msra.mxu0 %v5068
        %v5070 = vand.u32 %v4998, 4294901760
        %v5071 = vsub.f32 %v4998, %v5070
        %5072 = vmatmul.f32.gmra.mxu0 %v5071
        %v5073 = vpop.f32.mrf.mxu0
        %v5074 = vadd.f32 %v5050, %v5073
        %5075 = vdwg.mxu0
        %5076 = vmatpush.msra.mxu0 0.0
        %5077 = vmatpush.msra.mxu0 0.0
        %5078 = vmatpush.msra.mxu0 0.0
        %5079 = vmatpush.msra.mxu0 0.0
        %5080 = vmatpush.msra.mxu0 0.0
        %5081 = vmatpush.msra.mxu0 0.0
        %5082 = vmatpush.msra.mxu0 0.0
        %5083 = vmatpush.msra.mxu0 0.0
        %5084 = vmatpush.msra.mxu0 0.0
        %5085 = vmatpush.msra.mxu0 0.0
        %5086 = vmatpush.msra.mxu0 0.0
        %5087 = vmatpush.msra.mxu0 0.0
        %5088 = vmatpush.msra.mxu0 0.0
        %5089 = vmatpush.msra.mxu0 0.0
        %5090 = vmatpush.msra.mxu0 0.0
        %v5091 = vand.u32 %v4996, 4294901760
        %5092 = vmatpush.msra.mxu0 %v5091
        %v5093 = vand.u32 %v4998, 4294901760
        %v5094 = vsub.f32 %v4998, %v5093
        %v5095 = vand.u32 %v5094, 4294901760
        %5096 = vmatmul.f32.gmra.mxu0 %v5095
        %v5097 = vpop.f32.mrf.mxu0
        %v5098 = vadd.f32 %v5074, %v5097
        %5099 = vdwg.mxu0
        %5100 = vmatpush.msra.mxu0 0.0
        %5101 = vmatpush.msra.mxu0 0.0
        %5102 = vmatpush.msra.mxu0 0.0
        %5103 = vmatpush.msra.mxu0 0.0
        %5104 = vmatpush.msra.mxu0 0.0
        %5105 = vmatpush.msra.mxu0 0.0
        %5106 = vmatpush.msra.mxu0 0.0
        %5107 = vmatpush.msra.mxu0 0.0
        %5108 = vmatpush.msra.mxu0 0.0
        %5109 = vmatpush.msra.mxu0 0.0
        %5110 = vmatpush.msra.mxu0 0.0
        %5111 = vmatpush.msra.mxu0 0.0
        %5112 = vmatpush.msra.mxu0 0.0
        %5113 = vmatpush.msra.mxu0 0.0
        %5114 = vmatpush.msra.mxu0 0.0
        %v5115 = vand.u32 %v4996, 4294901760
        %v5116 = vsub.f32 %v4996, %v5115
        %v5117 = vand.u32 %v5116, 4294901760
        %5118 = vmatpush.msra.mxu0 %v5117
        %v5119 = vand.u32 %v4998, 4294901760
        %5120 = vmatmul.f32.gmra.mxu0 %v5119
        %v5121 = vpop.f32.mrf.mxu0
        %v5122 = vadd.f32 %v5098, %v5121
        %5123 = vdwg.mxu0
        %5124 = vmatpush.msra.mxu0 0.0
        %5125 = vmatpush.msra.mxu0 0.0
        %5126 = vmatpush.msra.mxu0 0.0
        %5127 = vmatpush.msra.mxu0 0.0
        %5128 = vmatpush.msra.mxu0 0.0
        %5129 = vmatpush.msra.mxu0 0.0
        %5130 = vmatpush.msra.mxu0 0.0
        %5131 = vmatpush.msra.mxu0 0.0
        %5132 = vmatpush.msra.mxu0 0.0
        %5133 = vmatpush.msra.mxu0 0.0
        %5134 = vmatpush.msra.mxu0 0.0
        %5135 = vmatpush.msra.mxu0 0.0
        %5136 = vmatpush.msra.mxu0 0.0
        %5137 = vmatpush.msra.mxu0 0.0
        %5138 = vmatpush.msra.mxu0 0.0
        %v5139 = vand.u32 %v4996, 4294901760
        %5140 = vmatpush.msra.mxu0 %v5139
        %v5141 = vand.u32 %v4998, 4294901760
        %5142 = vmatmul.f32.gmra.mxu0 %v5141
        %v5143 = vpop.f32.mrf.mxu0
        %v5144 = vadd.f32 %v5122, %v5143
        %5145 = vdwg.mxu0
        %5146 = vst.msk [vmem:[#allocation2 + $0xe] sm:$0x1] %vm2863, %v5144
        %v5147 = vperm.slane %v2397, 7
        %v5148 = vmul.f32 %v2699, %v5147
        %v5149 = vsel %vm2702, %v5148, 0.0
        %5150 = vadd.xlane.f32.xlu0 %v5149
        %v5151 = vpop.xlane.xlu0 %5150
        %v5152 = vperm.slane %v2122, 7
        %v5153 = vmul.f32 %v2696, %v5152
        %v5154 = vmul.f32 %v5153, 1.442695
        %v5155 = vpow.pop %v5154
        %v5156 = vmul.f32 %v5155, %v4996
        %v5157 = vperm.slane %v2690, 7
        %v5158 = vmul.f32 %v5151, %v5157
        %v5159 = vadd.f32 %v5156, %v5158
        %v5160 = vrot.slane %v2679, 7
        %v5161 = vsel %vm2702, %v5160, 0
        %5163 = vmatpush.msra.mxu0 0.0
        %5164 = vmatpush.msra.mxu0 0.0
        %5165 = vmatpush.msra.mxu0 0.0
        %5166 = vmatpush.msra.mxu0 0.0
        %5167 = vmatpush.msra.mxu0 0.0
        %5168 = vmatpush.msra.mxu0 0.0
        %5169 = vmatpush.msra.mxu0 0.0
        %5170 = vmatpush.msra.mxu0 0.0
        %5171 = vmatpush.msra.mxu0 0.0
        %5172 = vmatpush.msra.mxu0 0.0
        %5173 = vmatpush.msra.mxu0 0.0
        %5174 = vmatpush.msra.mxu0 0.0
        %5175 = vmatpush.msra.mxu0 0.0
        %5176 = vmatpush.msra.mxu0 0.0
        %5177 = vmatpush.msra.mxu0 0.0
        %v5178 = vand.u32 %v5159, 4294901760
        %5179 = vmatpush.msra.mxu0 %v5178
        %v5180 = vand.u32 %v5161, 4294901760
        %v5181 = vsub.f32 %v5161, %v5180
        %v5182 = vand.u32 %v5181, 4294901760
        %v5183 = vsub.f32 %v5181, %v5182
        %v5184 = vand.u32 %v5183, 4294901760
        %5185 = vmatmul.f32.gmra.mxu0 %v5184
        %v5186 = vpop.f32.mrf.mxu0
        %v5187 = vadd.f32 0.0, %v5186
        %5188 = vdwg.mxu0
        %5189 = vmatpush.msra.mxu0 0.0
        %5190 = vmatpush.msra.mxu0 0.0
        %5191 = vmatpush.msra.mxu0 0.0
        %5192 = vmatpush.msra.mxu0 0.0
        %5193 = vmatpush.msra.mxu0 0.0
        %5194 = vmatpush.msra.mxu0 0.0
        %5195 = vmatpush.msra.mxu0 0.0
        %5196 = vmatpush.msra.mxu0 0.0
        %5197 = vmatpush.msra.mxu0 0.0
        %5198 = vmatpush.msra.mxu0 0.0
        %5199 = vmatpush.msra.mxu0 0.0
        %5200 = vmatpush.msra.mxu0 0.0
        %5201 = vmatpush.msra.mxu0 0.0
        %5202 = vmatpush.msra.mxu0 0.0
        %5203 = vmatpush.msra.mxu0 0.0
        %v5204 = vand.u32 %v5159, 4294901760
        %v5205 = vsub.f32 %v5159, %v5204
        %v5206 = vand.u32 %v5205, 4294901760
        %v5207 = vsub.f32 %v5205, %v5206
        %v5208 = vand.u32 %v5207, 4294901760
        %5209 = vmatpush.msra.mxu0 %v5208
        %v5210 = vand.u32 %v5161, 4294901760
        %5211 = vmatmul.f32.gmra.mxu0 %v5210
        %v5212 = vpop.f32.mrf.mxu0
        %v5213 = vadd.f32 %v5187, %v5212
        %5214 = vdwg.mxu0
        %5215 = vmatpush.msra.mxu0 0.0
        %5216 = vmatpush.msra.mxu0 0.0
        %5217 = vmatpush.msra.mxu0 0.0
        %5218 = vmatpush.msra.mxu0 0.0
        %5219 = vmatpush.msra.mxu0 0.0
        %5220 = vmatpush.msra.mxu0 0.0
        %5221 = vmatpush.msra.mxu0 0.0
        %5222 = vmatpush.msra.mxu0 0.0
        %5223 = vmatpush.msra.mxu0 0.0
        %5224 = vmatpush.msra.mxu0 0.0
        %5225 = vmatpush.msra.mxu0 0.0
        %5226 = vmatpush.msra.mxu0 0.0
        %5227 = vmatpush.msra.mxu0 0.0
        %5228 = vmatpush.msra.mxu0 0.0
        %5229 = vmatpush.msra.mxu0 0.0
        %v5230 = vand.u32 %v5159, 4294901760
        %v5231 = vsub.f32 %v5159, %v5230
        %5232 = vmatpush.msra.mxu0 %v5231
        %v5233 = vand.u32 %v5161, 4294901760
        %v5234 = vsub.f32 %v5161, %v5233
        %5235 = vmatmul.f32.gmra.mxu0 %v5234
        %v5236 = vpop.f32.mrf.mxu0
        %v5237 = vadd.f32 %v5213, %v5236
        %5238 = vdwg.mxu0
        %5239 = vmatpush.msra.mxu0 0.0
        %5240 = vmatpush.msra.mxu0 0.0
        %5241 = vmatpush.msra.mxu0 0.0
        %5242 = vmatpush.msra.mxu0 0.0
        %5243 = vmatpush.msra.mxu0 0.0
        %5244 = vmatpush.msra.mxu0 0.0
        %5245 = vmatpush.msra.mxu0 0.0
        %5246 = vmatpush.msra.mxu0 0.0
        %5247 = vmatpush.msra.mxu0 0.0
        %5248 = vmatpush.msra.mxu0 0.0
        %5249 = vmatpush.msra.mxu0 0.0
        %5250 = vmatpush.msra.mxu0 0.0
        %5251 = vmatpush.msra.mxu0 0.0
        %5252 = vmatpush.msra.mxu0 0.0
        %5253 = vmatpush.msra.mxu0 0.0
        %v5254 = vand.u32 %v5159, 4294901760
        %5255 = vmatpush.msra.mxu0 %v5254
        %v5256 = vand.u32 %v5161, 4294901760
        %v5257 = vsub.f32 %v5161, %v5256
        %v5258 = vand.u32 %v5257, 4294901760
        %5259 = vmatmul.f32.gmra.mxu0 %v5258
        %v5260 = vpop.f32.mrf.mxu0
        %v5261 = vadd.f32 %v5237, %v5260
        %5262 = vdwg.mxu0
        %5263 = vmatpush.msra.mxu0 0.0
        %5264 = vmatpush.msra.mxu0 0.0
        %5265 = vmatpush.msra.mxu0 0.0
        %5266 = vmatpush.msra.mxu0 0.0
        %5267 = vmatpush.msra.mxu0 0.0
        %5268 = vmatpush.msra.mxu0 0.0
        %5269 = vmatpush.msra.mxu0 0.0
        %5270 = vmatpush.msra.mxu0 0.0
        %5271 = vmatpush.msra.mxu0 0.0
        %5272 = vmatpush.msra.mxu0 0.0
        %5273 = vmatpush.msra.mxu0 0.0
        %5274 = vmatpush.msra.mxu0 0.0
        %5275 = vmatpush.msra.mxu0 0.0
        %5276 = vmatpush.msra.mxu0 0.0
        %5277 = vmatpush.msra.mxu0 0.0
        %v5278 = vand.u32 %v5159, 4294901760
        %v5279 = vsub.f32 %v5159, %v5278
        %v5280 = vand.u32 %v5279, 4294901760
        %5281 = vmatpush.msra.mxu0 %v5280
        %v5282 = vand.u32 %v5161, 4294901760
        %5283 = vmatmul.f32.gmra.mxu0 %v5282
        %v5284 = vpop.f32.mrf.mxu0
        %v5285 = vadd.f32 %v5261, %v5284
        %5286 = vdwg.mxu0
        %5287 = vmatpush.msra.mxu0 0.0
        %5288 = vmatpush.msra.mxu0 0.0
        %5289 = vmatpush.msra.mxu0 0.0
        %5290 = vmatpush.msra.mxu0 0.0
        %5291 = vmatpush.msra.mxu0 0.0
        %5292 = vmatpush.msra.mxu0 0.0
        %5293 = vmatpush.msra.mxu0 0.0
        %5294 = vmatpush.msra.mxu0 0.0
        %5295 = vmatpush.msra.mxu0 0.0
        %5296 = vmatpush.msra.mxu0 0.0
        %5297 = vmatpush.msra.mxu0 0.0
        %5298 = vmatpush.msra.mxu0 0.0
        %5299 = vmatpush.msra.mxu0 0.0
        %5300 = vmatpush.msra.mxu0 0.0
        %5301 = vmatpush.msra.mxu0 0.0
        %v5302 = vand.u32 %v5159, 4294901760
        %5303 = vmatpush.msra.mxu0 %v5302
        %v5304 = vand.u32 %v5161, 4294901760
        %5305 = vmatmul.f32.gmra.mxu0 %v5304
        %v5306 = vpop.f32.mrf.mxu0
        %v5307 = vadd.f32 %v5285, %v5306
        %5308 = vdwg.mxu0
        %5309 = vst.msk [vmem:[#allocation2 + $0xf] sm:$0x1] %vm2863, %v5307
        %v5310 = vperm.slane %v2401, 0
        %v5311 = vmul.f32 %v2699, %v5310
        %v5312 = vsel %vm2702, %v5311, 0.0
        %5313 = vadd.xlane.f32.xlu0 %v5312
        %v5314 = vpop.xlane.xlu0 %5313
        %v5315 = vperm.slane %v2123, 0
        %v5316 = vmul.f32 %v2696, %v5315
        %v5317 = vmul.f32 %v5316, 1.442695
        %v5318 = vpow.pop %v5317
        %v5319 = vmul.f32 %v5318, %v5159
        %v5320 = vperm.slane %v2691, 0
        %v5321 = vmul.f32 %v5314, %v5320
        %v5322 = vadd.f32 %v5319, %v5321
        %v5324 = vsel %vm2702, %v2683, 0
        %5326 = vmatpush.msra.mxu0 0.0
        %5327 = vmatpush.msra.mxu0 0.0
        %5328 = vmatpush.msra.mxu0 0.0
        %5329 = vmatpush.msra.mxu0 0.0
        %5330 = vmatpush.msra.mxu0 0.0
        %5331 = vmatpush.msra.mxu0 0.0
        %5332 = vmatpush.msra.mxu0 0.0
        %5333 = vmatpush.msra.mxu0 0.0
        %5334 = vmatpush.msra.mxu0 0.0
        %5335 = vmatpush.msra.mxu0 0.0
        %5336 = vmatpush.msra.mxu0 0.0
        %5337 = vmatpush.msra.mxu0 0.0
        %5338 = vmatpush.msra.mxu0 0.0
        %5339 = vmatpush.msra.mxu0 0.0
        %5340 = vmatpush.msra.mxu0 0.0
        %v5341 = vand.u32 %v5322, 4294901760
        %5342 = vmatpush.msra.mxu0 %v5341
        %v5343 = vand.u32 %v5324, 4294901760
        %v5344 = vsub.f32 %v5324, %v5343
        %v5345 = vand.u32 %v5344, 4294901760
        %v5346 = vsub.f32 %v5344, %v5345
        %v5347 = vand.u32 %v5346, 4294901760
        %5348 = vmatmul.f32.gmra.mxu0 %v5347
        %v5349 = vpop.f32.mrf.mxu0
        %v5350 = vadd.f32 0.0, %v5349
        %5351 = vdwg.mxu0
        %5352 = vmatpush.msra.mxu0 0.0
        %5353 = vmatpush.msra.mxu0 0.0
        %5354 = vmatpush.msra.mxu0 0.0
        %5355 = vmatpush.msra.mxu0 0.0
        %5356 = vmatpush.msra.mxu0 0.0
        %5357 = vmatpush.msra.mxu0 0.0
        %5358 = vmatpush.msra.mxu0 0.0
        %5359 = vmatpush.msra.mxu0 0.0
        %5360 = vmatpush.msra.mxu0 0.0
        %5361 = vmatpush.msra.mxu0 0.0
        %5362 = vmatpush.msra.mxu0 0.0
        %5363 = vmatpush.msra.mxu0 0.0
        %5364 = vmatpush.msra.mxu0 0.0
        %5365 = vmatpush.msra.mxu0 0.0
        %5366 = vmatpush.msra.mxu0 0.0
        %v5367 = vand.u32 %v5322, 4294901760
        %v5368 = vsub.f32 %v5322, %v5367
        %v5369 = vand.u32 %v5368, 4294901760
        %v5370 = vsub.f32 %v5368, %v5369
        %v5371 = vand.u32 %v5370, 4294901760
        %5372 = vmatpush.msra.mxu0 %v5371
        %v5373 = vand.u32 %v5324, 4294901760
        %5374 = vmatmul.f32.gmra.mxu0 %v5373
        %v5375 = vpop.f32.mrf.mxu0
        %v5376 = vadd.f32 %v5350, %v5375
        %5377 = vdwg.mxu0
        %5378 = vmatpush.msra.mxu0 0.0
        %5379 = vmatpush.msra.mxu0 0.0
        %5380 = vmatpush.msra.mxu0 0.0
        %5381 = vmatpush.msra.mxu0 0.0
        %5382 = vmatpush.msra.mxu0 0.0
        %5383 = vmatpush.msra.mxu0 0.0
        %5384 = vmatpush.msra.mxu0 0.0
        %5385 = vmatpush.msra.mxu0 0.0
        %5386 = vmatpush.msra.mxu0 0.0
        %5387 = vmatpush.msra.mxu0 0.0
        %5388 = vmatpush.msra.mxu0 0.0
        %5389 = vmatpush.msra.mxu0 0.0
        %5390 = vmatpush.msra.mxu0 0.0
        %5391 = vmatpush.msra.mxu0 0.0
        %5392 = vmatpush.msra.mxu0 0.0
        %v5393 = vand.u32 %v5322, 4294901760
        %v5394 = vsub.f32 %v5322, %v5393
        %5395 = vmatpush.msra.mxu0 %v5394
        %v5396 = vand.u32 %v5324, 4294901760
        %v5397 = vsub.f32 %v5324, %v5396
        %5398 = vmatmul.f32.gmra.mxu0 %v5397
        %v5399 = vpop.f32.mrf.mxu0
        %v5400 = vadd.f32 %v5376, %v5399
        %5401 = vdwg.mxu0
        %5402 = vmatpush.msra.mxu0 0.0
        %5403 = vmatpush.msra.mxu0 0.0
        %5404 = vmatpush.msra.mxu0 0.0
        %5405 = vmatpush.msra.mxu0 0.0
        %5406 = vmatpush.msra.mxu0 0.0
        %5407 = vmatpush.msra.mxu0 0.0
        %5408 = vmatpush.msra.mxu0 0.0
        %5409 = vmatpush.msra.mxu0 0.0
        %5410 = vmatpush.msra.mxu0 0.0
        %5411 = vmatpush.msra.mxu0 0.0
        %5412 = vmatpush.msra.mxu0 0.0
        %5413 = vmatpush.msra.mxu0 0.0
        %5414 = vmatpush.msra.mxu0 0.0
        %5415 = vmatpush.msra.mxu0 0.0
        %5416 = vmatpush.msra.mxu0 0.0
        %v5417 = vand.u32 %v5322, 4294901760
        %5418 = vmatpush.msra.mxu0 %v5417
        %v5419 = vand.u32 %v5324, 4294901760
        %v5420 = vsub.f32 %v5324, %v5419
        %v5421 = vand.u32 %v5420, 4294901760
        %5422 = vmatmul.f32.gmra.mxu0 %v5421
        %v5423 = vpop.f32.mrf.mxu0
        %v5424 = vadd.f32 %v5400, %v5423
        %5425 = vdwg.mxu0
        %5426 = vmatpush.msra.mxu0 0.0
        %5427 = vmatpush.msra.mxu0 0.0
        %5428 = vmatpush.msra.mxu0 0.0
        %5429 = vmatpush.msra.mxu0 0.0
        %5430 = vmatpush.msra.mxu0 0.0
        %5431 = vmatpush.msra.mxu0 0.0
        %5432 = vmatpush.msra.mxu0 0.0
        %5433 = vmatpush.msra.mxu0 0.0
        %5434 = vmatpush.msra.mxu0 0.0
        %5435 = vmatpush.msra.mxu0 0.0
        %5436 = vmatpush.msra.mxu0 0.0
        %5437 = vmatpush.msra.mxu0 0.0
        %5438 = vmatpush.msra.mxu0 0.0
        %5439 = vmatpush.msra.mxu0 0.0
        %5440 = vmatpush.msra.mxu0 0.0
        %v5441 = vand.u32 %v5322, 4294901760
        %v5442 = vsub.f32 %v5322, %v5441
        %v5443 = vand.u32 %v5442, 4294901760
        %5444 = vmatpush.msra.mxu0 %v5443
        %v5445 = vand.u32 %v5324, 4294901760
        %5446 = vmatmul.f32.gmra.mxu0 %v5445
        %v5447 = vpop.f32.mrf.mxu0
        %v5448 = vadd.f32 %v5424, %v5447
        %5449 = vdwg.mxu0
        %5450 = vmatpush.msra.mxu0 0.0
        %5451 = vmatpush.msra.mxu0 0.0
        %5452 = vmatpush.msra.mxu0 0.0
        %5453 = vmatpush.msra.mxu0 0.0
        %5454 = vmatpush.msra.mxu0 0.0
        %5455 = vmatpush.msra.mxu0 0.0
        %5456 = vmatpush.msra.mxu0 0.0
        %5457 = vmatpush.msra.mxu0 0.0
        %5458 = vmatpush.msra.mxu0 0.0
        %5459 = vmatpush.msra.mxu0 0.0
        %5460 = vmatpush.msra.mxu0 0.0
        %5461 = vmatpush.msra.mxu0 0.0
        %5462 = vmatpush.msra.mxu0 0.0
        %5463 = vmatpush.msra.mxu0 0.0
        %5464 = vmatpush.msra.mxu0 0.0
        %v5465 = vand.u32 %v5322, 4294901760
        %5466 = vmatpush.msra.mxu0 %v5465
        %v5467 = vand.u32 %v5324, 4294901760
        %5468 = vmatmul.f32.gmra.mxu0 %v5467
        %v5469 = vpop.f32.mrf.mxu0
        %v5470 = vadd.f32 %v5448, %v5469
        %5471 = vdwg.mxu0
        %5472 = vst.msk [vmem:[#allocation2 + $0x10] sm:$0x1] %vm2863, %v5470
        %v5473 = vperm.slane %v2401, 1
        %v5474 = vmul.f32 %v2699, %v5473
        %v5475 = vsel %vm2702, %v5474, 0.0
        %5476 = vadd.xlane.f32.xlu0 %v5475
        %v5477 = vpop.xlane.xlu0 %5476
        %v5478 = vperm.slane %v2123, 1
        %v5479 = vmul.f32 %v2696, %v5478
        %v5480 = vmul.f32 %v5479, 1.442695
        %v5481 = vpow.pop %v5480
        %v5482 = vmul.f32 %v5481, %v5322
        %v5483 = vperm.slane %v2691, 1
        %v5484 = vmul.f32 %v5477, %v5483
        %v5485 = vadd.f32 %v5482, %v5484
        %v5486 = vrot.slane %v2683, 1
        %v5487 = vsel %vm2702, %v5486, 0
        %5489 = vmatpush.msra.mxu0 0.0
        %5490 = vmatpush.msra.mxu0 0.0
        %5491 = vmatpush.msra.mxu0 0.0
        %5492 = vmatpush.msra.mxu0 0.0
        %5493 = vmatpush.msra.mxu0 0.0
        %5494 = vmatpush.msra.mxu0 0.0
        %5495 = vmatpush.msra.mxu0 0.0
        %5496 = vmatpush.msra.mxu0 0.0
        %5497 = vmatpush.msra.mxu0 0.0
        %5498 = vmatpush.msra.mxu0 0.0
        %5499 = vmatpush.msra.mxu0 0.0
        %5500 = vmatpush.msra.mxu0 0.0
        %5501 = vmatpush.msra.mxu0 0.0
        %5502 = vmatpush.msra.mxu0 0.0
        %5503 = vmatpush.msra.mxu0 0.0
        %v5504 = vand.u32 %v5485, 4294901760
        %5505 = vmatpush.msra.mxu0 %v5504
        %v5506 = vand.u32 %v5487, 4294901760
        %v5507 = vsub.f32 %v5487, %v5506
        %v5508 = vand.u32 %v5507, 4294901760
        %v5509 = vsub.f32 %v5507, %v5508
        %v5510 = vand.u32 %v5509, 4294901760
        %5511 = vmatmul.f32.gmra.mxu0 %v5510
        %v5512 = vpop.f32.mrf.mxu0
        %v5513 = vadd.f32 0.0, %v5512
        %5514 = vdwg.mxu0
        %5515 = vmatpush.msra.mxu0 0.0
        %5516 = vmatpush.msra.mxu0 0.0
        %5517 = vmatpush.msra.mxu0 0.0
        %5518 = vmatpush.msra.mxu0 0.0
        %5519 = vmatpush.msra.mxu0 0.0
        %5520 = vmatpush.msra.mxu0 0.0
        %5521 = vmatpush.msra.mxu0 0.0
        %5522 = vmatpush.msra.mxu0 0.0
        %5523 = vmatpush.msra.mxu0 0.0
        %5524 = vmatpush.msra.mxu0 0.0
        %5525 = vmatpush.msra.mxu0 0.0
        %5526 = vmatpush.msra.mxu0 0.0
        %5527 = vmatpush.msra.mxu0 0.0
        %5528 = vmatpush.msra.mxu0 0.0
        %5529 = vmatpush.msra.mxu0 0.0
        %v5530 = vand.u32 %v5485, 4294901760
        %v5531 = vsub.f32 %v5485, %v5530
        %v5532 = vand.u32 %v5531, 4294901760
        %v5533 = vsub.f32 %v5531, %v5532
        %v5534 = vand.u32 %v5533, 4294901760
        %5535 = vmatpush.msra.mxu0 %v5534
        %v5536 = vand.u32 %v5487, 4294901760
        %5537 = vmatmul.f32.gmra.mxu0 %v5536
        %v5538 = vpop.f32.mrf.mxu0
        %v5539 = vadd.f32 %v5513, %v5538
        %5540 = vdwg.mxu0
        %5541 = vmatpush.msra.mxu0 0.0
        %5542 = vmatpush.msra.mxu0 0.0
        %5543 = vmatpush.msra.mxu0 0.0
        %5544 = vmatpush.msra.mxu0 0.0
        %5545 = vmatpush.msra.mxu0 0.0
        %5546 = vmatpush.msra.mxu0 0.0
        %5547 = vmatpush.msra.mxu0 0.0
        %5548 = vmatpush.msra.mxu0 0.0
        %5549 = vmatpush.msra.mxu0 0.0
        %5550 = vmatpush.msra.mxu0 0.0
        %5551 = vmatpush.msra.mxu0 0.0
        %5552 = vmatpush.msra.mxu0 0.0
        %5553 = vmatpush.msra.mxu0 0.0
        %5554 = vmatpush.msra.mxu0 0.0
        %5555 = vmatpush.msra.mxu0 0.0
        %v5556 = vand.u32 %v5485, 4294901760
        %v5557 = vsub.f32 %v5485, %v5556
        %5558 = vmatpush.msra.mxu0 %v5557
        %v5559 = vand.u32 %v5487, 4294901760
        %v5560 = vsub.f32 %v5487, %v5559
        %5561 = vmatmul.f32.gmra.mxu0 %v5560
        %v5562 = vpop.f32.mrf.mxu0
        %v5563 = vadd.f32 %v5539, %v5562
        %5564 = vdwg.mxu0
        %5565 = vmatpush.msra.mxu0 0.0
        %5566 = vmatpush.msra.mxu0 0.0
        %5567 = vmatpush.msra.mxu0 0.0
        %5568 = vmatpush.msra.mxu0 0.0
        %5569 = vmatpush.msra.mxu0 0.0
        %5570 = vmatpush.msra.mxu0 0.0
        %5571 = vmatpush.msra.mxu0 0.0
        %5572 = vmatpush.msra.mxu0 0.0
        %5573 = vmatpush.msra.mxu0 0.0
        %5574 = vmatpush.msra.mxu0 0.0
        %5575 = vmatpush.msra.mxu0 0.0
        %5576 = vmatpush.msra.mxu0 0.0
        %5577 = vmatpush.msra.mxu0 0.0
        %5578 = vmatpush.msra.mxu0 0.0
        %5579 = vmatpush.msra.mxu0 0.0
        %v5580 = vand.u32 %v5485, 4294901760
        %5581 = vmatpush.msra.mxu0 %v5580
        %v5582 = vand.u32 %v5487, 4294901760
        %v5583 = vsub.f32 %v5487, %v5582
        %v5584 = vand.u32 %v5583, 4294901760
        %5585 = vmatmul.f32.gmra.mxu0 %v5584
        %v5586 = vpop.f32.mrf.mxu0
        %v5587 = vadd.f32 %v5563, %v5586
        %5588 = vdwg.mxu0
        %5589 = vmatpush.msra.mxu0 0.0
        %5590 = vmatpush.msra.mxu0 0.0
        %5591 = vmatpush.msra.mxu0 0.0
        %5592 = vmatpush.msra.mxu0 0.0
        %5593 = vmatpush.msra.mxu0 0.0
        %5594 = vmatpush.msra.mxu0 0.0
        %5595 = vmatpush.msra.mxu0 0.0
        %5596 = vmatpush.msra.mxu0 0.0
        %5597 = vmatpush.msra.mxu0 0.0
        %5598 = vmatpush.msra.mxu0 0.0
        %5599 = vmatpush.msra.mxu0 0.0
        %5600 = vmatpush.msra.mxu0 0.0
        %5601 = vmatpush.msra.mxu0 0.0
        %5602 = vmatpush.msra.mxu0 0.0
        %5603 = vmatpush.msra.mxu0 0.0
        %v5604 = vand.u32 %v5485, 4294901760
        %v5605 = vsub.f32 %v5485, %v5604
        %v5606 = vand.u32 %v5605, 4294901760
        %5607 = vmatpush.msra.mxu0 %v5606
        %v5608 = vand.u32 %v5487, 4294901760
        %5609 = vmatmul.f32.gmra.mxu0 %v5608
        %v5610 = vpop.f32.mrf.mxu0
        %v5611 = vadd.f32 %v5587, %v5610
        %5612 = vdwg.mxu0
        %5613 = vmatpush.msra.mxu0 0.0
        %5614 = vmatpush.msra.mxu0 0.0
        %5615 = vmatpush.msra.mxu0 0.0
        %5616 = vmatpush.msra.mxu0 0.0
        %5617 = vmatpush.msra.mxu0 0.0
        %5618 = vmatpush.msra.mxu0 0.0
        %5619 = vmatpush.msra.mxu0 0.0
        %5620 = vmatpush.msra.mxu0 0.0
        %5621 = vmatpush.msra.mxu0 0.0
        %5622 = vmatpush.msra.mxu0 0.0
        %5623 = vmatpush.msra.mxu0 0.0
        %5624 = vmatpush.msra.mxu0 0.0
        %5625 = vmatpush.msra.mxu0 0.0
        %5626 = vmatpush.msra.mxu0 0.0
        %5627 = vmatpush.msra.mxu0 0.0
        %v5628 = vand.u32 %v5485, 4294901760
        %5629 = vmatpush.msra.mxu0 %v5628
        %v5630 = vand.u32 %v5487, 4294901760
        %5631 = vmatmul.f32.gmra.mxu0 %v5630
        %v5632 = vpop.f32.mrf.mxu0
        %v5633 = vadd.f32 %v5611, %v5632
        %5634 = vdwg.mxu0
        %5635 = vst.msk [vmem:[#allocation2 + $0x11] sm:$0x1] %vm2863, %v5633
        %v5636 = vperm.slane %v2401, 2
        %v5637 = vmul.f32 %v2699, %v5636
        %v5638 = vsel %vm2702, %v5637, 0.0
        %5639 = vadd.xlane.f32.xlu0 %v5638
        %v5640 = vpop.xlane.xlu0 %5639
        %v5641 = vperm.slane %v2123, 2
        %v5642 = vmul.f32 %v2696, %v5641
        %v5643 = vmul.f32 %v5642, 1.442695
        %v5644 = vpow.pop %v5643
        %v5645 = vmul.f32 %v5644, %v5485
        %v5646 = vperm.slane %v2691, 2
        %v5647 = vmul.f32 %v5640, %v5646
        %v5648 = vadd.f32 %v5645, %v5647
        %v5649 = vrot.slane %v2683, 2
        %v5650 = vsel %vm2702, %v5649, 0
        %5652 = vmatpush.msra.mxu0 0.0
        %5653 = vmatpush.msra.mxu0 0.0
        %5654 = vmatpush.msra.mxu0 0.0
        %5655 = vmatpush.msra.mxu0 0.0
        %5656 = vmatpush.msra.mxu0 0.0
        %5657 = vmatpush.msra.mxu0 0.0
        %5658 = vmatpush.msra.mxu0 0.0
        %5659 = vmatpush.msra.mxu0 0.0
        %5660 = vmatpush.msra.mxu0 0.0
        %5661 = vmatpush.msra.mxu0 0.0
        %5662 = vmatpush.msra.mxu0 0.0
        %5663 = vmatpush.msra.mxu0 0.0
        %5664 = vmatpush.msra.mxu0 0.0
        %5665 = vmatpush.msra.mxu0 0.0
        %5666 = vmatpush.msra.mxu0 0.0
        %v5667 = vand.u32 %v5648, 4294901760
        %5668 = vmatpush.msra.mxu0 %v5667
        %v5669 = vand.u32 %v5650, 4294901760
        %v5670 = vsub.f32 %v5650, %v5669
        %v5671 = vand.u32 %v5670, 4294901760
        %v5672 = vsub.f32 %v5670, %v5671
        %v5673 = vand.u32 %v5672, 4294901760
        %5674 = vmatmul.f32.gmra.mxu0 %v5673
        %v5675 = vpop.f32.mrf.mxu0
        %v5676 = vadd.f32 0.0, %v5675
        %5677 = vdwg.mxu0
        %5678 = vmatpush.msra.mxu0 0.0
        %5679 = vmatpush.msra.mxu0 0.0
        %5680 = vmatpush.msra.mxu0 0.0
        %5681 = vmatpush.msra.mxu0 0.0
        %5682 = vmatpush.msra.mxu0 0.0
        %5683 = vmatpush.msra.mxu0 0.0
        %5684 = vmatpush.msra.mxu0 0.0
        %5685 = vmatpush.msra.mxu0 0.0
        %5686 = vmatpush.msra.mxu0 0.0
        %5687 = vmatpush.msra.mxu0 0.0
        %5688 = vmatpush.msra.mxu0 0.0
        %5689 = vmatpush.msra.mxu0 0.0
        %5690 = vmatpush.msra.mxu0 0.0
        %5691 = vmatpush.msra.mxu0 0.0
        %5692 = vmatpush.msra.mxu0 0.0
        %v5693 = vand.u32 %v5648, 4294901760
        %v5694 = vsub.f32 %v5648, %v5693
        %v5695 = vand.u32 %v5694, 4294901760
        %v5696 = vsub.f32 %v5694, %v5695
        %v5697 = vand.u32 %v5696, 4294901760
        %5698 = vmatpush.msra.mxu0 %v5697
        %v5699 = vand.u32 %v5650, 4294901760
        %5700 = vmatmul.f32.gmra.mxu0 %v5699
        %v5701 = vpop.f32.mrf.mxu0
        %v5702 = vadd.f32 %v5676, %v5701
        %5703 = vdwg.mxu0
        %5704 = vmatpush.msra.mxu0 0.0
        %5705 = vmatpush.msra.mxu0 0.0
        %5706 = vmatpush.msra.mxu0 0.0
        %5707 = vmatpush.msra.mxu0 0.0
        %5708 = vmatpush.msra.mxu0 0.0
        %5709 = vmatpush.msra.mxu0 0.0
        %5710 = vmatpush.msra.mxu0 0.0
        %5711 = vmatpush.msra.mxu0 0.0
        %5712 = vmatpush.msra.mxu0 0.0
        %5713 = vmatpush.msra.mxu0 0.0
        %5714 = vmatpush.msra.mxu0 0.0
        %5715 = vmatpush.msra.mxu0 0.0
        %5716 = vmatpush.msra.mxu0 0.0
        %5717 = vmatpush.msra.mxu0 0.0
        %5718 = vmatpush.msra.mxu0 0.0
        %v5719 = vand.u32 %v5648, 4294901760
        %v5720 = vsub.f32 %v5648, %v5719
        %5721 = vmatpush.msra.mxu0 %v5720
        %v5722 = vand.u32 %v5650, 4294901760
        %v5723 = vsub.f32 %v5650, %v5722
        %5724 = vmatmul.f32.gmra.mxu0 %v5723
        %v5725 = vpop.f32.mrf.mxu0
        %v5726 = vadd.f32 %v5702, %v5725
        %5727 = vdwg.mxu0
        %5728 = vmatpush.msra.mxu0 0.0
        %5729 = vmatpush.msra.mxu0 0.0
        %5730 = vmatpush.msra.mxu0 0.0
        %5731 = vmatpush.msra.mxu0 0.0
        %5732 = vmatpush.msra.mxu0 0.0
        %5733 = vmatpush.msra.mxu0 0.0
        %5734 = vmatpush.msra.mxu0 0.0
        %5735 = vmatpush.msra.mxu0 0.0
        %5736 = vmatpush.msra.mxu0 0.0
        %5737 = vmatpush.msra.mxu0 0.0
        %5738 = vmatpush.msra.mxu0 0.0
        %5739 = vmatpush.msra.mxu0 0.0
        %5740 = vmatpush.msra.mxu0 0.0
        %5741 = vmatpush.msra.mxu0 0.0
        %5742 = vmatpush.msra.mxu0 0.0
        %v5743 = vand.u32 %v5648, 4294901760
        %5744 = vmatpush.msra.mxu0 %v5743
        %v5745 = vand.u32 %v5650, 4294901760
        %v5746 = vsub.f32 %v5650, %v5745
        %v5747 = vand.u32 %v5746, 4294901760
        %5748 = vmatmul.f32.gmra.mxu0 %v5747
        %v5749 = vpop.f32.mrf.mxu0
        %v5750 = vadd.f32 %v5726, %v5749
        %5751 = vdwg.mxu0
        %5752 = vmatpush.msra.mxu0 0.0
        %5753 = vmatpush.msra.mxu0 0.0
        %5754 = vmatpush.msra.mxu0 0.0
        %5755 = vmatpush.msra.mxu0 0.0
        %5756 = vmatpush.msra.mxu0 0.0
        %5757 = vmatpush.msra.mxu0 0.0
        %5758 = vmatpush.msra.mxu0 0.0
        %5759 = vmatpush.msra.mxu0 0.0
        %5760 = vmatpush.msra.mxu0 0.0
        %5761 = vmatpush.msra.mxu0 0.0
        %5762 = vmatpush.msra.mxu0 0.0
        %5763 = vmatpush.msra.mxu0 0.0
        %5764 = vmatpush.msra.mxu0 0.0
        %5765 = vmatpush.msra.mxu0 0.0
        %5766 = vmatpush.msra.mxu0 0.0
        %v5767 = vand.u32 %v5648, 4294901760
        %v5768 = vsub.f32 %v5648, %v5767
        %v5769 = vand.u32 %v5768, 4294901760
        %5770 = vmatpush.msra.mxu0 %v5769
        %v5771 = vand.u32 %v5650, 4294901760
        %5772 = vmatmul.f32.gmra.mxu0 %v5771
        %v5773 = vpop.f32.mrf.mxu0
        %v5774 = vadd.f32 %v5750, %v5773
        %5775 = vdwg.mxu0
        %5776 = vmatpush.msra.mxu0 0.0
        %5777 = vmatpush.msra.mxu0 0.0
        %5778 = vmatpush.msra.mxu0 0.0
        %5779 = vmatpush.msra.mxu0 0.0
        %5780 = vmatpush.msra.mxu0 0.0
        %5781 = vmatpush.msra.mxu0 0.0
        %5782 = vmatpush.msra.mxu0 0.0
        %5783 = vmatpush.msra.mxu0 0.0
        %5784 = vmatpush.msra.mxu0 0.0
        %5785 = vmatpush.msra.mxu0 0.0
        %5786 = vmatpush.msra.mxu0 0.0
        %5787 = vmatpush.msra.mxu0 0.0
        %5788 = vmatpush.msra.mxu0 0.0
        %5789 = vmatpush.msra.mxu0 0.0
        %5790 = vmatpush.msra.mxu0 0.0
        %v5791 = vand.u32 %v5648, 4294901760
        %5792 = vmatpush.msra.mxu0 %v5791
        %v5793 = vand.u32 %v5650, 4294901760
        %5794 = vmatmul.f32.gmra.mxu0 %v5793
        %v5795 = vpop.f32.mrf.mxu0
        %v5796 = vadd.f32 %v5774, %v5795
        %5797 = vdwg.mxu0
        %5798 = vst.msk [vmem:[#allocation2 + $0x12] sm:$0x1] %vm2863, %v5796
        %v5799 = vperm.slane %v2401, 3
        %v5800 = vmul.f32 %v2699, %v5799
        %v5801 = vsel %vm2702, %v5800, 0.0
        %5802 = vadd.xlane.f32.xlu0 %v5801
        %v5803 = vpop.xlane.xlu0 %5802
        %v5804 = vperm.slane %v2123, 3
        %v5805 = vmul.f32 %v2696, %v5804
        %v5806 = vmul.f32 %v5805, 1.442695
        %v5807 = vpow.pop %v5806
        %v5808 = vmul.f32 %v5807, %v5648
        %v5809 = vperm.slane %v2691, 3
        %v5810 = vmul.f32 %v5803, %v5809
        %v5811 = vadd.f32 %v5808, %v5810
        %v5812 = vrot.slane %v2683, 3
        %v5813 = vsel %vm2702, %v5812, 0
        %5815 = vmatpush.msra.mxu0 0.0
        %5816 = vmatpush.msra.mxu0 0.0
        %5817 = vmatpush.msra.mxu0 0.0
        %5818 = vmatpush.msra.mxu0 0.0
        %5819 = vmatpush.msra.mxu0 0.0
        %5820 = vmatpush.msra.mxu0 0.0
        %5821 = vmatpush.msra.mxu0 0.0
        %5822 = vmatpush.msra.mxu0 0.0
        %5823 = vmatpush.msra.mxu0 0.0
        %5824 = vmatpush.msra.mxu0 0.0
        %5825 = vmatpush.msra.mxu0 0.0
        %5826 = vmatpush.msra.mxu0 0.0
        %5827 = vmatpush.msra.mxu0 0.0
        %5828 = vmatpush.msra.mxu0 0.0
        %5829 = vmatpush.msra.mxu0 0.0
        %v5830 = vand.u32 %v5811, 4294901760
        %5831 = vmatpush.msra.mxu0 %v5830
        %v5832 = vand.u32 %v5813, 4294901760
        %v5833 = vsub.f32 %v5813, %v5832
        %v5834 = vand.u32 %v5833, 4294901760
        %v5835 = vsub.f32 %v5833, %v5834
        %v5836 = vand.u32 %v5835, 4294901760
        %5837 = vmatmul.f32.gmra.mxu0 %v5836
        %v5838 = vpop.f32.mrf.mxu0
        %v5839 = vadd.f32 0.0, %v5838
        %5840 = vdwg.mxu0
        %5841 = vmatpush.msra.mxu0 0.0
        %5842 = vmatpush.msra.mxu0 0.0
        %5843 = vmatpush.msra.mxu0 0.0
        %5844 = vmatpush.msra.mxu0 0.0
        %5845 = vmatpush.msra.mxu0 0.0
        %5846 = vmatpush.msra.mxu0 0.0
        %5847 = vmatpush.msra.mxu0 0.0
        %5848 = vmatpush.msra.mxu0 0.0
        %5849 = vmatpush.msra.mxu0 0.0
        %5850 = vmatpush.msra.mxu0 0.0
        %5851 = vmatpush.msra.mxu0 0.0
        %5852 = vmatpush.msra.mxu0 0.0
        %5853 = vmatpush.msra.mxu0 0.0
        %5854 = vmatpush.msra.mxu0 0.0
        %5855 = vmatpush.msra.mxu0 0.0
        %v5856 = vand.u32 %v5811, 4294901760
        %v5857 = vsub.f32 %v5811, %v5856
        %v5858 = vand.u32 %v5857, 4294901760
        %v5859 = vsub.f32 %v5857, %v5858
        %v5860 = vand.u32 %v5859, 4294901760
        %5861 = vmatpush.msra.mxu0 %v5860
        %v5862 = vand.u32 %v5813, 4294901760
        %5863 = vmatmul.f32.gmra.mxu0 %v5862
        %v5864 = vpop.f32.mrf.mxu0
        %v5865 = vadd.f32 %v5839, %v5864
        %5866 = vdwg.mxu0
        %5867 = vmatpush.msra.mxu0 0.0
        %5868 = vmatpush.msra.mxu0 0.0
        %5869 = vmatpush.msra.mxu0 0.0
        %5870 = vmatpush.msra.mxu0 0.0
        %5871 = vmatpush.msra.mxu0 0.0
        %5872 = vmatpush.msra.mxu0 0.0
        %5873 = vmatpush.msra.mxu0 0.0
        %5874 = vmatpush.msra.mxu0 0.0
        %5875 = vmatpush.msra.mxu0 0.0
        %5876 = vmatpush.msra.mxu0 0.0
        %5877 = vmatpush.msra.mxu0 0.0
        %5878 = vmatpush.msra.mxu0 0.0
        %5879 = vmatpush.msra.mxu0 0.0
        %5880 = vmatpush.msra.mxu0 0.0
        %5881 = vmatpush.msra.mxu0 0.0
        %v5882 = vand.u32 %v5811, 4294901760
        %v5883 = vsub.f32 %v5811, %v5882
        %5884 = vmatpush.msra.mxu0 %v5883
        %v5885 = vand.u32 %v5813, 4294901760
        %v5886 = vsub.f32 %v5813, %v5885
        %5887 = vmatmul.f32.gmra.mxu0 %v5886
        %v5888 = vpop.f32.mrf.mxu0
        %v5889 = vadd.f32 %v5865, %v5888
        %5890 = vdwg.mxu0
        %5891 = vmatpush.msra.mxu0 0.0
        %5892 = vmatpush.msra.mxu0 0.0
        %5893 = vmatpush.msra.mxu0 0.0
        %5894 = vmatpush.msra.mxu0 0.0
        %5895 = vmatpush.msra.mxu0 0.0
        %5896 = vmatpush.msra.mxu0 0.0
        %5897 = vmatpush.msra.mxu0 0.0
        %5898 = vmatpush.msra.mxu0 0.0
        %5899 = vmatpush.msra.mxu0 0.0
        %5900 = vmatpush.msra.mxu0 0.0
        %5901 = vmatpush.msra.mxu0 0.0
        %5902 = vmatpush.msra.mxu0 0.0
        %5903 = vmatpush.msra.mxu0 0.0
        %5904 = vmatpush.msra.mxu0 0.0
        %5905 = vmatpush.msra.mxu0 0.0
        %v5906 = vand.u32 %v5811, 4294901760
        %5907 = vmatpush.msra.mxu0 %v5906
        %v5908 = vand.u32 %v5813, 4294901760
        %v5909 = vsub.f32 %v5813, %v5908
        %v5910 = vand.u32 %v5909, 4294901760
        %5911 = vmatmul.f32.gmra.mxu0 %v5910
        %v5912 = vpop.f32.mrf.mxu0
        %v5913 = vadd.f32 %v5889, %v5912
        %5914 = vdwg.mxu0
        %5915 = vmatpush.msra.mxu0 0.0
        %5916 = vmatpush.msra.mxu0 0.0
        %5917 = vmatpush.msra.mxu0 0.0
        %5918 = vmatpush.msra.mxu0 0.0
        %5919 = vmatpush.msra.mxu0 0.0
        %5920 = vmatpush.msra.mxu0 0.0
        %5921 = vmatpush.msra.mxu0 0.0
        %5922 = vmatpush.msra.mxu0 0.0
        %5923 = vmatpush.msra.mxu0 0.0
        %5924 = vmatpush.msra.mxu0 0.0
        %5925 = vmatpush.msra.mxu0 0.0
        %5926 = vmatpush.msra.mxu0 0.0
        %5927 = vmatpush.msra.mxu0 0.0
        %5928 = vmatpush.msra.mxu0 0.0
        %5929 = vmatpush.msra.mxu0 0.0
        %v5930 = vand.u32 %v5811, 4294901760
        %v5931 = vsub.f32 %v5811, %v5930
        %v5932 = vand.u32 %v5931, 4294901760
        %5933 = vmatpush.msra.mxu0 %v5932
        %v5934 = vand.u32 %v5813, 4294901760
        %5935 = vmatmul.f32.gmra.mxu0 %v5934
        %v5936 = vpop.f32.mrf.mxu0
        %v5937 = vadd.f32 %v5913, %v5936
        %5938 = vdwg.mxu0
        %5939 = vmatpush.msra.mxu0 0.0
        %5940 = vmatpush.msra.mxu0 0.0
        %5941 = vmatpush.msra.mxu0 0.0
        %5942 = vmatpush.msra.mxu0 0.0
        %5943 = vmatpush.msra.mxu0 0.0
        %5944 = vmatpush.msra.mxu0 0.0
        %5945 = vmatpush.msra.mxu0 0.0
        %5946 = vmatpush.msra.mxu0 0.0
        %5947 = vmatpush.msra.mxu0 0.0
        %5948 = vmatpush.msra.mxu0 0.0
        %5949 = vmatpush.msra.mxu0 0.0
        %5950 = vmatpush.msra.mxu0 0.0
        %5951 = vmatpush.msra.mxu0 0.0
        %5952 = vmatpush.msra.mxu0 0.0
        %5953 = vmatpush.msra.mxu0 0.0
        %v5954 = vand.u32 %v5811, 4294901760
        %5955 = vmatpush.msra.mxu0 %v5954
        %v5956 = vand.u32 %v5813, 4294901760
        %5957 = vmatmul.f32.gmra.mxu0 %v5956
        %v5958 = vpop.f32.mrf.mxu0
        %v5959 = vadd.f32 %v5937, %v5958
        %5960 = vdwg.mxu0
        %5961 = vst.msk [vmem:[#allocation2 + $0x13] sm:$0x1] %vm2863, %v5959
        %v5962 = vperm.slane %v2401, 4
        %v5963 = vmul.f32 %v2699, %v5962
        %v5964 = vsel %vm2702, %v5963, 0.0
        %5965 = vadd.xlane.f32.xlu0 %v5964
        %v5966 = vpop.xlane.xlu0 %5965
        %v5967 = vperm.slane %v2123, 4
        %v5968 = vmul.f32 %v2696, %v5967
        %v5969 = vmul.f32 %v5968, 1.442695
        %v5970 = vpow.pop %v5969
        %v5971 = vmul.f32 %v5970, %v5811
        %v5972 = vperm.slane %v2691, 4
        %v5973 = vmul.f32 %v5966, %v5972
        %v5974 = vadd.f32 %v5971, %v5973
        %v5975 = vrot.slane %v2683, 4
        %v5976 = vsel %vm2702, %v5975, 0
        %5978 = vmatpush.msra.mxu0 0.0
        %5979 = vmatpush.msra.mxu0 0.0
        %5980 = vmatpush.msra.mxu0 0.0
        %5981 = vmatpush.msra.mxu0 0.0
        %5982 = vmatpush.msra.mxu0 0.0
        %5983 = vmatpush.msra.mxu0 0.0
        %5984 = vmatpush.msra.mxu0 0.0
        %5985 = vmatpush.msra.mxu0 0.0
        %5986 = vmatpush.msra.mxu0 0.0
        %5987 = vmatpush.msra.mxu0 0.0
        %5988 = vmatpush.msra.mxu0 0.0
        %5989 = vmatpush.msra.mxu0 0.0
        %5990 = vmatpush.msra.mxu0 0.0
        %5991 = vmatpush.msra.mxu0 0.0
        %5992 = vmatpush.msra.mxu0 0.0
        %v5993 = vand.u32 %v5974, 4294901760
        %5994 = vmatpush.msra.mxu0 %v5993
        %v5995 = vand.u32 %v5976, 4294901760
        %v5996 = vsub.f32 %v5976, %v5995
        %v5997 = vand.u32 %v5996, 4294901760
        %v5998 = vsub.f32 %v5996, %v5997
        %v5999 = vand.u32 %v5998, 4294901760
        %6000 = vmatmul.f32.gmra.mxu0 %v5999
        %v6001 = vpop.f32.mrf.mxu0
        %v6002 = vadd.f32 0.0, %v6001
        %6003 = vdwg.mxu0
        %6004 = vmatpush.msra.mxu0 0.0
        %6005 = vmatpush.msra.mxu0 0.0
        %6006 = vmatpush.msra.mxu0 0.0
        %6007 = vmatpush.msra.mxu0 0.0
        %6008 = vmatpush.msra.mxu0 0.0
        %6009 = vmatpush.msra.mxu0 0.0
        %6010 = vmatpush.msra.mxu0 0.0
        %6011 = vmatpush.msra.mxu0 0.0
        %6012 = vmatpush.msra.mxu0 0.0
        %6013 = vmatpush.msra.mxu0 0.0
        %6014 = vmatpush.msra.mxu0 0.0
        %6015 = vmatpush.msra.mxu0 0.0
        %6016 = vmatpush.msra.mxu0 0.0
        %6017 = vmatpush.msra.mxu0 0.0
        %6018 = vmatpush.msra.mxu0 0.0
        %v6019 = vand.u32 %v5974, 4294901760
        %v6020 = vsub.f32 %v5974, %v6019
        %v6021 = vand.u32 %v6020, 4294901760
        %v6022 = vsub.f32 %v6020, %v6021
        %v6023 = vand.u32 %v6022, 4294901760
        %6024 = vmatpush.msra.mxu0 %v6023
        %v6025 = vand.u32 %v5976, 4294901760
        %6026 = vmatmul.f32.gmra.mxu0 %v6025
        %v6027 = vpop.f32.mrf.mxu0
        %v6028 = vadd.f32 %v6002, %v6027
        %6029 = vdwg.mxu0
        %6030 = vmatpush.msra.mxu0 0.0
        %6031 = vmatpush.msra.mxu0 0.0
        %6032 = vmatpush.msra.mxu0 0.0
        %6033 = vmatpush.msra.mxu0 0.0
        %6034 = vmatpush.msra.mxu0 0.0
        %6035 = vmatpush.msra.mxu0 0.0
        %6036 = vmatpush.msra.mxu0 0.0
        %6037 = vmatpush.msra.mxu0 0.0
        %6038 = vmatpush.msra.mxu0 0.0
        %6039 = vmatpush.msra.mxu0 0.0
        %6040 = vmatpush.msra.mxu0 0.0
        %6041 = vmatpush.msra.mxu0 0.0
        %6042 = vmatpush.msra.mxu0 0.0
        %6043 = vmatpush.msra.mxu0 0.0
        %6044 = vmatpush.msra.mxu0 0.0
        %v6045 = vand.u32 %v5974, 4294901760
        %v6046 = vsub.f32 %v5974, %v6045
        %6047 = vmatpush.msra.mxu0 %v6046
        %v6048 = vand.u32 %v5976, 4294901760
        %v6049 = vsub.f32 %v5976, %v6048
        %6050 = vmatmul.f32.gmra.mxu0 %v6049
        %v6051 = vpop.f32.mrf.mxu0
        %v6052 = vadd.f32 %v6028, %v6051
        %6053 = vdwg.mxu0
        %6054 = vmatpush.msra.mxu0 0.0
        %6055 = vmatpush.msra.mxu0 0.0
        %6056 = vmatpush.msra.mxu0 0.0
        %6057 = vmatpush.msra.mxu0 0.0
        %6058 = vmatpush.msra.mxu0 0.0
        %6059 = vmatpush.msra.mxu0 0.0
        %6060 = vmatpush.msra.mxu0 0.0
        %6061 = vmatpush.msra.mxu0 0.0
        %6062 = vmatpush.msra.mxu0 0.0
        %6063 = vmatpush.msra.mxu0 0.0
        %6064 = vmatpush.msra.mxu0 0.0
        %6065 = vmatpush.msra.mxu0 0.0
        %6066 = vmatpush.msra.mxu0 0.0
        %6067 = vmatpush.msra.mxu0 0.0
        %6068 = vmatpush.msra.mxu0 0.0
        %v6069 = vand.u32 %v5974, 4294901760
        %6070 = vmatpush.msra.mxu0 %v6069
        %v6071 = vand.u32 %v5976, 4294901760
        %v6072 = vsub.f32 %v5976, %v6071
        %v6073 = vand.u32 %v6072, 4294901760
        %6074 = vmatmul.f32.gmra.mxu0 %v6073
        %v6075 = vpop.f32.mrf.mxu0
        %v6076 = vadd.f32 %v6052, %v6075
        %6077 = vdwg.mxu0
        %6078 = vmatpush.msra.mxu0 0.0
        %6079 = vmatpush.msra.mxu0 0.0
        %6080 = vmatpush.msra.mxu0 0.0
        %6081 = vmatpush.msra.mxu0 0.0
        %6082 = vmatpush.msra.mxu0 0.0
        %6083 = vmatpush.msra.mxu0 0.0
        %6084 = vmatpush.msra.mxu0 0.0
        %6085 = vmatpush.msra.mxu0 0.0
        %6086 = vmatpush.msra.mxu0 0.0
        %6087 = vmatpush.msra.mxu0 0.0
        %6088 = vmatpush.msra.mxu0 0.0
        %6089 = vmatpush.msra.mxu0 0.0
        %6090 = vmatpush.msra.mxu0 0.0
        %6091 = vmatpush.msra.mxu0 0.0
        %6092 = vmatpush.msra.mxu0 0.0
        %v6093 = vand.u32 %v5974, 4294901760
        %v6094 = vsub.f32 %v5974, %v6093
        %v6095 = vand.u32 %v6094, 4294901760
        %6096 = vmatpush.msra.mxu0 %v6095
        %v6097 = vand.u32 %v5976, 4294901760
        %6098 = vmatmul.f32.gmra.mxu0 %v6097
        %v6099 = vpop.f32.mrf.mxu0
        %v6100 = vadd.f32 %v6076, %v6099
        %6101 = vdwg.mxu0
        %6102 = vmatpush.msra.mxu0 0.0
        %6103 = vmatpush.msra.mxu0 0.0
        %6104 = vmatpush.msra.mxu0 0.0
        %6105 = vmatpush.msra.mxu0 0.0
        %6106 = vmatpush.msra.mxu0 0.0
        %6107 = vmatpush.msra.mxu0 0.0
        %6108 = vmatpush.msra.mxu0 0.0
        %6109 = vmatpush.msra.mxu0 0.0
        %6110 = vmatpush.msra.mxu0 0.0
        %6111 = vmatpush.msra.mxu0 0.0
        %6112 = vmatpush.msra.mxu0 0.0
        %6113 = vmatpush.msra.mxu0 0.0
        %6114 = vmatpush.msra.mxu0 0.0
        %6115 = vmatpush.msra.mxu0 0.0
        %6116 = vmatpush.msra.mxu0 0.0
        %v6117 = vand.u32 %v5974, 4294901760
        %6118 = vmatpush.msra.mxu0 %v6117
        %v6119 = vand.u32 %v5976, 4294901760
        %6120 = vmatmul.f32.gmra.mxu0 %v6119
        %v6121 = vpop.f32.mrf.mxu0
        %v6122 = vadd.f32 %v6100, %v6121
        %6123 = vdwg.mxu0
        %6124 = vst.msk [vmem:[#allocation2 + $0x14] sm:$0x1] %vm2863, %v6122
        %v6125 = vperm.slane %v2401, 5
        %v6126 = vmul.f32 %v2699, %v6125
        %v6127 = vsel %vm2702, %v6126, 0.0
        %6128 = vadd.xlane.f32.xlu0 %v6127
        %v6129 = vpop.xlane.xlu0 %6128
        %v6130 = vperm.slane %v2123, 5
        %v6131 = vmul.f32 %v2696, %v6130
        %v6132 = vmul.f32 %v6131, 1.442695
        %v6133 = vpow.pop %v6132
        %v6134 = vmul.f32 %v6133, %v5974
        %v6135 = vperm.slane %v2691, 5
        %v6136 = vmul.f32 %v6129, %v6135
        %v6137 = vadd.f32 %v6134, %v6136
        %v6138 = vrot.slane %v2683, 5
        %v6139 = vsel %vm2702, %v6138, 0
        %6141 = vmatpush.msra.mxu0 0.0
        %6142 = vmatpush.msra.mxu0 0.0
        %6143 = vmatpush.msra.mxu0 0.0
        %6144 = vmatpush.msra.mxu0 0.0
        %6145 = vmatpush.msra.mxu0 0.0
        %6146 = vmatpush.msra.mxu0 0.0
        %6147 = vmatpush.msra.mxu0 0.0
        %6148 = vmatpush.msra.mxu0 0.0
        %6149 = vmatpush.msra.mxu0 0.0
        %6150 = vmatpush.msra.mxu0 0.0
        %6151 = vmatpush.msra.mxu0 0.0
        %6152 = vmatpush.msra.mxu0 0.0
        %6153 = vmatpush.msra.mxu0 0.0
        %6154 = vmatpush.msra.mxu0 0.0
        %6155 = vmatpush.msra.mxu0 0.0
        %v6156 = vand.u32 %v6137, 4294901760
        %6157 = vmatpush.msra.mxu0 %v6156
        %v6158 = vand.u32 %v6139, 4294901760
        %v6159 = vsub.f32 %v6139, %v6158
        %v6160 = vand.u32 %v6159, 4294901760
        %v6161 = vsub.f32 %v6159, %v6160
        %v6162 = vand.u32 %v6161, 4294901760
        %6163 = vmatmul.f32.gmra.mxu0 %v6162
        %v6164 = vpop.f32.mrf.mxu0
        %v6165 = vadd.f32 0.0, %v6164
        %6166 = vdwg.mxu0
        %6167 = vmatpush.msra.mxu0 0.0
        %6168 = vmatpush.msra.mxu0 0.0
        %6169 = vmatpush.msra.mxu0 0.0
        %6170 = vmatpush.msra.mxu0 0.0
        %6171 = vmatpush.msra.mxu0 0.0
        %6172 = vmatpush.msra.mxu0 0.0
        %6173 = vmatpush.msra.mxu0 0.0
        %6174 = vmatpush.msra.mxu0 0.0
        %6175 = vmatpush.msra.mxu0 0.0
        %6176 = vmatpush.msra.mxu0 0.0
        %6177 = vmatpush.msra.mxu0 0.0
        %6178 = vmatpush.msra.mxu0 0.0
        %6179 = vmatpush.msra.mxu0 0.0
        %6180 = vmatpush.msra.mxu0 0.0
        %6181 = vmatpush.msra.mxu0 0.0
        %v6182 = vand.u32 %v6137, 4294901760
        %v6183 = vsub.f32 %v6137, %v6182
        %v6184 = vand.u32 %v6183, 4294901760
        %v6185 = vsub.f32 %v6183, %v6184
        %v6186 = vand.u32 %v6185, 4294901760
        %6187 = vmatpush.msra.mxu0 %v6186
        %v6188 = vand.u32 %v6139, 4294901760
        %6189 = vmatmul.f32.gmra.mxu0 %v6188
        %v6190 = vpop.f32.mrf.mxu0
        %v6191 = vadd.f32 %v6165, %v6190
        %6192 = vdwg.mxu0
        %6193 = vmatpush.msra.mxu0 0.0
        %6194 = vmatpush.msra.mxu0 0.0
        %6195 = vmatpush.msra.mxu0 0.0
        %6196 = vmatpush.msra.mxu0 0.0
        %6197 = vmatpush.msra.mxu0 0.0
        %6198 = vmatpush.msra.mxu0 0.0
        %6199 = vmatpush.msra.mxu0 0.0
        %6200 = vmatpush.msra.mxu0 0.0
        %6201 = vmatpush.msra.mxu0 0.0
        %6202 = vmatpush.msra.mxu0 0.0
        %6203 = vmatpush.msra.mxu0 0.0
        %6204 = vmatpush.msra.mxu0 0.0
        %6205 = vmatpush.msra.mxu0 0.0
        %6206 = vmatpush.msra.mxu0 0.0
        %6207 = vmatpush.msra.mxu0 0.0
        %v6208 = vand.u32 %v6137, 4294901760
        %v6209 = vsub.f32 %v6137, %v6208
        %6210 = vmatpush.msra.mxu0 %v6209
        %v6211 = vand.u32 %v6139, 4294901760
        %v6212 = vsub.f32 %v6139, %v6211
        %6213 = vmatmul.f32.gmra.mxu0 %v6212
        %v6214 = vpop.f32.mrf.mxu0
        %v6215 = vadd.f32 %v6191, %v6214
        %6216 = vdwg.mxu0
        %6217 = vmatpush.msra.mxu0 0.0
        %6218 = vmatpush.msra.mxu0 0.0
        %6219 = vmatpush.msra.mxu0 0.0
        %6220 = vmatpush.msra.mxu0 0.0
        %6221 = vmatpush.msra.mxu0 0.0
        %6222 = vmatpush.msra.mxu0 0.0
        %6223 = vmatpush.msra.mxu0 0.0
        %6224 = vmatpush.msra.mxu0 0.0
        %6225 = vmatpush.msra.mxu0 0.0
        %6226 = vmatpush.msra.mxu0 0.0
        %6227 = vmatpush.msra.mxu0 0.0
        %6228 = vmatpush.msra.mxu0 0.0
        %6229 = vmatpush.msra.mxu0 0.0
        %6230 = vmatpush.msra.mxu0 0.0
        %6231 = vmatpush.msra.mxu0 0.0
        %v6232 = vand.u32 %v6137, 4294901760
        %6233 = vmatpush.msra.mxu0 %v6232
        %v6234 = vand.u32 %v6139, 4294901760
        %v6235 = vsub.f32 %v6139, %v6234
        %v6236 = vand.u32 %v6235, 4294901760
        %6237 = vmatmul.f32.gmra.mxu0 %v6236
        %v6238 = vpop.f32.mrf.mxu0
        %v6239 = vadd.f32 %v6215, %v6238
        %6240 = vdwg.mxu0
        %6241 = vmatpush.msra.mxu0 0.0
        %6242 = vmatpush.msra.mxu0 0.0
        %6243 = vmatpush.msra.mxu0 0.0
        %6244 = vmatpush.msra.mxu0 0.0
        %6245 = vmatpush.msra.mxu0 0.0
        %6246 = vmatpush.msra.mxu0 0.0
        %6247 = vmatpush.msra.mxu0 0.0
        %6248 = vmatpush.msra.mxu0 0.0
        %6249 = vmatpush.msra.mxu0 0.0
        %6250 = vmatpush.msra.mxu0 0.0
        %6251 = vmatpush.msra.mxu0 0.0
        %6252 = vmatpush.msra.mxu0 0.0
        %6253 = vmatpush.msra.mxu0 0.0
        %6254 = vmatpush.msra.mxu0 0.0
        %6255 = vmatpush.msra.mxu0 0.0
        %v6256 = vand.u32 %v6137, 4294901760
        %v6257 = vsub.f32 %v6137, %v6256
        %v6258 = vand.u32 %v6257, 4294901760
        %6259 = vmatpush.msra.mxu0 %v6258
        %v6260 = vand.u32 %v6139, 4294901760
        %6261 = vmatmul.f32.gmra.mxu0 %v6260
        %v6262 = vpop.f32.mrf.mxu0
        %v6263 = vadd.f32 %v6239, %v6262
        %6264 = vdwg.mxu0
        %6265 = vmatpush.msra.mxu0 0.0
        %6266 = vmatpush.msra.mxu0 0.0
        %6267 = vmatpush.msra.mxu0 0.0
        %6268 = vmatpush.msra.mxu0 0.0
        %6269 = vmatpush.msra.mxu0 0.0
        %6270 = vmatpush.msra.mxu0 0.0
        %6271 = vmatpush.msra.mxu0 0.0
        %6272 = vmatpush.msra.mxu0 0.0
        %6273 = vmatpush.msra.mxu0 0.0
        %6274 = vmatpush.msra.mxu0 0.0
        %6275 = vmatpush.msra.mxu0 0.0
        %6276 = vmatpush.msra.mxu0 0.0
        %6277 = vmatpush.msra.mxu0 0.0
        %6278 = vmatpush.msra.mxu0 0.0
        %6279 = vmatpush.msra.mxu0 0.0
        %v6280 = vand.u32 %v6137, 4294901760
        %6281 = vmatpush.msra.mxu0 %v6280
        %v6282 = vand.u32 %v6139, 4294901760
        %6283 = vmatmul.f32.gmra.mxu0 %v6282
        %v6284 = vpop.f32.mrf.mxu0
        %v6285 = vadd.f32 %v6263, %v6284
        %6286 = vdwg.mxu0
        %6287 = vst.msk [vmem:[#allocation2 + $0x15] sm:$0x1] %vm2863, %v6285
        %v6288 = vperm.slane %v2401, 6
        %v6289 = vmul.f32 %v2699, %v6288
        %v6290 = vsel %vm2702, %v6289, 0.0
        %6291 = vadd.xlane.f32.xlu0 %v6290
        %v6292 = vpop.xlane.xlu0 %6291
        %v6293 = vperm.slane %v2123, 6
        %v6294 = vmul.f32 %v2696, %v6293
        %v6295 = vmul.f32 %v6294, 1.442695
        %v6296 = vpow.pop %v6295
        %v6297 = vmul.f32 %v6296, %v6137
        %v6298 = vperm.slane %v2691, 6
        %v6299 = vmul.f32 %v6292, %v6298
        %v6300 = vadd.f32 %v6297, %v6299
        %v6301 = vrot.slane %v2683, 6
        %v6302 = vsel %vm2702, %v6301, 0
        %6304 = vmatpush.msra.mxu0 0.0
        %6305 = vmatpush.msra.mxu0 0.0
        %6306 = vmatpush.msra.mxu0 0.0
        %6307 = vmatpush.msra.mxu0 0.0
        %6308 = vmatpush.msra.mxu0 0.0
        %6309 = vmatpush.msra.mxu0 0.0
        %6310 = vmatpush.msra.mxu0 0.0
        %6311 = vmatpush.msra.mxu0 0.0
        %6312 = vmatpush.msra.mxu0 0.0
        %6313 = vmatpush.msra.mxu0 0.0
        %6314 = vmatpush.msra.mxu0 0.0
        %6315 = vmatpush.msra.mxu0 0.0
        %6316 = vmatpush.msra.mxu0 0.0
        %6317 = vmatpush.msra.mxu0 0.0
        %6318 = vmatpush.msra.mxu0 0.0
        %v6319 = vand.u32 %v6300, 4294901760
        %6320 = vmatpush.msra.mxu0 %v6319
        %v6321 = vand.u32 %v6302, 4294901760
        %v6322 = vsub.f32 %v6302, %v6321
        %v6323 = vand.u32 %v6322, 4294901760
        %v6324 = vsub.f32 %v6322, %v6323
        %v6325 = vand.u32 %v6324, 4294901760
        %6326 = vmatmul.f32.gmra.mxu0 %v6325
        %v6327 = vpop.f32.mrf.mxu0
        %v6328 = vadd.f32 0.0, %v6327
        %6329 = vdwg.mxu0
        %6330 = vmatpush.msra.mxu0 0.0
        %6331 = vmatpush.msra.mxu0 0.0
        %6332 = vmatpush.msra.mxu0 0.0
        %6333 = vmatpush.msra.mxu0 0.0
        %6334 = vmatpush.msra.mxu0 0.0
        %6335 = vmatpush.msra.mxu0 0.0
        %6336 = vmatpush.msra.mxu0 0.0
        %6337 = vmatpush.msra.mxu0 0.0
        %6338 = vmatpush.msra.mxu0 0.0
        %6339 = vmatpush.msra.mxu0 0.0
        %6340 = vmatpush.msra.mxu0 0.0
        %6341 = vmatpush.msra.mxu0 0.0
        %6342 = vmatpush.msra.mxu0 0.0
        %6343 = vmatpush.msra.mxu0 0.0
        %6344 = vmatpush.msra.mxu0 0.0
        %v6345 = vand.u32 %v6300, 4294901760
        %v6346 = vsub.f32 %v6300, %v6345
        %v6347 = vand.u32 %v6346, 4294901760
        %v6348 = vsub.f32 %v6346, %v6347
        %v6349 = vand.u32 %v6348, 4294901760
        %6350 = vmatpush.msra.mxu0 %v6349
        %v6351 = vand.u32 %v6302, 4294901760
        %6352 = vmatmul.f32.gmra.mxu0 %v6351
        %v6353 = vpop.f32.mrf.mxu0
        %v6354 = vadd.f32 %v6328, %v6353
        %6355 = vdwg.mxu0
        %6356 = vmatpush.msra.mxu0 0.0
        %6357 = vmatpush.msra.mxu0 0.0
        %6358 = vmatpush.msra.mxu0 0.0
        %6359 = vmatpush.msra.mxu0 0.0
        %6360 = vmatpush.msra.mxu0 0.0
        %6361 = vmatpush.msra.mxu0 0.0
        %6362 = vmatpush.msra.mxu0 0.0
        %6363 = vmatpush.msra.mxu0 0.0
        %6364 = vmatpush.msra.mxu0 0.0
        %6365 = vmatpush.msra.mxu0 0.0
        %6366 = vmatpush.msra.mxu0 0.0
        %6367 = vmatpush.msra.mxu0 0.0
        %6368 = vmatpush.msra.mxu0 0.0
        %6369 = vmatpush.msra.mxu0 0.0
        %6370 = vmatpush.msra.mxu0 0.0
        %v6371 = vand.u32 %v6300, 4294901760
        %v6372 = vsub.f32 %v6300, %v6371
        %6373 = vmatpush.msra.mxu0 %v6372
        %v6374 = vand.u32 %v6302, 4294901760
        %v6375 = vsub.f32 %v6302, %v6374
        %6376 = vmatmul.f32.gmra.mxu0 %v6375
        %v6377 = vpop.f32.mrf.mxu0
        %v6378 = vadd.f32 %v6354, %v6377
        %6379 = vdwg.mxu0
        %6380 = vmatpush.msra.mxu0 0.0
        %6381 = vmatpush.msra.mxu0 0.0
        %6382 = vmatpush.msra.mxu0 0.0
        %6383 = vmatpush.msra.mxu0 0.0
        %6384 = vmatpush.msra.mxu0 0.0
        %6385 = vmatpush.msra.mxu0 0.0
        %6386 = vmatpush.msra.mxu0 0.0
        %6387 = vmatpush.msra.mxu0 0.0
        %6388 = vmatpush.msra.mxu0 0.0
        %6389 = vmatpush.msra.mxu0 0.0
        %6390 = vmatpush.msra.mxu0 0.0
        %6391 = vmatpush.msra.mxu0 0.0
        %6392 = vmatpush.msra.mxu0 0.0
        %6393 = vmatpush.msra.mxu0 0.0
        %6394 = vmatpush.msra.mxu0 0.0
        %v6395 = vand.u32 %v6300, 4294901760
        %6396 = vmatpush.msra.mxu0 %v6395
        %v6397 = vand.u32 %v6302, 4294901760
        %v6398 = vsub.f32 %v6302, %v6397
        %v6399 = vand.u32 %v6398, 4294901760
        %6400 = vmatmul.f32.gmra.mxu0 %v6399
        %v6401 = vpop.f32.mrf.mxu0
        %v6402 = vadd.f32 %v6378, %v6401
        %6403 = vdwg.mxu0
        %6404 = vmatpush.msra.mxu0 0.0
        %6405 = vmatpush.msra.mxu0 0.0
        %6406 = vmatpush.msra.mxu0 0.0
        %6407 = vmatpush.msra.mxu0 0.0
        %6408 = vmatpush.msra.mxu0 0.0
        %6409 = vmatpush.msra.mxu0 0.0
        %6410 = vmatpush.msra.mxu0 0.0
        %6411 = vmatpush.msra.mxu0 0.0
        %6412 = vmatpush.msra.mxu0 0.0
        %6413 = vmatpush.msra.mxu0 0.0
        %6414 = vmatpush.msra.mxu0 0.0
        %6415 = vmatpush.msra.mxu0 0.0
        %6416 = vmatpush.msra.mxu0 0.0
        %6417 = vmatpush.msra.mxu0 0.0
        %6418 = vmatpush.msra.mxu0 0.0
        %v6419 = vand.u32 %v6300, 4294901760
        %v6420 = vsub.f32 %v6300, %v6419
        %v6421 = vand.u32 %v6420, 4294901760
        %6422 = vmatpush.msra.mxu0 %v6421
        %v6423 = vand.u32 %v6302, 4294901760
        %6424 = vmatmul.f32.gmra.mxu0 %v6423
        %v6425 = vpop.f32.mrf.mxu0
        %v6426 = vadd.f32 %v6402, %v6425
        %6427 = vdwg.mxu0
        %6428 = vmatpush.msra.mxu0 0.0
        %6429 = vmatpush.msra.mxu0 0.0
        %6430 = vmatpush.msra.mxu0 0.0
        %6431 = vmatpush.msra.mxu0 0.0
        %6432 = vmatpush.msra.mxu0 0.0
        %6433 = vmatpush.msra.mxu0 0.0
        %6434 = vmatpush.msra.mxu0 0.0
        %6435 = vmatpush.msra.mxu0 0.0
        %6436 = vmatpush.msra.mxu0 0.0
        %6437 = vmatpush.msra.mxu0 0.0
        %6438 = vmatpush.msra.mxu0 0.0
        %6439 = vmatpush.msra.mxu0 0.0
        %6440 = vmatpush.msra.mxu0 0.0
        %6441 = vmatpush.msra.mxu0 0.0
        %6442 = vmatpush.msra.mxu0 0.0
        %v6443 = vand.u32 %v6300, 4294901760
        %6444 = vmatpush.msra.mxu0 %v6443
        %v6445 = vand.u32 %v6302, 4294901760
        %6446 = vmatmul.f32.gmra.mxu0 %v6445
        %v6447 = vpop.f32.mrf.mxu0
        %v6448 = vadd.f32 %v6426, %v6447
        %6449 = vdwg.mxu0
        %6450 = vst.msk [vmem:[#allocation2 + $0x16] sm:$0x1] %vm2863, %v6448
        %v6451 = vperm.slane %v2401, 7
        %v6452 = vmul.f32 %v2699, %v6451
        %v6453 = vsel %vm2702, %v6452, 0.0
        %6454 = vadd.xlane.f32.xlu0 %v6453
        %v6455 = vpop.xlane.xlu0 %6454
        %v6456 = vperm.slane %v2123, 7
        %v6457 = vmul.f32 %v2696, %v6456
        %v6458 = vmul.f32 %v6457, 1.442695
        %v6459 = vpow.pop %v6458
        %v6460 = vmul.f32 %v6459, %v6300
        %v6461 = vperm.slane %v2691, 7
        %v6462 = vmul.f32 %v6455, %v6461
        %v6463 = vadd.f32 %v6460, %v6462
        %v6464 = vrot.slane %v2683, 7
        %v6465 = vsel %vm2702, %v6464, 0
        %6467 = vmatpush.msra.mxu0 0.0
        %6468 = vmatpush.msra.mxu0 0.0
        %6469 = vmatpush.msra.mxu0 0.0
        %6470 = vmatpush.msra.mxu0 0.0
        %6471 = vmatpush.msra.mxu0 0.0
        %6472 = vmatpush.msra.mxu0 0.0
        %6473 = vmatpush.msra.mxu0 0.0
        %6474 = vmatpush.msra.mxu0 0.0
        %6475 = vmatpush.msra.mxu0 0.0
        %6476 = vmatpush.msra.mxu0 0.0
        %6477 = vmatpush.msra.mxu0 0.0
        %6478 = vmatpush.msra.mxu0 0.0
        %6479 = vmatpush.msra.mxu0 0.0
        %6480 = vmatpush.msra.mxu0 0.0
        %6481 = vmatpush.msra.mxu0 0.0
        %v6482 = vand.u32 %v6463, 4294901760
        %6483 = vmatpush.msra.mxu0 %v6482
        %v6484 = vand.u32 %v6465, 4294901760
        %v6485 = vsub.f32 %v6465, %v6484
        %v6486 = vand.u32 %v6485, 4294901760
        %v6487 = vsub.f32 %v6485, %v6486
        %v6488 = vand.u32 %v6487, 4294901760
        %6489 = vmatmul.f32.gmra.mxu0 %v6488
        %v6490 = vpop.f32.mrf.mxu0
        %v6491 = vadd.f32 0.0, %v6490
        %6492 = vdwg.mxu0
        %6493 = vmatpush.msra.mxu0 0.0
        %6494 = vmatpush.msra.mxu0 0.0
        %6495 = vmatpush.msra.mxu0 0.0
        %6496 = vmatpush.msra.mxu0 0.0
        %6497 = vmatpush.msra.mxu0 0.0
        %6498 = vmatpush.msra.mxu0 0.0
        %6499 = vmatpush.msra.mxu0 0.0
        %6500 = vmatpush.msra.mxu0 0.0
        %6501 = vmatpush.msra.mxu0 0.0
        %6502 = vmatpush.msra.mxu0 0.0
        %6503 = vmatpush.msra.mxu0 0.0
        %6504 = vmatpush.msra.mxu0 0.0
        %6505 = vmatpush.msra.mxu0 0.0
        %6506 = vmatpush.msra.mxu0 0.0
        %6507 = vmatpush.msra.mxu0 0.0
        %v6508 = vand.u32 %v6463, 4294901760
        %v6509 = vsub.f32 %v6463, %v6508
        %v6510 = vand.u32 %v6509, 4294901760
        %v6511 = vsub.f32 %v6509, %v6510
        %v6512 = vand.u32 %v6511, 4294901760
        %6513 = vmatpush.msra.mxu0 %v6512
        %v6514 = vand.u32 %v6465, 4294901760
        %6515 = vmatmul.f32.gmra.mxu0 %v6514
        %v6516 = vpop.f32.mrf.mxu0
        %v6517 = vadd.f32 %v6491, %v6516
        %6518 = vdwg.mxu0
        %6519 = vmatpush.msra.mxu0 0.0
        %6520 = vmatpush.msra.mxu0 0.0
        %6521 = vmatpush.msra.mxu0 0.0
        %6522 = vmatpush.msra.mxu0 0.0
        %6523 = vmatpush.msra.mxu0 0.0
        %6524 = vmatpush.msra.mxu0 0.0
        %6525 = vmatpush.msra.mxu0 0.0
        %6526 = vmatpush.msra.mxu0 0.0
        %6527 = vmatpush.msra.mxu0 0.0
        %6528 = vmatpush.msra.mxu0 0.0
        %6529 = vmatpush.msra.mxu0 0.0
        %6530 = vmatpush.msra.mxu0 0.0
        %6531 = vmatpush.msra.mxu0 0.0
        %6532 = vmatpush.msra.mxu0 0.0
        %6533 = vmatpush.msra.mxu0 0.0
        %v6534 = vand.u32 %v6463, 4294901760
        %v6535 = vsub.f32 %v6463, %v6534
        %6536 = vmatpush.msra.mxu0 %v6535
        %v6537 = vand.u32 %v6465, 4294901760
        %v6538 = vsub.f32 %v6465, %v6537
        %6539 = vmatmul.f32.gmra.mxu0 %v6538
        %v6540 = vpop.f32.mrf.mxu0
        %v6541 = vadd.f32 %v6517, %v6540
        %6542 = vdwg.mxu0
        %6543 = vmatpush.msra.mxu0 0.0
        %6544 = vmatpush.msra.mxu0 0.0
        %6545 = vmatpush.msra.mxu0 0.0
        %6546 = vmatpush.msra.mxu0 0.0
        %6547 = vmatpush.msra.mxu0 0.0
        %6548 = vmatpush.msra.mxu0 0.0
        %6549 = vmatpush.msra.mxu0 0.0
        %6550 = vmatpush.msra.mxu0 0.0
        %6551 = vmatpush.msra.mxu0 0.0
        %6552 = vmatpush.msra.mxu0 0.0
        %6553 = vmatpush.msra.mxu0 0.0
        %6554 = vmatpush.msra.mxu0 0.0
        %6555 = vmatpush.msra.mxu0 0.0
        %6556 = vmatpush.msra.mxu0 0.0
        %6557 = vmatpush.msra.mxu0 0.0
        %v6558 = vand.u32 %v6463, 4294901760
        %6559 = vmatpush.msra.mxu0 %v6558
        %v6560 = vand.u32 %v6465, 4294901760
        %v6561 = vsub.f32 %v6465, %v6560
        %v6562 = vand.u32 %v6561, 4294901760
        %6563 = vmatmul.f32.gmra.mxu0 %v6562
        %v6564 = vpop.f32.mrf.mxu0
        %v6565 = vadd.f32 %v6541, %v6564
        %6566 = vdwg.mxu0
        %6567 = vmatpush.msra.mxu0 0.0
        %6568 = vmatpush.msra.mxu0 0.0
        %6569 = vmatpush.msra.mxu0 0.0
        %6570 = vmatpush.msra.mxu0 0.0
        %6571 = vmatpush.msra.mxu0 0.0
        %6572 = vmatpush.msra.mxu0 0.0
        %6573 = vmatpush.msra.mxu0 0.0
        %6574 = vmatpush.msra.mxu0 0.0
        %6575 = vmatpush.msra.mxu0 0.0
        %6576 = vmatpush.msra.mxu0 0.0
        %6577 = vmatpush.msra.mxu0 0.0
        %6578 = vmatpush.msra.mxu0 0.0
        %6579 = vmatpush.msra.mxu0 0.0
        %6580 = vmatpush.msra.mxu0 0.0
        %6581 = vmatpush.msra.mxu0 0.0
        %v6582 = vand.u32 %v6463, 4294901760
        %v6583 = vsub.f32 %v6463, %v6582
        %v6584 = vand.u32 %v6583, 4294901760
        %6585 = vmatpush.msra.mxu0 %v6584
        %v6586 = vand.u32 %v6465, 4294901760
        %6587 = vmatmul.f32.gmra.mxu0 %v6586
        %v6588 = vpop.f32.mrf.mxu0
        %v6589 = vadd.f32 %v6565, %v6588
        %6590 = vdwg.mxu0
        %6591 = vmatpush.msra.mxu0 0.0
        %6592 = vmatpush.msra.mxu0 0.0
        %6593 = vmatpush.msra.mxu0 0.0
        %6594 = vmatpush.msra.mxu0 0.0
        %6595 = vmatpush.msra.mxu0 0.0
        %6596 = vmatpush.msra.mxu0 0.0
        %6597 = vmatpush.msra.mxu0 0.0
        %6598 = vmatpush.msra.mxu0 0.0
        %6599 = vmatpush.msra.mxu0 0.0
        %6600 = vmatpush.msra.mxu0 0.0
        %6601 = vmatpush.msra.mxu0 0.0
        %6602 = vmatpush.msra.mxu0 0.0
        %6603 = vmatpush.msra.mxu0 0.0
        %6604 = vmatpush.msra.mxu0 0.0
        %6605 = vmatpush.msra.mxu0 0.0
        %v6606 = vand.u32 %v6463, 4294901760
        %6607 = vmatpush.msra.mxu0 %v6606
        %v6608 = vand.u32 %v6465, 4294901760
        %6609 = vmatmul.f32.gmra.mxu0 %v6608
        %v6610 = vpop.f32.mrf.mxu0
        %v6611 = vadd.f32 %v6589, %v6610
        %6612 = vdwg.mxu0
        %6613 = vst.msk [vmem:[#allocation2 + $0x17] sm:$0x1] %vm2863, %v6611
        %v6614 = vperm.slane %v2405, 0
        %v6615 = vmul.f32 %v2699, %v6614
        %v6616 = vsel %vm2702, %v6615, 0.0
        %6617 = vadd.xlane.f32.xlu0 %v6616
        %v6618 = vpop.xlane.xlu0 %6617
        %v6619 = vperm.slane %v2124, 0
        %v6620 = vmul.f32 %v2696, %v6619
        %v6621 = vmul.f32 %v6620, 1.442695
        %v6622 = vpow.pop %v6621
        %v6623 = vmul.f32 %v6622, %v6463
        %v6624 = vperm.slane %v2692, 0
        %v6625 = vmul.f32 %v6618, %v6624
        %v6626 = vadd.f32 %v6623, %v6625
        %v6628 = vsel %vm2702, %v2687, 0
        %6630 = vmatpush.msra.mxu0 0.0
        %6631 = vmatpush.msra.mxu0 0.0
        %6632 = vmatpush.msra.mxu0 0.0
        %6633 = vmatpush.msra.mxu0 0.0
        %6634 = vmatpush.msra.mxu0 0.0
        %6635 = vmatpush.msra.mxu0 0.0
        %6636 = vmatpush.msra.mxu0 0.0
        %6637 = vmatpush.msra.mxu0 0.0
        %6638 = vmatpush.msra.mxu0 0.0
        %6639 = vmatpush.msra.mxu0 0.0
        %6640 = vmatpush.msra.mxu0 0.0
        %6641 = vmatpush.msra.mxu0 0.0
        %6642 = vmatpush.msra.mxu0 0.0
        %6643 = vmatpush.msra.mxu0 0.0
        %6644 = vmatpush.msra.mxu0 0.0
        %v6645 = vand.u32 %v6626, 4294901760
        %6646 = vmatpush.msra.mxu0 %v6645
        %v6647 = vand.u32 %v6628, 4294901760
        %v6648 = vsub.f32 %v6628, %v6647
        %v6649 = vand.u32 %v6648, 4294901760
        %v6650 = vsub.f32 %v6648, %v6649
        %v6651 = vand.u32 %v6650, 4294901760
        %6652 = vmatmul.f32.gmra.mxu0 %v6651
        %v6653 = vpop.f32.mrf.mxu0
        %v6654 = vadd.f32 0.0, %v6653
        %6655 = vdwg.mxu0
        %6656 = vmatpush.msra.mxu0 0.0
        %6657 = vmatpush.msra.mxu0 0.0
        %6658 = vmatpush.msra.mxu0 0.0
        %6659 = vmatpush.msra.mxu0 0.0
        %6660 = vmatpush.msra.mxu0 0.0
        %6661 = vmatpush.msra.mxu0 0.0
        %6662 = vmatpush.msra.mxu0 0.0
        %6663 = vmatpush.msra.mxu0 0.0
        %6664 = vmatpush.msra.mxu0 0.0
        %6665 = vmatpush.msra.mxu0 0.0
        %6666 = vmatpush.msra.mxu0 0.0
        %6667 = vmatpush.msra.mxu0 0.0
        %6668 = vmatpush.msra.mxu0 0.0
        %6669 = vmatpush.msra.mxu0 0.0
        %6670 = vmatpush.msra.mxu0 0.0
        %v6671 = vand.u32 %v6626, 4294901760
        %v6672 = vsub.f32 %v6626, %v6671
        %v6673 = vand.u32 %v6672, 4294901760
        %v6674 = vsub.f32 %v6672, %v6673
        %v6675 = vand.u32 %v6674, 4294901760
        %6676 = vmatpush.msra.mxu0 %v6675
        %v6677 = vand.u32 %v6628, 4294901760
        %6678 = vmatmul.f32.gmra.mxu0 %v6677
        %v6679 = vpop.f32.mrf.mxu0
        %v6680 = vadd.f32 %v6654, %v6679
        %6681 = vdwg.mxu0
        %6682 = vmatpush.msra.mxu0 0.0
        %6683 = vmatpush.msra.mxu0 0.0
        %6684 = vmatpush.msra.mxu0 0.0
        %6685 = vmatpush.msra.mxu0 0.0
        %6686 = vmatpush.msra.mxu0 0.0
        %6687 = vmatpush.msra.mxu0 0.0
        %6688 = vmatpush.msra.mxu0 0.0
        %6689 = vmatpush.msra.mxu0 0.0
        %6690 = vmatpush.msra.mxu0 0.0
        %6691 = vmatpush.msra.mxu0 0.0
        %6692 = vmatpush.msra.mxu0 0.0
        %6693 = vmatpush.msra.mxu0 0.0
        %6694 = vmatpush.msra.mxu0 0.0
        %6695 = vmatpush.msra.mxu0 0.0
        %6696 = vmatpush.msra.mxu0 0.0
        %v6697 = vand.u32 %v6626, 4294901760
        %v6698 = vsub.f32 %v6626, %v6697
        %6699 = vmatpush.msra.mxu0 %v6698
        %v6700 = vand.u32 %v6628, 4294901760
        %v6701 = vsub.f32 %v6628, %v6700
        %6702 = vmatmul.f32.gmra.mxu0 %v6701
        %v6703 = vpop.f32.mrf.mxu0
        %v6704 = vadd.f32 %v6680, %v6703
        %6705 = vdwg.mxu0
        %6706 = vmatpush.msra.mxu0 0.0
        %6707 = vmatpush.msra.mxu0 0.0
        %6708 = vmatpush.msra.mxu0 0.0
        %6709 = vmatpush.msra.mxu0 0.0
        %6710 = vmatpush.msra.mxu0 0.0
        %6711 = vmatpush.msra.mxu0 0.0
        %6712 = vmatpush.msra.mxu0 0.0
        %6713 = vmatpush.msra.mxu0 0.0
        %6714 = vmatpush.msra.mxu0 0.0
        %6715 = vmatpush.msra.mxu0 0.0
        %6716 = vmatpush.msra.mxu0 0.0
        %6717 = vmatpush.msra.mxu0 0.0
        %6718 = vmatpush.msra.mxu0 0.0
        %6719 = vmatpush.msra.mxu0 0.0
        %6720 = vmatpush.msra.mxu0 0.0
        %v6721 = vand.u32 %v6626, 4294901760
        %6722 = vmatpush.msra.mxu0 %v6721
        %v6723 = vand.u32 %v6628, 4294901760
        %v6724 = vsub.f32 %v6628, %v6723
        %v6725 = vand.u32 %v6724, 4294901760
        %6726 = vmatmul.f32.gmra.mxu0 %v6725
        %v6727 = vpop.f32.mrf.mxu0
        %v6728 = vadd.f32 %v6704, %v6727
        %6729 = vdwg.mxu0
        %6730 = vmatpush.msra.mxu0 0.0
        %6731 = vmatpush.msra.mxu0 0.0
        %6732 = vmatpush.msra.mxu0 0.0
        %6733 = vmatpush.msra.mxu0 0.0
        %6734 = vmatpush.msra.mxu0 0.0
        %6735 = vmatpush.msra.mxu0 0.0
        %6736 = vmatpush.msra.mxu0 0.0
        %6737 = vmatpush.msra.mxu0 0.0
        %6738 = vmatpush.msra.mxu0 0.0
        %6739 = vmatpush.msra.mxu0 0.0
        %6740 = vmatpush.msra.mxu0 0.0
        %6741 = vmatpush.msra.mxu0 0.0
        %6742 = vmatpush.msra.mxu0 0.0
        %6743 = vmatpush.msra.mxu0 0.0
        %6744 = vmatpush.msra.mxu0 0.0
        %v6745 = vand.u32 %v6626, 4294901760
        %v6746 = vsub.f32 %v6626, %v6745
        %v6747 = vand.u32 %v6746, 4294901760
        %6748 = vmatpush.msra.mxu0 %v6747
        %v6749 = vand.u32 %v6628, 4294901760
        %6750 = vmatmul.f32.gmra.mxu0 %v6749
        %v6751 = vpop.f32.mrf.mxu0
        %v6752 = vadd.f32 %v6728, %v6751
        %6753 = vdwg.mxu0
        %6754 = vmatpush.msra.mxu0 0.0
        %6755 = vmatpush.msra.mxu0 0.0
        %6756 = vmatpush.msra.mxu0 0.0
        %6757 = vmatpush.msra.mxu0 0.0
        %6758 = vmatpush.msra.mxu0 0.0
        %6759 = vmatpush.msra.mxu0 0.0
        %6760 = vmatpush.msra.mxu0 0.0
        %6761 = vmatpush.msra.mxu0 0.0
        %6762 = vmatpush.msra.mxu0 0.0
        %6763 = vmatpush.msra.mxu0 0.0
        %6764 = vmatpush.msra.mxu0 0.0
        %6765 = vmatpush.msra.mxu0 0.0
        %6766 = vmatpush.msra.mxu0 0.0
        %6767 = vmatpush.msra.mxu0 0.0
        %6768 = vmatpush.msra.mxu0 0.0
        %v6769 = vand.u32 %v6626, 4294901760
        %6770 = vmatpush.msra.mxu0 %v6769
        %v6771 = vand.u32 %v6628, 4294901760
        %6772 = vmatmul.f32.gmra.mxu0 %v6771
        %v6773 = vpop.f32.mrf.mxu0
        %v6774 = vadd.f32 %v6752, %v6773
        %6775 = vdwg.mxu0
        %6776 = vst.msk [vmem:[#allocation2 + $0x18] sm:$0x1] %vm2863, %v6774
        %v6777 = vperm.slane %v2405, 1
        %v6778 = vmul.f32 %v2699, %v6777
        %v6779 = vsel %vm2702, %v6778, 0.0
        %6780 = vadd.xlane.f32.xlu0 %v6779
        %v6781 = vpop.xlane.xlu0 %6780
        %v6782 = vperm.slane %v2124, 1
        %v6783 = vmul.f32 %v2696, %v6782
        %v6784 = vmul.f32 %v6783, 1.442695
        %v6785 = vpow.pop %v6784
        %v6786 = vmul.f32 %v6785, %v6626
        %v6787 = vperm.slane %v2692, 1
        %v6788 = vmul.f32 %v6781, %v6787
        %v6789 = vadd.f32 %v6786, %v6788
        %v6790 = vrot.slane %v2687, 1
        %v6791 = vsel %vm2702, %v6790, 0
        %6793 = vmatpush.msra.mxu0 0.0
        %6794 = vmatpush.msra.mxu0 0.0
        %6795 = vmatpush.msra.mxu0 0.0
        %6796 = vmatpush.msra.mxu0 0.0
        %6797 = vmatpush.msra.mxu0 0.0
        %6798 = vmatpush.msra.mxu0 0.0
        %6799 = vmatpush.msra.mxu0 0.0
        %6800 = vmatpush.msra.mxu0 0.0
        %6801 = vmatpush.msra.mxu0 0.0
        %6802 = vmatpush.msra.mxu0 0.0
        %6803 = vmatpush.msra.mxu0 0.0
        %6804 = vmatpush.msra.mxu0 0.0
        %6805 = vmatpush.msra.mxu0 0.0
        %6806 = vmatpush.msra.mxu0 0.0
        %6807 = vmatpush.msra.mxu0 0.0
        %v6808 = vand.u32 %v6789, 4294901760
        %6809 = vmatpush.msra.mxu0 %v6808
        %v6810 = vand.u32 %v6791, 4294901760
        %v6811 = vsub.f32 %v6791, %v6810
        %v6812 = vand.u32 %v6811, 4294901760
        %v6813 = vsub.f32 %v6811, %v6812
        %v6814 = vand.u32 %v6813, 4294901760
        %6815 = vmatmul.f32.gmra.mxu0 %v6814
        %v6816 = vpop.f32.mrf.mxu0
        %v6817 = vadd.f32 0.0, %v6816
        %6818 = vdwg.mxu0
        %6819 = vmatpush.msra.mxu0 0.0
        %6820 = vmatpush.msra.mxu0 0.0
        %6821 = vmatpush.msra.mxu0 0.0
        %6822 = vmatpush.msra.mxu0 0.0
        %6823 = vmatpush.msra.mxu0 0.0
        %6824 = vmatpush.msra.mxu0 0.0
        %6825 = vmatpush.msra.mxu0 0.0
        %6826 = vmatpush.msra.mxu0 0.0
        %6827 = vmatpush.msra.mxu0 0.0
        %6828 = vmatpush.msra.mxu0 0.0
        %6829 = vmatpush.msra.mxu0 0.0
        %6830 = vmatpush.msra.mxu0 0.0
        %6831 = vmatpush.msra.mxu0 0.0
        %6832 = vmatpush.msra.mxu0 0.0
        %6833 = vmatpush.msra.mxu0 0.0
        %v6834 = vand.u32 %v6789, 4294901760
        %v6835 = vsub.f32 %v6789, %v6834
        %v6836 = vand.u32 %v6835, 4294901760
        %v6837 = vsub.f32 %v6835, %v6836
        %v6838 = vand.u32 %v6837, 4294901760
        %6839 = vmatpush.msra.mxu0 %v6838
        %v6840 = vand.u32 %v6791, 4294901760
        %6841 = vmatmul.f32.gmra.mxu0 %v6840
        %v6842 = vpop.f32.mrf.mxu0
        %v6843 = vadd.f32 %v6817, %v6842
        %6844 = vdwg.mxu0
        %6845 = vmatpush.msra.mxu0 0.0
        %6846 = vmatpush.msra.mxu0 0.0
        %6847 = vmatpush.msra.mxu0 0.0
        %6848 = vmatpush.msra.mxu0 0.0
        %6849 = vmatpush.msra.mxu0 0.0
        %6850 = vmatpush.msra.mxu0 0.0
        %6851 = vmatpush.msra.mxu0 0.0
        %6852 = vmatpush.msra.mxu0 0.0
        %6853 = vmatpush.msra.mxu0 0.0
        %6854 = vmatpush.msra.mxu0 0.0
        %6855 = vmatpush.msra.mxu0 0.0
        %6856 = vmatpush.msra.mxu0 0.0
        %6857 = vmatpush.msra.mxu0 0.0
        %6858 = vmatpush.msra.mxu0 0.0
        %6859 = vmatpush.msra.mxu0 0.0
        %v6860 = vand.u32 %v6789, 4294901760
        %v6861 = vsub.f32 %v6789, %v6860
        %6862 = vmatpush.msra.mxu0 %v6861
        %v6863 = vand.u32 %v6791, 4294901760
        %v6864 = vsub.f32 %v6791, %v6863
        %6865 = vmatmul.f32.gmra.mxu0 %v6864
        %v6866 = vpop.f32.mrf.mxu0
        %v6867 = vadd.f32 %v6843, %v6866
        %6868 = vdwg.mxu0
        %6869 = vmatpush.msra.mxu0 0.0
        %6870 = vmatpush.msra.mxu0 0.0
        %6871 = vmatpush.msra.mxu0 0.0
        %6872 = vmatpush.msra.mxu0 0.0
        %6873 = vmatpush.msra.mxu0 0.0
        %6874 = vmatpush.msra.mxu0 0.0
        %6875 = vmatpush.msra.mxu0 0.0
        %6876 = vmatpush.msra.mxu0 0.0
        %6877 = vmatpush.msra.mxu0 0.0
        %6878 = vmatpush.msra.mxu0 0.0
        %6879 = vmatpush.msra.mxu0 0.0
        %6880 = vmatpush.msra.mxu0 0.0
        %6881 = vmatpush.msra.mxu0 0.0
        %6882 = vmatpush.msra.mxu0 0.0
        %6883 = vmatpush.msra.mxu0 0.0
        %v6884 = vand.u32 %v6789, 4294901760
        %6885 = vmatpush.msra.mxu0 %v6884
        %v6886 = vand.u32 %v6791, 4294901760
        %v6887 = vsub.f32 %v6791, %v6886
        %v6888 = vand.u32 %v6887, 4294901760
        %6889 = vmatmul.f32.gmra.mxu0 %v6888
        %v6890 = vpop.f32.mrf.mxu0
        %v6891 = vadd.f32 %v6867, %v6890
        %6892 = vdwg.mxu0
        %6893 = vmatpush.msra.mxu0 0.0
        %6894 = vmatpush.msra.mxu0 0.0
        %6895 = vmatpush.msra.mxu0 0.0
        %6896 = vmatpush.msra.mxu0 0.0
        %6897 = vmatpush.msra.mxu0 0.0
        %6898 = vmatpush.msra.mxu0 0.0
        %6899 = vmatpush.msra.mxu0 0.0
        %6900 = vmatpush.msra.mxu0 0.0
        %6901 = vmatpush.msra.mxu0 0.0
        %6902 = vmatpush.msra.mxu0 0.0
        %6903 = vmatpush.msra.mxu0 0.0
        %6904 = vmatpush.msra.mxu0 0.0
        %6905 = vmatpush.msra.mxu0 0.0
        %6906 = vmatpush.msra.mxu0 0.0
        %6907 = vmatpush.msra.mxu0 0.0
        %v6908 = vand.u32 %v6789, 4294901760
        %v6909 = vsub.f32 %v6789, %v6908
        %v6910 = vand.u32 %v6909, 4294901760
        %6911 = vmatpush.msra.mxu0 %v6910
        %v6912 = vand.u32 %v6791, 4294901760
        %6913 = vmatmul.f32.gmra.mxu0 %v6912
        %v6914 = vpop.f32.mrf.mxu0
        %v6915 = vadd.f32 %v6891, %v6914
        %6916 = vdwg.mxu0
        %6917 = vmatpush.msra.mxu0 0.0
        %6918 = vmatpush.msra.mxu0 0.0
        %6919 = vmatpush.msra.mxu0 0.0
        %6920 = vmatpush.msra.mxu0 0.0
        %6921 = vmatpush.msra.mxu0 0.0
        %6922 = vmatpush.msra.mxu0 0.0
        %6923 = vmatpush.msra.mxu0 0.0
        %6924 = vmatpush.msra.mxu0 0.0
        %6925 = vmatpush.msra.mxu0 0.0
        %6926 = vmatpush.msra.mxu0 0.0
        %6927 = vmatpush.msra.mxu0 0.0
        %6928 = vmatpush.msra.mxu0 0.0
        %6929 = vmatpush.msra.mxu0 0.0
        %6930 = vmatpush.msra.mxu0 0.0
        %6931 = vmatpush.msra.mxu0 0.0
        %v6932 = vand.u32 %v6789, 4294901760
        %6933 = vmatpush.msra.mxu0 %v6932
        %v6934 = vand.u32 %v6791, 4294901760
        %6935 = vmatmul.f32.gmra.mxu0 %v6934
        %v6936 = vpop.f32.mrf.mxu0
        %v6937 = vadd.f32 %v6915, %v6936
        %6938 = vdwg.mxu0
        %6939 = vst.msk [vmem:[#allocation2 + $0x19] sm:$0x1] %vm2863, %v6937
        %v6940 = vperm.slane %v2405, 2
        %v6941 = vmul.f32 %v2699, %v6940
        %v6942 = vsel %vm2702, %v6941, 0.0
        %6943 = vadd.xlane.f32.xlu0 %v6942
        %v6944 = vpop.xlane.xlu0 %6943
        %v6945 = vperm.slane %v2124, 2
        %v6946 = vmul.f32 %v2696, %v6945
        %v6947 = vmul.f32 %v6946, 1.442695
        %v6948 = vpow.pop %v6947
        %v6949 = vmul.f32 %v6948, %v6789
        %v6950 = vperm.slane %v2692, 2
        %v6951 = vmul.f32 %v6944, %v6950
        %v6952 = vadd.f32 %v6949, %v6951
        %v6953 = vrot.slane %v2687, 2
        %v6954 = vsel %vm2702, %v6953, 0
        %6956 = vmatpush.msra.mxu0 0.0
        %6957 = vmatpush.msra.mxu0 0.0
        %6958 = vmatpush.msra.mxu0 0.0
        %6959 = vmatpush.msra.mxu0 0.0
        %6960 = vmatpush.msra.mxu0 0.0
        %6961 = vmatpush.msra.mxu0 0.0
        %6962 = vmatpush.msra.mxu0 0.0
        %6963 = vmatpush.msra.mxu0 0.0
        %6964 = vmatpush.msra.mxu0 0.0
        %6965 = vmatpush.msra.mxu0 0.0
        %6966 = vmatpush.msra.mxu0 0.0
        %6967 = vmatpush.msra.mxu0 0.0
        %6968 = vmatpush.msra.mxu0 0.0
        %6969 = vmatpush.msra.mxu0 0.0
        %6970 = vmatpush.msra.mxu0 0.0
        %v6971 = vand.u32 %v6952, 4294901760
        %6972 = vmatpush.msra.mxu0 %v6971
        %v6973 = vand.u32 %v6954, 4294901760
        %v6974 = vsub.f32 %v6954, %v6973
        %v6975 = vand.u32 %v6974, 4294901760
        %v6976 = vsub.f32 %v6974, %v6975
        %v6977 = vand.u32 %v6976, 4294901760
        %6978 = vmatmul.f32.gmra.mxu0 %v6977
        %v6979 = vpop.f32.mrf.mxu0
        %v6980 = vadd.f32 0.0, %v6979
        %6981 = vdwg.mxu0
        %6982 = vmatpush.msra.mxu0 0.0
        %6983 = vmatpush.msra.mxu0 0.0
        %6984 = vmatpush.msra.mxu0 0.0
        %6985 = vmatpush.msra.mxu0 0.0
        %6986 = vmatpush.msra.mxu0 0.0
        %6987 = vmatpush.msra.mxu0 0.0
        %6988 = vmatpush.msra.mxu0 0.0
        %6989 = vmatpush.msra.mxu0 0.0
        %6990 = vmatpush.msra.mxu0 0.0
        %6991 = vmatpush.msra.mxu0 0.0
        %6992 = vmatpush.msra.mxu0 0.0
        %6993 = vmatpush.msra.mxu0 0.0
        %6994 = vmatpush.msra.mxu0 0.0
        %6995 = vmatpush.msra.mxu0 0.0
        %6996 = vmatpush.msra.mxu0 0.0
        %v6997 = vand.u32 %v6952, 4294901760
        %v6998 = vsub.f32 %v6952, %v6997
        %v6999 = vand.u32 %v6998, 4294901760
        %v7000 = vsub.f32 %v6998, %v6999
        %v7001 = vand.u32 %v7000, 4294901760
        %7002 = vmatpush.msra.mxu0 %v7001
        %v7003 = vand.u32 %v6954, 4294901760
        %7004 = vmatmul.f32.gmra.mxu0 %v7003
        %v7005 = vpop.f32.mrf.mxu0
        %v7006 = vadd.f32 %v6980, %v7005
        %7007 = vdwg.mxu0
        %7008 = vmatpush.msra.mxu0 0.0
        %7009 = vmatpush.msra.mxu0 0.0
        %7010 = vmatpush.msra.mxu0 0.0
        %7011 = vmatpush.msra.mxu0 0.0
        %7012 = vmatpush.msra.mxu0 0.0
        %7013 = vmatpush.msra.mxu0 0.0
        %7014 = vmatpush.msra.mxu0 0.0
        %7015 = vmatpush.msra.mxu0 0.0
        %7016 = vmatpush.msra.mxu0 0.0
        %7017 = vmatpush.msra.mxu0 0.0
        %7018 = vmatpush.msra.mxu0 0.0
        %7019 = vmatpush.msra.mxu0 0.0
        %7020 = vmatpush.msra.mxu0 0.0
        %7021 = vmatpush.msra.mxu0 0.0
        %7022 = vmatpush.msra.mxu0 0.0
        %v7023 = vand.u32 %v6952, 4294901760
        %v7024 = vsub.f32 %v6952, %v7023
        %7025 = vmatpush.msra.mxu0 %v7024
        %v7026 = vand.u32 %v6954, 4294901760
        %v7027 = vsub.f32 %v6954, %v7026
        %7028 = vmatmul.f32.gmra.mxu0 %v7027
        %v7029 = vpop.f32.mrf.mxu0
        %v7030 = vadd.f32 %v7006, %v7029
        %7031 = vdwg.mxu0
        %7032 = vmatpush.msra.mxu0 0.0
        %7033 = vmatpush.msra.mxu0 0.0
        %7034 = vmatpush.msra.mxu0 0.0
        %7035 = vmatpush.msra.mxu0 0.0
        %7036 = vmatpush.msra.mxu0 0.0
        %7037 = vmatpush.msra.mxu0 0.0
        %7038 = vmatpush.msra.mxu0 0.0
        %7039 = vmatpush.msra.mxu0 0.0
        %7040 = vmatpush.msra.mxu0 0.0
        %7041 = vmatpush.msra.mxu0 0.0
        %7042 = vmatpush.msra.mxu0 0.0
        %7043 = vmatpush.msra.mxu0 0.0
        %7044 = vmatpush.msra.mxu0 0.0
        %7045 = vmatpush.msra.mxu0 0.0
        %7046 = vmatpush.msra.mxu0 0.0
        %v7047 = vand.u32 %v6952, 4294901760
        %7048 = vmatpush.msra.mxu0 %v7047
        %v7049 = vand.u32 %v6954, 4294901760
        %v7050 = vsub.f32 %v6954, %v7049
        %v7051 = vand.u32 %v7050, 4294901760
        %7052 = vmatmul.f32.gmra.mxu0 %v7051
        %v7053 = vpop.f32.mrf.mxu0
        %v7054 = vadd.f32 %v7030, %v7053
        %7055 = vdwg.mxu0
        %7056 = vmatpush.msra.mxu0 0.0
        %7057 = vmatpush.msra.mxu0 0.0
        %7058 = vmatpush.msra.mxu0 0.0
        %7059 = vmatpush.msra.mxu0 0.0
        %7060 = vmatpush.msra.mxu0 0.0
        %7061 = vmatpush.msra.mxu0 0.0
        %7062 = vmatpush.msra.mxu0 0.0
        %7063 = vmatpush.msra.mxu0 0.0
        %7064 = vmatpush.msra.mxu0 0.0
        %7065 = vmatpush.msra.mxu0 0.0
        %7066 = vmatpush.msra.mxu0 0.0
        %7067 = vmatpush.msra.mxu0 0.0
        %7068 = vmatpush.msra.mxu0 0.0
        %7069 = vmatpush.msra.mxu0 0.0
        %7070 = vmatpush.msra.mxu0 0.0
        %v7071 = vand.u32 %v6952, 4294901760
        %v7072 = vsub.f32 %v6952, %v7071
        %v7073 = vand.u32 %v7072, 4294901760
        %7074 = vmatpush.msra.mxu0 %v7073
        %v7075 = vand.u32 %v6954, 4294901760
        %7076 = vmatmul.f32.gmra.mxu0 %v7075
        %v7077 = vpop.f32.mrf.mxu0
        %v7078 = vadd.f32 %v7054, %v7077
        %7079 = vdwg.mxu0
        %7080 = vmatpush.msra.mxu0 0.0
        %7081 = vmatpush.msra.mxu0 0.0
        %7082 = vmatpush.msra.mxu0 0.0
        %7083 = vmatpush.msra.mxu0 0.0
        %7084 = vmatpush.msra.mxu0 0.0
        %7085 = vmatpush.msra.mxu0 0.0
        %7086 = vmatpush.msra.mxu0 0.0
        %7087 = vmatpush.msra.mxu0 0.0
        %7088 = vmatpush.msra.mxu0 0.0
        %7089 = vmatpush.msra.mxu0 0.0
        %7090 = vmatpush.msra.mxu0 0.0
        %7091 = vmatpush.msra.mxu0 0.0
        %7092 = vmatpush.msra.mxu0 0.0
        %7093 = vmatpush.msra.mxu0 0.0
        %7094 = vmatpush.msra.mxu0 0.0
        %v7095 = vand.u32 %v6952, 4294901760
        %7096 = vmatpush.msra.mxu0 %v7095
        %v7097 = vand.u32 %v6954, 4294901760
        %7098 = vmatmul.f32.gmra.mxu0 %v7097
        %v7099 = vpop.f32.mrf.mxu0
        %v7100 = vadd.f32 %v7078, %v7099
        %7101 = vdwg.mxu0
        %7102 = vst.msk [vmem:[#allocation2 + $0x1a] sm:$0x1] %vm2863, %v7100
        %v7103 = vperm.slane %v2405, 3
        %v7104 = vmul.f32 %v2699, %v7103
        %v7105 = vsel %vm2702, %v7104, 0.0
        %7106 = vadd.xlane.f32.xlu0 %v7105
        %v7107 = vpop.xlane.xlu0 %7106
        %v7108 = vperm.slane %v2124, 3
        %v7109 = vmul.f32 %v2696, %v7108
        %v7110 = vmul.f32 %v7109, 1.442695
        %v7111 = vpow.pop %v7110
        %v7112 = vmul.f32 %v7111, %v6952
        %v7113 = vperm.slane %v2692, 3
        %v7114 = vmul.f32 %v7107, %v7113
        %v7115 = vadd.f32 %v7112, %v7114
        %v7116 = vrot.slane %v2687, 3
        %v7117 = vsel %vm2702, %v7116, 0
        %7119 = vmatpush.msra.mxu0 0.0
        %7120 = vmatpush.msra.mxu0 0.0
        %7121 = vmatpush.msra.mxu0 0.0
        %7122 = vmatpush.msra.mxu0 0.0
        %7123 = vmatpush.msra.mxu0 0.0
        %7124 = vmatpush.msra.mxu0 0.0
        %7125 = vmatpush.msra.mxu0 0.0
        %7126 = vmatpush.msra.mxu0 0.0
        %7127 = vmatpush.msra.mxu0 0.0
        %7128 = vmatpush.msra.mxu0 0.0
        %7129 = vmatpush.msra.mxu0 0.0
        %7130 = vmatpush.msra.mxu0 0.0
        %7131 = vmatpush.msra.mxu0 0.0
        %7132 = vmatpush.msra.mxu0 0.0
        %7133 = vmatpush.msra.mxu0 0.0
        %v7134 = vand.u32 %v7115, 4294901760
        %7135 = vmatpush.msra.mxu0 %v7134
        %v7136 = vand.u32 %v7117, 4294901760
        %v7137 = vsub.f32 %v7117, %v7136
        %v7138 = vand.u32 %v7137, 4294901760
        %v7139 = vsub.f32 %v7137, %v7138
        %v7140 = vand.u32 %v7139, 4294901760
        %7141 = vmatmul.f32.gmra.mxu0 %v7140
        %v7142 = vpop.f32.mrf.mxu0
        %v7143 = vadd.f32 0.0, %v7142
        %7144 = vdwg.mxu0
        %7145 = vmatpush.msra.mxu0 0.0
        %7146 = vmatpush.msra.mxu0 0.0
        %7147 = vmatpush.msra.mxu0 0.0
        %7148 = vmatpush.msra.mxu0 0.0
        %7149 = vmatpush.msra.mxu0 0.0
        %7150 = vmatpush.msra.mxu0 0.0
        %7151 = vmatpush.msra.mxu0 0.0
        %7152 = vmatpush.msra.mxu0 0.0
        %7153 = vmatpush.msra.mxu0 0.0
        %7154 = vmatpush.msra.mxu0 0.0
        %7155 = vmatpush.msra.mxu0 0.0
        %7156 = vmatpush.msra.mxu0 0.0
        %7157 = vmatpush.msra.mxu0 0.0
        %7158 = vmatpush.msra.mxu0 0.0
        %7159 = vmatpush.msra.mxu0 0.0
        %v7160 = vand.u32 %v7115, 4294901760
        %v7161 = vsub.f32 %v7115, %v7160
        %v7162 = vand.u32 %v7161, 4294901760
        %v7163 = vsub.f32 %v7161, %v7162
        %v7164 = vand.u32 %v7163, 4294901760
        %7165 = vmatpush.msra.mxu0 %v7164
        %v7166 = vand.u32 %v7117, 4294901760
        %7167 = vmatmul.f32.gmra.mxu0 %v7166
        %v7168 = vpop.f32.mrf.mxu0
        %v7169 = vadd.f32 %v7143, %v7168
        %7170 = vdwg.mxu0
        %7171 = vmatpush.msra.mxu0 0.0
        %7172 = vmatpush.msra.mxu0 0.0
        %7173 = vmatpush.msra.mxu0 0.0
        %7174 = vmatpush.msra.mxu0 0.0
        %7175 = vmatpush.msra.mxu0 0.0
        %7176 = vmatpush.msra.mxu0 0.0
        %7177 = vmatpush.msra.mxu0 0.0
        %7178 = vmatpush.msra.mxu0 0.0
        %7179 = vmatpush.msra.mxu0 0.0
        %7180 = vmatpush.msra.mxu0 0.0
        %7181 = vmatpush.msra.mxu0 0.0
        %7182 = vmatpush.msra.mxu0 0.0
        %7183 = vmatpush.msra.mxu0 0.0
        %7184 = vmatpush.msra.mxu0 0.0
        %7185 = vmatpush.msra.mxu0 0.0
        %v7186 = vand.u32 %v7115, 4294901760
        %v7187 = vsub.f32 %v7115, %v7186
        %7188 = vmatpush.msra.mxu0 %v7187
        %v7189 = vand.u32 %v7117, 4294901760
        %v7190 = vsub.f32 %v7117, %v7189
        %7191 = vmatmul.f32.gmra.mxu0 %v7190
        %v7192 = vpop.f32.mrf.mxu0
        %v7193 = vadd.f32 %v7169, %v7192
        %7194 = vdwg.mxu0
        %7195 = vmatpush.msra.mxu0 0.0
        %7196 = vmatpush.msra.mxu0 0.0
        %7197 = vmatpush.msra.mxu0 0.0
        %7198 = vmatpush.msra.mxu0 0.0
        %7199 = vmatpush.msra.mxu0 0.0
        %7200 = vmatpush.msra.mxu0 0.0
        %7201 = vmatpush.msra.mxu0 0.0
        %7202 = vmatpush.msra.mxu0 0.0
        %7203 = vmatpush.msra.mxu0 0.0
        %7204 = vmatpush.msra.mxu0 0.0
        %7205 = vmatpush.msra.mxu0 0.0
        %7206 = vmatpush.msra.mxu0 0.0
        %7207 = vmatpush.msra.mxu0 0.0
        %7208 = vmatpush.msra.mxu0 0.0
        %7209 = vmatpush.msra.mxu0 0.0
        %v7210 = vand.u32 %v7115, 4294901760
        %7211 = vmatpush.msra.mxu0 %v7210
        %v7212 = vand.u32 %v7117, 4294901760
        %v7213 = vsub.f32 %v7117, %v7212
        %v7214 = vand.u32 %v7213, 4294901760
        %7215 = vmatmul.f32.gmra.mxu0 %v7214
        %v7216 = vpop.f32.mrf.mxu0
        %v7217 = vadd.f32 %v7193, %v7216
        %7218 = vdwg.mxu0
        %7219 = vmatpush.msra.mxu0 0.0
        %7220 = vmatpush.msra.mxu0 0.0
        %7221 = vmatpush.msra.mxu0 0.0
        %7222 = vmatpush.msra.mxu0 0.0
        %7223 = vmatpush.msra.mxu0 0.0
        %7224 = vmatpush.msra.mxu0 0.0
        %7225 = vmatpush.msra.mxu0 0.0
        %7226 = vmatpush.msra.mxu0 0.0
        %7227 = vmatpush.msra.mxu0 0.0
        %7228 = vmatpush.msra.mxu0 0.0
        %7229 = vmatpush.msra.mxu0 0.0
        %7230 = vmatpush.msra.mxu0 0.0
        %7231 = vmatpush.msra.mxu0 0.0
        %7232 = vmatpush.msra.mxu0 0.0
        %7233 = vmatpush.msra.mxu0 0.0
        %v7234 = vand.u32 %v7115, 4294901760
        %v7235 = vsub.f32 %v7115, %v7234
        %v7236 = vand.u32 %v7235, 4294901760
        %7237 = vmatpush.msra.mxu0 %v7236
        %v7238 = vand.u32 %v7117, 4294901760
        %7239 = vmatmul.f32.gmra.mxu0 %v7238
        %v7240 = vpop.f32.mrf.mxu0
        %v7241 = vadd.f32 %v7217, %v7240
        %7242 = vdwg.mxu0
        %7243 = vmatpush.msra.mxu0 0.0
        %7244 = vmatpush.msra.mxu0 0.0
        %7245 = vmatpush.msra.mxu0 0.0
        %7246 = vmatpush.msra.mxu0 0.0
        %7247 = vmatpush.msra.mxu0 0.0
        %7248 = vmatpush.msra.mxu0 0.0
        %7249 = vmatpush.msra.mxu0 0.0
        %7250 = vmatpush.msra.mxu0 0.0
        %7251 = vmatpush.msra.mxu0 0.0
        %7252 = vmatpush.msra.mxu0 0.0
        %7253 = vmatpush.msra.mxu0 0.0
        %7254 = vmatpush.msra.mxu0 0.0
        %7255 = vmatpush.msra.mxu0 0.0
        %7256 = vmatpush.msra.mxu0 0.0
        %7257 = vmatpush.msra.mxu0 0.0
        %v7258 = vand.u32 %v7115, 4294901760
        %7259 = vmatpush.msra.mxu0 %v7258
        %v7260 = vand.u32 %v7117, 4294901760
        %7261 = vmatmul.f32.gmra.mxu0 %v7260
        %v7262 = vpop.f32.mrf.mxu0
        %v7263 = vadd.f32 %v7241, %v7262
        %7264 = vdwg.mxu0
        %7265 = vst.msk [vmem:[#allocation2 + $0x1b] sm:$0x1] %vm2863, %v7263
        %v7266 = vperm.slane %v2405, 4
        %v7267 = vmul.f32 %v2699, %v7266
        %v7268 = vsel %vm2702, %v7267, 0.0
        %7269 = vadd.xlane.f32.xlu0 %v7268
        %v7270 = vpop.xlane.xlu0 %7269
        %v7271 = vperm.slane %v2124, 4
        %v7272 = vmul.f32 %v2696, %v7271
        %v7273 = vmul.f32 %v7272, 1.442695
        %v7274 = vpow.pop %v7273
        %v7275 = vmul.f32 %v7274, %v7115
        %v7276 = vperm.slane %v2692, 4
        %v7277 = vmul.f32 %v7270, %v7276
        %v7278 = vadd.f32 %v7275, %v7277
        %v7279 = vrot.slane %v2687, 4
        %v7280 = vsel %vm2702, %v7279, 0
        %7282 = vmatpush.msra.mxu0 0.0
        %7283 = vmatpush.msra.mxu0 0.0
        %7284 = vmatpush.msra.mxu0 0.0
        %7285 = vmatpush.msra.mxu0 0.0
        %7286 = vmatpush.msra.mxu0 0.0
        %7287 = vmatpush.msra.mxu0 0.0
        %7288 = vmatpush.msra.mxu0 0.0
        %7289 = vmatpush.msra.mxu0 0.0
        %7290 = vmatpush.msra.mxu0 0.0
        %7291 = vmatpush.msra.mxu0 0.0
        %7292 = vmatpush.msra.mxu0 0.0
        %7293 = vmatpush.msra.mxu0 0.0
        %7294 = vmatpush.msra.mxu0 0.0
        %7295 = vmatpush.msra.mxu0 0.0
        %7296 = vmatpush.msra.mxu0 0.0
        %v7297 = vand.u32 %v7278, 4294901760
        %7298 = vmatpush.msra.mxu0 %v7297
        %v7299 = vand.u32 %v7280, 4294901760
        %v7300 = vsub.f32 %v7280, %v7299
        %v7301 = vand.u32 %v7300, 4294901760
        %v7302 = vsub.f32 %v7300, %v7301
        %v7303 = vand.u32 %v7302, 4294901760
        %7304 = vmatmul.f32.gmra.mxu0 %v7303
        %v7305 = vpop.f32.mrf.mxu0
        %v7306 = vadd.f32 0.0, %v7305
        %7307 = vdwg.mxu0
        %7308 = vmatpush.msra.mxu0 0.0
        %7309 = vmatpush.msra.mxu0 0.0
        %7310 = vmatpush.msra.mxu0 0.0
        %7311 = vmatpush.msra.mxu0 0.0
        %7312 = vmatpush.msra.mxu0 0.0
        %7313 = vmatpush.msra.mxu0 0.0
        %7314 = vmatpush.msra.mxu0 0.0
        %7315 = vmatpush.msra.mxu0 0.0
        %7316 = vmatpush.msra.mxu0 0.0
        %7317 = vmatpush.msra.mxu0 0.0
        %7318 = vmatpush.msra.mxu0 0.0
        %7319 = vmatpush.msra.mxu0 0.0
        %7320 = vmatpush.msra.mxu0 0.0
        %7321 = vmatpush.msra.mxu0 0.0
        %7322 = vmatpush.msra.mxu0 0.0
        %v7323 = vand.u32 %v7278, 4294901760
        %v7324 = vsub.f32 %v7278, %v7323
        %v7325 = vand.u32 %v7324, 4294901760
        %v7326 = vsub.f32 %v7324, %v7325
        %v7327 = vand.u32 %v7326, 4294901760
        %7328 = vmatpush.msra.mxu0 %v7327
        %v7329 = vand.u32 %v7280, 4294901760
        %7330 = vmatmul.f32.gmra.mxu0 %v7329
        %v7331 = vpop.f32.mrf.mxu0
        %v7332 = vadd.f32 %v7306, %v7331
        %7333 = vdwg.mxu0
        %7334 = vmatpush.msra.mxu0 0.0
        %7335 = vmatpush.msra.mxu0 0.0
        %7336 = vmatpush.msra.mxu0 0.0
        %7337 = vmatpush.msra.mxu0 0.0
        %7338 = vmatpush.msra.mxu0 0.0
        %7339 = vmatpush.msra.mxu0 0.0
        %7340 = vmatpush.msra.mxu0 0.0
        %7341 = vmatpush.msra.mxu0 0.0
        %7342 = vmatpush.msra.mxu0 0.0
        %7343 = vmatpush.msra.mxu0 0.0
        %7344 = vmatpush.msra.mxu0 0.0
        %7345 = vmatpush.msra.mxu0 0.0
        %7346 = vmatpush.msra.mxu0 0.0
        %7347 = vmatpush.msra.mxu0 0.0
        %7348 = vmatpush.msra.mxu0 0.0
        %v7349 = vand.u32 %v7278, 4294901760
        %v7350 = vsub.f32 %v7278, %v7349
        %7351 = vmatpush.msra.mxu0 %v7350
        %v7352 = vand.u32 %v7280, 4294901760
        %v7353 = vsub.f32 %v7280, %v7352
        %7354 = vmatmul.f32.gmra.mxu0 %v7353
        %v7355 = vpop.f32.mrf.mxu0
        %v7356 = vadd.f32 %v7332, %v7355
        %7357 = vdwg.mxu0
        %7358 = vmatpush.msra.mxu0 0.0
        %7359 = vmatpush.msra.mxu0 0.0
        %7360 = vmatpush.msra.mxu0 0.0
        %7361 = vmatpush.msra.mxu0 0.0
        %7362 = vmatpush.msra.mxu0 0.0
        %7363 = vmatpush.msra.mxu0 0.0
        %7364 = vmatpush.msra.mxu0 0.0
        %7365 = vmatpush.msra.mxu0 0.0
        %7366 = vmatpush.msra.mxu0 0.0
        %7367 = vmatpush.msra.mxu0 0.0
        %7368 = vmatpush.msra.mxu0 0.0
        %7369 = vmatpush.msra.mxu0 0.0
        %7370 = vmatpush.msra.mxu0 0.0
        %7371 = vmatpush.msra.mxu0 0.0
        %7372 = vmatpush.msra.mxu0 0.0
        %v7373 = vand.u32 %v7278, 4294901760
        %7374 = vmatpush.msra.mxu0 %v7373
        %v7375 = vand.u32 %v7280, 4294901760
        %v7376 = vsub.f32 %v7280, %v7375
        %v7377 = vand.u32 %v7376, 4294901760
        %7378 = vmatmul.f32.gmra.mxu0 %v7377
        %v7379 = vpop.f32.mrf.mxu0
        %v7380 = vadd.f32 %v7356, %v7379
        %7381 = vdwg.mxu0
        %7382 = vmatpush.msra.mxu0 0.0
        %7383 = vmatpush.msra.mxu0 0.0
        %7384 = vmatpush.msra.mxu0 0.0
        %7385 = vmatpush.msra.mxu0 0.0
        %7386 = vmatpush.msra.mxu0 0.0
        %7387 = vmatpush.msra.mxu0 0.0
        %7388 = vmatpush.msra.mxu0 0.0
        %7389 = vmatpush.msra.mxu0 0.0
        %7390 = vmatpush.msra.mxu0 0.0
        %7391 = vmatpush.msra.mxu0 0.0
        %7392 = vmatpush.msra.mxu0 0.0
        %7393 = vmatpush.msra.mxu0 0.0
        %7394 = vmatpush.msra.mxu0 0.0
        %7395 = vmatpush.msra.mxu0 0.0
        %7396 = vmatpush.msra.mxu0 0.0
        %v7397 = vand.u32 %v7278, 4294901760
        %v7398 = vsub.f32 %v7278, %v7397
        %v7399 = vand.u32 %v7398, 4294901760
        %7400 = vmatpush.msra.mxu0 %v7399
        %v7401 = vand.u32 %v7280, 4294901760
        %7402 = vmatmul.f32.gmra.mxu0 %v7401
        %v7403 = vpop.f32.mrf.mxu0
        %v7404 = vadd.f32 %v7380, %v7403
        %7405 = vdwg.mxu0
        %7406 = vmatpush.msra.mxu0 0.0
        %7407 = vmatpush.msra.mxu0 0.0
        %7408 = vmatpush.msra.mxu0 0.0
        %7409 = vmatpush.msra.mxu0 0.0
        %7410 = vmatpush.msra.mxu0 0.0
        %7411 = vmatpush.msra.mxu0 0.0
        %7412 = vmatpush.msra.mxu0 0.0
        %7413 = vmatpush.msra.mxu0 0.0
        %7414 = vmatpush.msra.mxu0 0.0
        %7415 = vmatpush.msra.mxu0 0.0
        %7416 = vmatpush.msra.mxu0 0.0
        %7417 = vmatpush.msra.mxu0 0.0
        %7418 = vmatpush.msra.mxu0 0.0
        %7419 = vmatpush.msra.mxu0 0.0
        %7420 = vmatpush.msra.mxu0 0.0
        %v7421 = vand.u32 %v7278, 4294901760
        %7422 = vmatpush.msra.mxu0 %v7421
        %v7423 = vand.u32 %v7280, 4294901760
        %7424 = vmatmul.f32.gmra.mxu0 %v7423
        %v7425 = vpop.f32.mrf.mxu0
        %v7426 = vadd.f32 %v7404, %v7425
        %7427 = vdwg.mxu0
        %7428 = vst.msk [vmem:[#allocation2 + $0x1c] sm:$0x1] %vm2863, %v7426
        %v7429 = vperm.slane %v2405, 5
        %v7430 = vmul.f32 %v2699, %v7429
        %v7431 = vsel %vm2702, %v7430, 0.0
        %7432 = vadd.xlane.f32.xlu0 %v7431
        %v7433 = vpop.xlane.xlu0 %7432
        %v7434 = vperm.slane %v2124, 5
        %v7435 = vmul.f32 %v2696, %v7434
        %v7436 = vmul.f32 %v7435, 1.442695
        %v7437 = vpow.pop %v7436
        %v7438 = vmul.f32 %v7437, %v7278
        %v7439 = vperm.slane %v2692, 5
        %v7440 = vmul.f32 %v7433, %v7439
        %v7441 = vadd.f32 %v7438, %v7440
        %v7442 = vrot.slane %v2687, 5
        %v7443 = vsel %vm2702, %v7442, 0
        %7445 = vmatpush.msra.mxu0 0.0
        %7446 = vmatpush.msra.mxu0 0.0
        %7447 = vmatpush.msra.mxu0 0.0
        %7448 = vmatpush.msra.mxu0 0.0
        %7449 = vmatpush.msra.mxu0 0.0
        %7450 = vmatpush.msra.mxu0 0.0
        %7451 = vmatpush.msra.mxu0 0.0
        %7452 = vmatpush.msra.mxu0 0.0
        %7453 = vmatpush.msra.mxu0 0.0
        %7454 = vmatpush.msra.mxu0 0.0
        %7455 = vmatpush.msra.mxu0 0.0
        %7456 = vmatpush.msra.mxu0 0.0
        %7457 = vmatpush.msra.mxu0 0.0
        %7458 = vmatpush.msra.mxu0 0.0
        %7459 = vmatpush.msra.mxu0 0.0
        %v7460 = vand.u32 %v7441, 4294901760
        %7461 = vmatpush.msra.mxu0 %v7460
        %v7462 = vand.u32 %v7443, 4294901760
        %v7463 = vsub.f32 %v7443, %v7462
        %v7464 = vand.u32 %v7463, 4294901760
        %v7465 = vsub.f32 %v7463, %v7464
        %v7466 = vand.u32 %v7465, 4294901760
        %7467 = vmatmul.f32.gmra.mxu0 %v7466
        %v7468 = vpop.f32.mrf.mxu0
        %v7469 = vadd.f32 0.0, %v7468
        %7470 = vdwg.mxu0
        %7471 = vmatpush.msra.mxu0 0.0
        %7472 = vmatpush.msra.mxu0 0.0
        %7473 = vmatpush.msra.mxu0 0.0
        %7474 = vmatpush.msra.mxu0 0.0
        %7475 = vmatpush.msra.mxu0 0.0
        %7476 = vmatpush.msra.mxu0 0.0
        %7477 = vmatpush.msra.mxu0 0.0
        %7478 = vmatpush.msra.mxu0 0.0
        %7479 = vmatpush.msra.mxu0 0.0
        %7480 = vmatpush.msra.mxu0 0.0
        %7481 = vmatpush.msra.mxu0 0.0
        %7482 = vmatpush.msra.mxu0 0.0
        %7483 = vmatpush.msra.mxu0 0.0
        %7484 = vmatpush.msra.mxu0 0.0
        %7485 = vmatpush.msra.mxu0 0.0
        %v7486 = vand.u32 %v7441, 4294901760
        %v7487 = vsub.f32 %v7441, %v7486
        %v7488 = vand.u32 %v7487, 4294901760
        %v7489 = vsub.f32 %v7487, %v7488
        %v7490 = vand.u32 %v7489, 4294901760
        %7491 = vmatpush.msra.mxu0 %v7490
        %v7492 = vand.u32 %v7443, 4294901760
        %7493 = vmatmul.f32.gmra.mxu0 %v7492
        %v7494 = vpop.f32.mrf.mxu0
        %v7495 = vadd.f32 %v7469, %v7494
        %7496 = vdwg.mxu0
        %7497 = vmatpush.msra.mxu0 0.0
        %7498 = vmatpush.msra.mxu0 0.0
        %7499 = vmatpush.msra.mxu0 0.0
        %7500 = vmatpush.msra.mxu0 0.0
        %7501 = vmatpush.msra.mxu0 0.0
        %7502 = vmatpush.msra.mxu0 0.0
        %7503 = vmatpush.msra.mxu0 0.0
        %7504 = vmatpush.msra.mxu0 0.0
        %7505 = vmatpush.msra.mxu0 0.0
        %7506 = vmatpush.msra.mxu0 0.0
        %7507 = vmatpush.msra.mxu0 0.0
        %7508 = vmatpush.msra.mxu0 0.0
        %7509 = vmatpush.msra.mxu0 0.0
        %7510 = vmatpush.msra.mxu0 0.0
        %7511 = vmatpush.msra.mxu0 0.0
        %v7512 = vand.u32 %v7441, 4294901760
        %v7513 = vsub.f32 %v7441, %v7512
        %7514 = vmatpush.msra.mxu0 %v7513
        %v7515 = vand.u32 %v7443, 4294901760
        %v7516 = vsub.f32 %v7443, %v7515
        %7517 = vmatmul.f32.gmra.mxu0 %v7516
        %v7518 = vpop.f32.mrf.mxu0
        %v7519 = vadd.f32 %v7495, %v7518
        %7520 = vdwg.mxu0
        %7521 = vmatpush.msra.mxu0 0.0
        %7522 = vmatpush.msra.mxu0 0.0
        %7523 = vmatpush.msra.mxu0 0.0
        %7524 = vmatpush.msra.mxu0 0.0
        %7525 = vmatpush.msra.mxu0 0.0
        %7526 = vmatpush.msra.mxu0 0.0
        %7527 = vmatpush.msra.mxu0 0.0
        %7528 = vmatpush.msra.mxu0 0.0
        %7529 = vmatpush.msra.mxu0 0.0
        %7530 = vmatpush.msra.mxu0 0.0
        %7531 = vmatpush.msra.mxu0 0.0
        %7532 = vmatpush.msra.mxu0 0.0
        %7533 = vmatpush.msra.mxu0 0.0
        %7534 = vmatpush.msra.mxu0 0.0
        %7535 = vmatpush.msra.mxu0 0.0
        %v7536 = vand.u32 %v7441, 4294901760
        %7537 = vmatpush.msra.mxu0 %v7536
        %v7538 = vand.u32 %v7443, 4294901760
        %v7539 = vsub.f32 %v7443, %v7538
        %v7540 = vand.u32 %v7539, 4294901760
        %7541 = vmatmul.f32.gmra.mxu0 %v7540
        %v7542 = vpop.f32.mrf.mxu0
        %v7543 = vadd.f32 %v7519, %v7542
        %7544 = vdwg.mxu0
        %7545 = vmatpush.msra.mxu0 0.0
        %7546 = vmatpush.msra.mxu0 0.0
        %7547 = vmatpush.msra.mxu0 0.0
        %7548 = vmatpush.msra.mxu0 0.0
        %7549 = vmatpush.msra.mxu0 0.0
        %7550 = vmatpush.msra.mxu0 0.0
        %7551 = vmatpush.msra.mxu0 0.0
        %7552 = vmatpush.msra.mxu0 0.0
        %7553 = vmatpush.msra.mxu0 0.0
        %7554 = vmatpush.msra.mxu0 0.0
        %7555 = vmatpush.msra.mxu0 0.0
        %7556 = vmatpush.msra.mxu0 0.0
        %7557 = vmatpush.msra.mxu0 0.0
        %7558 = vmatpush.msra.mxu0 0.0
        %7559 = vmatpush.msra.mxu0 0.0
        %v7560 = vand.u32 %v7441, 4294901760
        %v7561 = vsub.f32 %v7441, %v7560
        %v7562 = vand.u32 %v7561, 4294901760
        %7563 = vmatpush.msra.mxu0 %v7562
        %v7564 = vand.u32 %v7443, 4294901760
        %7565 = vmatmul.f32.gmra.mxu0 %v7564
        %v7566 = vpop.f32.mrf.mxu0
        %v7567 = vadd.f32 %v7543, %v7566
        %7568 = vdwg.mxu0
        %7569 = vmatpush.msra.mxu0 0.0
        %7570 = vmatpush.msra.mxu0 0.0
        %7571 = vmatpush.msra.mxu0 0.0
        %7572 = vmatpush.msra.mxu0 0.0
        %7573 = vmatpush.msra.mxu0 0.0
        %7574 = vmatpush.msra.mxu0 0.0
        %7575 = vmatpush.msra.mxu0 0.0
        %7576 = vmatpush.msra.mxu0 0.0
        %7577 = vmatpush.msra.mxu0 0.0
        %7578 = vmatpush.msra.mxu0 0.0
        %7579 = vmatpush.msra.mxu0 0.0
        %7580 = vmatpush.msra.mxu0 0.0
        %7581 = vmatpush.msra.mxu0 0.0
        %7582 = vmatpush.msra.mxu0 0.0
        %7583 = vmatpush.msra.mxu0 0.0
        %v7584 = vand.u32 %v7441, 4294901760
        %7585 = vmatpush.msra.mxu0 %v7584
        %v7586 = vand.u32 %v7443, 4294901760
        %7587 = vmatmul.f32.gmra.mxu0 %v7586
        %v7588 = vpop.f32.mrf.mxu0
        %v7589 = vadd.f32 %v7567, %v7588
        %7590 = vdwg.mxu0
        %7591 = vst.msk [vmem:[#allocation2 + $0x1d] sm:$0x1] %vm2863, %v7589
        %v7592 = vperm.slane %v2405, 6
        %v7593 = vmul.f32 %v2699, %v7592
        %v7594 = vsel %vm2702, %v7593, 0.0
        %7595 = vadd.xlane.f32.xlu0 %v7594
        %v7596 = vpop.xlane.xlu0 %7595
        %v7597 = vperm.slane %v2124, 6
        %v7598 = vmul.f32 %v2696, %v7597
        %v7599 = vmul.f32 %v7598, 1.442695
        %v7600 = vpow.pop %v7599
        %v7601 = vmul.f32 %v7600, %v7441
        %v7602 = vperm.slane %v2692, 6
        %v7603 = vmul.f32 %v7596, %v7602
        %v7604 = vadd.f32 %v7601, %v7603
        %v7605 = vrot.slane %v2687, 6
        %v7606 = vsel %vm2702, %v7605, 0
        %7608 = vmatpush.msra.mxu0 0.0
        %7609 = vmatpush.msra.mxu0 0.0
        %7610 = vmatpush.msra.mxu0 0.0
        %7611 = vmatpush.msra.mxu0 0.0
        %7612 = vmatpush.msra.mxu0 0.0
        %7613 = vmatpush.msra.mxu0 0.0
        %7614 = vmatpush.msra.mxu0 0.0
        %7615 = vmatpush.msra.mxu0 0.0
        %7616 = vmatpush.msra.mxu0 0.0
        %7617 = vmatpush.msra.mxu0 0.0
        %7618 = vmatpush.msra.mxu0 0.0
        %7619 = vmatpush.msra.mxu0 0.0
        %7620 = vmatpush.msra.mxu0 0.0
        %7621 = vmatpush.msra.mxu0 0.0
        %7622 = vmatpush.msra.mxu0 0.0
        %v7623 = vand.u32 %v7604, 4294901760
        %7624 = vmatpush.msra.mxu0 %v7623
        %v7625 = vand.u32 %v7606, 4294901760
        %v7626 = vsub.f32 %v7606, %v7625
        %v7627 = vand.u32 %v7626, 4294901760
        %v7628 = vsub.f32 %v7626, %v7627
        %v7629 = vand.u32 %v7628, 4294901760
        %7630 = vmatmul.f32.gmra.mxu0 %v7629
        %v7631 = vpop.f32.mrf.mxu0
        %v7632 = vadd.f32 0.0, %v7631
        %7633 = vdwg.mxu0
        %7634 = vmatpush.msra.mxu0 0.0
        %7635 = vmatpush.msra.mxu0 0.0
        %7636 = vmatpush.msra.mxu0 0.0
        %7637 = vmatpush.msra.mxu0 0.0
        %7638 = vmatpush.msra.mxu0 0.0
        %7639 = vmatpush.msra.mxu0 0.0
        %7640 = vmatpush.msra.mxu0 0.0
        %7641 = vmatpush.msra.mxu0 0.0
        %7642 = vmatpush.msra.mxu0 0.0
        %7643 = vmatpush.msra.mxu0 0.0
        %7644 = vmatpush.msra.mxu0 0.0
        %7645 = vmatpush.msra.mxu0 0.0
        %7646 = vmatpush.msra.mxu0 0.0
        %7647 = vmatpush.msra.mxu0 0.0
        %7648 = vmatpush.msra.mxu0 0.0
        %v7649 = vand.u32 %v7604, 4294901760
        %v7650 = vsub.f32 %v7604, %v7649
        %v7651 = vand.u32 %v7650, 4294901760
        %v7652 = vsub.f32 %v7650, %v7651
        %v7653 = vand.u32 %v7652, 4294901760
        %7654 = vmatpush.msra.mxu0 %v7653
        %v7655 = vand.u32 %v7606, 4294901760
        %7656 = vmatmul.f32.gmra.mxu0 %v7655
        %v7657 = vpop.f32.mrf.mxu0
        %v7658 = vadd.f32 %v7632, %v7657
        %7659 = vdwg.mxu0
        %7660 = vmatpush.msra.mxu0 0.0
        %7661 = vmatpush.msra.mxu0 0.0
        %7662 = vmatpush.msra.mxu0 0.0
        %7663 = vmatpush.msra.mxu0 0.0
        %7664 = vmatpush.msra.mxu0 0.0
        %7665 = vmatpush.msra.mxu0 0.0
        %7666 = vmatpush.msra.mxu0 0.0
        %7667 = vmatpush.msra.mxu0 0.0
        %7668 = vmatpush.msra.mxu0 0.0
        %7669 = vmatpush.msra.mxu0 0.0
        %7670 = vmatpush.msra.mxu0 0.0
        %7671 = vmatpush.msra.mxu0 0.0
        %7672 = vmatpush.msra.mxu0 0.0
        %7673 = vmatpush.msra.mxu0 0.0
        %7674 = vmatpush.msra.mxu0 0.0
        %v7675 = vand.u32 %v7604, 4294901760
        %v7676 = vsub.f32 %v7604, %v7675
        %7677 = vmatpush.msra.mxu0 %v7676
        %v7678 = vand.u32 %v7606, 4294901760
        %v7679 = vsub.f32 %v7606, %v7678
        %7680 = vmatmul.f32.gmra.mxu0 %v7679
        %v7681 = vpop.f32.mrf.mxu0
        %v7682 = vadd.f32 %v7658, %v7681
        %7683 = vdwg.mxu0
        %7684 = vmatpush.msra.mxu0 0.0
        %7685 = vmatpush.msra.mxu0 0.0
        %7686 = vmatpush.msra.mxu0 0.0
        %7687 = vmatpush.msra.mxu0 0.0
        %7688 = vmatpush.msra.mxu0 0.0
        %7689 = vmatpush.msra.mxu0 0.0
        %7690 = vmatpush.msra.mxu0 0.0
        %7691 = vmatpush.msra.mxu0 0.0
        %7692 = vmatpush.msra.mxu0 0.0
        %7693 = vmatpush.msra.mxu0 0.0
        %7694 = vmatpush.msra.mxu0 0.0
        %7695 = vmatpush.msra.mxu0 0.0
        %7696 = vmatpush.msra.mxu0 0.0
        %7697 = vmatpush.msra.mxu0 0.0
        %7698 = vmatpush.msra.mxu0 0.0
        %v7699 = vand.u32 %v7604, 4294901760
        %7700 = vmatpush.msra.mxu0 %v7699
        %v7701 = vand.u32 %v7606, 4294901760
        %v7702 = vsub.f32 %v7606, %v7701
        %v7703 = vand.u32 %v7702, 4294901760
        %7704 = vmatmul.f32.gmra.mxu0 %v7703
        %v7705 = vpop.f32.mrf.mxu0
        %v7706 = vadd.f32 %v7682, %v7705
        %7707 = vdwg.mxu0
        %7708 = vmatpush.msra.mxu0 0.0
        %7709 = vmatpush.msra.mxu0 0.0
        %7710 = vmatpush.msra.mxu0 0.0
        %7711 = vmatpush.msra.mxu0 0.0
        %7712 = vmatpush.msra.mxu0 0.0
        %7713 = vmatpush.msra.mxu0 0.0
        %7714 = vmatpush.msra.mxu0 0.0
        %7715 = vmatpush.msra.mxu0 0.0
        %7716 = vmatpush.msra.mxu0 0.0
        %7717 = vmatpush.msra.mxu0 0.0
        %7718 = vmatpush.msra.mxu0 0.0
        %7719 = vmatpush.msra.mxu0 0.0
        %7720 = vmatpush.msra.mxu0 0.0
        %7721 = vmatpush.msra.mxu0 0.0
        %7722 = vmatpush.msra.mxu0 0.0
        %v7723 = vand.u32 %v7604, 4294901760
        %v7724 = vsub.f32 %v7604, %v7723
        %v7725 = vand.u32 %v7724, 4294901760
        %7726 = vmatpush.msra.mxu0 %v7725
        %v7727 = vand.u32 %v7606, 4294901760
        %7728 = vmatmul.f32.gmra.mxu0 %v7727
        %v7729 = vpop.f32.mrf.mxu0
        %v7730 = vadd.f32 %v7706, %v7729
        %7731 = vdwg.mxu0
        %7732 = vmatpush.msra.mxu0 0.0
        %7733 = vmatpush.msra.mxu0 0.0
        %7734 = vmatpush.msra.mxu0 0.0
        %7735 = vmatpush.msra.mxu0 0.0
        %7736 = vmatpush.msra.mxu0 0.0
        %7737 = vmatpush.msra.mxu0 0.0
        %7738 = vmatpush.msra.mxu0 0.0
        %7739 = vmatpush.msra.mxu0 0.0
        %7740 = vmatpush.msra.mxu0 0.0
        %7741 = vmatpush.msra.mxu0 0.0
        %7742 = vmatpush.msra.mxu0 0.0
        %7743 = vmatpush.msra.mxu0 0.0
        %7744 = vmatpush.msra.mxu0 0.0
        %7745 = vmatpush.msra.mxu0 0.0
        %7746 = vmatpush.msra.mxu0 0.0
        %v7747 = vand.u32 %v7604, 4294901760
        %7748 = vmatpush.msra.mxu0 %v7747
        %v7749 = vand.u32 %v7606, 4294901760
        %7750 = vmatmul.f32.gmra.mxu0 %v7749
        %v7751 = vpop.f32.mrf.mxu0
        %v7752 = vadd.f32 %v7730, %v7751
        %7753 = vdwg.mxu0
        %7754 = vst.msk [vmem:[#allocation2 + $0x1e] sm:$0x1] %vm2863, %v7752
        %v7755 = vperm.slane %v2405, 7
        %v7756 = vmul.f32 %v2699, %v7755
        %v7757 = vsel %vm2702, %v7756, 0.0
        %7758 = vadd.xlane.f32.xlu0 %v7757
        %v7759 = vpop.xlane.xlu0 %7758
        %v7760 = vperm.slane %v2124, 7
        %v7761 = vmul.f32 %v2696, %v7760
        %v7762 = vmul.f32 %v7761, 1.442695
        %v7763 = vpow.pop %v7762
        %v7764 = vmul.f32 %v7763, %v7604
        %v7765 = vperm.slane %v2692, 7
        %v7766 = vmul.f32 %v7759, %v7765
        %v7767 = vadd.f32 %v7764, %v7766
        %v7768 = vrot.slane %v2687, 7
        %v7769 = vsel %vm2702, %v7768, 0
        %7771 = vmatpush.msra.mxu0 0.0
        %7772 = vmatpush.msra.mxu0 0.0
        %7773 = vmatpush.msra.mxu0 0.0
        %7774 = vmatpush.msra.mxu0 0.0
        %7775 = vmatpush.msra.mxu0 0.0
        %7776 = vmatpush.msra.mxu0 0.0
        %7777 = vmatpush.msra.mxu0 0.0
        %7778 = vmatpush.msra.mxu0 0.0
        %7779 = vmatpush.msra.mxu0 0.0
        %7780 = vmatpush.msra.mxu0 0.0
        %7781 = vmatpush.msra.mxu0 0.0
        %7782 = vmatpush.msra.mxu0 0.0
        %7783 = vmatpush.msra.mxu0 0.0
        %7784 = vmatpush.msra.mxu0 0.0
        %7785 = vmatpush.msra.mxu0 0.0
        %v7786 = vand.u32 %v7767, 4294901760
        %7787 = vmatpush.msra.mxu0 %v7786
        %v7788 = vand.u32 %v7769, 4294901760
        %v7789 = vsub.f32 %v7769, %v7788
        %v7790 = vand.u32 %v7789, 4294901760
        %v7791 = vsub.f32 %v7789, %v7790
        %v7792 = vand.u32 %v7791, 4294901760
        %7793 = vmatmul.f32.gmra.mxu0 %v7792
        %v7794 = vpop.f32.mrf.mxu0
        %v7795 = vadd.f32 0.0, %v7794
        %7796 = vdwg.mxu0
        %7797 = vmatpush.msra.mxu0 0.0
        %7798 = vmatpush.msra.mxu0 0.0
        %7799 = vmatpush.msra.mxu0 0.0
        %7800 = vmatpush.msra.mxu0 0.0
        %7801 = vmatpush.msra.mxu0 0.0
        %7802 = vmatpush.msra.mxu0 0.0
        %7803 = vmatpush.msra.mxu0 0.0
        %7804 = vmatpush.msra.mxu0 0.0
        %7805 = vmatpush.msra.mxu0 0.0
        %7806 = vmatpush.msra.mxu0 0.0
        %7807 = vmatpush.msra.mxu0 0.0
        %7808 = vmatpush.msra.mxu0 0.0
        %7809 = vmatpush.msra.mxu0 0.0
        %7810 = vmatpush.msra.mxu0 0.0
        %7811 = vmatpush.msra.mxu0 0.0
        %v7812 = vand.u32 %v7767, 4294901760
        %v7813 = vsub.f32 %v7767, %v7812
        %v7814 = vand.u32 %v7813, 4294901760
        %v7815 = vsub.f32 %v7813, %v7814
        %v7816 = vand.u32 %v7815, 4294901760
        %7817 = vmatpush.msra.mxu0 %v7816
        %v7818 = vand.u32 %v7769, 4294901760
        %7819 = vmatmul.f32.gmra.mxu0 %v7818
        %v7820 = vpop.f32.mrf.mxu0
        %v7821 = vadd.f32 %v7795, %v7820
        %7822 = vdwg.mxu0
        %7823 = vmatpush.msra.mxu0 0.0
        %7824 = vmatpush.msra.mxu0 0.0
        %7825 = vmatpush.msra.mxu0 0.0
        %7826 = vmatpush.msra.mxu0 0.0
        %7827 = vmatpush.msra.mxu0 0.0
        %7828 = vmatpush.msra.mxu0 0.0
        %7829 = vmatpush.msra.mxu0 0.0
        %7830 = vmatpush.msra.mxu0 0.0
        %7831 = vmatpush.msra.mxu0 0.0
        %7832 = vmatpush.msra.mxu0 0.0
        %7833 = vmatpush.msra.mxu0 0.0
        %7834 = vmatpush.msra.mxu0 0.0
        %7835 = vmatpush.msra.mxu0 0.0
        %7836 = vmatpush.msra.mxu0 0.0
        %7837 = vmatpush.msra.mxu0 0.0
        %v7838 = vand.u32 %v7767, 4294901760
        %v7839 = vsub.f32 %v7767, %v7838
        %7840 = vmatpush.msra.mxu0 %v7839
        %v7841 = vand.u32 %v7769, 4294901760
        %v7842 = vsub.f32 %v7769, %v7841
        %7843 = vmatmul.f32.gmra.mxu0 %v7842
        %v7844 = vpop.f32.mrf.mxu0
        %v7845 = vadd.f32 %v7821, %v7844
        %7846 = vdwg.mxu0
        %7847 = vmatpush.msra.mxu0 0.0
        %7848 = vmatpush.msra.mxu0 0.0
        %7849 = vmatpush.msra.mxu0 0.0
        %7850 = vmatpush.msra.mxu0 0.0
        %7851 = vmatpush.msra.mxu0 0.0
        %7852 = vmatpush.msra.mxu0 0.0
        %7853 = vmatpush.msra.mxu0 0.0
        %7854 = vmatpush.msra.mxu0 0.0
        %7855 = vmatpush.msra.mxu0 0.0
        %7856 = vmatpush.msra.mxu0 0.0
        %7857 = vmatpush.msra.mxu0 0.0
        %7858 = vmatpush.msra.mxu0 0.0
        %7859 = vmatpush.msra.mxu0 0.0
        %7860 = vmatpush.msra.mxu0 0.0
        %7861 = vmatpush.msra.mxu0 0.0
        %v7862 = vand.u32 %v7767, 4294901760
        %7863 = vmatpush.msra.mxu0 %v7862
        %v7864 = vand.u32 %v7769, 4294901760
        %v7865 = vsub.f32 %v7769, %v7864
        %v7866 = vand.u32 %v7865, 4294901760
        %7867 = vmatmul.f32.gmra.mxu0 %v7866
        %v7868 = vpop.f32.mrf.mxu0
        %v7869 = vadd.f32 %v7845, %v7868
        %7870 = vdwg.mxu0
        %7871 = vmatpush.msra.mxu0 0.0
        %7872 = vmatpush.msra.mxu0 0.0
        %7873 = vmatpush.msra.mxu0 0.0
        %7874 = vmatpush.msra.mxu0 0.0
        %7875 = vmatpush.msra.mxu0 0.0
        %7876 = vmatpush.msra.mxu0 0.0
        %7877 = vmatpush.msra.mxu0 0.0
        %7878 = vmatpush.msra.mxu0 0.0
        %7879 = vmatpush.msra.mxu0 0.0
        %7880 = vmatpush.msra.mxu0 0.0
        %7881 = vmatpush.msra.mxu0 0.0
        %7882 = vmatpush.msra.mxu0 0.0
        %7883 = vmatpush.msra.mxu0 0.0
        %7884 = vmatpush.msra.mxu0 0.0
        %7885 = vmatpush.msra.mxu0 0.0
        %v7886 = vand.u32 %v7767, 4294901760
        %v7887 = vsub.f32 %v7767, %v7886
        %v7888 = vand.u32 %v7887, 4294901760
        %7889 = vmatpush.msra.mxu0 %v7888
        %v7890 = vand.u32 %v7769, 4294901760
        %7891 = vmatmul.f32.gmra.mxu0 %v7890
        %v7892 = vpop.f32.mrf.mxu0
        %v7893 = vadd.f32 %v7869, %v7892
        %7894 = vdwg.mxu0
        %7895 = vmatpush.msra.mxu0 0.0
        %7896 = vmatpush.msra.mxu0 0.0
        %7897 = vmatpush.msra.mxu0 0.0
        %7898 = vmatpush.msra.mxu0 0.0
        %7899 = vmatpush.msra.mxu0 0.0
        %7900 = vmatpush.msra.mxu0 0.0
        %7901 = vmatpush.msra.mxu0 0.0
        %7902 = vmatpush.msra.mxu0 0.0
        %7903 = vmatpush.msra.mxu0 0.0
        %7904 = vmatpush.msra.mxu0 0.0
        %7905 = vmatpush.msra.mxu0 0.0
        %7906 = vmatpush.msra.mxu0 0.0
        %7907 = vmatpush.msra.mxu0 0.0
        %7908 = vmatpush.msra.mxu0 0.0
        %7909 = vmatpush.msra.mxu0 0.0
        %v7910 = vand.u32 %v7767, 4294901760
        %7911 = vmatpush.msra.mxu0 %v7910
        %v7912 = vand.u32 %v7769, 4294901760
        %7913 = vmatmul.f32.gmra.mxu0 %v7912
        %v7914 = vpop.f32.mrf.mxu0
        %v7915 = vadd.f32 %v7893, %v7914
        %7916 = vdwg.mxu0
        %7917 = vst.msk [vmem:[#allocation2 + $0x1f] sm:$0x1] %vm2863, %v7915
        %v7918 = vld [vmem:[#allocation2] sm:$0xff]
        %v7919 = vld [vmem:[#allocation2 + $0x8] sm:$0xff]
        %v7920 = vld [vmem:[#allocation2 + $0x10] sm:$0xff]
        %v7921 = vld [vmem:[#allocation2 + $0x18] sm:$0xff]
        %v7922 = vld [vmem:[%s9] sm:$0x1]
        %v7924 = vperm.slane %v7922, 0
        %v7926 = vmul.f32 %v1787, %v7924
        %v7927 = vmul.f32 %v1788, %v7924
        %v7928 = vmul.f32 %v1789, %v7924
        %v7929 = vmul.f32 %v1790, %v7924
        %v7930 = vadd.f32 %v7918, %v7926
        %v7931 = vadd.f32 %v7919, %v7927
        %v7932 = vadd.f32 %v7920, %v7928
        %v7933 = vadd.f32 %v7921, %v7929
        %v7934 = vsub.f32 0.0, %v697
        %v7935 = vsub.f32 0.0, %v701
        %v7936 = vsub.f32 0.0, %v705
        %v7937 = vsub.f32 0.0, %v709
        %v7938 = vmul.f32 %v7934, 1.442695
        %v7939 = vpow.pop %v7938
        %v7940 = vmul.f32 %v7935, 1.442695
        %v7941 = vpow.pop %v7940
        %v7942 = vmul.f32 %v7936, 1.442695
        %v7943 = vpow.pop %v7942
        %v7944 = vmul.f32 %v7937, 1.442695
        %v7945 = vpow.pop %v7944
        %v7946 = vadd.f32 %v7939, 1.0
        %v7947 = vadd.f32 %v7941, 1.0
        %v7948 = vadd.f32 %v7943, 1.0
        %v7949 = vadd.f32 %v7945, 1.0
        %v7950 = vrcp.pop %v7946
        %v7951 = vmul.f32 %v7946, %v7950
        %v7952 = vsub.f32 1.0, %v7951
        %v7953 = vmul.f32 %v7950, %v7952
        %v7954 = vadd.f32 %v7950, %v7953
        %vm7955 = vweird.f32 %v7946
        %vm7956 = vweird.f32 %v7950
        %vm7957 = vmor %vm7955, %vm7956
        %v7958 = vsel %vm7957, %v7950, %v7954
        %v7959 = vand.u32 2147483647, %v7946
        %vm7960 = vcmp.eq.f32.partialorder %v7959, 8.507059e+37
        %v7961 = vand.u32 %v7946, 2147483648
        %v7962 = vor.u32 1.1754944e-38, %v7961
        %v7963 = vsel %vm7960, %v7962, %v7958
        %v7964 = vmul.f32 1.0, %v7963
        %v7965 = vrcp.pop %v7947
        %v7966 = vmul.f32 %v7947, %v7965
        %v7967 = vsub.f32 1.0, %v7966
        %v7968 = vmul.f32 %v7965, %v7967
        %v7969 = vadd.f32 %v7965, %v7968
        %vm7970 = vweird.f32 %v7947
        %vm7971 = vweird.f32 %v7965
        %vm7972 = vmor %vm7970, %vm7971
        %v7973 = vsel %vm7972, %v7965, %v7969
        %v7974 = vand.u32 2147483647, %v7947
        %vm7975 = vcmp.eq.f32.partialorder %v7974, 8.507059e+37
        %v7976 = vand.u32 %v7947, 2147483648
        %v7977 = vor.u32 1.1754944e-38, %v7976
        %v7978 = vsel %vm7975, %v7977, %v7973
        %v7979 = vmul.f32 1.0, %v7978
        %v7980 = vrcp.pop %v7948
        %v7981 = vmul.f32 %v7948, %v7980
        %v7982 = vsub.f32 1.0, %v7981
        %v7983 = vmul.f32 %v7980, %v7982
        %v7984 = vadd.f32 %v7980, %v7983
        %vm7985 = vweird.f32 %v7948
        %vm7986 = vweird.f32 %v7980
        %vm7987 = vmor %vm7985, %vm7986
        %v7988 = vsel %vm7987, %v7980, %v7984
        %v7989 = vand.u32 2147483647, %v7948
        %vm7990 = vcmp.eq.f32.partialorder %v7989, 8.507059e+37
        %v7991 = vand.u32 %v7948, 2147483648
        %v7992 = vor.u32 1.1754944e-38, %v7991
        %v7993 = vsel %vm7990, %v7992, %v7988
        %v7994 = vmul.f32 1.0, %v7993
        %v7995 = vrcp.pop %v7949
        %v7996 = vmul.f32 %v7949, %v7995
        %v7997 = vsub.f32 1.0, %v7996
        %v7998 = vmul.f32 %v7995, %v7997
        %v7999 = vadd.f32 %v7995, %v7998
        %vm8000 = vweird.f32 %v7949
        %vm8001 = vweird.f32 %v7995
        %vm8002 = vmor %vm8000, %vm8001
        %v8003 = vsel %vm8002, %v7995, %v7999
        %v8004 = vand.u32 2147483647, %v7949
        %vm8005 = vcmp.eq.f32.partialorder %v8004, 8.507059e+37
        %v8006 = vand.u32 %v7949, 2147483648
        %v8007 = vor.u32 1.1754944e-38, %v8006
        %v8008 = vsel %vm8005, %v8007, %v8003
        %v8009 = vmul.f32 1.0, %v8008
        %v8010 = vmul.f32 %v697, %v7964
        %v8011 = vmul.f32 %v701, %v7979
        %v8012 = vmul.f32 %v705, %v7994
        %v8013 = vmul.f32 %v709, %v8009
        %v8014 = vmul.f32 %v8010, %v7930
        %v8015 = vmul.f32 %v8011, %v7931
        %v8016 = vmul.f32 %v8012, %v7932
        %v8017 = vmul.f32 %v8013, %v7933
        %v8019 = vsel %vm420, %v8014, 0
        %v8022 = vsel %vm420, %v8015, 0
        %v8025 = vsel %vm420, %v8016, 0
        %v8028 = vsel %vm420, %v8017, 0
        %8030 = vmatpush.msra.mxu0 0.0
        %8031 = vmatpush.msra.mxu0 0.0
        %8032 = vmatpush.msra.mxu0 0.0
        %8033 = vmatpush.msra.mxu0 0.0
        %8034 = vmatpush.msra.mxu0 0.0
        %8035 = vmatpush.msra.mxu0 0.0
        %8036 = vmatpush.msra.mxu0 0.0
        %8037 = vmatpush.msra.mxu0 0.0
        %8038 = vmatpush.msra.mxu0 0.0
        %8039 = vmatpush.msra.mxu0 0.0
        %8040 = vmatpush.msra.mxu0 0.0
        %8041 = vmatpush.msra.mxu0 0.0
        %v8042 = vand.u32 %v415, 4294901760
        %8043 = vmatpush.msra.mxu0 %v8042
        %v8044 = vand.u32 %v414, 4294901760
        %8045 = vmatpush.msra.mxu0 %v8044
        %v8046 = vand.u32 %v413, 4294901760
        %8047 = vmatpush.msra.mxu0 %v8046
        %v8048 = vand.u32 %v412, 4294901760
        %8049 = vmatpush.msra.mxu0 %v8048
        %v8050 = vand.u32 %v8019, 4294901760
        %v8051 = vsub.f32 %v8019, %v8050
        %v8052 = vand.u32 %v8051, 4294901760
        %v8053 = vsub.f32 %v8051, %v8052
        %v8054 = vand.u32 %v8053, 4294901760
        %8055 = vmatmul.f32.gmra.mxu0 %v8054
        %v8056 = vpop.f32.mrf.mxu0
        %v8057 = vadd.f32 %v418, %v8056
        %v8058 = vand.u32 %v8022, 4294901760
        %v8059 = vsub.f32 %v8022, %v8058
        %v8060 = vand.u32 %v8059, 4294901760
        %v8061 = vsub.f32 %v8059, %v8060
        %v8062 = vand.u32 %v8061, 4294901760
        %8063 = vmatmul.f32.gmra.mxu0 %v8062
        %v8064 = vpop.f32.mrf.mxu0
        %v8065 = vadd.f32 %v418, %v8064
        %v8066 = vand.u32 %v8025, 4294901760
        %v8067 = vsub.f32 %v8025, %v8066
        %v8068 = vand.u32 %v8067, 4294901760
        %v8069 = vsub.f32 %v8067, %v8068
        %v8070 = vand.u32 %v8069, 4294901760
        %8071 = vmatmul.f32.gmra.mxu0 %v8070
        %v8072 = vpop.f32.mrf.mxu0
        %v8073 = vadd.f32 %v418, %v8072
        %v8074 = vand.u32 %v8028, 4294901760
        %v8075 = vsub.f32 %v8028, %v8074
        %v8076 = vand.u32 %v8075, 4294901760
        %v8077 = vsub.f32 %v8075, %v8076
        %v8078 = vand.u32 %v8077, 4294901760
        %8079 = vmatmul.f32.gmra.mxu0 %v8078
        %v8080 = vpop.f32.mrf.mxu0
        %v8081 = vadd.f32 %v418, %v8080
        %8082 = vdwg.mxu0
        %8083 = vmatpush.msra.mxu0 0.0
        %8084 = vmatpush.msra.mxu0 0.0
        %8085 = vmatpush.msra.mxu0 0.0
        %8086 = vmatpush.msra.mxu0 0.0
        %8087 = vmatpush.msra.mxu0 0.0
        %8088 = vmatpush.msra.mxu0 0.0
        %8089 = vmatpush.msra.mxu0 0.0
        %8090 = vmatpush.msra.mxu0 0.0
        %8091 = vmatpush.msra.mxu0 0.0
        %8092 = vmatpush.msra.mxu0 0.0
        %8093 = vmatpush.msra.mxu0 0.0
        %8094 = vmatpush.msra.mxu0 0.0
        %v8095 = vand.u32 %v415, 4294901760
        %v8096 = vsub.f32 %v415, %v8095
        %v8097 = vand.u32 %v8096, 4294901760
        %v8098 = vsub.f32 %v8096, %v8097
        %v8099 = vand.u32 %v8098, 4294901760
        %8100 = vmatpush.msra.mxu0 %v8099
        %v8101 = vand.u32 %v414, 4294901760
        %v8102 = vsub.f32 %v414, %v8101
        %v8103 = vand.u32 %v8102, 4294901760
        %v8104 = vsub.f32 %v8102, %v8103
        %v8105 = vand.u32 %v8104, 4294901760
        %8106 = vmatpush.msra.mxu0 %v8105
        %v8107 = vand.u32 %v413, 4294901760
        %v8108 = vsub.f32 %v413, %v8107
        %v8109 = vand.u32 %v8108, 4294901760
        %v8110 = vsub.f32 %v8108, %v8109
        %v8111 = vand.u32 %v8110, 4294901760
        %8112 = vmatpush.msra.mxu0 %v8111
        %v8113 = vand.u32 %v412, 4294901760
        %v8114 = vsub.f32 %v412, %v8113
        %v8115 = vand.u32 %v8114, 4294901760
        %v8116 = vsub.f32 %v8114, %v8115
        %v8117 = vand.u32 %v8116, 4294901760
        %8118 = vmatpush.msra.mxu0 %v8117
        %v8119 = vand.u32 %v8019, 4294901760
        %8120 = vmatmul.f32.gmra.mxu0 %v8119
        %v8121 = vpop.f32.mrf.mxu0
        %v8122 = vadd.f32 %v8057, %v8121
        %v8123 = vand.u32 %v8022, 4294901760
        %8124 = vmatmul.f32.gmra.mxu0 %v8123
        %v8125 = vpop.f32.mrf.mxu0
        %v8126 = vadd.f32 %v8065, %v8125
        %v8127 = vand.u32 %v8025, 4294901760
        %8128 = vmatmul.f32.gmra.mxu0 %v8127
        %v8129 = vpop.f32.mrf.mxu0
        %v8130 = vadd.f32 %v8073, %v8129
        %v8131 = vand.u32 %v8028, 4294901760
        %8132 = vmatmul.f32.gmra.mxu0 %v8131
        %v8133 = vpop.f32.mrf.mxu0
        %v8134 = vadd.f32 %v8081, %v8133
        %8135 = vdwg.mxu0
        %8136 = vmatpush.msra.mxu0 0.0
        %8137 = vmatpush.msra.mxu0 0.0
        %8138 = vmatpush.msra.mxu0 0.0
        %8139 = vmatpush.msra.mxu0 0.0
        %8140 = vmatpush.msra.mxu0 0.0
        %8141 = vmatpush.msra.mxu0 0.0
        %8142 = vmatpush.msra.mxu0 0.0
        %8143 = vmatpush.msra.mxu0 0.0
        %8144 = vmatpush.msra.mxu0 0.0
        %8145 = vmatpush.msra.mxu0 0.0
        %8146 = vmatpush.msra.mxu0 0.0
        %8147 = vmatpush.msra.mxu0 0.0
        %v8148 = vand.u32 %v415, 4294901760
        %v8149 = vsub.f32 %v415, %v8148
        %8150 = vmatpush.msra.mxu0 %v8149
        %v8151 = vand.u32 %v414, 4294901760
        %v8152 = vsub.f32 %v414, %v8151
        %8153 = vmatpush.msra.mxu0 %v8152
        %v8154 = vand.u32 %v413, 4294901760
        %v8155 = vsub.f32 %v413, %v8154
        %8156 = vmatpush.msra.mxu0 %v8155
        %v8157 = vand.u32 %v412, 4294901760
        %v8158 = vsub.f32 %v412, %v8157
        %8159 = vmatpush.msra.mxu0 %v8158
        %v8160 = vand.u32 %v8019, 4294901760
        %v8161 = vsub.f32 %v8019, %v8160
        %8162 = vmatmul.f32.gmra.mxu0 %v8161
        %v8163 = vpop.f32.mrf.mxu0
        %v8164 = vadd.f32 %v8122, %v8163
        %v8165 = vand.u32 %v8022, 4294901760
        %v8166 = vsub.f32 %v8022, %v8165
        %8167 = vmatmul.f32.gmra.mxu0 %v8166
        %v8168 = vpop.f32.mrf.mxu0
        %v8169 = vadd.f32 %v8126, %v8168
        %v8170 = vand.u32 %v8025, 4294901760
        %v8171 = vsub.f32 %v8025, %v8170
        %8172 = vmatmul.f32.gmra.mxu0 %v8171
        %v8173 = vpop.f32.mrf.mxu0
        %v8174 = vadd.f32 %v8130, %v8173
        %v8175 = vand.u32 %v8028, 4294901760
        %v8176 = vsub.f32 %v8028, %v8175
        %8177 = vmatmul.f32.gmra.mxu0 %v8176
        %v8178 = vpop.f32.mrf.mxu0
        %v8179 = vadd.f32 %v8134, %v8178
        %8180 = vdwg.mxu0
        %8181 = vmatpush.msra.mxu0 0.0
        %8182 = vmatpush.msra.mxu0 0.0
        %8183 = vmatpush.msra.mxu0 0.0
        %8184 = vmatpush.msra.mxu0 0.0
        %8185 = vmatpush.msra.mxu0 0.0
        %8186 = vmatpush.msra.mxu0 0.0
        %8187 = vmatpush.msra.mxu0 0.0
        %8188 = vmatpush.msra.mxu0 0.0
        %8189 = vmatpush.msra.mxu0 0.0
        %8190 = vmatpush.msra.mxu0 0.0
        %8191 = vmatpush.msra.mxu0 0.0
        %8192 = vmatpush.msra.mxu0 0.0
        %v8193 = vand.u32 %v415, 4294901760
        %8194 = vmatpush.msra.mxu0 %v8193
        %v8195 = vand.u32 %v414, 4294901760
        %8196 = vmatpush.msra.mxu0 %v8195
        %v8197 = vand.u32 %v413, 4294901760
        %8198 = vmatpush.msra.mxu0 %v8197
        %v8199 = vand.u32 %v412, 4294901760
        %8200 = vmatpush.msra.mxu0 %v8199
        %v8201 = vand.u32 %v8019, 4294901760
        %v8202 = vsub.f32 %v8019, %v8201
        %v8203 = vand.u32 %v8202, 4294901760
        %8204 = vmatmul.f32.gmra.mxu0 %v8203
        %v8205 = vpop.f32.mrf.mxu0
        %v8206 = vadd.f32 %v8164, %v8205
        %v8207 = vand.u32 %v8022, 4294901760
        %v8208 = vsub.f32 %v8022, %v8207
        %v8209 = vand.u32 %v8208, 4294901760
        %8210 = vmatmul.f32.gmra.mxu0 %v8209
        %v8211 = vpop.f32.mrf.mxu0
        %v8212 = vadd.f32 %v8169, %v8211
        %v8213 = vand.u32 %v8025, 4294901760
        %v8214 = vsub.f32 %v8025, %v8213
        %v8215 = vand.u32 %v8214, 4294901760
        %8216 = vmatmul.f32.gmra.mxu0 %v8215
        %v8217 = vpop.f32.mrf.mxu0
        %v8218 = vadd.f32 %v8174, %v8217
        %v8219 = vand.u32 %v8028, 4294901760
        %v8220 = vsub.f32 %v8028, %v8219
        %v8221 = vand.u32 %v8220, 4294901760
        %8222 = vmatmul.f32.gmra.mxu0 %v8221
        %v8223 = vpop.f32.mrf.mxu0
        %v8224 = vadd.f32 %v8179, %v8223
        %8225 = vdwg.mxu0
        %8226 = vmatpush.msra.mxu0 0.0
        %8227 = vmatpush.msra.mxu0 0.0
        %8228 = vmatpush.msra.mxu0 0.0
        %8229 = vmatpush.msra.mxu0 0.0
        %8230 = vmatpush.msra.mxu0 0.0
        %8231 = vmatpush.msra.mxu0 0.0
        %8232 = vmatpush.msra.mxu0 0.0
        %8233 = vmatpush.msra.mxu0 0.0
        %8234 = vmatpush.msra.mxu0 0.0
        %8235 = vmatpush.msra.mxu0 0.0
        %8236 = vmatpush.msra.mxu0 0.0
        %8237 = vmatpush.msra.mxu0 0.0
        %v8238 = vand.u32 %v415, 4294901760
        %v8239 = vsub.f32 %v415, %v8238
        %v8240 = vand.u32 %v8239, 4294901760
        %8241 = vmatpush.msra.mxu0 %v8240
        %v8242 = vand.u32 %v414, 4294901760
        %v8243 = vsub.f32 %v414, %v8242
        %v8244 = vand.u32 %v8243, 4294901760
        %8245 = vmatpush.msra.mxu0 %v8244
        %v8246 = vand.u32 %v413, 4294901760
        %v8247 = vsub.f32 %v413, %v8246
        %v8248 = vand.u32 %v8247, 4294901760
        %8249 = vmatpush.msra.mxu0 %v8248
        %v8250 = vand.u32 %v412, 4294901760
        %v8251 = vsub.f32 %v412, %v8250
        %v8252 = vand.u32 %v8251, 4294901760
        %8253 = vmatpush.msra.mxu0 %v8252
        %v8254 = vand.u32 %v8019, 4294901760
        %8255 = vmatmul.f32.gmra.mxu0 %v8254
        %v8256 = vpop.f32.mrf.mxu0
        %v8257 = vadd.f32 %v8206, %v8256
        %v8258 = vand.u32 %v8022, 4294901760
        %8259 = vmatmul.f32.gmra.mxu0 %v8258
        %v8260 = vpop.f32.mrf.mxu0
        %v8261 = vadd.f32 %v8212, %v8260
        %v8262 = vand.u32 %v8025, 4294901760
        %8263 = vmatmul.f32.gmra.mxu0 %v8262
        %v8264 = vpop.f32.mrf.mxu0
        %v8265 = vadd.f32 %v8218, %v8264
        %v8266 = vand.u32 %v8028, 4294901760
        %8267 = vmatmul.f32.gmra.mxu0 %v8266
        %v8268 = vpop.f32.mrf.mxu0
        %v8269 = vadd.f32 %v8224, %v8268
        %8270 = vdwg.mxu0
        %8271 = vmatpush.msra.mxu0 0.0
        %8272 = vmatpush.msra.mxu0 0.0
        %8273 = vmatpush.msra.mxu0 0.0
        %8274 = vmatpush.msra.mxu0 0.0
        %8275 = vmatpush.msra.mxu0 0.0
        %8276 = vmatpush.msra.mxu0 0.0
        %8277 = vmatpush.msra.mxu0 0.0
        %8278 = vmatpush.msra.mxu0 0.0
        %8279 = vmatpush.msra.mxu0 0.0
        %8280 = vmatpush.msra.mxu0 0.0
        %8281 = vmatpush.msra.mxu0 0.0
        %8282 = vmatpush.msra.mxu0 0.0
        %v8283 = vand.u32 %v415, 4294901760
        %8284 = vmatpush.msra.mxu0 %v8283
        %v8285 = vand.u32 %v414, 4294901760
        %8286 = vmatpush.msra.mxu0 %v8285
        %v8287 = vand.u32 %v413, 4294901760
        %8288 = vmatpush.msra.mxu0 %v8287
        %v8289 = vand.u32 %v412, 4294901760
        %8290 = vmatpush.msra.mxu0 %v8289
        %v8291 = vand.u32 %v8019, 4294901760
        %8292 = vmatmul.f32.gmra.mxu0 %v8291
        %v8293 = vpop.f32.mrf.mxu0
        %v8294 = vadd.f32 %v8257, %v8293
        %v8295 = vand.u32 %v8022, 4294901760
        %8296 = vmatmul.f32.gmra.mxu0 %v8295
        %v8297 = vpop.f32.mrf.mxu0
        %v8298 = vadd.f32 %v8261, %v8297
        %v8299 = vand.u32 %v8025, 4294901760
        %8300 = vmatmul.f32.gmra.mxu0 %v8299
        %v8301 = vpop.f32.mrf.mxu0
        %v8302 = vadd.f32 %v8265, %v8301
        %v8303 = vand.u32 %v8028, 4294901760
        %8304 = vmatmul.f32.gmra.mxu0 %v8303
        %v8305 = vpop.f32.mrf.mxu0
        %v8306 = vadd.f32 %v8269, %v8305
        %8307 = vdwg.mxu0
        %8308 = vst.msk [vmem:[%s402] sm:$0xff] %vm420, %v8294
        %8309 = vst.msk [vmem:[%s402 + $0x8] sm:$0xff] %vm420, %v8298
        %8310 = vst.msk [vmem:[%s402 + $0x10] sm:$0xff] %vm420, %v8302
        %8311 = vst.msk [vmem:[%s402 + $0x18] sm:$0xff] %vm420, %v8306
        %s8312 = sand.u32 %s249, 1
        %s8313 = scalar_lea.sflag [#allocation5], %s8312
        %s8314 = sand.u32 %s249, 1
        %s8315 = smul.addr %s8314, 32
        %s8316 = scalar_lea.vmem [#allocation9], %s8315
        // Predicated region
        $region73: #{tpu_custom_call.1} parent=59 // pred_check
          %p8317 = pneg %p259
        $region74: #{tpu_custom_call.1} parent=59 // pred_check_branch
          %8319 = sbr.rel (%p8317) target = $region76
        $region75: #{tpu_custom_call.1} parent=59 // pred_region
          %8321 = vsyncadd %s8313, 0
          %s8322 = smul.addr %s26, 4
          %s8323 = smul.addr %s8322, 8
          %s8324 = scalar_lea.hbm %s10, %s8323
          %s8325 = sshll.u32 %s8316, 4
          %s8326 = int_to_ptr.vmem [resolvable:$true] %s8325
          %s8327 = sshll.u32 %s8324, 4
          %s8328 = int_to_ptr.hbm [resolvable:$true] %s8327
          %8333 = dma.vmem_to_hbm [thread:$0]  %s8326, 512, %s8328, %s8313, 128, 128, 8
        $region76: #{tpu_custom_call.1} parent=59 // pred_fallthru
          _
      $region60: #{tpu_custom_call.1} parent=5 // pred_fallthru
        _
      %p8334 = scmp.le.s32.totalorder 2, %s21
      // Predicated region
      $region77: #{tpu_custom_call.1} parent=5 // pred_check
        %p8335 = pneg %p8334
      $region78: #{tpu_custom_call.1} parent=5 // pred_check_branch
        %8337 = sbr.rel (%p8335) target = $region80
      $region79: #{tpu_custom_call.1} parent=5 // pred_region
        %s8338 = ssub.s32 %s21, 2
        // Predicated region
        $region81: #{tpu_custom_call.1} parent=79 // pred_check
          %p8339 = pneg %p265
        $region82: #{tpu_custom_call.1} parent=79 // pred_check_branch
          %8341 = sbr.rel (%p8339) target = $region84
        $region83: #{tpu_custom_call.1} parent=79 // pred_region
          %s8342 = sand.u32 %s250, 1
          %s8343 = scalar_lea.sflag [#allocation5], %s8342
          %s8344 = sand.u32 %s250, 1
          %s8345 = smul.addr %s8344, 32
          %s8346 = scalar_lea.vmem [#allocation9], %s8345
          %8348 = dma.done %s8343, 512
        $region84: #{tpu_custom_call.1} parent=79 // pred_fallthru
          _
      $region80: #{tpu_custom_call.1} parent=5 // pred_fallthru
        _
    $region6: #{tpu_custom_call.1} parent=1 // loop_footer
      %s25 = sadd.s32 1, %s21
    $region7: #{tpu_custom_call.1} parent=1 // loop_footer_branch
      %20 = sbr.rel target = $region3
    $region8: #{tpu_custom_call.1} parent=1 // loop_exit
      _
    %8349 = vsyncpa [#allocation4], 1
    %s8350 = scalar_lea.sflag [#allocation4], 1
    %8351 = vsyncpa %s8350, 1
    %8352 = vsyncpa [#allocation7], 1
    %8353 = vsyncpa [#allocation5], 1
    %s8354 = scalar_lea.sflag [#allocation5], 1
    %8355 = vsyncpa %s8354, 1

</llo_original>
